<compile_context>
chip_gen: v7x
topology: tpu7x:2x2x1
jax: 0.10.0
libtpu: 0.0.40
codegen_flags: <defaults>
</compile_context>

<pallas_src>
import functools

import jax
import jax.numpy as jnp
from jax import lax
from jax.experimental import pallas as pl
from jax.experimental.pallas import tpu as pltpu

# ----------------------------- model dims (small) -----------------------------
VOCAB    = 16     # chars_len (input_size == output_size)
HIDDEN   = 128    # hidden_size (keeps gate slabs lane-aligned)
N_LAYERS = 2
BATCH    = 16     # minibatch (sublane-aligned; raised per perf review)
SEQ      = 8      # sequence length
VPAD     = 128    # decoder output padded to a full 128-lane tile
VTILE    = 128    # embedding/gate lookup table padded to 128 rows (one-hot lanes)


# ------------------------------- Pallas kernel --------------------------------
def gru_decoder_kernel(
    tok_ref,     # (S*B, 1)    i32 : tokens, time-major flattened
    h0_ref,      # (L, B, H)   f32 : initial hidden state
    embgate_ref, # (VTILE, 3H) mxu : embedding @ [Wir|Wiz|Win].T + fused biases (rows >= V are 0)
    wi1_ref,     # (H, 3H)     mxu : layer-1 input weights, pre-transposed
    wh_ref,      # (L, H, 3H)  mxu : hidden weights [Whr|Whz|Whn], pre-transposed
    bi1_ref,     # (1, 3H)     f32 : layer-1 fused input bias (r/z hidden biases folded)
    bhn_ref,     # (L, 1, H)   f32 : per-layer b_hn (must stay inside r * (...))
    wd_ref,      # (H, VPAD)   mxu : decoder weight, transposed + lane padded
    bd_ref,      # (1, VPAD)   f32 : decoder bias, lane padded
    logits_ref,  # (S*B, VPAD) f32 out : lane-dense logits slab, written once
    hfinal_ref,  # (L, B, H)   f32 out : final hidden state
    top_ref,     # (S*B, H)    mxu scratch : top-layer hidden per step (decoder LHS)
    xg0_ref,     # (S*B, 3H)   f32 scratch : layer-0 gate preacts for all steps
):
    SB, H = top_ref.shape
    L, B, _ = h0_ref.shape
    S = SB // B
    VT = embgate_ref.shape[0]
    mdt = wh_ref.dtype  # MXU operand dtype (f32 or bf16)

    # ---- prologue: embedding lookup fused with layer-0 input projection ----
    # One-hot row selection via a single (S*B, VT) @ (VT, 3H) MXU matmul;
    # biases are pre-folded into the table rows, so this IS x@Wi + b for all t.
    tok = tok_ref[...]                                             # (S*B, 1) i32
    iota = lax.broadcasted_iota(jnp.int32, (SB, VT), 1)
    onehot = jnp.where(iota == tok, 1.0, 0.0).astype(mdt)          # (S*B, VT)
    xg0_ref[...] = jnp.dot(onehot, embgate_ref[...],
                           preferred_element_type=jnp.float32)     # (S*B, 3H) f32

    # ---- hoist weight loads and bias broadcasts out of the unrolled loop ----
    wh0 = wh_ref[0]
    wh1 = wh_ref[1]
    wi1 = wi1_ref[...]
    bi1_b = jnp.broadcast_to(bi1_ref[...], (B, 3 * H))             # (B, 3H)
    bhn0_b = jnp.broadcast_to(bhn_ref[0], (B, H))                  # (B, H)
    bhn1_b = jnp.broadcast_to(bhn_ref[1], (B, H))                  # (B, H)

    def gru_cell(ig, h_prev, wh, bhn_b):
        # ig already holds x @ W_i + b_i (with b_hr / b_hz folded into r/z cols).
        # One fused (B, H) @ (H, 3H) MXU matmul per layer per step.
        hg = jnp.dot(h_prev.astype(mdt), wh, preferred_element_type=jnp.float32)
        r = jax.nn.sigmoid(ig[:, :H] + hg[:, :H])
        z = jax.nn.sigmoid(ig[:, H:2 * H] + hg[:, H:2 * H])
        n = jnp.tanh(ig[:, 2 * H:] + r * (hg[:, 2 * H:] + bhn_b))
        # Gate blend stays in f32 (no bf16 VPU/EUP dependence -> v5e-safe).
        return (1.0 - z) * n + z * h_prev

    def step(t, carry):
        h0, h1 = carry
        # Layer 0: input-side preactivations precomputed in the prologue.
        ig0 = xg0_ref[pl.ds(t * B, B), :]
        h0 = gru_cell(ig0, h0, wh0, bhn0_b)
        # Layer 1: input is layer-0's fresh output -> project it here.
        ig1 = jnp.dot(h0.astype(mdt), wi1,
                      preferred_element_type=jnp.float32) + bi1_b
        h1 = gru_cell(ig1, h1, wh1, bhn1_b)
        # Stash the top-layer output already in the MXU dtype (decoder LHS).
        top_ref[pl.ds(t * B, B), :] = h1.astype(top_ref.dtype)
        return (h0, h1)

    h0_f, h1_f = lax.fori_loop(0, S, step, (h0_ref[0], h0_ref[1]), unroll=True)

    hfinal_ref[0] = h0_f
    hfinal_ref[1] = h1_f

    # Bulk decoder: one (S*B, H) @ (H, VPAD) matmul, single lane-dense store.
    logits_ref[...] = (
        jnp.dot(top_ref[...], wd_ref[...], preferred_element_type=jnp.float32)
        + bd_ref[...]
    ).astype(logits_ref.dtype)


# ------------------------------- packing (one-time) ----------------------------
def _fused_gate_weights(params, prefix, l):
    # Columns ordered [r | z | n]; pre-transposed so the kernel does x @ W.
    return jnp.concatenate(
        [params[prefix + "r"][l].T,
         params[prefix + "z"][l].T,
         params[prefix + "n"][l].T], axis=1)          # (H, 3H)


def pack_params(params, *, mxu_dtype=jnp.bfloat16):
    """One-time weight repack. Call once and cache; do NOT call per forward."""
    L, H, _ = params["w_ir"].shape
    V = params["decoder_w"].shape[0]

    # Layer 0: fold embedding lookup + input projection + biases into a table.
    wi0 = _fused_gate_weights(params, "w_i", 0)                      # (H, 3H) f32
    bi0 = jnp.concatenate([params["b_ir"][0] + params["b_hr"][0],
                           params["b_iz"][0] + params["b_hz"][0],
                           params["b_in"][0]])                       # (3H,)
    table = params["embedding"] @ wi0 + bi0                          # (V, 3H)
    embgate = (jnp.zeros((VTILE, 3 * H), jnp.float32)
               .at[:V].set(table).astype(mxu_dtype))                 # (VTILE, 3H)

    wi1 = _fused_gate_weights(params, "w_i", 1).astype(mxu_dtype)    # (H, 3H)
    bi1 = jnp.concatenate([params["b_ir"][1] + params["b_hr"][1],
                           params["b_iz"][1] + params["b_hz"][1],
                           params["b_in"][1]])[None, :]              # (1, 3H)
    wh = jnp.stack([_fused_gate_weights(params, "w_h", l)
                    for l in range(L)]).astype(mxu_dtype)            # (L, H, 3H)
    bhn = params["b_hn"][:, None, :]                                 # (L, 1, H)

    wd = (jnp.zeros((H, VPAD), jnp.float32)
          .at[:, :V].set(params["decoder_w"].T).astype(mxu_dtype))   # (H, VPAD)
    bd = jnp.zeros((1, VPAD), jnp.float32).at[:, :V].set(params["decoder_b"])

    return {"embgate": embgate, "wi1": wi1, "bi1": bi1,
            "wh": wh, "bhn": bhn, "wd": wd, "bd": bd}


# ------------------------------- forward wrapper -------------------------------
def rnn_forward(tokens, hidden, packed):
    """tokens: (S, B) i32, hidden: (L, B, H) f32, packed: pack_params(...) output.

    Returns (logits (S*B, V), hidden (L, B, H)) — matches the PyTorch forward.
    """
    S, B = tokens.shape
    L, _, H = hidden.shape
    SB = S * B
    mdt = packed["wh"].dtype
    VT = packed["embgate"].shape[0]

    tok = tokens.reshape(SB, 1)   # time-major flatten (matches output.view order)

    full = lambda shape: pl.BlockSpec(shape, lambda i: (0,) * len(shape))

    grid_spec = pltpu.PrefetchScalarGridSpec(
        num_scalar_prefetch=0,
        grid=(1,),  # single program: whole time recurrence runs in-kernel
        in_specs=[
            full((SB, 1)),          # tokens
            full((L, B, H)),        # h0
            full((VT, 3 * H)),      # embgate table
            full((H, 3 * H)),       # wi1
            full((L, H, 3 * H)),    # wh
            full((1, 3 * H)),       # bi1
            full((L, 1, H)),        # bhn
            full((H, VPAD)),        # wd
            full((1, VPAD)),        # bd
        ],
        out_specs=[
            full((SB, VPAD)),       # logits (lane-dense slab)
            full((L, B, H)),        # final hidden
        ],
        scratch_shapes=[
            pltpu.VMEM((SB, H), mdt),             # top-layer outputs (mxu dtype)
            pltpu.VMEM((SB, 3 * H), jnp.float32), # layer-0 gate preacts
        ],
    )

    logits_pad, h_final = pl.pallas_call(
        gru_decoder_kernel,
        out_shape=(
            jax.ShapeDtypeStruct((SB, VPAD), jnp.float32),
            jax.ShapeDtypeStruct((L, B, H), jnp.float32),
        ),
        grid_spec=grid_spec,
        compiler_params=pltpu.CompilerParams(
            dimension_semantics=("arbitrary",),
        ),
    )(tok, hidden, packed["embgate"], packed["wi1"], packed["wh"],
      packed["bi1"], packed["bhn"], packed["wd"], packed["bd"])

    # PyTorch: decoder(output.view(S*B, H)) -> (S*B, V); drop lane padding here.
    return logits_pad[:, :VOCAB], h_final


# --------------------------- pure-JAX reference ---------------------------------
def rnn_forward_ref(tokens, hidden, params):
    S, B = tokens.shape
    L, _, H = hidden.shape
    x = jnp.take(params["embedding"], tokens, axis=0)  # (S, B, H)
    h = hidden
    outs = []
    for t in range(S):
        xt = x[t]
        new_h = []
        for l in range(L):
            hp = h[l]
            r = jax.nn.sigmoid(xt @ params["w_ir"][l].T + params["b_ir"][l]
                               + hp @ params["w_hr"][l].T + params["b_hr"][l])
            z = jax.nn.sigmoid(xt @ params["w_iz"][l].T + params["b_iz"][l]
                               + hp @ params["w_hz"][l].T + params["b_hz"][l])
            n = jnp.tanh(xt @ params["w_in"][l].T + params["b_in"][l]
                         + r * (hp @ params["w_hn"][l].T + params["b_hn"][l]))
            hn = (1.0 - z) * n + z * hp
            new_h.append(hn)
            xt = hn
        h = jnp.stack(new_h)
        outs.append(xt)
    out = jnp.stack(outs)                                   # (S, B, H)
    logits = out.reshape(S * B, H) @ params["decoder_w"].T + params["decoder_b"]
    return logits, h


# ------------------------------ param init --------------------------------------
def init_params(key):
    ks = jax.random.split(key, 16)
    k = 1.0 / jnp.sqrt(HIDDEN)
    u = lambda kk, shape: jax.random.uniform(kk, shape, jnp.float32, -k, k)
    return {
        "embedding": jax.random.normal(ks[0], (VOCAB, HIDDEN), jnp.float32),
        "w_ir": u(ks[1], (N_LAYERS, HIDDEN, HIDDEN)),
        "w_iz": u(ks[2], (N_LAYERS, HIDDEN, HIDDEN)),
        "w_in": u(ks[3], (N_LAYERS, HIDDEN, HIDDEN)),
        "w_hr": u(ks[4], (N_LAYERS, HIDDEN, HIDDEN)),
        "w_hz": u(ks[5], (N_LAYERS, HIDDEN, HIDDEN)),
        "w_hn": u(ks[6], (N_LAYERS, HIDDEN, HIDDEN)),
        "b_ir": u(ks[7], (N_LAYERS, HIDDEN)),
        "b_iz": u(ks[8], (N_LAYERS, HIDDEN)),
        "b_in": u(ks[9], (N_LAYERS, HIDDEN)),
        "b_hr": u(ks[10], (N_LAYERS, HIDDEN)),
        "b_hz": u(ks[11], (N_LAYERS, HIDDEN)),
        "b_hn": u(ks[12], (N_LAYERS, HIDDEN)),
        "decoder_w": u(ks[13], (VOCAB, HIDDEN)),
        "decoder_b": u(ks[14], (VOCAB,)),
    }


# ---------------------------------- main -----------------------------------------
if __name__ == "__main__":
    key = jax.random.PRNGKey(0)
    pkey, tkey = jax.random.split(key)
    params = init_params(pkey)

    tokens = jax.random.randint(tkey, (SEQ, BATCH), 0, VOCAB, dtype=jnp.int32)
    hidden0 = jnp.zeros((N_LAYERS, BATCH, HIDDEN), jnp.float32)  # model.create_hidden()

    logits_ref, hidden_ref = rnn_forward_ref(tokens, hidden0, params)

    fwd = jax.jit(rnn_forward)

    # ---- exact-precision path (f32 MXU operands): tight correctness check ----
    packed_f32 = pack_params(params, mxu_dtype=jnp.float32)   # packed ONCE, cached
    logits32, hid32 = fwd(tokens, hidden0, packed_f32)
    jax.block_until_ready((logits32, hid32))
    assert logits32.shape == (SEQ * BATCH, VOCAB)
    assert hid32.shape == (N_LAYERS, BATCH, HIDDEN)
    assert jnp.allclose(logits32, logits_ref, rtol=1e-4, atol=1e-4), "f32 logits mismatch"
    assert jnp.allclose(hid32, hidden_ref, rtol=1e-4, atol=1e-4), "f32 hidden mismatch"

    # ---- bf16-MXU production path (f32 accumulation + f32 gate math) ----
    # bf16 rounding accumulates across the 8-step recurrence -> loose tolerance.
    packed_bf16 = pack_params(params, mxu_dtype=jnp.bfloat16)  # packed ONCE, cached
    logits16, hid16 = fwd(tokens, hidden0, packed_bf16)
    jax.block_until_ready((logits16, hid16))
    assert jnp.allclose(logits16, logits_ref, rtol=1e-1, atol=1e-1), "bf16 logits mismatch"
    assert jnp.allclose(hid16, hidden_ref, rtol=1e-1, atol=1e-1), "bf16 hidden mismatch"

    print("KERNEL_OK")
</pallas_src>

<mosaic_0001>
module attributes {stable_mosaic.version = 11 : i64} {
  func.func @gru_decoder_kernel(%arg0: i32, %arg1: memref<128x1xi32, #tpu.memory_space<vmem>>, %arg2: memref<2x16x128xf32, #tpu.memory_space<vmem>>, %arg3: memref<128x384xf32, #tpu.memory_space<vmem>>, %arg4: memref<128x384xf32, #tpu.memory_space<vmem>>, %arg5: memref<2x128x384xf32, #tpu.memory_space<vmem>>, %arg6: memref<1x384xf32, #tpu.memory_space<vmem>>, %arg7: memref<2x1x128xf32, #tpu.memory_space<vmem>>, %arg8: memref<128x128xf32, #tpu.memory_space<vmem>>, %arg9: memref<1x128xf32, #tpu.memory_space<vmem>>, %arg10: memref<128x128xf32, #tpu.memory_space<vmem>>, %arg11: memref<2x16x128xf32, #tpu.memory_space<vmem>>, %arg12: memref<128x128xf32, #tpu.memory_space<vmem>>, %arg13: memref<128x384xf32, #tpu.memory_space<vmem>>) attributes {dimension_semantics = [#tpu.dimension_semantics<arbitrary>], iteration_bounds = array<i64: 1>, scalar_prefetch = 0 : i64, scratch_operands = 2 : i64, tpu.core_type = #tpu.core_type<tc>, window_params = [{pipeline_mode = #tpu.pipeline_mode<synchronous>, transform_indices = @transform_0, window_bounds = array<i64: 128, 1>}, {pipeline_mode = #tpu.pipeline_mode<synchronous>, transform_indices = @transform_1, window_bounds = array<i64: 2, 16, 128>}, {pipeline_mode = #tpu.pipeline_mode<synchronous>, transform_indices = @transform_2, window_bounds = array<i64: 128, 384>}, {pipeline_mode = #tpu.pipeline_mode<synchronous>, transform_indices = @transform_3, window_bounds = array<i64: 128, 384>}, {pipeline_mode = #tpu.pipeline_mode<synchronous>, transform_indices = @transform_4, window_bounds = array<i64: 2, 128, 384>}, {pipeline_mode = #tpu.pipeline_mode<synchronous>, transform_indices = @transform_5, window_bounds = array<i64: 1, 384>}, {pipeline_mode = #tpu.pipeline_mode<synchronous>, transform_indices = @transform_6, window_bounds = array<i64: 2, 1, 128>}, {pipeline_mode = #tpu.pipeline_mode<synchronous>, transform_indices = @transform_7, window_bounds = array<i64: 128, 128>}, {pipeline_mode = #tpu.pipeline_mode<synchronous>, transform_indices = @transform_8, window_bounds = array<i64: 1, 128>}, {pipeline_mode = #tpu.pipeline_mode<synchronous>, transform_indices = @transform_9, window_bounds = array<i64: 128, 128>}, {pipeline_mode = #tpu.pipeline_mode<synchronous>, transform_indices = @transform_10, window_bounds = array<i64: 2, 16, 128>}]} {
    %c0 = arith.constant 0 : index
    %c0_0 = arith.constant 0 : index
    %0 = vector.load %arg1[%c0, %c0_0] : memref<128x1xi32, #tpu.memory_space<vmem>>, vector<128x1xi32>
    %1 = tpu.iota {dimensions = array<i32: 1>} : vector<128x128xi32>
    %2 = vector.broadcast %0 : vector<128x1xi32> to vector<128x128xi32>
    %3 = arith.cmpi eq, %1, %2 : vector<128x128xi32>
    %cst = arith.constant 1.000000e+00 : f32
    %cst_1 = arith.constant 0.000000e+00 : f32
    %4 = vector.broadcast %cst : f32 to vector<128x128xf32>
    %5 = vector.broadcast %cst_1 : f32 to vector<128x128xf32>
    %6 = arith.select %3, %4, %5 : vector<128x128xi1>, vector<128x128xf32>
    %c0_2 = arith.constant 0 : index
    %c0_3 = arith.constant 0 : index
    %7 = vector.load %arg3[%c0_2, %c0_3] : memref<128x384xf32, #tpu.memory_space<vmem>>, vector<128x384xf32>
    %cst_4 = arith.constant dense<0.000000e+00> : vector<128x384xf32>
    %8 = tpu.matmul %6, %7, %cst_4 {dimension_numbers = #tpu.dot_dimension_numbers<[1], [0], [0], [1], [0, 0, 1, 1], [], []>} : vector<128x128xf32>, vector<128x384xf32>, vector<128x384xf32> -> vector<128x384xf32>
    %c0_5 = arith.constant 0 : index
    %c0_6 = arith.constant 0 : index
    %9 = vector.load %arg13[%c0_5, %c0_6] : memref<128x384xf32, #tpu.memory_space<vmem>>, vector<128x384xf32>
    tpu.vector_store %arg13[%c0_5, %c0_6], %8 {strides = array<i32>} : memref<128x384xf32, #tpu.memory_space<vmem>>, vector<128x384xf32>,
    %c0_7 = arith.constant 0 : index
    %c0_8 = arith.constant 0 : index
    %c0_9 = arith.constant 0 : index
    %10 = vector.load %arg5[%c0_7, %c0_8, %c0_9] : memref<2x128x384xf32, #tpu.memory_space<vmem>>, vector<1x128x384xf32>
    %11 = vector.shape_cast %10 : vector<1x128x384xf32> to vector<128x384xf32>
    %c1 = arith.constant 1 : index
    %c0_10 = arith.constant 0 : index
    %c0_11 = arith.constant 0 : index
    %12 = vector.load %arg5[%c1, %c0_10, %c0_11] : memref<2x128x384xf32, #tpu.memory_space<vmem>>, vector<1x128x384xf32>
    %13 = vector.shape_cast %12 : vector<1x128x384xf32> to vector<128x384xf32>
    %c0_12 = arith.constant 0 : index
    %c0_13 = arith.constant 0 : index
    %14 = vector.load %arg4[%c0_12, %c0_13] : memref<128x384xf32, #tpu.memory_space<vmem>>, vector<128x384xf32>
    %c0_14 = arith.constant 0 : index
    %c0_15 = arith.constant 0 : index
    %15 = vector.load %arg6[%c0_14, %c0_15] : memref<1x384xf32, #tpu.memory_space<vmem>>, vector<1x384xf32>
    %16 = vector.shape_cast %15 : vector<1x384xf32> to vector<1x384xf32>
    %17 = vector.broadcast %16 : vector<1x384xf32> to vector<16x384xf32>
    %c0_16 = arith.constant 0 : index
    %c0_17 = arith.constant 0 : index
    %c0_18 = arith.constant 0 : index
    %18 = vector.load %arg7[%c0_16, %c0_17, %c0_18] : memref<2x1x128xf32, #tpu.memory_space<vmem>>, vector<1x1x128xf32>
    %19 = vector.shape_cast %18 : vector<1x1x128xf32> to vector<1x128xf32>
    %20 = vector.shape_cast %19 : vector<1x128xf32> to vector<1x128xf32>
    %21 = vector.broadcast %20 : vector<1x128xf32> to vector<16x128xf32>
    %c1_19 = arith.constant 1 : index
    %c0_20 = arith.constant 0 : index
    %c0_21 = arith.constant 0 : index
    %22 = vector.load %arg7[%c1_19, %c0_20, %c0_21] : memref<2x1x128xf32, #tpu.memory_space<vmem>>, vector<1x1x128xf32>
    %23 = vector.shape_cast %22 : vector<1x1x128xf32> to vector<1x128xf32>
    %24 = vector.shape_cast %23 : vector<1x128xf32> to vector<1x128xf32>
    %25 = vector.broadcast %24 : vector<1x128xf32> to vector<16x128xf32>
    %c0_22 = arith.constant 0 : index
    %c0_23 = arith.constant 0 : index
    %c0_24 = arith.constant 0 : index
    %26 = vector.load %arg2[%c0_22, %c0_23, %c0_24] : memref<2x16x128xf32, #tpu.memory_space<vmem>>, vector<1x16x128xf32>
    %27 = vector.shape_cast %26 : vector<1x16x128xf32> to vector<16x128xf32>
    %c1_25 = arith.constant 1 : index
    %c0_26 = arith.constant 0 : index
    %c0_27 = arith.constant 0 : index
    %28 = vector.load %arg2[%c1_25, %c0_26, %c0_27] : memref<2x16x128xf32, #tpu.memory_space<vmem>>, vector<1x16x128xf32>
    %29 = vector.shape_cast %28 : vector<1x16x128xf32> to vector<16x128xf32>
    %c0_i32 = arith.constant 0 : i32
    %c16_i32 = arith.constant 16 : i32
    %30 = arith.muli %c0_i32, %c16_i32 : i32
    %31 = arith.index_cast %30 : i32 to index
    %c0_28 = arith.constant 0 : index
    %32 = vector.load %arg13[%31, %c0_28] : memref<128x384xf32, #tpu.memory_space<vmem>>, vector<16x384xf32>
    %cst_29 = arith.constant dense<0.000000e+00> : vector<16x384xf32>
    %33 = tpu.matmul %27, %11, %cst_29 {dimension_numbers = #tpu.dot_dimension_numbers<[1], [0], [0], [1], [0, 0, 1, 1], [], []>} : vector<16x128xf32>, vector<128x384xf32>, vector<16x384xf32> -> vector<16x384xf32>
    %34 = vector.extract_strided_slice %32 {offsets = [0, 0], sizes = [16, 128], strides = [1, 1]} : vector<16x384xf32> to vector<16x128xf32>
    %35 = vector.extract_strided_slice %33 {offsets = [0, 0], sizes = [16, 128], strides = [1, 1]} : vector<16x384xf32> to vector<16x128xf32>
    %36 = arith.addf %34, %35 : vector<16x128xf32>
    %37 = arith.negf %36 : vector<16x128xf32>
    %38 = math.exp %37 : vector<16x128xf32>
    %cst_30 = arith.constant 1.000000e+00 : f32
    %39 = vector.broadcast %cst_30 : f32 to vector<16x128xf32>
    %40 = arith.addf %39, %38 : vector<16x128xf32>
    %41 = arith.divf %39, %40 : vector<16x128xf32>
    %42 = vector.extract_strided_slice %32 {offsets = [0, 128], sizes = [16, 128], strides = [1, 1]} : vector<16x384xf32> to vector<16x128xf32>
    %43 = vector.extract_strided_slice %33 {offsets = [0, 128], sizes = [16, 128], strides = [1, 1]} : vector<16x384xf32> to vector<16x128xf32>
    %44 = arith.addf %42, %43 : vector<16x128xf32>
    %45 = arith.negf %44 : vector<16x128xf32>
    %46 = math.exp %45 : vector<16x128xf32>
    %cst_31 = arith.constant 1.000000e+00 : f32
    %47 = vector.broadcast %cst_31 : f32 to vector<16x128xf32>
    %48 = arith.addf %47, %46 : vector<16x128xf32>
    %49 = arith.divf %47, %48 : vector<16x128xf32>
    %50 = vector.extract_strided_slice %32 {offsets = [0, 256], sizes = [16, 128], strides = [1, 1]} : vector<16x384xf32> to vector<16x128xf32>
    %51 = vector.extract_strided_slice %33 {offsets = [0, 256], sizes = [16, 128], strides = [1, 1]} : vector<16x384xf32> to vector<16x128xf32>
    %52 = arith.addf %51, %21 : vector<16x128xf32>
    %53 = arith.mulf %41, %52 : vector<16x128xf32>
    %54 = arith.addf %50, %53 : vector<16x128xf32>
    %55 = math.tanh %54 : vector<16x128xf32>
    %cst_32 = arith.constant 1.000000e+00 : f32
    %56 = vector.broadcast %cst_32 : f32 to vector<16x128xf32>
    %57 = arith.subf %56, %49 : vector<16x128xf32>
    %58 = arith.mulf %57, %55 : vector<16x128xf32>
    %59 = arith.mulf %49, %27 : vector<16x128xf32>
    %60 = arith.addf %58, %59 : vector<16x128xf32>
    %cst_33 = arith.constant dense<0.000000e+00> : vector<16x384xf32>
    %61 = tpu.matmul %60, %14, %cst_33 {dimension_numbers = #tpu.dot_dimension_numbers<[1], [0], [0], [1], [0, 0, 1, 1], [], []>} : vector<16x128xf32>, vector<128x384xf32>, vector<16x384xf32> -> vector<16x384xf32>
    %62 = arith.addf %61, %17 : vector<16x384xf32>
    %cst_34 = arith.constant dense<0.000000e+00> : vector<16x384xf32>
    %63 = tpu.matmul %29, %13, %cst_34 {dimension_numbers = #tpu.dot_dimension_numbers<[1], [0], [0], [1], [0, 0, 1, 1], [], []>} : vector<16x128xf32>, vector<128x384xf32>, vector<16x384xf32> -> vector<16x384xf32>
    %64 = vector.extract_strided_slice %62 {offsets = [0, 0], sizes = [16, 128], strides = [1, 1]} : vector<16x384xf32> to vector<16x128xf32>
    %65 = vector.extract_strided_slice %63 {offsets = [0, 0], sizes = [16, 128], strides = [1, 1]} : vector<16x384xf32> to vector<16x128xf32>
    %66 = arith.addf %64, %65 : vector<16x128xf32>
    %67 = arith.negf %66 : vector<16x128xf32>
    %68 = math.exp %67 : vector<16x128xf32>
    %cst_35 = arith.constant 1.000000e+00 : f32
    %69 = vector.broadcast %cst_35 : f32 to vector<16x128xf32>
    %70 = arith.addf %69, %68 : vector<16x128xf32>
    %71 = arith.divf %69, %70 : vector<16x128xf32>
    %72 = vector.extract_strided_slice %62 {offsets = [0, 128], sizes = [16, 128], strides = [1, 1]} : vector<16x384xf32> to vector<16x128xf32>
    %73 = vector.extract_strided_slice %63 {offsets = [0, 128], sizes = [16, 128], strides = [1, 1]} : vector<16x384xf32> to vector<16x128xf32>
    %74 = arith.addf %72, %73 : vector<16x128xf32>
    %75 = arith.negf %74 : vector<16x128xf32>
    %76 = math.exp %75 : vector<16x128xf32>
    %cst_36 = arith.constant 1.000000e+00 : f32
    %77 = vector.broadcast %cst_36 : f32 to vector<16x128xf32>
    %78 = arith.addf %77, %76 : vector<16x128xf32>
    %79 = arith.divf %77, %78 : vector<16x128xf32>
    %80 = vector.extract_strided_slice %62 {offsets = [0, 256], sizes = [16, 128], strides = [1, 1]} : vector<16x384xf32> to vector<16x128xf32>
    %81 = vector.extract_strided_slice %63 {offsets = [0, 256], sizes = [16, 128], strides = [1, 1]} : vector<16x384xf32> to vector<16x128xf32>
    %82 = arith.addf %81, %25 : vector<16x128xf32>
    %83 = arith.mulf %71, %82 : vector<16x128xf32>
    %84 = arith.addf %80, %83 : vector<16x128xf32>
    %85 = math.tanh %84 : vector<16x128xf32>
    %cst_37 = arith.constant 1.000000e+00 : f32
    %86 = vector.broadcast %cst_37 : f32 to vector<16x128xf32>
    %87 = arith.subf %86, %79 : vector<16x128xf32>
    %88 = arith.mulf %87, %85 : vector<16x128xf32>
    %89 = arith.mulf %79, %29 : vector<16x128xf32>
    %90 = arith.addf %88, %89 : vector<16x128xf32>
    %c16_i32_38 = arith.constant 16 : i32
    %91 = arith.muli %c0_i32, %c16_i32_38 : i32
    %92 = arith.index_cast %91 : i32 to index
    %c0_39 = arith.constant 0 : index
    %93 = vector.load %arg12[%92, %c0_39] : memref<128x128xf32, #tpu.memory_space<vmem>>, vector<16x128xf32>
    tpu.vector_store %arg12[%92, %c0_39], %90 {strides = array<i32>} : memref<128x128xf32, #tpu.memory_space<vmem>>, vector<16x128xf32>,
    %c1_i32 = arith.constant 1 : i32
    %c16_i32_40 = arith.constant 16 : i32
    %94 = arith.muli %c1_i32, %c16_i32_40 : i32
    %95 = arith.index_cast %94 : i32 to index
    %c0_41 = arith.constant 0 : index
    %96 = vector.load %arg13[%95, %c0_41] : memref<128x384xf32, #tpu.memory_space<vmem>>, vector<16x384xf32>
    %cst_42 = arith.constant dense<0.000000e+00> : vector<16x384xf32>
    %97 = tpu.matmul %60, %11, %cst_42 {dimension_numbers = #tpu.dot_dimension_numbers<[1], [0], [0], [1], [0, 0, 1, 1], [], []>} : vector<16x128xf32>, vector<128x384xf32>, vector<16x384xf32> -> vector<16x384xf32>
    %98 = vector.extract_strided_slice %96 {offsets = [0, 0], sizes = [16, 128], strides = [1, 1]} : vector<16x384xf32> to vector<16x128xf32>
    %99 = vector.extract_strided_slice %97 {offsets = [0, 0], sizes = [16, 128], strides = [1, 1]} : vector<16x384xf32> to vector<16x128xf32>
    %100 = arith.addf %98, %99 : vector<16x128xf32>
    %101 = arith.negf %100 : vector<16x128xf32>
    %102 = math.exp %101 : vector<16x128xf32>
    %cst_43 = arith.constant 1.000000e+00 : f32
    %103 = vector.broadcast %cst_43 : f32 to vector<16x128xf32>
    %104 = arith.addf %103, %102 : vector<16x128xf32>
    %105 = arith.divf %103, %104 : vector<16x128xf32>
    %106 = vector.extract_strided_slice %96 {offsets = [0, 128], sizes = [16, 128], strides = [1, 1]} : vector<16x384xf32> to vector<16x128xf32>
    %107 = vector.extract_strided_slice %97 {offsets = [0, 128], sizes = [16, 128], strides = [1, 1]} : vector<16x384xf32> to vector<16x128xf32>
    %108 = arith.addf %106, %107 : vector<16x128xf32>
    %109 = arith.negf %108 : vector<16x128xf32>
    %110 = math.exp %109 : vector<16x128xf32>
    %cst_44 = arith.constant 1.000000e+00 : f32
    %111 = vector.broadcast %cst_44 : f32 to vector<16x128xf32>
    %112 = arith.addf %111, %110 : vector<16x128xf32>
    %113 = arith.divf %111, %112 : vector<16x128xf32>
    %114 = vector.extract_strided_slice %96 {offsets = [0, 256], sizes = [16, 128], strides = [1, 1]} : vector<16x384xf32> to vector<16x128xf32>
    %115 = vector.extract_strided_slice %97 {offsets = [0, 256], sizes = [16, 128], strides = [1, 1]} : vector<16x384xf32> to vector<16x128xf32>
    %116 = arith.addf %115, %21 : vector<16x128xf32>
    %117 = arith.mulf %105, %116 : vector<16x128xf32>
    %118 = arith.addf %114, %117 : vector<16x128xf32>
    %119 = math.tanh %118 : vector<16x128xf32>
    %cst_45 = arith.constant 1.000000e+00 : f32
    %120 = vector.broadcast %cst_45 : f32 to vector<16x128xf32>
    %121 = arith.subf %120, %113 : vector<16x128xf32>
    %122 = arith.mulf %121, %119 : vector<16x128xf32>
    %123 = arith.mulf %113, %60 : vector<16x128xf32>
    %124 = arith.addf %122, %123 : vector<16x128xf32>
    %cst_46 = arith.constant dense<0.000000e+00> : vector<16x384xf32>
    %125 = tpu.matmul %124, %14, %cst_46 {dimension_numbers = #tpu.dot_dimension_numbers<[1], [0], [0], [1], [0, 0, 1, 1], [], []>} : vector<16x128xf32>, vector<128x384xf32>, vector<16x384xf32> -> vector<16x384xf32>
    %126 = arith.addf %125, %17 : vector<16x384xf32>
    %cst_47 = arith.constant dense<0.000000e+00> : vector<16x384xf32>
    %127 = tpu.matmul %90, %13, %cst_47 {dimension_numbers = #tpu.dot_dimension_numbers<[1], [0], [0], [1], [0, 0, 1, 1], [], []>} : vector<16x128xf32>, vector<128x384xf32>, vector<16x384xf32> -> vector<16x384xf32>
    %128 = vector.extract_strided_slice %126 {offsets = [0, 0], sizes = [16, 128], strides = [1, 1]} : vector<16x384xf32> to vector<16x128xf32>
    %129 = vector.extract_strided_slice %127 {offsets = [0, 0], sizes = [16, 128], strides = [1, 1]} : vector<16x384xf32> to vector<16x128xf32>
    %130 = arith.addf %128, %129 : vector<16x128xf32>
    %131 = arith.negf %130 : vector<16x128xf32>
    %132 = math.exp %131 : vector<16x128xf32>
    %cst_48 = arith.constant 1.000000e+00 : f32
    %133 = vector.broadcast %cst_48 : f32 to vector<16x128xf32>
    %134 = arith.addf %133, %132 : vector<16x128xf32>
    %135 = arith.divf %133, %134 : vector<16x128xf32>
    %136 = vector.extract_strided_slice %126 {offsets = [0, 128], sizes = [16, 128], strides = [1, 1]} : vector<16x384xf32> to vector<16x128xf32>
    %137 = vector.extract_strided_slice %127 {offsets = [0, 128], sizes = [16, 128], strides = [1, 1]} : vector<16x384xf32> to vector<16x128xf32>
    %138 = arith.addf %136, %137 : vector<16x128xf32>
    %139 = arith.negf %138 : vector<16x128xf32>
    %140 = math.exp %139 : vector<16x128xf32>
    %cst_49 = arith.constant 1.000000e+00 : f32
    %141 = vector.broadcast %cst_49 : f32 to vector<16x128xf32>
    %142 = arith.addf %141, %140 : vector<16x128xf32>
    %143 = arith.divf %141, %142 : vector<16x128xf32>
    %144 = vector.extract_strided_slice %126 {offsets = [0, 256], sizes = [16, 128], strides = [1, 1]} : vector<16x384xf32> to vector<16x128xf32>
    %145 = vector.extract_strided_slice %127 {offsets = [0, 256], sizes = [16, 128], strides = [1, 1]} : vector<16x384xf32> to vector<16x128xf32>
    %146 = arith.addf %145, %25 : vector<16x128xf32>
    %147 = arith.mulf %135, %146 : vector<16x128xf32>
    %148 = arith.addf %144, %147 : vector<16x128xf32>
    %149 = math.tanh %148 : vector<16x128xf32>
    %cst_50 = arith.constant 1.000000e+00 : f32
    %150 = vector.broadcast %cst_50 : f32 to vector<16x128xf32>
    %151 = arith.subf %150, %143 : vector<16x128xf32>
    %152 = arith.mulf %151, %149 : vector<16x128xf32>
    %153 = arith.mulf %143, %90 : vector<16x128xf32>
    %154 = arith.addf %152, %153 : vector<16x128xf32>
    %c16_i32_51 = arith.constant 16 : i32
    %155 = arith.muli %c1_i32, %c16_i32_51 : i32
    %156 = arith.index_cast %155 : i32 to index
    %c0_52 = arith.constant 0 : index
    %157 = vector.load %arg12[%156, %c0_52] : memref<128x128xf32, #tpu.memory_space<vmem>>, vector<16x128xf32>
    tpu.vector_store %arg12[%156, %c0_52], %154 {strides = array<i32>} : memref<128x128xf32, #tpu.memory_space<vmem>>, vector<16x128xf32>,
    %c2_i32 = arith.constant 2 : i32
    %c16_i32_53 = arith.constant 16 : i32
    %158 = arith.muli %c2_i32, %c16_i32_53 : i32
    %159 = arith.index_cast %158 : i32 to index
    %c0_54 = arith.constant 0 : index
    %160 = vector.load %arg13[%159, %c0_54] : memref<128x384xf32, #tpu.memory_space<vmem>>, vector<16x384xf32>
    %cst_55 = arith.constant dense<0.000000e+00> : vector<16x384xf32>
    %161 = tpu.matmul %124, %11, %cst_55 {dimension_numbers = #tpu.dot_dimension_numbers<[1], [0], [0], [1], [0, 0, 1, 1], [], []>} : vector<16x128xf32>, vector<128x384xf32>, vector<16x384xf32> -> vector<16x384xf32>
    %162 = vector.extract_strided_slice %160 {offsets = [0, 0], sizes = [16, 128], strides = [1, 1]} : vector<16x384xf32> to vector<16x128xf32>
    %163 = vector.extract_strided_slice %161 {offsets = [0, 0], sizes = [16, 128], strides = [1, 1]} : vector<16x384xf32> to vector<16x128xf32>
    %164 = arith.addf %162, %163 : vector<16x128xf32>
    %165 = arith.negf %164 : vector<16x128xf32>
    %166 = math.exp %165 : vector<16x128xf32>
    %cst_56 = arith.constant 1.000000e+00 : f32
    %167 = vector.broadcast %cst_56 : f32 to vector<16x128xf32>
    %168 = arith.addf %167, %166 : vector<16x128xf32>
    %169 = arith.divf %167, %168 : vector<16x128xf32>
    %170 = vector.extract_strided_slice %160 {offsets = [0, 128], sizes = [16, 128], strides = [1, 1]} : vector<16x384xf32> to vector<16x128xf32>
    %171 = vector.extract_strided_slice %161 {offsets = [0, 128], sizes = [16, 128], strides = [1, 1]} : vector<16x384xf32> to vector<16x128xf32>
    %172 = arith.addf %170, %171 : vector<16x128xf32>
    %173 = arith.negf %172 : vector<16x128xf32>
    %174 = math.exp %173 : vector<16x128xf32>
    %cst_57 = arith.constant 1.000000e+00 : f32
    %175 = vector.broadcast %cst_57 : f32 to vector<16x128xf32>
    %176 = arith.addf %175, %174 : vector<16x128xf32>
    %177 = arith.divf %175, %176 : vector<16x128xf32>
    %178 = vector.extract_strided_slice %160 {offsets = [0, 256], sizes = [16, 128], strides = [1, 1]} : vector<16x384xf32> to vector<16x128xf32>
    %179 = vector.extract_strided_slice %161 {offsets = [0, 256], sizes = [16, 128], strides = [1, 1]} : vector<16x384xf32> to vector<16x128xf32>
    %180 = arith.addf %179, %21 : vector<16x128xf32>
    %181 = arith.mulf %169, %180 : vector<16x128xf32>
    %182 = arith.addf %178, %181 : vector<16x128xf32>
    %183 = math.tanh %182 : vector<16x128xf32>
    %cst_58 = arith.constant 1.000000e+00 : f32
    %184 = vector.broadcast %cst_58 : f32 to vector<16x128xf32>
    %185 = arith.subf %184, %177 : vector<16x128xf32>
    %186 = arith.mulf %185, %183 : vector<16x128xf32>
    %187 = arith.mulf %177, %124 : vector<16x128xf32>
    %188 = arith.addf %186, %187 : vector<16x128xf32>
    %cst_59 = arith.constant dense<0.000000e+00> : vector<16x384xf32>
    %189 = tpu.matmul %188, %14, %cst_59 {dimension_numbers = #tpu.dot_dimension_numbers<[1], [0], [0], [1], [0, 0, 1, 1], [], []>} : vector<16x128xf32>, vector<128x384xf32>, vector<16x384xf32> -> vector<16x384xf32>
    %190 = arith.addf %189, %17 : vector<16x384xf32>
    %cst_60 = arith.constant dense<0.000000e+00> : vector<16x384xf32>
    %191 = tpu.matmul %154, %13, %cst_60 {dimension_numbers = #tpu.dot_dimension_numbers<[1], [0], [0], [1], [0, 0, 1, 1], [], []>} : vector<16x128xf32>, vector<128x384xf32>, vector<16x384xf32> -> vector<16x384xf32>
    %192 = vector.extract_strided_slice %190 {offsets = [0, 0], sizes = [16, 128], strides = [1, 1]} : vector<16x384xf32> to vector<16x128xf32>
    %193 = vector.extract_strided_slice %191 {offsets = [0, 0], sizes = [16, 128], strides = [1, 1]} : vector<16x384xf32> to vector<16x128xf32>
    %194 = arith.addf %192, %193 : vector<16x128xf32>
    %195 = arith.negf %194 : vector<16x128xf32>
    %196 = math.exp %195 : vector<16x128xf32>
    %cst_61 = arith.constant 1.000000e+00 : f32
    %197 = vector.broadcast %cst_61 : f32 to vector<16x128xf32>
    %198 = arith.addf %197, %196 : vector<16x128xf32>
    %199 = arith.divf %197, %198 : vector<16x128xf32>
    %200 = vector.extract_strided_slice %190 {offsets = [0, 128], sizes = [16, 128], strides = [1, 1]} : vector<16x384xf32> to vector<16x128xf32>
    %201 = vector.extract_strided_slice %191 {offsets = [0, 128], sizes = [16, 128], strides = [1, 1]} : vector<16x384xf32> to vector<16x128xf32>
    %202 = arith.addf %200, %201 : vector<16x128xf32>
    %203 = arith.negf %202 : vector<16x128xf32>
    %204 = math.exp %203 : vector<16x128xf32>
    %cst_62 = arith.constant 1.000000e+00 : f32
    %205 = vector.broadcast %cst_62 : f32 to vector<16x128xf32>
    %206 = arith.addf %205, %204 : vector<16x128xf32>
    %207 = arith.divf %205, %206 : vector<16x128xf32>
    %208 = vector.extract_strided_slice %190 {offsets = [0, 256], sizes = [16, 128], strides = [1, 1]} : vector<16x384xf32> to vector<16x128xf32>
    %209 = vector.extract_strided_slice %191 {offsets = [0, 256], sizes = [16, 128], strides = [1, 1]} : vector<16x384xf32> to vector<16x128xf32>
    %210 = arith.addf %209, %25 : vector<16x128xf32>
    %211 = arith.mulf %199, %210 : vector<16x128xf32>
    %212 = arith.addf %208, %211 : vector<16x128xf32>
    %213 = math.tanh %212 : vector<16x128xf32>
    %cst_63 = arith.constant 1.000000e+00 : f32
    %214 = vector.broadcast %cst_63 : f32 to vector<16x128xf32>
    %215 = arith.subf %214, %207 : vector<16x128xf32>
    %216 = arith.mulf %215, %213 : vector<16x128xf32>
    %217 = arith.mulf %207, %154 : vector<16x128xf32>
    %218 = arith.addf %216, %217 : vector<16x128xf32>
    %c16_i32_64 = arith.constant 16 : i32
    %219 = arith.muli %c2_i32, %c16_i32_64 : i32
    %220 = arith.index_cast %219 : i32 to index
    %c0_65 = arith.constant 0 : index
    %221 = vector.load %arg12[%220, %c0_65] : memref<128x128xf32, #tpu.memory_space<vmem>>, vector<16x128xf32>
    tpu.vector_store %arg12[%220, %c0_65], %218 {strides = array<i32>} : memref<128x128xf32, #tpu.memory_space<vmem>>, vector<16x128xf32>,
    %c3_i32 = arith.constant 3 : i32
    %c16_i32_66 = arith.constant 16 : i32
    %222 = arith.muli %c3_i32, %c16_i32_66 : i32
    %223 = arith.index_cast %222 : i32 to index
    %c0_67 = arith.constant 0 : index
    %224 = vector.load %arg13[%223, %c0_67] : memref<128x384xf32, #tpu.memory_space<vmem>>, vector<16x384xf32>
    %cst_68 = arith.constant dense<0.000000e+00> : vector<16x384xf32>
    %225 = tpu.matmul %188, %11, %cst_68 {dimension_numbers = #tpu.dot_dimension_numbers<[1], [0], [0], [1], [0, 0, 1, 1], [], []>} : vector<16x128xf32>, vector<128x384xf32>, vector<16x384xf32> -> vector<16x384xf32>
    %226 = vector.extract_strided_slice %224 {offsets = [0, 0], sizes = [16, 128], strides = [1, 1]} : vector<16x384xf32> to vector<16x128xf32>
    %227 = vector.extract_strided_slice %225 {offsets = [0, 0], sizes = [16, 128], strides = [1, 1]} : vector<16x384xf32> to vector<16x128xf32>
    %228 = arith.addf %226, %227 : vector<16x128xf32>
    %229 = arith.negf %228 : vector<16x128xf32>
    %230 = math.exp %229 : vector<16x128xf32>
    %cst_69 = arith.constant 1.000000e+00 : f32
    %231 = vector.broadcast %cst_69 : f32 to vector<16x128xf32>
    %232 = arith.addf %231, %230 : vector<16x128xf32>
    %233 = arith.divf %231, %232 : vector<16x128xf32>
    %234 = vector.extract_strided_slice %224 {offsets = [0, 128], sizes = [16, 128], strides = [1, 1]} : vector<16x384xf32> to vector<16x128xf32>
    %235 = vector.extract_strided_slice %225 {offsets = [0, 128], sizes = [16, 128], strides = [1, 1]} : vector<16x384xf32> to vector<16x128xf32>
    %236 = arith.addf %234, %235 : vector<16x128xf32>
    %237 = arith.negf %236 : vector<16x128xf32>
    %238 = math.exp %237 : vector<16x128xf32>
    %cst_70 = arith.constant 1.000000e+00 : f32
    %239 = vector.broadcast %cst_70 : f32 to vector<16x128xf32>
    %240 = arith.addf %239, %238 : vector<16x128xf32>
    %241 = arith.divf %239, %240 : vector<16x128xf32>
    %242 = vector.extract_strided_slice %224 {offsets = [0, 256], sizes = [16, 128], strides = [1, 1]} : vector<16x384xf32> to vector<16x128xf32>
    %243 = vector.extract_strided_slice %225 {offsets = [0, 256], sizes = [16, 128], strides = [1, 1]} : vector<16x384xf32> to vector<16x128xf32>
    %244 = arith.addf %243, %21 : vector<16x128xf32>
    %245 = arith.mulf %233, %244 : vector<16x128xf32>
    %246 = arith.addf %242, %245 : vector<16x128xf32>
    %247 = math.tanh %246 : vector<16x128xf32>
    %cst_71 = arith.constant 1.000000e+00 : f32
    %248 = vector.broadcast %cst_71 : f32 to vector<16x128xf32>
    %249 = arith.subf %248, %241 : vector<16x128xf32>
    %250 = arith.mulf %249, %247 : vector<16x128xf32>
    %251 = arith.mulf %241, %188 : vector<16x128xf32>
    %252 = arith.addf %250, %251 : vector<16x128xf32>
    %cst_72 = arith.constant dense<0.000000e+00> : vector<16x384xf32>
    %253 = tpu.matmul %252, %14, %cst_72 {dimension_numbers = #tpu.dot_dimension_numbers<[1], [0], [0], [1], [0, 0, 1, 1], [], []>} : vector<16x128xf32>, vector<128x384xf32>, vector<16x384xf32> -> vector<16x384xf32>
    %254 = arith.addf %253, %17 : vector<16x384xf32>
    %cst_73 = arith.constant dense<0.000000e+00> : vector<16x384xf32>
    %255 = tpu.matmul %218, %13, %cst_73 {dimension_numbers = #tpu.dot_dimension_numbers<[1], [0], [0], [1], [0, 0, 1, 1], [], []>} : vector<16x128xf32>, vector<128x384xf32>, vector<16x384xf32> -> vector<16x384xf32>
    %256 = vector.extract_strided_slice %254 {offsets = [0, 0], sizes = [16, 128], strides = [1, 1]} : vector<16x384xf32> to vector<16x128xf32>
    %257 = vector.extract_strided_slice %255 {offsets = [0, 0], sizes = [16, 128], strides = [1, 1]} : vector<16x384xf32> to vector<16x128xf32>
    %258 = arith.addf %256, %257 : vector<16x128xf32>
    %259 = arith.negf %258 : vector<16x128xf32>
    %260 = math.exp %259 : vector<16x128xf32>
    %cst_74 = arith.constant 1.000000e+00 : f32
    %261 = vector.broadcast %cst_74 : f32 to vector<16x128xf32>
    %262 = arith.addf %261, %260 : vector<16x128xf32>
    %263 = arith.divf %261, %262 : vector<16x128xf32>
    %264 = vector.extract_strided_slice %254 {offsets = [0, 128], sizes = [16, 128], strides = [1, 1]} : vector<16x384xf32> to vector<16x128xf32>
    %265 = vector.extract_strided_slice %255 {offsets = [0, 128], sizes = [16, 128], strides = [1, 1]} : vector<16x384xf32> to vector<16x128xf32>
    %266 = arith.addf %264, %265 : vector<16x128xf32>
    %267 = arith.negf %266 : vector<16x128xf32>
    %268 = math.exp %267 : vector<16x128xf32>
    %cst_75 = arith.constant 1.000000e+00 : f32
    %269 = vector.broadcast %cst_75 : f32 to vector<16x128xf32>
    %270 = arith.addf %269, %268 : vector<16x128xf32>
    %271 = arith.divf %269, %270 : vector<16x128xf32>
    %272 = vector.extract_strided_slice %254 {offsets = [0, 256], sizes = [16, 128], strides = [1, 1]} : vector<16x384xf32> to vector<16x128xf32>
    %273 = vector.extract_strided_slice %255 {offsets = [0, 256], sizes = [16, 128], strides = [1, 1]} : vector<16x384xf32> to vector<16x128xf32>
    %274 = arith.addf %273, %25 : vector<16x128xf32>
    %275 = arith.mulf %263, %274 : vector<16x128xf32>
    %276 = arith.addf %272, %275 : vector<16x128xf32>
    %277 = math.tanh %276 : vector<16x128xf32>
    %cst_76 = arith.constant 1.000000e+00 : f32
    %278 = vector.broadcast %cst_76 : f32 to vector<16x128xf32>
    %279 = arith.subf %278, %271 : vector<16x128xf32>
    %280 = arith.mulf %279, %277 : vector<16x128xf32>
    %281 = arith.mulf %271, %218 : vector<16x128xf32>
    %282 = arith.addf %280, %281 : vector<16x128xf32>
    %c16_i32_77 = arith.constant 16 : i32
    %283 = arith.muli %c3_i32, %c16_i32_77 : i32
    %284 = arith.index_cast %283 : i32 to index
    %c0_78 = arith.constant 0 : index
    %285 = vector.load %arg12[%284, %c0_78] : memref<128x128xf32, #tpu.memory_space<vmem>>, vector<16x128xf32>
    tpu.vector_store %arg12[%284, %c0_78], %282 {strides = array<i32>} : memref<128x128xf32, #tpu.memory_space<vmem>>, vector<16x128xf32>,
    %c4_i32 = arith.constant 4 : i32
    %c16_i32_79 = arith.constant 16 : i32
    %286 = arith.muli %c4_i32, %c16_i32_79 : i32
    %287 = arith.index_cast %286 : i32 to index
    %c0_80 = arith.constant 0 : index
    %288 = vector.load %arg13[%287, %c0_80] : memref<128x384xf32, #tpu.memory_space<vmem>>, vector<16x384xf32>
    %cst_81 = arith.constant dense<0.000000e+00> : vector<16x384xf32>
    %289 = tpu.matmul %252, %11, %cst_81 {dimension_numbers = #tpu.dot_dimension_numbers<[1], [0], [0], [1], [0, 0, 1, 1], [], []>} : vector<16x128xf32>, vector<128x384xf32>, vector<16x384xf32> -> vector<16x384xf32>
    %290 = vector.extract_strided_slice %288 {offsets = [0, 0], sizes = [16, 128], strides = [1, 1]} : vector<16x384xf32> to vector<16x128xf32>
    %291 = vector.extract_strided_slice %289 {offsets = [0, 0], sizes = [16, 128], strides = [1, 1]} : vector<16x384xf32> to vector<16x128xf32>
    %292 = arith.addf %290, %291 : vector<16x128xf32>
    %293 = arith.negf %292 : vector<16x128xf32>
    %294 = math.exp %293 : vector<16x128xf32>
    %cst_82 = arith.constant 1.000000e+00 : f32
    %295 = vector.broadcast %cst_82 : f32 to vector<16x128xf32>
    %296 = arith.addf %295, %294 : vector<16x128xf32>
    %297 = arith.divf %295, %296 : vector<16x128xf32>
    %298 = vector.extract_strided_slice %288 {offsets = [0, 128], sizes = [16, 128], strides = [1, 1]} : vector<16x384xf32> to vector<16x128xf32>
    %299 = vector.extract_strided_slice %289 {offsets = [0, 128], sizes = [16, 128], strides = [1, 1]} : vector<16x384xf32> to vector<16x128xf32>
    %300 = arith.addf %298, %299 : vector<16x128xf32>
    %301 = arith.negf %300 : vector<16x128xf32>
    %302 = math.exp %301 : vector<16x128xf32>
    %cst_83 = arith.constant 1.000000e+00 : f32
    %303 = vector.broadcast %cst_83 : f32 to vector<16x128xf32>
    %304 = arith.addf %303, %302 : vector<16x128xf32>
    %305 = arith.divf %303, %304 : vector<16x128xf32>
    %306 = vector.extract_strided_slice %288 {offsets = [0, 256], sizes = [16, 128], strides = [1, 1]} : vector<16x384xf32> to vector<16x128xf32>
    %307 = vector.extract_strided_slice %289 {offsets = [0, 256], sizes = [16, 128], strides = [1, 1]} : vector<16x384xf32> to vector<16x128xf32>
    %308 = arith.addf %307, %21 : vector<16x128xf32>
    %309 = arith.mulf %297, %308 : vector<16x128xf32>
    %310 = arith.addf %306, %309 : vector<16x128xf32>
    %311 = math.tanh %310 : vector<16x128xf32>
    %cst_84 = arith.constant 1.000000e+00 : f32
    %312 = vector.broadcast %cst_84 : f32 to vector<16x128xf32>
    %313 = arith.subf %312, %305 : vector<16x128xf32>
    %314 = arith.mulf %313, %311 : vector<16x128xf32>
    %315 = arith.mulf %305, %252 : vector<16x128xf32>
    %316 = arith.addf %314, %315 : vector<16x128xf32>
    %cst_85 = arith.constant dense<0.000000e+00> : vector<16x384xf32>
    %317 = tpu.matmul %316, %14, %cst_85 {dimension_numbers = #tpu.dot_dimension_numbers<[1], [0], [0], [1], [0, 0, 1, 1], [], []>} : vector<16x128xf32>, vector<128x384xf32>, vector<16x384xf32> -> vector<16x384xf32>
    %318 = arith.addf %317, %17 : vector<16x384xf32>
    %cst_86 = arith.constant dense<0.000000e+00> : vector<16x384xf32>
    %319 = tpu.matmul %282, %13, %cst_86 {dimension_numbers = #tpu.dot_dimension_numbers<[1], [0], [0], [1], [0, 0, 1, 1], [], []>} : vector<16x128xf32>, vector<128x384xf32>, vector<16x384xf32> -> vector<16x384xf32>
    %320 = vector.extract_strided_slice %318 {offsets = [0, 0], sizes = [16, 128], strides = [1, 1]} : vector<16x384xf32> to vector<16x128xf32>
    %321 = vector.extract_strided_slice %319 {offsets = [0, 0], sizes = [16, 128], strides = [1, 1]} : vector<16x384xf32> to vector<16x128xf32>
    %322 = arith.addf %320, %321 : vector<16x128xf32>
    %323 = arith.negf %322 : vector<16x128xf32>
    %324 = math.exp %323 : vector<16x128xf32>
    %cst_87 = arith.constant 1.000000e+00 : f32
    %325 = vector.broadcast %cst_87 : f32 to vector<16x128xf32>
    %326 = arith.addf %325, %324 : vector<16x128xf32>
    %327 = arith.divf %325, %326 : vector<16x128xf32>
    %328 = vector.extract_strided_slice %318 {offsets = [0, 128], sizes = [16, 128], strides = [1, 1]} : vector<16x384xf32> to vector<16x128xf32>
    %329 = vector.extract_strided_slice %319 {offsets = [0, 128], sizes = [16, 128], strides = [1, 1]} : vector<16x384xf32> to vector<16x128xf32>
    %330 = arith.addf %328, %329 : vector<16x128xf32>
    %331 = arith.negf %330 : vector<16x128xf32>
    %332 = math.exp %331 : vector<16x128xf32>
    %cst_88 = arith.constant 1.000000e+00 : f32
    %333 = vector.broadcast %cst_88 : f32 to vector<16x128xf32>
    %334 = arith.addf %333, %332 : vector<16x128xf32>
    %335 = arith.divf %333, %334 : vector<16x128xf32>
    %336 = vector.extract_strided_slice %318 {offsets = [0, 256], sizes = [16, 128], strides = [1, 1]} : vector<16x384xf32> to vector<16x128xf32>
    %337 = vector.extract_strided_slice %319 {offsets = [0, 256], sizes = [16, 128], strides = [1, 1]} : vector<16x384xf32> to vector<16x128xf32>
    %338 = arith.addf %337, %25 : vector<16x128xf32>
    %339 = arith.mulf %327, %338 : vector<16x128xf32>
    %340 = arith.addf %336, %339 : vector<16x128xf32>
    %341 = math.tanh %340 : vector<16x128xf32>
    %cst_89 = arith.constant 1.000000e+00 : f32
    %342 = vector.broadcast %cst_89 : f32 to vector<16x128xf32>
    %343 = arith.subf %342, %335 : vector<16x128xf32>
    %344 = arith.mulf %343, %341 : vector<16x128xf32>
    %345 = arith.mulf %335, %282 : vector<16x128xf32>
    %346 = arith.addf %344, %345 : vector<16x128xf32>
    %c16_i32_90 = arith.constant 16 : i32
    %347 = arith.muli %c4_i32, %c16_i32_90 : i32
    %348 = arith.index_cast %347 : i32 to index
    %c0_91 = arith.constant 0 : index
    %349 = vector.load %arg12[%348, %c0_91] : memref<128x128xf32, #tpu.memory_space<vmem>>, vector<16x128xf32>
    tpu.vector_store %arg12[%348, %c0_91], %346 {strides = array<i32>} : memref<128x128xf32, #tpu.memory_space<vmem>>, vector<16x128xf32>,
    %c5_i32 = arith.constant 5 : i32
    %c16_i32_92 = arith.constant 16 : i32
    %350 = arith.muli %c5_i32, %c16_i32_92 : i32
    %351 = arith.index_cast %350 : i32 to index
    %c0_93 = arith.constant 0 : index
    %352 = vector.load %arg13[%351, %c0_93] : memref<128x384xf32, #tpu.memory_space<vmem>>, vector<16x384xf32>
    %cst_94 = arith.constant dense<0.000000e+00> : vector<16x384xf32>
    %353 = tpu.matmul %316, %11, %cst_94 {dimension_numbers = #tpu.dot_dimension_numbers<[1], [0], [0], [1], [0, 0, 1, 1], [], []>} : vector<16x128xf32>, vector<128x384xf32>, vector<16x384xf32> -> vector<16x384xf32>
    %354 = vector.extract_strided_slice %352 {offsets = [0, 0], sizes = [16, 128], strides = [1, 1]} : vector<16x384xf32> to vector<16x128xf32>
    %355 = vector.extract_strided_slice %353 {offsets = [0, 0], sizes = [16, 128], strides = [1, 1]} : vector<16x384xf32> to vector<16x128xf32>
    %356 = arith.addf %354, %355 : vector<16x128xf32>
    %357 = arith.negf %356 : vector<16x128xf32>
    %358 = math.exp %357 : vector<16x128xf32>
    %cst_95 = arith.constant 1.000000e+00 : f32
    %359 = vector.broadcast %cst_95 : f32 to vector<16x128xf32>
    %360 = arith.addf %359, %358 : vector<16x128xf32>
    %361 = arith.divf %359, %360 : vector<16x128xf32>
    %362 = vector.extract_strided_slice %352 {offsets = [0, 128], sizes = [16, 128], strides = [1, 1]} : vector<16x384xf32> to vector<16x128xf32>
    %363 = vector.extract_strided_slice %353 {offsets = [0, 128], sizes = [16, 128], strides = [1, 1]} : vector<16x384xf32> to vector<16x128xf32>
    %364 = arith.addf %362, %363 : vector<16x128xf32>
    %365 = arith.negf %364 : vector<16x128xf32>
    %366 = math.exp %365 : vector<16x128xf32>
    %cst_96 = arith.constant 1.000000e+00 : f32
    %367 = vector.broadcast %cst_96 : f32 to vector<16x128xf32>
    %368 = arith.addf %367, %366 : vector<16x128xf32>
    %369 = arith.divf %367, %368 : vector<16x128xf32>
    %370 = vector.extract_strided_slice %352 {offsets = [0, 256], sizes = [16, 128], strides = [1, 1]} : vector<16x384xf32> to vector<16x128xf32>
    %371 = vector.extract_strided_slice %353 {offsets = [0, 256], sizes = [16, 128], strides = [1, 1]} : vector<16x384xf32> to vector<16x128xf32>
    %372 = arith.addf %371, %21 : vector<16x128xf32>
    %373 = arith.mulf %361, %372 : vector<16x128xf32>
    %374 = arith.addf %370, %373 : vector<16x128xf32>
    %375 = math.tanh %374 : vector<16x128xf32>
    %cst_97 = arith.constant 1.000000e+00 : f32
    %376 = vector.broadcast %cst_97 : f32 to vector<16x128xf32>
    %377 = arith.subf %376, %369 : vector<16x128xf32>
    %378 = arith.mulf %377, %375 : vector<16x128xf32>
    %379 = arith.mulf %369, %316 : vector<16x128xf32>
    %380 = arith.addf %378, %379 : vector<16x128xf32>
    %cst_98 = arith.constant dense<0.000000e+00> : vector<16x384xf32>
    %381 = tpu.matmul %380, %14, %cst_98 {dimension_numbers = #tpu.dot_dimension_numbers<[1], [0], [0], [1], [0, 0, 1, 1], [], []>} : vector<16x128xf32>, vector<128x384xf32>, vector<16x384xf32> -> vector<16x384xf32>
    %382 = arith.addf %381, %17 : vector<16x384xf32>
    %cst_99 = arith.constant dense<0.000000e+00> : vector<16x384xf32>
    %383 = tpu.matmul %346, %13, %cst_99 {dimension_numbers = #tpu.dot_dimension_numbers<[1], [0], [0], [1], [0, 0, 1, 1], [], []>} : vector<16x128xf32>, vector<128x384xf32>, vector<16x384xf32> -> vector<16x384xf32>
    %384 = vector.extract_strided_slice %382 {offsets = [0, 0], sizes = [16, 128], strides = [1, 1]} : vector<16x384xf32> to vector<16x128xf32>
    %385 = vector.extract_strided_slice %383 {offsets = [0, 0], sizes = [16, 128], strides = [1, 1]} : vector<16x384xf32> to vector<16x128xf32>
    %386 = arith.addf %384, %385 : vector<16x128xf32>
    %387 = arith.negf %386 : vector<16x128xf32>
    %388 = math.exp %387 : vector<16x128xf32>
    %cst_100 = arith.constant 1.000000e+00 : f32
    %389 = vector.broadcast %cst_100 : f32 to vector<16x128xf32>
    %390 = arith.addf %389, %388 : vector<16x128xf32>
    %391 = arith.divf %389, %390 : vector<16x128xf32>
    %392 = vector.extract_strided_slice %382 {offsets = [0, 128], sizes = [16, 128], strides = [1, 1]} : vector<16x384xf32> to vector<16x128xf32>
    %393 = vector.extract_strided_slice %383 {offsets = [0, 128], sizes = [16, 128], strides = [1, 1]} : vector<16x384xf32> to vector<16x128xf32>
    %394 = arith.addf %392, %393 : vector<16x128xf32>
    %395 = arith.negf %394 : vector<16x128xf32>
    %396 = math.exp %395 : vector<16x128xf32>
    %cst_101 = arith.constant 1.000000e+00 : f32
    %397 = vector.broadcast %cst_101 : f32 to vector<16x128xf32>
    %398 = arith.addf %397, %396 : vector<16x128xf32>
    %399 = arith.divf %397, %398 : vector<16x128xf32>
    %400 = vector.extract_strided_slice %382 {offsets = [0, 256], sizes = [16, 128], strides = [1, 1]} : vector<16x384xf32> to vector<16x128xf32>
    %401 = vector.extract_strided_slice %383 {offsets = [0, 256], sizes = [16, 128], strides = [1, 1]} : vector<16x384xf32> to vector<16x128xf32>
    %402 = arith.addf %401, %25 : vector<16x128xf32>
    %403 = arith.mulf %391, %402 : vector<16x128xf32>
    %404 = arith.addf %400, %403 : vector<16x128xf32>
    %405 = math.tanh %404 : vector<16x128xf32>
    %cst_102 = arith.constant 1.000000e+00 : f32
    %406 = vector.broadcast %cst_102 : f32 to vector<16x128xf32>
    %407 = arith.subf %406, %399 : vector<16x128xf32>
    %408 = arith.mulf %407, %405 : vector<16x128xf32>
    %409 = arith.mulf %399, %346 : vector<16x128xf32>
    %410 = arith.addf %408, %409 : vector<16x128xf32>
    %c16_i32_103 = arith.constant 16 : i32
    %411 = arith.muli %c5_i32, %c16_i32_103 : i32
    %412 = arith.index_cast %411 : i32 to index
    %c0_104 = arith.constant 0 : index
    %413 = vector.load %arg12[%412, %c0_104] : memref<128x128xf32, #tpu.memory_space<vmem>>, vector<16x128xf32>
    tpu.vector_store %arg12[%412, %c0_104], %410 {strides = array<i32>} : memref<128x128xf32, #tpu.memory_space<vmem>>, vector<16x128xf32>,
    %c6_i32 = arith.constant 6 : i32
    %c16_i32_105 = arith.constant 16 : i32
    %414 = arith.muli %c6_i32, %c16_i32_105 : i32
    %415 = arith.index_cast %414 : i32 to index
    %c0_106 = arith.constant 0 : index
    %416 = vector.load %arg13[%415, %c0_106] : memref<128x384xf32, #tpu.memory_space<vmem>>, vector<16x384xf32>
    %cst_107 = arith.constant dense<0.000000e+00> : vector<16x384xf32>
    %417 = tpu.matmul %380, %11, %cst_107 {dimension_numbers = #tpu.dot_dimension_numbers<[1], [0], [0], [1], [0, 0, 1, 1], [], []>} : vector<16x128xf32>, vector<128x384xf32>, vector<16x384xf32> -> vector<16x384xf32>
    %418 = vector.extract_strided_slice %416 {offsets = [0, 0], sizes = [16, 128], strides = [1, 1]} : vector<16x384xf32> to vector<16x128xf32>
    %419 = vector.extract_strided_slice %417 {offsets = [0, 0], sizes = [16, 128], strides = [1, 1]} : vector<16x384xf32> to vector<16x128xf32>
    %420 = arith.addf %418, %419 : vector<16x128xf32>
    %421 = arith.negf %420 : vector<16x128xf32>
    %422 = math.exp %421 : vector<16x128xf32>
    %cst_108 = arith.constant 1.000000e+00 : f32
    %423 = vector.broadcast %cst_108 : f32 to vector<16x128xf32>
    %424 = arith.addf %423, %422 : vector<16x128xf32>
    %425 = arith.divf %423, %424 : vector<16x128xf32>
    %426 = vector.extract_strided_slice %416 {offsets = [0, 128], sizes = [16, 128], strides = [1, 1]} : vector<16x384xf32> to vector<16x128xf32>
    %427 = vector.extract_strided_slice %417 {offsets = [0, 128], sizes = [16, 128], strides = [1, 1]} : vector<16x384xf32> to vector<16x128xf32>
    %428 = arith.addf %426, %427 : vector<16x128xf32>
    %429 = arith.negf %428 : vector<16x128xf32>
    %430 = math.exp %429 : vector<16x128xf32>
    %cst_109 = arith.constant 1.000000e+00 : f32
    %431 = vector.broadcast %cst_109 : f32 to vector<16x128xf32>
    %432 = arith.addf %431, %430 : vector<16x128xf32>
    %433 = arith.divf %431, %432 : vector<16x128xf32>
    %434 = vector.extract_strided_slice %416 {offsets = [0, 256], sizes = [16, 128], strides = [1, 1]} : vector<16x384xf32> to vector<16x128xf32>
    %435 = vector.extract_strided_slice %417 {offsets = [0, 256], sizes = [16, 128], strides = [1, 1]} : vector<16x384xf32> to vector<16x128xf32>
    %436 = arith.addf %435, %21 : vector<16x128xf32>
    %437 = arith.mulf %425, %436 : vector<16x128xf32>
    %438 = arith.addf %434, %437 : vector<16x128xf32>
    %439 = math.tanh %438 : vector<16x128xf32>
    %cst_110 = arith.constant 1.000000e+00 : f32
    %440 = vector.broadcast %cst_110 : f32 to vector<16x128xf32>
    %441 = arith.subf %440, %433 : vector<16x128xf32>
    %442 = arith.mulf %441, %439 : vector<16x128xf32>
    %443 = arith.mulf %433, %380 : vector<16x128xf32>
    %444 = arith.addf %442, %443 : vector<16x128xf32>
    %cst_111 = arith.constant dense<0.000000e+00> : vector<16x384xf32>
    %445 = tpu.matmul %444, %14, %cst_111 {dimension_numbers = #tpu.dot_dimension_numbers<[1], [0], [0], [1], [0, 0, 1, 1], [], []>} : vector<16x128xf32>, vector<128x384xf32>, vector<16x384xf32> -> vector<16x384xf32>
    %446 = arith.addf %445, %17 : vector<16x384xf32>
    %cst_112 = arith.constant dense<0.000000e+00> : vector<16x384xf32>
    %447 = tpu.matmul %410, %13, %cst_112 {dimension_numbers = #tpu.dot_dimension_numbers<[1], [0], [0], [1], [0, 0, 1, 1], [], []>} : vector<16x128xf32>, vector<128x384xf32>, vector<16x384xf32> -> vector<16x384xf32>
    %448 = vector.extract_strided_slice %446 {offsets = [0, 0], sizes = [16, 128], strides = [1, 1]} : vector<16x384xf32> to vector<16x128xf32>
    %449 = vector.extract_strided_slice %447 {offsets = [0, 0], sizes = [16, 128], strides = [1, 1]} : vector<16x384xf32> to vector<16x128xf32>
    %450 = arith.addf %448, %449 : vector<16x128xf32>
    %451 = arith.negf %450 : vector<16x128xf32>
    %452 = math.exp %451 : vector<16x128xf32>
    %cst_113 = arith.constant 1.000000e+00 : f32
    %453 = vector.broadcast %cst_113 : f32 to vector<16x128xf32>
    %454 = arith.addf %453, %452 : vector<16x128xf32>
    %455 = arith.divf %453, %454 : vector<16x128xf32>
    %456 = vector.extract_strided_slice %446 {offsets = [0, 128], sizes = [16, 128], strides = [1, 1]} : vector<16x384xf32> to vector<16x128xf32>
    %457 = vector.extract_strided_slice %447 {offsets = [0, 128], sizes = [16, 128], strides = [1, 1]} : vector<16x384xf32> to vector<16x128xf32>
    %458 = arith.addf %456, %457 : vector<16x128xf32>
    %459 = arith.negf %458 : vector<16x128xf32>
    %460 = math.exp %459 : vector<16x128xf32>
    %cst_114 = arith.constant 1.000000e+00 : f32
    %461 = vector.broadcast %cst_114 : f32 to vector<16x128xf32>
    %462 = arith.addf %461, %460 : vector<16x128xf32>
    %463 = arith.divf %461, %462 : vector<16x128xf32>
    %464 = vector.extract_strided_slice %446 {offsets = [0, 256], sizes = [16, 128], strides = [1, 1]} : vector<16x384xf32> to vector<16x128xf32>
    %465 = vector.extract_strided_slice %447 {offsets = [0, 256], sizes = [16, 128], strides = [1, 1]} : vector<16x384xf32> to vector<16x128xf32>
    %466 = arith.addf %465, %25 : vector<16x128xf32>
    %467 = arith.mulf %455, %466 : vector<16x128xf32>
    %468 = arith.addf %464, %467 : vector<16x128xf32>
    %469 = math.tanh %468 : vector<16x128xf32>
    %cst_115 = arith.constant 1.000000e+00 : f32
    %470 = vector.broadcast %cst_115 : f32 to vector<16x128xf32>
    %471 = arith.subf %470, %463 : vector<16x128xf32>
    %472 = arith.mulf %471, %469 : vector<16x128xf32>
    %473 = arith.mulf %463, %410 : vector<16x128xf32>
    %474 = arith.addf %472, %473 : vector<16x128xf32>
    %c16_i32_116 = arith.constant 16 : i32
    %475 = arith.muli %c6_i32, %c16_i32_116 : i32
    %476 = arith.index_cast %475 : i32 to index
    %c0_117 = arith.constant 0 : index
    %477 = vector.load %arg12[%476, %c0_117] : memref<128x128xf32, #tpu.memory_space<vmem>>, vector<16x128xf32>
    tpu.vector_store %arg12[%476, %c0_117], %474 {strides = array<i32>} : memref<128x128xf32, #tpu.memory_space<vmem>>, vector<16x128xf32>,
    %c7_i32 = arith.constant 7 : i32
    %c16_i32_118 = arith.constant 16 : i32
    %478 = arith.muli %c7_i32, %c16_i32_118 : i32
    %479 = arith.index_cast %478 : i32 to index
    %c0_119 = arith.constant 0 : index
    %480 = vector.load %arg13[%479, %c0_119] : memref<128x384xf32, #tpu.memory_space<vmem>>, vector<16x384xf32>
    %cst_120 = arith.constant dense<0.000000e+00> : vector<16x384xf32>
    %481 = tpu.matmul %444, %11, %cst_120 {dimension_numbers = #tpu.dot_dimension_numbers<[1], [0], [0], [1], [0, 0, 1, 1], [], []>} : vector<16x128xf32>, vector<128x384xf32>, vector<16x384xf32> -> vector<16x384xf32>
    %482 = vector.extract_strided_slice %480 {offsets = [0, 0], sizes = [16, 128], strides = [1, 1]} : vector<16x384xf32> to vector<16x128xf32>
    %483 = vector.extract_strided_slice %481 {offsets = [0, 0], sizes = [16, 128], strides = [1, 1]} : vector<16x384xf32> to vector<16x128xf32>
    %484 = arith.addf %482, %483 : vector<16x128xf32>
    %485 = arith.negf %484 : vector<16x128xf32>
    %486 = math.exp %485 : vector<16x128xf32>
    %cst_121 = arith.constant 1.000000e+00 : f32
    %487 = vector.broadcast %cst_121 : f32 to vector<16x128xf32>
    %488 = arith.addf %487, %486 : vector<16x128xf32>
    %489 = arith.divf %487, %488 : vector<16x128xf32>
    %490 = vector.extract_strided_slice %480 {offsets = [0, 128], sizes = [16, 128], strides = [1, 1]} : vector<16x384xf32> to vector<16x128xf32>
    %491 = vector.extract_strided_slice %481 {offsets = [0, 128], sizes = [16, 128], strides = [1, 1]} : vector<16x384xf32> to vector<16x128xf32>
    %492 = arith.addf %490, %491 : vector<16x128xf32>
    %493 = arith.negf %492 : vector<16x128xf32>
    %494 = math.exp %493 : vector<16x128xf32>
    %cst_122 = arith.constant 1.000000e+00 : f32
    %495 = vector.broadcast %cst_122 : f32 to vector<16x128xf32>
    %496 = arith.addf %495, %494 : vector<16x128xf32>
    %497 = arith.divf %495, %496 : vector<16x128xf32>
    %498 = vector.extract_strided_slice %480 {offsets = [0, 256], sizes = [16, 128], strides = [1, 1]} : vector<16x384xf32> to vector<16x128xf32>
    %499 = vector.extract_strided_slice %481 {offsets = [0, 256], sizes = [16, 128], strides = [1, 1]} : vector<16x384xf32> to vector<16x128xf32>
    %500 = arith.addf %499, %21 : vector<16x128xf32>
    %501 = arith.mulf %489, %500 : vector<16x128xf32>
    %502 = arith.addf %498, %501 : vector<16x128xf32>
    %503 = math.tanh %502 : vector<16x128xf32>
    %cst_123 = arith.constant 1.000000e+00 : f32
    %504 = vector.broadcast %cst_123 : f32 to vector<16x128xf32>
    %505 = arith.subf %504, %497 : vector<16x128xf32>
    %506 = arith.mulf %505, %503 : vector<16x128xf32>
    %507 = arith.mulf %497, %444 : vector<16x128xf32>
    %508 = arith.addf %506, %507 : vector<16x128xf32>
    %cst_124 = arith.constant dense<0.000000e+00> : vector<16x384xf32>
    %509 = tpu.matmul %508, %14, %cst_124 {dimension_numbers = #tpu.dot_dimension_numbers<[1], [0], [0], [1], [0, 0, 1, 1], [], []>} : vector<16x128xf32>, vector<128x384xf32>, vector<16x384xf32> -> vector<16x384xf32>
    %510 = arith.addf %509, %17 : vector<16x384xf32>
    %cst_125 = arith.constant dense<0.000000e+00> : vector<16x384xf32>
    %511 = tpu.matmul %474, %13, %cst_125 {dimension_numbers = #tpu.dot_dimension_numbers<[1], [0], [0], [1], [0, 0, 1, 1], [], []>} : vector<16x128xf32>, vector<128x384xf32>, vector<16x384xf32> -> vector<16x384xf32>
    %512 = vector.extract_strided_slice %510 {offsets = [0, 0], sizes = [16, 128], strides = [1, 1]} : vector<16x384xf32> to vector<16x128xf32>
    %513 = vector.extract_strided_slice %511 {offsets = [0, 0], sizes = [16, 128], strides = [1, 1]} : vector<16x384xf32> to vector<16x128xf32>
    %514 = arith.addf %512, %513 : vector<16x128xf32>
    %515 = arith.negf %514 : vector<16x128xf32>
    %516 = math.exp %515 : vector<16x128xf32>
    %cst_126 = arith.constant 1.000000e+00 : f32
    %517 = vector.broadcast %cst_126 : f32 to vector<16x128xf32>
    %518 = arith.addf %517, %516 : vector<16x128xf32>
    %519 = arith.divf %517, %518 : vector<16x128xf32>
    %520 = vector.extract_strided_slice %510 {offsets = [0, 128], sizes = [16, 128], strides = [1, 1]} : vector<16x384xf32> to vector<16x128xf32>
    %521 = vector.extract_strided_slice %511 {offsets = [0, 128], sizes = [16, 128], strides = [1, 1]} : vector<16x384xf32> to vector<16x128xf32>
    %522 = arith.addf %520, %521 : vector<16x128xf32>
    %523 = arith.negf %522 : vector<16x128xf32>
    %524 = math.exp %523 : vector<16x128xf32>
    %cst_127 = arith.constant 1.000000e+00 : f32
    %525 = vector.broadcast %cst_127 : f32 to vector<16x128xf32>
    %526 = arith.addf %525, %524 : vector<16x128xf32>
    %527 = arith.divf %525, %526 : vector<16x128xf32>
    %528 = vector.extract_strided_slice %510 {offsets = [0, 256], sizes = [16, 128], strides = [1, 1]} : vector<16x384xf32> to vector<16x128xf32>
    %529 = vector.extract_strided_slice %511 {offsets = [0, 256], sizes = [16, 128], strides = [1, 1]} : vector<16x384xf32> to vector<16x128xf32>
    %530 = arith.addf %529, %25 : vector<16x128xf32>
    %531 = arith.mulf %519, %530 : vector<16x128xf32>
    %532 = arith.addf %528, %531 : vector<16x128xf32>
    %533 = math.tanh %532 : vector<16x128xf32>
    %cst_128 = arith.constant 1.000000e+00 : f32
    %534 = vector.broadcast %cst_128 : f32 to vector<16x128xf32>
    %535 = arith.subf %534, %527 : vector<16x128xf32>
    %536 = arith.mulf %535, %533 : vector<16x128xf32>
    %537 = arith.mulf %527, %474 : vector<16x128xf32>
    %538 = arith.addf %536, %537 : vector<16x128xf32>
    %c16_i32_129 = arith.constant 16 : i32
    %539 = arith.muli %c7_i32, %c16_i32_129 : i32
    %540 = arith.index_cast %539 : i32 to index
    %c0_130 = arith.constant 0 : index
    %541 = vector.load %arg12[%540, %c0_130] : memref<128x128xf32, #tpu.memory_space<vmem>>, vector<16x128xf32>
    tpu.vector_store %arg12[%540, %c0_130], %538 {strides = array<i32>} : memref<128x128xf32, #tpu.memory_space<vmem>>, vector<16x128xf32>,
    %c8_i32 = arith.constant 8 : i32
    %c0_131 = arith.constant 0 : index
    %c0_132 = arith.constant 0 : index
    %c0_133 = arith.constant 0 : index
    %542 = vector.load %arg11[%c0_131, %c0_132, %c0_133] : memref<2x16x128xf32, #tpu.memory_space<vmem>>, vector<1x16x128xf32>
    %543 = vector.shape_cast %542 : vector<1x16x128xf32> to vector<16x128xf32>
    %544 = vector.shape_cast %508 : vector<16x128xf32> to vector<1x16x128xf32>
    tpu.vector_store %arg11[%c0_131, %c0_132, %c0_133], %544 {strides = array<i32>} : memref<2x16x128xf32, #tpu.memory_space<vmem>>, vector<1x16x128xf32>,
    %c1_134 = arith.constant 1 : index
    %c0_135 = arith.constant 0 : index
    %c0_136 = arith.constant 0 : index
    %545 = vector.load %arg11[%c1_134, %c0_135, %c0_136] : memref<2x16x128xf32, #tpu.memory_space<vmem>>, vector<1x16x128xf32>
    %546 = vector.shape_cast %545 : vector<1x16x128xf32> to vector<16x128xf32>
    %547 = vector.shape_cast %538 : vector<16x128xf32> to vector<1x16x128xf32>
    tpu.vector_store %arg11[%c1_134, %c0_135, %c0_136], %547 {strides = array<i32>} : memref<2x16x128xf32, #tpu.memory_space<vmem>>, vector<1x16x128xf32>,
    %c0_137 = arith.constant 0 : index
    %c0_138 = arith.constant 0 : index
    %548 = vector.load %arg12[%c0_137, %c0_138] : memref<128x128xf32, #tpu.memory_space<vmem>>, vector<128x128xf32>
    %c0_139 = arith.constant 0 : index
    %c0_140 = arith.constant 0 : index
    %549 = vector.load %arg8[%c0_139, %c0_140] : memref<128x128xf32, #tpu.memory_space<vmem>>, vector<128x128xf32>
    %cst_141 = arith.constant dense<0.000000e+00> : vector<128x128xf32>
    %550 = tpu.matmul %548, %549, %cst_141 {dimension_numbers = #tpu.dot_dimension_numbers<[1], [0], [0], [1], [0, 0, 1, 1], [], []>} : vector<128x128xf32>, vector<128x128xf32>, vector<128x128xf32> -> vector<128x128xf32>
    %c0_142 = arith.constant 0 : index
    %c0_143 = arith.constant 0 : index
    %551 = vector.load %arg9[%c0_142, %c0_143] : memref<1x128xf32, #tpu.memory_space<vmem>>, vector<1x128xf32>
    %552 = vector.broadcast %551 : vector<1x128xf32> to vector<128x128xf32>
    %553 = arith.addf %550, %552 : vector<128x128xf32>
    %c0_144 = arith.constant 0 : index
    %c0_145 = arith.constant 0 : index
    %554 = vector.load %arg10[%c0_144, %c0_145] : memref<128x128xf32, #tpu.memory_space<vmem>>, vector<128x128xf32>
    tpu.vector_store %arg10[%c0_144, %c0_145], %553 {strides = array<i32>} : memref<128x128xf32, #tpu.memory_space<vmem>>, vector<128x128xf32>,
    return
  }
  func.func @transform_0(%arg0: i32) -> (i32, i32) {
    %c0_i32 = arith.constant 0 : i32
    %c0_i32_0 = arith.constant 0 : i32
    %c0_i32_1 = arith.constant 0 : i32
    return %c0_i32, %c0_i32_0 : i32, i32
  }
  func.func @transform_1(%arg0: i32) -> (i32, i32, i32) {
    %c0_i32 = arith.constant 0 : i32
    %c0_i32_0 = arith.constant 0 : i32
    %c0_i32_1 = arith.constant 0 : i32
    %c0_i32_2 = arith.constant 0 : i32
    return %c0_i32, %c0_i32_0, %c0_i32_1 : i32, i32, i32
  }
  func.func @transform_2(%arg0: i32) -> (i32, i32) {
    %c0_i32 = arith.constant 0 : i32
    %c0_i32_0 = arith.constant 0 : i32
    %c0_i32_1 = arith.constant 0 : i32
    return %c0_i32, %c0_i32_0 : i32, i32
  }
  func.func @transform_3(%arg0: i32) -> (i32, i32) {
    %c0_i32 = arith.constant 0 : i32
    %c0_i32_0 = arith.constant 0 : i32
    %c0_i32_1 = arith.constant 0 : i32
    return %c0_i32, %c0_i32_0 : i32, i32
  }
  func.func @transform_4(%arg0: i32) -> (i32, i32, i32) {
    %c0_i32 = arith.constant 0 : i32
    %c0_i32_0 = arith.constant 0 : i32
    %c0_i32_1 = arith.constant 0 : i32
    %c0_i32_2 = arith.constant 0 : i32
    return %c0_i32, %c0_i32_0, %c0_i32_1 : i32, i32, i32
  }
  func.func @transform_5(%arg0: i32) -> (i32, i32) {
    %c0_i32 = arith.constant 0 : i32
    %c0_i32_0 = arith.constant 0 : i32
    %c0_i32_1 = arith.constant 0 : i32
    return %c0_i32, %c0_i32_0 : i32, i32
  }
  func.func @transform_6(%arg0: i32) -> (i32, i32, i32) {
    %c0_i32 = arith.constant 0 : i32
    %c0_i32_0 = arith.constant 0 : i32
    %c0_i32_1 = arith.constant 0 : i32
    %c0_i32_2 = arith.constant 0 : i32
    return %c0_i32, %c0_i32_0, %c0_i32_1 : i32, i32, i32
  }
  func.func @transform_7(%arg0: i32) -> (i32, i32) {
    %c0_i32 = arith.constant 0 : i32
    %c0_i32_0 = arith.constant 0 : i32
    %c0_i32_1 = arith.constant 0 : i32
    return %c0_i32, %c0_i32_0 : i32, i32
  }
  func.func @transform_8(%arg0: i32) -> (i32, i32) {
    %c0_i32 = arith.constant 0 : i32
    %c0_i32_0 = arith.constant 0 : i32
    %c0_i32_1 = arith.constant 0 : i32
    return %c0_i32, %c0_i32_0 : i32, i32
  }
  func.func @transform_9(%arg0: i32) -> (i32, i32) {
    %c0_i32 = arith.constant 0 : i32
    %c0_i32_0 = arith.constant 0 : i32
    %c0_i32_1 = arith.constant 0 : i32
    return %c0_i32, %c0_i32_0 : i32, i32
  }
  func.func @transform_10(%arg0: i32) -> (i32, i32, i32) {
    %c0_i32 = arith.constant 0 : i32
    %c0_i32_0 = arith.constant 0 : i32
    %c0_i32_1 = arith.constant 0 : i32
    %c0_i32_2 = arith.constant 0 : i32
    return %c0_i32, %c0_i32_0, %c0_i32_1 : i32, i32, i32
  }
}

</mosaic_0001>

<llo_original>
// kernel: rnn_forward.1
$region0: #{rnn_forward.1}
  #allocation0 [shape = 'u32[]', space=smem, size = 0x4, offset = 0x4, fixed_abs, tag = 'smem constant byte address 0x4 - core index']
  #allocation1 [shape = 'u32[144,128]{1,0:T(1,128)}', space=vmem, size = 0x12000, scoped, tag = 'internal scratch']
  #allocation2 [shape = 'f32[128,128]{1,0:T(8,128)}', space=vmem, size = 0x10000, scoped, tag = 'scratch operand']
  #allocation3 [shape = 'f32[128,384]{1,0:T(8,128)}', space=vmem, size = 0x30000, scoped, tag = 'scratch operand']
  %s0 = inlined_call_operand.vmem [shape: s32[128,1], index: 0, kind: input, shape index: {}]
  %s1 = inlined_call_operand.hbm [shape: f32[2,16,128], index: 1, kind: input, shape index: {}]
  %s2 = inlined_call_operand.hbm [shape: f32[128,384], index: 2, kind: input, shape index: {}]
  %s3 = inlined_call_operand.hbm [shape: f32[128,384], index: 3, kind: input, shape index: {}]
  %s4 = inlined_call_operand.hbm [shape: f32[2,128,384], index: 4, kind: input, shape index: {}]
  %s5 = inlined_call_operand.vmem [shape: f32[1,384], index: 5, kind: input, shape index: {}]
  %s6 = inlined_call_operand.vmem [shape: f32[2,1,128], index: 6, kind: input, shape index: {}]
  %s7 = inlined_call_operand.vmem [shape: f32[128,128], index: 7, kind: input, shape index: {}]
  %s8 = inlined_call_operand.vmem [shape: f32[1,128], index: 8, kind: input, shape index: {}]
  %s9 = inlined_call_operand.vmem [shape: f32[128,128], index: 9, kind: output, shape index: {0}]
  %s10 = inlined_call_operand.hbm [shape: f32[2,16,128], index: 10, kind: output, shape index: {1}]
  %11 = xla_tuple %s9, %s10
  %s12 = sld [smem:[#allocation0]]
  $region70: #{rnn_forward.1} parent=0
    _
  %s14 = ssub.s32 1, %s12
  %s15 = scalar_select 0, %s14, %s12
  $region1: #{rnn_forward.1} parent=0
    #allocation4 [shape = 'u8[16384]{0}', space=vmem, size = 0x4000, scoped, tag = 'input window, operand 1, single buffered']
    #allocation5 [shape = 's32[1]{0}', space=sflag, size = 0x4, scoped, tag = 'scoped memory for rnn_forward.1']
    #allocation6 [shape = 's32[1]{0}', space=sflag, size = 0x4, scoped, tag = 'scoped memory for rnn_forward.1']
    #allocation7 [shape = 'u8[196608]{0}', space=vmem, size = 0x30000, scoped, tag = 'input window, operand 2, single buffered']
    #allocation8 [shape = 's32[1]{0}', space=sflag, size = 0x4, scoped, tag = 'scoped memory for rnn_forward.1']
    #allocation9 [shape = 'u8[196608]{0}', space=vmem, size = 0x30000, scoped, tag = 'input window, operand 3, single buffered']
    #allocation10 [shape = 'u8[393216]{0}', space=vmem, size = 0x60000, scoped, tag = 'input window, operand 4, single buffered']
    #allocation11 [shape = 's32[1]{0}', space=sflag, size = 0x4, scoped, tag = 'scoped memory for rnn_forward.1']
    #allocation12 [shape = 'u8[16384]{0}', space=vmem, size = 0x4000, scoped, tag = 'output window, operand 1, single buffered']
    %16 = vsyncpa [#allocation5], 0
    %17 = vsyncpa [#allocation8], 0
    %18 = vsyncpa [#allocation11], 0
    %19 = vsyncpa [#allocation6], 0
    // Predicated region
    $region2: #{rnn_forward.1} parent=1 // pred_check
      _
    $region3: #{rnn_forward.1} parent=1 // pred_check_branch
      %21 = sbr.rel (0) target = $region5
    $region4: #{rnn_forward.1} parent=1 // pred_region
      _
    $region5: #{rnn_forward.1} parent=1 // pred_fallthru
      _
    // Predicated region
    $region6: #{rnn_forward.1} parent=1 // pred_check
      _
    $region7: #{rnn_forward.1} parent=1 // pred_check_branch
      %23 = sbr.rel (0) target = $region9
    $region8: #{rnn_forward.1} parent=1 // pred_region
      %s25 = ssub.s32 512, 512
      %26 = vsyncadd [#allocation5], %s25
      %s27 = sshll.u32 [#allocation4], 4
      %s28 = int_to_ptr.vmem [resolvable:$true] %s27
      %33 = dma.hbm_to_vmem [thread:$0]  %s1, 512, %s28, [#allocation5], 128, 128, 8
    $region9: #{rnn_forward.1} parent=1 // pred_fallthru
      _
    // Predicated region
    $region10: #{rnn_forward.1} parent=1 // pred_check
      _
    $region11: #{rnn_forward.1} parent=1 // pred_check_branch
      %35 = sbr.rel (0) target = $region13
    $region12: #{rnn_forward.1} parent=1 // pred_region
      %s37 = ssub.s32 6144, 6144
      %38 = vsyncadd [#allocation8], %s37
      %s39 = sshll.u32 [#allocation7], 4
      %s40 = int_to_ptr.vmem [resolvable:$true] %s39
      %45 = dma.hbm_to_vmem [thread:$0]  %s2, 6144, %s40, [#allocation8], 384, 384, 24
    $region13: #{rnn_forward.1} parent=1 // pred_fallthru
      _
    // Predicated region
    $region14: #{rnn_forward.1} parent=1 // pred_check
      _
    $region15: #{rnn_forward.1} parent=1 // pred_check_branch
      %47 = sbr.rel (0) target = $region17
    $region16: #{rnn_forward.1} parent=1 // pred_region
      %s49 = ssub.s32 6144, 6144
      %50 = vsyncadd [#allocation8], %s49
      %s51 = sshll.u32 [#allocation9], 4
      %s52 = int_to_ptr.vmem [resolvable:$true] %s51
      %57 = dma.hbm_to_vmem [thread:$0]  %s3, 6144, %s52, [#allocation8], 384, 384, 24
    $region17: #{rnn_forward.1} parent=1 // pred_fallthru
      _
    // Predicated region
    $region18: #{rnn_forward.1} parent=1 // pred_check
      _
    $region19: #{rnn_forward.1} parent=1 // pred_check_branch
      %59 = sbr.rel (0) target = $region21
    $region20: #{rnn_forward.1} parent=1 // pred_region
      %s61 = ssub.s32 12288, 12288
      %62 = vsyncadd [#allocation11], %s61
      %s63 = sshll.u32 [#allocation10], 4
      %s64 = int_to_ptr.vmem [resolvable:$true] %s63
      %69 = dma.hbm_to_vmem [thread:$0]  %s4, 12288, %s64, [#allocation11], 384, 384, 24
    $region21: #{rnn_forward.1} parent=1 // pred_fallthru
      _
    // Predicated region
    $region22: #{rnn_forward.1} parent=1 // pred_check
      _
    $region23: #{rnn_forward.1} parent=1 // pred_check_branch
      %71 = sbr.rel (0) target = $region25
    $region24: #{rnn_forward.1} parent=1 // pred_region
      _
    $region25: #{rnn_forward.1} parent=1 // pred_fallthru
      _
    // Predicated region
    $region26: #{rnn_forward.1} parent=1 // pred_check
      _
    $region27: #{rnn_forward.1} parent=1 // pred_check_branch
      %73 = sbr.rel (0) target = $region29
    $region28: #{rnn_forward.1} parent=1 // pred_region
      _
    $region29: #{rnn_forward.1} parent=1 // pred_fallthru
      _
    // Predicated region
    $region30: #{rnn_forward.1} parent=1 // pred_check
      _
    $region31: #{rnn_forward.1} parent=1 // pred_check_branch
      %75 = sbr.rel (0) target = $region33
    $region32: #{rnn_forward.1} parent=1 // pred_region
      _
    $region33: #{rnn_forward.1} parent=1 // pred_fallthru
      _
    // Predicated region
    $region34: #{rnn_forward.1} parent=1 // pred_check
      _
    $region35: #{rnn_forward.1} parent=1 // pred_check_branch
      %77 = sbr.rel (0) target = $region37
    $region36: #{rnn_forward.1} parent=1 // pred_region
      _
    $region37: #{rnn_forward.1} parent=1 // pred_fallthru
      _
    // Predicated region
    $region38: #{rnn_forward.1} parent=1 // pred_check
      _
    $region39: #{rnn_forward.1} parent=1 // pred_check_branch
      %79 = sbr.rel (0) target = $region41
    $region40: #{rnn_forward.1} parent=1 // pred_region
      %80 = dma.done [#allocation5], 512
    $region41: #{rnn_forward.1} parent=1 // pred_fallthru
      _
    // Predicated region
    $region42: #{rnn_forward.1} parent=1 // pred_check
      _
    $region43: #{rnn_forward.1} parent=1 // pred_check_branch
      %82 = sbr.rel (0) target = $region45
    $region44: #{rnn_forward.1} parent=1 // pred_region
      %83 = dma.done [#allocation8], 6144
    $region45: #{rnn_forward.1} parent=1 // pred_fallthru
      _
    // Predicated region
    $region46: #{rnn_forward.1} parent=1 // pred_check
      _
    $region47: #{rnn_forward.1} parent=1 // pred_check_branch
      %85 = sbr.rel (0) target = $region49
    $region48: #{rnn_forward.1} parent=1 // pred_region
      %86 = dma.done [#allocation8], 6144
    $region49: #{rnn_forward.1} parent=1 // pred_fallthru
      _
    // Predicated region
    $region50: #{rnn_forward.1} parent=1 // pred_check
      _
    $region51: #{rnn_forward.1} parent=1 // pred_check_branch
      %88 = sbr.rel (0) target = $region53
    $region52: #{rnn_forward.1} parent=1 // pred_region
      %89 = dma.done [#allocation11], 12288
    $region53: #{rnn_forward.1} parent=1 // pred_fallthru
      _
    %v90 = vld [vmem:[%s0] sm:$0xff]
    %v91 = vld [vmem:[%s0 + $0x8] sm:$0xff]
    %v92 = vld [vmem:[%s0 + $0x10] sm:$0xff]
    %v93 = vld [vmem:[%s0 + $0x18] sm:$0xff]
    %v94 = vld [vmem:[%s0 + $0x20] sm:$0xff]
    %v95 = vld [vmem:[%s0 + $0x28] sm:$0xff]
    %v96 = vld [vmem:[%s0 + $0x30] sm:$0xff]
    %v97 = vld [vmem:[%s0 + $0x38] sm:$0xff]
    %v98 = vld [vmem:[%s0 + $0x40] sm:$0xff]
    %v99 = vld [vmem:[%s0 + $0x48] sm:$0xff]
    %v100 = vld [vmem:[%s0 + $0x50] sm:$0xff]
    %v101 = vld [vmem:[%s0 + $0x58] sm:$0xff]
    %v102 = vld [vmem:[%s0 + $0x60] sm:$0xff]
    %v103 = vld [vmem:[%s0 + $0x68] sm:$0xff]
    %v104 = vld [vmem:[%s0 + $0x70] sm:$0xff]
    %v105 = vld [vmem:[%s0 + $0x78] sm:$0xff]
    %v106 = vlaneseq
    %v107 = vand.u32 %v106, 127
    %108 = vset.pattern.permute.xlu0 0
    %109 = vperm.xlu0 %108, %v90
    %v110 = vpop.permute.xlu0 %109
    %111 = vset.pattern.permute.xlu0 0
    %112 = vperm.xlu0 %111, %v91
    %v113 = vpop.permute.xlu0 %112
    %114 = vset.pattern.permute.xlu0 0
    %115 = vperm.xlu0 %114, %v92
    %v116 = vpop.permute.xlu0 %115
    %117 = vset.pattern.permute.xlu0 0
    %118 = vperm.xlu0 %117, %v93
    %v119 = vpop.permute.xlu0 %118
    %120 = vset.pattern.permute.xlu0 0
    %121 = vperm.xlu0 %120, %v94
    %v122 = vpop.permute.xlu0 %121
    %123 = vset.pattern.permute.xlu0 0
    %124 = vperm.xlu0 %123, %v95
    %v125 = vpop.permute.xlu0 %124
    %126 = vset.pattern.permute.xlu0 0
    %127 = vperm.xlu0 %126, %v96
    %v128 = vpop.permute.xlu0 %127
    %129 = vset.pattern.permute.xlu0 0
    %130 = vperm.xlu0 %129, %v97
    %v131 = vpop.permute.xlu0 %130
    %132 = vset.pattern.permute.xlu0 0
    %133 = vperm.xlu0 %132, %v98
    %v134 = vpop.permute.xlu0 %133
    %135 = vset.pattern.permute.xlu0 0
    %136 = vperm.xlu0 %135, %v99
    %v137 = vpop.permute.xlu0 %136
    %138 = vset.pattern.permute.xlu0 0
    %139 = vperm.xlu0 %138, %v100
    %v140 = vpop.permute.xlu0 %139
    %141 = vset.pattern.permute.xlu0 0
    %142 = vperm.xlu0 %141, %v101
    %v143 = vpop.permute.xlu0 %142
    %144 = vset.pattern.permute.xlu0 0
    %145 = vperm.xlu0 %144, %v102
    %v146 = vpop.permute.xlu0 %145
    %147 = vset.pattern.permute.xlu0 0
    %148 = vperm.xlu0 %147, %v103
    %v149 = vpop.permute.xlu0 %148
    %150 = vset.pattern.permute.xlu0 0
    %151 = vperm.xlu0 %150, %v104
    %v152 = vpop.permute.xlu0 %151
    %153 = vset.pattern.permute.xlu0 0
    %154 = vperm.xlu0 %153, %v105
    %v155 = vpop.permute.xlu0 %154
    %vm156 = vcmp.eq.s32.totalorder %v107, %v110
    %vm157 = vcmp.eq.s32.totalorder %v107, %v113
    %vm158 = vcmp.eq.s32.totalorder %v107, %v116
    %vm159 = vcmp.eq.s32.totalorder %v107, %v119
    %vm160 = vcmp.eq.s32.totalorder %v107, %v122
    %vm161 = vcmp.eq.s32.totalorder %v107, %v125
    %vm162 = vcmp.eq.s32.totalorder %v107, %v128
    %vm163 = vcmp.eq.s32.totalorder %v107, %v131
    %vm164 = vcmp.eq.s32.totalorder %v107, %v134
    %vm165 = vcmp.eq.s32.totalorder %v107, %v137
    %vm166 = vcmp.eq.s32.totalorder %v107, %v140
    %vm167 = vcmp.eq.s32.totalorder %v107, %v143
    %vm168 = vcmp.eq.s32.totalorder %v107, %v146
    %vm169 = vcmp.eq.s32.totalorder %v107, %v149
    %vm170 = vcmp.eq.s32.totalorder %v107, %v152
    %vm171 = vcmp.eq.s32.totalorder %v107, %v155
    %v172 = vsel %vm156, 1.0, 0.0
    %v173 = vsel %vm157, 1.0, 0.0
    %v174 = vsel %vm158, 1.0, 0.0
    %v175 = vsel %vm159, 1.0, 0.0
    %v176 = vsel %vm160, 1.0, 0.0
    %v177 = vsel %vm161, 1.0, 0.0
    %v178 = vsel %vm162, 1.0, 0.0
    %v179 = vsel %vm163, 1.0, 0.0
    %v180 = vsel %vm164, 1.0, 0.0
    %v181 = vsel %vm165, 1.0, 0.0
    %v182 = vsel %vm166, 1.0, 0.0
    %v183 = vsel %vm167, 1.0, 0.0
    %v184 = vsel %vm168, 1.0, 0.0
    %v185 = vsel %vm169, 1.0, 0.0
    %v186 = vsel %vm170, 1.0, 0.0
    %v187 = vsel %vm171, 1.0, 0.0
    %v188 = vld [vmem:[#allocation7] sm:$0xff]
    %v189 = vld [vmem:[#allocation7 + $0x8] sm:$0xff]
    %v190 = vld [vmem:[#allocation7 + $0x10] sm:$0xff]
    %v191 = vld [vmem:[#allocation7 + $0x18] sm:$0xff]
    %v192 = vld [vmem:[#allocation7 + $0x20] sm:$0xff]
    %v193 = vld [vmem:[#allocation7 + $0x28] sm:$0xff]
    %v194 = vld [vmem:[#allocation7 + $0x30] sm:$0xff]
    %v195 = vld [vmem:[#allocation7 + $0x38] sm:$0xff]
    %v196 = vld [vmem:[#allocation7 + $0x40] sm:$0xff]
    %v197 = vld [vmem:[#allocation7 + $0x48] sm:$0xff]
    %v198 = vld [vmem:[#allocation7 + $0x50] sm:$0xff]
    %v199 = vld [vmem:[#allocation7 + $0x58] sm:$0xff]
    %v200 = vld [vmem:[#allocation7 + $0x60] sm:$0xff]
    %v201 = vld [vmem:[#allocation7 + $0x68] sm:$0xff]
    %v202 = vld [vmem:[#allocation7 + $0x70] sm:$0xff]
    %v203 = vld [vmem:[#allocation7 + $0x78] sm:$0xff]
    %v204 = vld [vmem:[#allocation7 + $0x80] sm:$0xff]
    %v205 = vld [vmem:[#allocation7 + $0x88] sm:$0xff]
    %v206 = vld [vmem:[#allocation7 + $0x90] sm:$0xff]
    %v207 = vld [vmem:[#allocation7 + $0x98] sm:$0xff]
    %v208 = vld [vmem:[#allocation7 + $0xa0] sm:$0xff]
    %v209 = vld [vmem:[#allocation7 + $0xa8] sm:$0xff]
    %v210 = vld [vmem:[#allocation7 + $0xb0] sm:$0xff]
    %v211 = vld [vmem:[#allocation7 + $0xb8] sm:$0xff]
    %v212 = vld [vmem:[#allocation7 + $0xc0] sm:$0xff]
    %v213 = vld [vmem:[#allocation7 + $0xc8] sm:$0xff]
    %v214 = vld [vmem:[#allocation7 + $0xd0] sm:$0xff]
    %v215 = vld [vmem:[#allocation7 + $0xd8] sm:$0xff]
    %v216 = vld [vmem:[#allocation7 + $0xe0] sm:$0xff]
    %v217 = vld [vmem:[#allocation7 + $0xe8] sm:$0xff]
    %v218 = vld [vmem:[#allocation7 + $0xf0] sm:$0xff]
    %v219 = vld [vmem:[#allocation7 + $0xf8] sm:$0xff]
    %v220 = vld [vmem:[#allocation7 + $0x100] sm:$0xff]
    %v221 = vld [vmem:[#allocation7 + $0x108] sm:$0xff]
    %v222 = vld [vmem:[#allocation7 + $0x110] sm:$0xff]
    %v223 = vld [vmem:[#allocation7 + $0x118] sm:$0xff]
    %v224 = vld [vmem:[#allocation7 + $0x120] sm:$0xff]
    %v225 = vld [vmem:[#allocation7 + $0x128] sm:$0xff]
    %v226 = vld [vmem:[#allocation7 + $0x130] sm:$0xff]
    %v227 = vld [vmem:[#allocation7 + $0x138] sm:$0xff]
    %v228 = vld [vmem:[#allocation7 + $0x140] sm:$0xff]
    %v229 = vld [vmem:[#allocation7 + $0x148] sm:$0xff]
    %v230 = vld [vmem:[#allocation7 + $0x150] sm:$0xff]
    %v231 = vld [vmem:[#allocation7 + $0x158] sm:$0xff]
    %v232 = vld [vmem:[#allocation7 + $0x160] sm:$0xff]
    %v233 = vld [vmem:[#allocation7 + $0x168] sm:$0xff]
    %v234 = vld [vmem:[#allocation7 + $0x170] sm:$0xff]
    %v235 = vld [vmem:[#allocation7 + $0x178] sm:$0xff]
    %236 = vmatprep.subr.mxu0 %v189
    %237 = vmatpush1.msra.mxu0 %v188
    %238 = vmatprep.subr.mxu0 %v192
    %239 = vmatpush1.msra.mxu0 %v191
    %240 = vmatprep.subr.mxu0 %v195
    %241 = vmatpush1.msra.mxu0 %v194
    %242 = vmatprep.subr.mxu0 %v198
    %243 = vmatpush1.msra.mxu0 %v197
    %244 = vmatprep.subr.mxu0 %v201
    %245 = vmatpush1.msra.mxu0 %v200
    %246 = vmatprep.subr.mxu0 %v204
    %247 = vmatpush1.msra.mxu0 %v203
    %248 = vmatprep.subr.mxu0 %v207
    %249 = vmatpush1.msra.mxu0 %v206
    %250 = vmatprep.subr.mxu0 %v210
    %251 = vmatpush1.msra.mxu0 %v209
    %252 = vmatprep.subr.mxu0 %v213
    %253 = vmatpush1.msra.mxu0 %v212
    %254 = vmatprep.subr.mxu0 %v216
    %255 = vmatpush1.msra.mxu0 %v215
    %256 = vmatprep.subr.mxu0 %v219
    %257 = vmatpush1.msra.mxu0 %v218
    %258 = vmatprep.subr.mxu0 %v222
    %259 = vmatpush1.msra.mxu0 %v221
    %260 = vmatprep.subr.mxu0 %v225
    %261 = vmatpush1.msra.mxu0 %v224
    %262 = vmatprep.subr.mxu0 %v228
    %263 = vmatpush1.msra.mxu0 %v227
    %264 = vmatprep.subr.mxu0 %v231
    %265 = vmatpush1.msra.mxu0 %v230
    %266 = vmatprep.subr.mxu0 %v234
    %267 = vmatpush1.msra.mxu0 %v233
    %268 = vmatprep.subr.mxu0 0.0
    %269 = vmatpush1.msra.mxu0 0.0
    %270 = vmatprep.subr.mxu0 0.0
    %271 = vmatpush1.msra.mxu0 0.0
    %272 = vmatprep.subr.mxu0 0.0
    %273 = vmatpush1.msra.mxu0 0.0
    %274 = vmatprep.subr.mxu0 0.0
    %275 = vmatpush1.msra.mxu0 0.0
    %276 = vmatprep.subr.mxu0 0.0
    %277 = vmatpush1.msra.mxu0 0.0
    %278 = vmatprep.subr.mxu0 0.0
    %279 = vmatpush1.msra.mxu0 0.0
    %280 = vmatprep.subr.mxu0 0.0
    %281 = vmatpush1.msra.mxu0 0.0
    %282 = vmatprep.subr.mxu0 0.0
    %283 = vmatpush1.msra.mxu0 0.0
    %284 = vmatprep.subr.mxu0 0.0
    %285 = vmatpush1.msra.mxu0 0.0
    %286 = vmatprep.subr.mxu0 0.0
    %287 = vmatpush1.msra.mxu0 0.0
    %288 = vmatprep.subr.mxu0 0.0
    %289 = vmatpush1.msra.mxu0 0.0
    %290 = vmatprep.subr.mxu0 0.0
    %291 = vmatpush1.msra.mxu0 0.0
    %292 = vmatprep.subr.mxu0 0.0
    %293 = vmatpush1.msra.mxu0 0.0
    %294 = vmatprep.subr.mxu0 0.0
    %295 = vmatpush1.msra.mxu0 0.0
    %296 = vmatprep.subr.mxu0 0.0
    %297 = vmatpush1.msra.mxu0 0.0
    %298 = vmatprep.subr.mxu0 0.0
    %299 = vmatpush1.msra.mxu0 0.0
    %300 = vmatprep.mubr.f32.mxu0 0.0
    %301 = vmatmul.mubr.f32.gmra.mrb[0].mxu0 %v172
    %v302 = vpop.f32.mrb[0].mxu0
    %v303 = vadd.f32 0.0, %v302
    %v304 = vpop.f32.mrb[0].mxu0
    %v305 = vadd.f32 0.0, %v304
    %306 = vmatprep.mubr.f32.mxu0 0.0
    %307 = vmatmul.mubr.f32.gmra.mrb[0].mxu0 %v173
    %v308 = vpop.f32.mrb[0].mxu0
    %v309 = vadd.f32 0.0, %v308
    %v310 = vpop.f32.mrb[0].mxu0
    %v311 = vadd.f32 0.0, %v310
    %312 = vmatprep.mubr.f32.mxu0 0.0
    %313 = vmatmul.mubr.f32.gmra.mrb[0].mxu0 %v174
    %v314 = vpop.f32.mrb[0].mxu0
    %v315 = vadd.f32 0.0, %v314
    %v316 = vpop.f32.mrb[0].mxu0
    %v317 = vadd.f32 0.0, %v316
    %318 = vmatprep.mubr.f32.mxu0 0.0
    %319 = vmatmul.mubr.f32.gmra.mrb[0].mxu0 %v175
    %v320 = vpop.f32.mrb[0].mxu0
    %v321 = vadd.f32 0.0, %v320
    %v322 = vpop.f32.mrb[0].mxu0
    %v323 = vadd.f32 0.0, %v322
    %324 = vmatprep.mubr.f32.mxu0 0.0
    %325 = vmatmul.mubr.f32.gmra.mrb[0].mxu0 %v176
    %v326 = vpop.f32.mrb[0].mxu0
    %v327 = vadd.f32 0.0, %v326
    %v328 = vpop.f32.mrb[0].mxu0
    %v329 = vadd.f32 0.0, %v328
    %330 = vmatprep.mubr.f32.mxu0 0.0
    %331 = vmatmul.mubr.f32.gmra.mrb[0].mxu0 %v177
    %v332 = vpop.f32.mrb[0].mxu0
    %v333 = vadd.f32 0.0, %v332
    %v334 = vpop.f32.mrb[0].mxu0
    %v335 = vadd.f32 0.0, %v334
    %336 = vmatprep.mubr.f32.mxu0 0.0
    %337 = vmatmul.mubr.f32.gmra.mrb[0].mxu0 %v178
    %v338 = vpop.f32.mrb[0].mxu0
    %v339 = vadd.f32 0.0, %v338
    %v340 = vpop.f32.mrb[0].mxu0
    %v341 = vadd.f32 0.0, %v340
    %342 = vmatprep.mubr.f32.mxu0 0.0
    %343 = vmatmul.mubr.f32.gmra.mrb[0].mxu0 %v179
    %v344 = vpop.f32.mrb[0].mxu0
    %v345 = vadd.f32 0.0, %v344
    %v346 = vpop.f32.mrb[0].mxu0
    %v347 = vadd.f32 0.0, %v346
    %348 = vmatprep.mubr.f32.mxu0 0.0
    %349 = vmatmul.mubr.f32.gmra.mrb[0].mxu0 %v180
    %v350 = vpop.f32.mrb[0].mxu0
    %v351 = vadd.f32 0.0, %v350
    %v352 = vpop.f32.mrb[0].mxu0
    %v353 = vadd.f32 0.0, %v352
    %354 = vmatprep.mubr.f32.mxu0 0.0
    %355 = vmatmul.mubr.f32.gmra.mrb[0].mxu0 %v181
    %v356 = vpop.f32.mrb[0].mxu0
    %v357 = vadd.f32 0.0, %v356
    %v358 = vpop.f32.mrb[0].mxu0
    %v359 = vadd.f32 0.0, %v358
    %360 = vmatprep.mubr.f32.mxu0 0.0
    %361 = vmatmul.mubr.f32.gmra.mrb[0].mxu0 %v182
    %v362 = vpop.f32.mrb[0].mxu0
    %v363 = vadd.f32 0.0, %v362
    %v364 = vpop.f32.mrb[0].mxu0
    %v365 = vadd.f32 0.0, %v364
    %366 = vmatprep.mubr.f32.mxu0 0.0
    %367 = vmatmul.mubr.f32.gmra.mrb[0].mxu0 %v183
    %v368 = vpop.f32.mrb[0].mxu0
    %v369 = vadd.f32 0.0, %v368
    %v370 = vpop.f32.mrb[0].mxu0
    %v371 = vadd.f32 0.0, %v370
    %372 = vmatprep.mubr.f32.mxu0 0.0
    %373 = vmatmul.mubr.f32.gmra.mrb[0].mxu0 %v184
    %v374 = vpop.f32.mrb[0].mxu0
    %v375 = vadd.f32 0.0, %v374
    %v376 = vpop.f32.mrb[0].mxu0
    %v377 = vadd.f32 0.0, %v376
    %378 = vmatprep.mubr.f32.mxu0 0.0
    %379 = vmatmul.mubr.f32.gmra.mrb[0].mxu0 %v185
    %v380 = vpop.f32.mrb[0].mxu0
    %v381 = vadd.f32 0.0, %v380
    %v382 = vpop.f32.mrb[0].mxu0
    %v383 = vadd.f32 0.0, %v382
    %384 = vmatprep.mubr.f32.mxu0 0.0
    %385 = vmatmul.mubr.f32.gmra.mrb[0].mxu0 %v186
    %v386 = vpop.f32.mrb[0].mxu0
    %v387 = vadd.f32 0.0, %v386
    %v388 = vpop.f32.mrb[0].mxu0
    %v389 = vadd.f32 0.0, %v388
    %390 = vmatprep.mubr.f32.mxu0 0.0
    %391 = vmatmul.mubr.f32.gmra.mrb[0].mxu0 %v187
    %v392 = vpop.f32.mrb[0].mxu0
    %v393 = vadd.f32 0.0, %v392
    %v394 = vpop.f32.mrb[0].mxu0
    %v395 = vadd.f32 0.0, %v394
    %396 = vdwg.mxu0
    %397 = vmatprep.subr.mxu0 0.0
    %398 = vmatpush1.msra.mxu0 %v190
    %399 = vmatprep.subr.mxu0 0.0
    %400 = vmatpush1.msra.mxu0 %v193
    %401 = vmatprep.subr.mxu0 0.0
    %402 = vmatpush1.msra.mxu0 %v196
    %403 = vmatprep.subr.mxu0 0.0
    %404 = vmatpush1.msra.mxu0 %v199
    %405 = vmatprep.subr.mxu0 0.0
    %406 = vmatpush1.msra.mxu0 %v202
    %407 = vmatprep.subr.mxu0 0.0
    %408 = vmatpush1.msra.mxu0 %v205
    %409 = vmatprep.subr.mxu0 0.0
    %410 = vmatpush1.msra.mxu0 %v208
    %411 = vmatprep.subr.mxu0 0.0
    %412 = vmatpush1.msra.mxu0 %v211
    %413 = vmatprep.subr.mxu0 0.0
    %414 = vmatpush1.msra.mxu0 %v214
    %415 = vmatprep.subr.mxu0 0.0
    %416 = vmatpush1.msra.mxu0 %v217
    %417 = vmatprep.subr.mxu0 0.0
    %418 = vmatpush1.msra.mxu0 %v220
    %419 = vmatprep.subr.mxu0 0.0
    %420 = vmatpush1.msra.mxu0 %v223
    %421 = vmatprep.subr.mxu0 0.0
    %422 = vmatpush1.msra.mxu0 %v226
    %423 = vmatprep.subr.mxu0 0.0
    %424 = vmatpush1.msra.mxu0 %v229
    %425 = vmatprep.subr.mxu0 0.0
    %426 = vmatpush1.msra.mxu0 %v232
    %427 = vmatprep.subr.mxu0 0.0
    %428 = vmatpush1.msra.mxu0 %v235
    %429 = vmatprep.subr.mxu0 0.0
    %430 = vmatpush1.msra.mxu0 0.0
    %431 = vmatprep.subr.mxu0 0.0
    %432 = vmatpush1.msra.mxu0 0.0
    %433 = vmatprep.subr.mxu0 0.0
    %434 = vmatpush1.msra.mxu0 0.0
    %435 = vmatprep.subr.mxu0 0.0
    %436 = vmatpush1.msra.mxu0 0.0
    %437 = vmatprep.subr.mxu0 0.0
    %438 = vmatpush1.msra.mxu0 0.0
    %439 = vmatprep.subr.mxu0 0.0
    %440 = vmatpush1.msra.mxu0 0.0
    %441 = vmatprep.subr.mxu0 0.0
    %442 = vmatpush1.msra.mxu0 0.0
    %443 = vmatprep.subr.mxu0 0.0
    %444 = vmatpush1.msra.mxu0 0.0
    %445 = vmatprep.subr.mxu0 0.0
    %446 = vmatpush1.msra.mxu0 0.0
    %447 = vmatprep.subr.mxu0 0.0
    %448 = vmatpush1.msra.mxu0 0.0
    %449 = vmatprep.subr.mxu0 0.0
    %450 = vmatpush1.msra.mxu0 0.0
    %451 = vmatprep.subr.mxu0 0.0
    %452 = vmatpush1.msra.mxu0 0.0
    %453 = vmatprep.subr.mxu0 0.0
    %454 = vmatpush1.msra.mxu0 0.0
    %455 = vmatprep.subr.mxu0 0.0
    %456 = vmatpush1.msra.mxu0 0.0
    %457 = vmatprep.subr.mxu0 0.0
    %458 = vmatpush1.msra.mxu0 0.0
    %459 = vmatprep.subr.mxu0 0.0
    %460 = vmatpush1.msra.mxu0 0.0
    %461 = vmatprep.mubr.f32.mxu0 0.0
    %462 = vmatmul.mubr.f32.gmra.mrb[0].mxu0 %v172
    %v463 = vpop.f32.mrb[0].mxu0
    %v464 = vadd.f32 0.0, %v463
    %v465 = vpop.f32.mrb[0].mxu0
    %466 = vmatprep.mubr.f32.mxu0 0.0
    %467 = vmatmul.mubr.f32.gmra.mrb[0].mxu0 %v173
    %v468 = vpop.f32.mrb[0].mxu0
    %v469 = vadd.f32 0.0, %v468
    %v470 = vpop.f32.mrb[0].mxu0
    %471 = vmatprep.mubr.f32.mxu0 0.0
    %472 = vmatmul.mubr.f32.gmra.mrb[0].mxu0 %v174
    %v473 = vpop.f32.mrb[0].mxu0
    %v474 = vadd.f32 0.0, %v473
    %v475 = vpop.f32.mrb[0].mxu0
    %476 = vmatprep.mubr.f32.mxu0 0.0
    %477 = vmatmul.mubr.f32.gmra.mrb[0].mxu0 %v175
    %v478 = vpop.f32.mrb[0].mxu0
    %v479 = vadd.f32 0.0, %v478
    %v480 = vpop.f32.mrb[0].mxu0
    %481 = vmatprep.mubr.f32.mxu0 0.0
    %482 = vmatmul.mubr.f32.gmra.mrb[0].mxu0 %v176
    %v483 = vpop.f32.mrb[0].mxu0
    %v484 = vadd.f32 0.0, %v483
    %v485 = vpop.f32.mrb[0].mxu0
    %486 = vmatprep.mubr.f32.mxu0 0.0
    %487 = vmatmul.mubr.f32.gmra.mrb[0].mxu0 %v177
    %v488 = vpop.f32.mrb[0].mxu0
    %v489 = vadd.f32 0.0, %v488
    %v490 = vpop.f32.mrb[0].mxu0
    %491 = vmatprep.mubr.f32.mxu0 0.0
    %492 = vmatmul.mubr.f32.gmra.mrb[0].mxu0 %v178
    %v493 = vpop.f32.mrb[0].mxu0
    %v494 = vadd.f32 0.0, %v493
    %v495 = vpop.f32.mrb[0].mxu0
    %496 = vmatprep.mubr.f32.mxu0 0.0
    %497 = vmatmul.mubr.f32.gmra.mrb[0].mxu0 %v179
    %v498 = vpop.f32.mrb[0].mxu0
    %v499 = vadd.f32 0.0, %v498
    %v500 = vpop.f32.mrb[0].mxu0
    %501 = vmatprep.mubr.f32.mxu0 0.0
    %502 = vmatmul.mubr.f32.gmra.mrb[0].mxu0 %v180
    %v503 = vpop.f32.mrb[0].mxu0
    %v504 = vadd.f32 0.0, %v503
    %v505 = vpop.f32.mrb[0].mxu0
    %506 = vmatprep.mubr.f32.mxu0 0.0
    %507 = vmatmul.mubr.f32.gmra.mrb[0].mxu0 %v181
    %v508 = vpop.f32.mrb[0].mxu0
    %v509 = vadd.f32 0.0, %v508
    %v510 = vpop.f32.mrb[0].mxu0
    %511 = vmatprep.mubr.f32.mxu0 0.0
    %512 = vmatmul.mubr.f32.gmra.mrb[0].mxu0 %v182
    %v513 = vpop.f32.mrb[0].mxu0
    %v514 = vadd.f32 0.0, %v513
    %v515 = vpop.f32.mrb[0].mxu0
    %516 = vmatprep.mubr.f32.mxu0 0.0
    %517 = vmatmul.mubr.f32.gmra.mrb[0].mxu0 %v183
    %v518 = vpop.f32.mrb[0].mxu0
    %v519 = vadd.f32 0.0, %v518
    %v520 = vpop.f32.mrb[0].mxu0
    %521 = vmatprep.mubr.f32.mxu0 0.0
    %522 = vmatmul.mubr.f32.gmra.mrb[0].mxu0 %v184
    %v523 = vpop.f32.mrb[0].mxu0
    %v524 = vadd.f32 0.0, %v523
    %v525 = vpop.f32.mrb[0].mxu0
    %526 = vmatprep.mubr.f32.mxu0 0.0
    %527 = vmatmul.mubr.f32.gmra.mrb[0].mxu0 %v185
    %v528 = vpop.f32.mrb[0].mxu0
    %v529 = vadd.f32 0.0, %v528
    %v530 = vpop.f32.mrb[0].mxu0
    %531 = vmatprep.mubr.f32.mxu0 0.0
    %532 = vmatmul.mubr.f32.gmra.mrb[0].mxu0 %v186
    %v533 = vpop.f32.mrb[0].mxu0
    %v534 = vadd.f32 0.0, %v533
    %v535 = vpop.f32.mrb[0].mxu0
    %536 = vmatprep.mubr.f32.mxu0 0.0
    %537 = vmatmul.mubr.f32.gmra.mrb[0].mxu0 %v187
    %v538 = vpop.f32.mrb[0].mxu0
    %v539 = vadd.f32 0.0, %v538
    %v540 = vpop.f32.mrb[0].mxu0
    %541 = vdwg.mxu0
    %542 = vst [vmem:[#allocation3] sm:$0xff] %v303
    %543 = vst [vmem:[#allocation3 + $0x8] sm:$0xff] %v305
    %544 = vst [vmem:[#allocation3 + $0x10] sm:$0xff] %v464
    %545 = vst [vmem:[#allocation3 + $0x18] sm:$0xff] %v309
    %546 = vst [vmem:[#allocation3 + $0x20] sm:$0xff] %v311
    %547 = vst [vmem:[#allocation3 + $0x28] sm:$0xff] %v469
    %548 = vst [vmem:[#allocation3 + $0x30] sm:$0xff] %v315
    %549 = vst [vmem:[#allocation3 + $0x38] sm:$0xff] %v317
    %550 = vst [vmem:[#allocation3 + $0x40] sm:$0xff] %v474
    %551 = vst [vmem:[#allocation3 + $0x48] sm:$0xff] %v321
    %552 = vst [vmem:[#allocation3 + $0x50] sm:$0xff] %v323
    %553 = vst [vmem:[#allocation3 + $0x58] sm:$0xff] %v479
    %554 = vst [vmem:[#allocation3 + $0x60] sm:$0xff] %v327
    %555 = vst [vmem:[#allocation3 + $0x68] sm:$0xff] %v329
    %556 = vst [vmem:[#allocation3 + $0x70] sm:$0xff] %v484
    %557 = vst [vmem:[#allocation3 + $0x78] sm:$0xff] %v333
    %558 = vst [vmem:[#allocation3 + $0x80] sm:$0xff] %v335
    %559 = vst [vmem:[#allocation3 + $0x88] sm:$0xff] %v489
    %560 = vst [vmem:[#allocation3 + $0x90] sm:$0xff] %v339
    %561 = vst [vmem:[#allocation3 + $0x98] sm:$0xff] %v341
    %562 = vst [vmem:[#allocation3 + $0xa0] sm:$0xff] %v494
    %563 = vst [vmem:[#allocation3 + $0xa8] sm:$0xff] %v345
    %564 = vst [vmem:[#allocation3 + $0xb0] sm:$0xff] %v347
    %565 = vst [vmem:[#allocation3 + $0xb8] sm:$0xff] %v499
    %566 = vst [vmem:[#allocation3 + $0xc0] sm:$0xff] %v351
    %567 = vst [vmem:[#allocation3 + $0xc8] sm:$0xff] %v353
    %568 = vst [vmem:[#allocation3 + $0xd0] sm:$0xff] %v504
    %569 = vst [vmem:[#allocation3 + $0xd8] sm:$0xff] %v357
    %570 = vst [vmem:[#allocation3 + $0xe0] sm:$0xff] %v359
    %571 = vst [vmem:[#allocation3 + $0xe8] sm:$0xff] %v509
    %572 = vst [vmem:[#allocation3 + $0xf0] sm:$0xff] %v363
    %573 = vst [vmem:[#allocation3 + $0xf8] sm:$0xff] %v365
    %574 = vst [vmem:[#allocation3 + $0x100] sm:$0xff] %v514
    %575 = vst [vmem:[#allocation3 + $0x108] sm:$0xff] %v369
    %576 = vst [vmem:[#allocation3 + $0x110] sm:$0xff] %v371
    %577 = vst [vmem:[#allocation3 + $0x118] sm:$0xff] %v519
    %578 = vst [vmem:[#allocation3 + $0x120] sm:$0xff] %v375
    %579 = vst [vmem:[#allocation3 + $0x128] sm:$0xff] %v377
    %580 = vst [vmem:[#allocation3 + $0x130] sm:$0xff] %v524
    %581 = vst [vmem:[#allocation3 + $0x138] sm:$0xff] %v381
    %582 = vst [vmem:[#allocation3 + $0x140] sm:$0xff] %v383
    %583 = vst [vmem:[#allocation3 + $0x148] sm:$0xff] %v529
    %584 = vst [vmem:[#allocation3 + $0x150] sm:$0xff] %v387
    %585 = vst [vmem:[#allocation3 + $0x158] sm:$0xff] %v389
    %586 = vst [vmem:[#allocation3 + $0x160] sm:$0xff] %v534
    %587 = vst [vmem:[#allocation3 + $0x168] sm:$0xff] %v393
    %588 = vst [vmem:[#allocation3 + $0x170] sm:$0xff] %v395
    %589 = vst [vmem:[#allocation3 + $0x178] sm:$0xff] %v539
    %v590 = vld [vmem:[#allocation10] sm:$0xff]
    %v591 = vld [vmem:[#allocation10 + $0x8] sm:$0xff]
    %v592 = vld [vmem:[#allocation10 + $0x10] sm:$0xff]
    %v593 = vld [vmem:[#allocation10 + $0x18] sm:$0xff]
    %v594 = vld [vmem:[#allocation10 + $0x20] sm:$0xff]
    %v595 = vld [vmem:[#allocation10 + $0x28] sm:$0xff]
    %v596 = vld [vmem:[#allocation10 + $0x30] sm:$0xff]
    %v597 = vld [vmem:[#allocation10 + $0x38] sm:$0xff]
    %v598 = vld [vmem:[#allocation10 + $0x40] sm:$0xff]
    %v599 = vld [vmem:[#allocation10 + $0x48] sm:$0xff]
    %v600 = vld [vmem:[#allocation10 + $0x50] sm:$0xff]
    %v601 = vld [vmem:[#allocation10 + $0x58] sm:$0xff]
    %v602 = vld [vmem:[#allocation10 + $0x60] sm:$0xff]
    %v603 = vld [vmem:[#allocation10 + $0x68] sm:$0xff]
    %v604 = vld [vmem:[#allocation10 + $0x70] sm:$0xff]
    %v605 = vld [vmem:[#allocation10 + $0x78] sm:$0xff]
    %v606 = vld [vmem:[#allocation10 + $0x80] sm:$0xff]
    %v607 = vld [vmem:[#allocation10 + $0x88] sm:$0xff]
    %v608 = vld [vmem:[#allocation10 + $0x90] sm:$0xff]
    %v609 = vld [vmem:[#allocation10 + $0x98] sm:$0xff]
    %v610 = vld [vmem:[#allocation10 + $0xa0] sm:$0xff]
    %v611 = vld [vmem:[#allocation10 + $0xa8] sm:$0xff]
    %v612 = vld [vmem:[#allocation10 + $0xb0] sm:$0xff]
    %v613 = vld [vmem:[#allocation10 + $0xb8] sm:$0xff]
    %v614 = vld [vmem:[#allocation10 + $0xc0] sm:$0xff]
    %v615 = vld [vmem:[#allocation10 + $0xc8] sm:$0xff]
    %v616 = vld [vmem:[#allocation10 + $0xd0] sm:$0xff]
    %v617 = vld [vmem:[#allocation10 + $0xd8] sm:$0xff]
    %v618 = vld [vmem:[#allocation10 + $0xe0] sm:$0xff]
    %v619 = vld [vmem:[#allocation10 + $0xe8] sm:$0xff]
    %v620 = vld [vmem:[#allocation10 + $0xf0] sm:$0xff]
    %v621 = vld [vmem:[#allocation10 + $0xf8] sm:$0xff]
    %v622 = vld [vmem:[#allocation10 + $0x100] sm:$0xff]
    %v623 = vld [vmem:[#allocation10 + $0x108] sm:$0xff]
    %v624 = vld [vmem:[#allocation10 + $0x110] sm:$0xff]
    %v625 = vld [vmem:[#allocation10 + $0x118] sm:$0xff]
    %v626 = vld [vmem:[#allocation10 + $0x120] sm:$0xff]
    %v627 = vld [vmem:[#allocation10 + $0x128] sm:$0xff]
    %v628 = vld [vmem:[#allocation10 + $0x130] sm:$0xff]
    %v629 = vld [vmem:[#allocation10 + $0x138] sm:$0xff]
    %v630 = vld [vmem:[#allocation10 + $0x140] sm:$0xff]
    %v631 = vld [vmem:[#allocation10 + $0x148] sm:$0xff]
    %v632 = vld [vmem:[#allocation10 + $0x150] sm:$0xff]
    %v633 = vld [vmem:[#allocation10 + $0x158] sm:$0xff]
    %v634 = vld [vmem:[#allocation10 + $0x160] sm:$0xff]
    %v635 = vld [vmem:[#allocation10 + $0x168] sm:$0xff]
    %v636 = vld [vmem:[#allocation10 + $0x170] sm:$0xff]
    %v637 = vld [vmem:[#allocation10 + $0x178] sm:$0xff]
    %s638 = scalar_lea.vmem [#allocation10], 384
    %v639 = vld [vmem:[%s638] sm:$0xff]
    %v640 = vld [vmem:[%s638 + $0x8] sm:$0xff]
    %v641 = vld [vmem:[%s638 + $0x10] sm:$0xff]
    %v642 = vld [vmem:[%s638 + $0x18] sm:$0xff]
    %v643 = vld [vmem:[%s638 + $0x20] sm:$0xff]
    %v644 = vld [vmem:[%s638 + $0x28] sm:$0xff]
    %v645 = vld [vmem:[%s638 + $0x30] sm:$0xff]
    %v646 = vld [vmem:[%s638 + $0x38] sm:$0xff]
    %v647 = vld [vmem:[%s638 + $0x40] sm:$0xff]
    %v648 = vld [vmem:[%s638 + $0x48] sm:$0xff]
    %v649 = vld [vmem:[%s638 + $0x50] sm:$0xff]
    %v650 = vld [vmem:[%s638 + $0x58] sm:$0xff]
    %v651 = vld [vmem:[%s638 + $0x60] sm:$0xff]
    %v652 = vld [vmem:[%s638 + $0x68] sm:$0xff]
    %v653 = vld [vmem:[%s638 + $0x70] sm:$0xff]
    %v654 = vld [vmem:[%s638 + $0x78] sm:$0xff]
    %v655 = vld [vmem:[%s638 + $0x80] sm:$0xff]
    %v656 = vld [vmem:[%s638 + $0x88] sm:$0xff]
    %v657 = vld [vmem:[%s638 + $0x90] sm:$0xff]
    %v658 = vld [vmem:[%s638 + $0x98] sm:$0xff]
    %v659 = vld [vmem:[%s638 + $0xa0] sm:$0xff]
    %v660 = vld [vmem:[%s638 + $0xa8] sm:$0xff]
    %v661 = vld [vmem:[%s638 + $0xb0] sm:$0xff]
    %v662 = vld [vmem:[%s638 + $0xb8] sm:$0xff]
    %v663 = vld [vmem:[%s638 + $0xc0] sm:$0xff]
    %v664 = vld [vmem:[%s638 + $0xc8] sm:$0xff]
    %v665 = vld [vmem:[%s638 + $0xd0] sm:$0xff]
    %v666 = vld [vmem:[%s638 + $0xd8] sm:$0xff]
    %v667 = vld [vmem:[%s638 + $0xe0] sm:$0xff]
    %v668 = vld [vmem:[%s638 + $0xe8] sm:$0xff]
    %v669 = vld [vmem:[%s638 + $0xf0] sm:$0xff]
    %v670 = vld [vmem:[%s638 + $0xf8] sm:$0xff]
    %v671 = vld [vmem:[%s638 + $0x100] sm:$0xff]
    %v672 = vld [vmem:[%s638 + $0x108] sm:$0xff]
    %v673 = vld [vmem:[%s638 + $0x110] sm:$0xff]
    %v674 = vld [vmem:[%s638 + $0x118] sm:$0xff]
    %v675 = vld [vmem:[%s638 + $0x120] sm:$0xff]
    %v676 = vld [vmem:[%s638 + $0x128] sm:$0xff]
    %v677 = vld [vmem:[%s638 + $0x130] sm:$0xff]
    %v678 = vld [vmem:[%s638 + $0x138] sm:$0xff]
    %v679 = vld [vmem:[%s638 + $0x140] sm:$0xff]
    %v680 = vld [vmem:[%s638 + $0x148] sm:$0xff]
    %v681 = vld [vmem:[%s638 + $0x150] sm:$0xff]
    %v682 = vld [vmem:[%s638 + $0x158] sm:$0xff]
    %v683 = vld [vmem:[%s638 + $0x160] sm:$0xff]
    %v684 = vld [vmem:[%s638 + $0x168] sm:$0xff]
    %v685 = vld [vmem:[%s638 + $0x170] sm:$0xff]
    %v686 = vld [vmem:[%s638 + $0x178] sm:$0xff]
    %v687 = vld [vmem:[#allocation9] sm:$0xff]
    %v688 = vld [vmem:[#allocation9 + $0x8] sm:$0xff]
    %v689 = vld [vmem:[#allocation9 + $0x10] sm:$0xff]
    %v690 = vld [vmem:[#allocation9 + $0x18] sm:$0xff]
    %v691 = vld [vmem:[#allocation9 + $0x20] sm:$0xff]
    %v692 = vld [vmem:[#allocation9 + $0x28] sm:$0xff]
    %v693 = vld [vmem:[#allocation9 + $0x30] sm:$0xff]
    %v694 = vld [vmem:[#allocation9 + $0x38] sm:$0xff]
    %v695 = vld [vmem:[#allocation9 + $0x40] sm:$0xff]
    %v696 = vld [vmem:[#allocation9 + $0x48] sm:$0xff]
    %v697 = vld [vmem:[#allocation9 + $0x50] sm:$0xff]
    %v698 = vld [vmem:[#allocation9 + $0x58] sm:$0xff]
    %v699 = vld [vmem:[#allocation9 + $0x60] sm:$0xff]
    %v700 = vld [vmem:[#allocation9 + $0x68] sm:$0xff]
    %v701 = vld [vmem:[#allocation9 + $0x70] sm:$0xff]
    %v702 = vld [vmem:[#allocation9 + $0x78] sm:$0xff]
    %v703 = vld [vmem:[#allocation9 + $0x80] sm:$0xff]
    %v704 = vld [vmem:[#allocation9 + $0x88] sm:$0xff]
    %v705 = vld [vmem:[#allocation9 + $0x90] sm:$0xff]
    %v706 = vld [vmem:[#allocation9 + $0x98] sm:$0xff]
    %v707 = vld [vmem:[#allocation9 + $0xa0] sm:$0xff]
    %v708 = vld [vmem:[#allocation9 + $0xa8] sm:$0xff]
    %v709 = vld [vmem:[#allocation9 + $0xb0] sm:$0xff]
    %v710 = vld [vmem:[#allocation9 + $0xb8] sm:$0xff]
    %v711 = vld [vmem:[#allocation9 + $0xc0] sm:$0xff]
    %v712 = vld [vmem:[#allocation9 + $0xc8] sm:$0xff]
    %v713 = vld [vmem:[#allocation9 + $0xd0] sm:$0xff]
    %v714 = vld [vmem:[#allocation9 + $0xd8] sm:$0xff]
    %v715 = vld [vmem:[#allocation9 + $0xe0] sm:$0xff]
    %v716 = vld [vmem:[#allocation9 + $0xe8] sm:$0xff]
    %v717 = vld [vmem:[#allocation9 + $0xf0] sm:$0xff]
    %v718 = vld [vmem:[#allocation9 + $0xf8] sm:$0xff]
    %v719 = vld [vmem:[#allocation9 + $0x100] sm:$0xff]
    %v720 = vld [vmem:[#allocation9 + $0x108] sm:$0xff]
    %v721 = vld [vmem:[#allocation9 + $0x110] sm:$0xff]
    %v722 = vld [vmem:[#allocation9 + $0x118] sm:$0xff]
    %v723 = vld [vmem:[#allocation9 + $0x120] sm:$0xff]
    %v724 = vld [vmem:[#allocation9 + $0x128] sm:$0xff]
    %v725 = vld [vmem:[#allocation9 + $0x130] sm:$0xff]
    %v726 = vld [vmem:[#allocation9 + $0x138] sm:$0xff]
    %v727 = vld [vmem:[#allocation9 + $0x140] sm:$0xff]
    %v728 = vld [vmem:[#allocation9 + $0x148] sm:$0xff]
    %v729 = vld [vmem:[#allocation9 + $0x150] sm:$0xff]
    %v730 = vld [vmem:[#allocation9 + $0x158] sm:$0xff]
    %v731 = vld [vmem:[#allocation9 + $0x160] sm:$0xff]
    %v732 = vld [vmem:[#allocation9 + $0x168] sm:$0xff]
    %v733 = vld [vmem:[#allocation9 + $0x170] sm:$0xff]
    %v734 = vld [vmem:[#allocation9 + $0x178] sm:$0xff]
    %v735 = vld [vmem:[%s5] sm:$0x7]
    %v737 = vlaneseq
    %v738 = vshrl.u32 %v737, 7
    %v739 = vsub.s32 0, %v738
    %v740 = vrot.slane %v735, %v739
    %v741 = vlaneseq
    %v742 = vshrl.u32 %v741, 7
    %v743 = vsub.s32 1, %v742
    %v744 = vrot.slane %v735, %v743
    %v745 = vlaneseq
    %v746 = vshrl.u32 %v745, 7
    %v747 = vsub.s32 2, %v746
    %v748 = vrot.slane %v735, %v747
    %v752 = vld [vmem:[%s6] sm:$0x1]
    %v754 = vlaneseq
    %v755 = vshrl.u32 %v754, 7
    %v756 = vsub.s32 0, %v755
    %v757 = vrot.slane %v752, %v756
    %s759 = scalar_lea.vmem %s6, 1
    %v760 = vld [vmem:[%s759] sm:$0x1]
    %v762 = vlaneseq
    %v763 = vshrl.u32 %v762, 7
    %v764 = vsub.s32 0, %v763
    %v765 = vrot.slane %v760, %v764
    %v767 = vld [vmem:[#allocation4] sm:$0xff]
    %v768 = vld [vmem:[#allocation4 + $0x8] sm:$0xff]
    %s769 = scalar_lea.vmem [#allocation4], 16
    %v770 = vld [vmem:[%s769] sm:$0xff]
    %v771 = vld [vmem:[%s769 + $0x8] sm:$0xff]
    %v772 = vld [vmem:[#allocation3] sm:$0xff]
    %v773 = vld [vmem:[#allocation3 + $0x8] sm:$0xff]
    %v774 = vld [vmem:[#allocation3 + $0x10] sm:$0xff]
    %v775 = vld [vmem:[#allocation3 + $0x18] sm:$0xff]
    %v776 = vld [vmem:[#allocation3 + $0x20] sm:$0xff]
    %v777 = vld [vmem:[#allocation3 + $0x28] sm:$0xff]
    %778 = vmatprep.subr.mxu0 %v591
    %779 = vmatpush1.msra.mxu0 %v590
    %780 = vmatprep.subr.mxu0 %v594
    %781 = vmatpush1.msra.mxu0 %v593
    %782 = vmatprep.subr.mxu0 %v597
    %783 = vmatpush1.msra.mxu0 %v596
    %784 = vmatprep.subr.mxu0 %v600
    %785 = vmatpush1.msra.mxu0 %v599
    %786 = vmatprep.subr.mxu0 %v603
    %787 = vmatpush1.msra.mxu0 %v602
    %788 = vmatprep.subr.mxu0 %v606
    %789 = vmatpush1.msra.mxu0 %v605
    %790 = vmatprep.subr.mxu0 %v609
    %791 = vmatpush1.msra.mxu0 %v608
    %792 = vmatprep.subr.mxu0 %v612
    %793 = vmatpush1.msra.mxu0 %v611
    %794 = vmatprep.subr.mxu0 %v615
    %795 = vmatpush1.msra.mxu0 %v614
    %796 = vmatprep.subr.mxu0 %v618
    %797 = vmatpush1.msra.mxu0 %v617
    %798 = vmatprep.subr.mxu0 %v621
    %799 = vmatpush1.msra.mxu0 %v620
    %800 = vmatprep.subr.mxu0 %v624
    %801 = vmatpush1.msra.mxu0 %v623
    %802 = vmatprep.subr.mxu0 %v627
    %803 = vmatpush1.msra.mxu0 %v626
    %804 = vmatprep.subr.mxu0 %v630
    %805 = vmatpush1.msra.mxu0 %v629
    %806 = vmatprep.subr.mxu0 %v633
    %807 = vmatpush1.msra.mxu0 %v632
    %808 = vmatprep.subr.mxu0 %v636
    %809 = vmatpush1.msra.mxu0 %v635
    %810 = vmatprep.subr.mxu0 0.0
    %811 = vmatpush1.msra.mxu0 0.0
    %812 = vmatprep.subr.mxu0 0.0
    %813 = vmatpush1.msra.mxu0 0.0
    %814 = vmatprep.subr.mxu0 0.0
    %815 = vmatpush1.msra.mxu0 0.0
    %816 = vmatprep.subr.mxu0 0.0
    %817 = vmatpush1.msra.mxu0 0.0
    %818 = vmatprep.subr.mxu0 0.0
    %819 = vmatpush1.msra.mxu0 0.0
    %820 = vmatprep.subr.mxu0 0.0
    %821 = vmatpush1.msra.mxu0 0.0
    %822 = vmatprep.subr.mxu0 0.0
    %823 = vmatpush1.msra.mxu0 0.0
    %824 = vmatprep.subr.mxu0 0.0
    %825 = vmatpush1.msra.mxu0 0.0
    %826 = vmatprep.subr.mxu0 0.0
    %827 = vmatpush1.msra.mxu0 0.0
    %828 = vmatprep.subr.mxu0 0.0
    %829 = vmatpush1.msra.mxu0 0.0
    %830 = vmatprep.subr.mxu0 0.0
    %831 = vmatpush1.msra.mxu0 0.0
    %832 = vmatprep.subr.mxu0 0.0
    %833 = vmatpush1.msra.mxu0 0.0
    %834 = vmatprep.subr.mxu0 0.0
    %835 = vmatpush1.msra.mxu0 0.0
    %836 = vmatprep.subr.mxu0 0.0
    %837 = vmatpush1.msra.mxu0 0.0
    %838 = vmatprep.subr.mxu0 0.0
    %839 = vmatpush1.msra.mxu0 0.0
    %840 = vmatprep.subr.mxu0 0.0
    %841 = vmatpush1.msra.mxu0 0.0
    %842 = vmatprep.mubr.f32.mxu0 0.0
    %843 = vmatmul.mubr.f32.gmra.mrb[0].mxu0 %v767
    %v844 = vpop.f32.mrb[0].mxu0
    %v845 = vadd.f32 0.0, %v844
    %v846 = vpop.f32.mrb[0].mxu0
    %v847 = vadd.f32 0.0, %v846
    %848 = vmatprep.mubr.f32.mxu0 0.0
    %849 = vmatmul.mubr.f32.gmra.mrb[0].mxu0 %v768
    %v850 = vpop.f32.mrb[0].mxu0
    %v851 = vadd.f32 0.0, %v850
    %v852 = vpop.f32.mrb[0].mxu0
    %v853 = vadd.f32 0.0, %v852
    %854 = vdwg.mxu0
    %855 = vmatprep.subr.mxu0 0.0
    %856 = vmatpush1.msra.mxu0 %v592
    %857 = vmatprep.subr.mxu0 0.0
    %858 = vmatpush1.msra.mxu0 %v595
    %859 = vmatprep.subr.mxu0 0.0
    %860 = vmatpush1.msra.mxu0 %v598
    %861 = vmatprep.subr.mxu0 0.0
    %862 = vmatpush1.msra.mxu0 %v601
    %863 = vmatprep.subr.mxu0 0.0
    %864 = vmatpush1.msra.mxu0 %v604
    %865 = vmatprep.subr.mxu0 0.0
    %866 = vmatpush1.msra.mxu0 %v607
    %867 = vmatprep.subr.mxu0 0.0
    %868 = vmatpush1.msra.mxu0 %v610
    %869 = vmatprep.subr.mxu0 0.0
    %870 = vmatpush1.msra.mxu0 %v613
    %871 = vmatprep.subr.mxu0 0.0
    %872 = vmatpush1.msra.mxu0 %v616
    %873 = vmatprep.subr.mxu0 0.0
    %874 = vmatpush1.msra.mxu0 %v619
    %875 = vmatprep.subr.mxu0 0.0
    %876 = vmatpush1.msra.mxu0 %v622
    %877 = vmatprep.subr.mxu0 0.0
    %878 = vmatpush1.msra.mxu0 %v625
    %879 = vmatprep.subr.mxu0 0.0
    %880 = vmatpush1.msra.mxu0 %v628
    %881 = vmatprep.subr.mxu0 0.0
    %882 = vmatpush1.msra.mxu0 %v631
    %883 = vmatprep.subr.mxu0 0.0
    %884 = vmatpush1.msra.mxu0 %v634
    %885 = vmatprep.subr.mxu0 0.0
    %886 = vmatpush1.msra.mxu0 %v637
    %887 = vmatprep.subr.mxu0 0.0
    %888 = vmatpush1.msra.mxu0 0.0
    %889 = vmatprep.subr.mxu0 0.0
    %890 = vmatpush1.msra.mxu0 0.0
    %891 = vmatprep.subr.mxu0 0.0
    %892 = vmatpush1.msra.mxu0 0.0
    %893 = vmatprep.subr.mxu0 0.0
    %894 = vmatpush1.msra.mxu0 0.0
    %895 = vmatprep.subr.mxu0 0.0
    %896 = vmatpush1.msra.mxu0 0.0
    %897 = vmatprep.subr.mxu0 0.0
    %898 = vmatpush1.msra.mxu0 0.0
    %899 = vmatprep.subr.mxu0 0.0
    %900 = vmatpush1.msra.mxu0 0.0
    %901 = vmatprep.subr.mxu0 0.0
    %902 = vmatpush1.msra.mxu0 0.0
    %903 = vmatprep.subr.mxu0 0.0
    %904 = vmatpush1.msra.mxu0 0.0
    %905 = vmatprep.subr.mxu0 0.0
    %906 = vmatpush1.msra.mxu0 0.0
    %907 = vmatprep.subr.mxu0 0.0
    %908 = vmatpush1.msra.mxu0 0.0
    %909 = vmatprep.subr.mxu0 0.0
    %910 = vmatpush1.msra.mxu0 0.0
    %911 = vmatprep.subr.mxu0 0.0
    %912 = vmatpush1.msra.mxu0 0.0
    %913 = vmatprep.subr.mxu0 0.0
    %914 = vmatpush1.msra.mxu0 0.0
    %915 = vmatprep.subr.mxu0 0.0
    %916 = vmatpush1.msra.mxu0 0.0
    %917 = vmatprep.subr.mxu0 0.0
    %918 = vmatpush1.msra.mxu0 0.0
    %919 = vmatprep.mubr.f32.mxu0 0.0
    %920 = vmatmul.mubr.f32.gmra.mrb[0].mxu0 %v767
    %v921 = vpop.f32.mrb[0].mxu0
    %v922 = vadd.f32 0.0, %v921
    %v923 = vpop.f32.mrb[0].mxu0
    %924 = vmatprep.mubr.f32.mxu0 0.0
    %925 = vmatmul.mubr.f32.gmra.mrb[0].mxu0 %v768
    %v926 = vpop.f32.mrb[0].mxu0
    %v927 = vadd.f32 0.0, %v926
    %v928 = vpop.f32.mrb[0].mxu0
    %929 = vdwg.mxu0
    %v930 = vadd.f32 %v772, %v845
    %v931 = vadd.f32 %v775, %v851
    %v932 = vxor.u32 %v930, 2147483648
    %v933 = vxor.u32 %v931, 2147483648
    %v934 = vmul.f32 %v932, 1.442695
    %v935 = vpow.pop %v934
    %v936 = vmul.f32 %v933, 1.442695
    %v937 = vpow.pop %v936
    %v938 = vadd.f32 %v935, 1.0
    %v939 = vadd.f32 %v937, 1.0
    %v940 = vrcp.pop %v938
    %v941 = vmul.f32 1.0, %v940
    %v942 = vrcp.pop %v939
    %v943 = vmul.f32 1.0, %v942
    %v944 = vadd.f32 %v773, %v847
    %v945 = vadd.f32 %v776, %v853
    %v946 = vxor.u32 %v944, 2147483648
    %v947 = vxor.u32 %v945, 2147483648
    %v948 = vmul.f32 %v946, 1.442695
    %v949 = vpow.pop %v948
    %v950 = vmul.f32 %v947, 1.442695
    %v951 = vpow.pop %v950
    %v952 = vadd.f32 %v949, 1.0
    %v953 = vadd.f32 %v951, 1.0
    %v954 = vrcp.pop %v952
    %v955 = vmul.f32 1.0, %v954
    %v956 = vrcp.pop %v953
    %v957 = vmul.f32 1.0, %v956
    %v958 = vadd.f32 %v922, %v757
    %v959 = vadd.f32 %v927, %v757
    %v960 = vmul.f32 %v941, %v958
    %v961 = vmul.f32 %v943, %v959
    %v962 = vadd.f32 %v774, %v960
    %v963 = vadd.f32 %v777, %v961
    %v964 = vtanh.pop %v962
    %v965 = vtanh.pop %v963
    %v966 = vsub.f32 1.0, %v955
    %v967 = vsub.f32 1.0, %v957
    %v968 = vmul.f32 %v966, %v964
    %v969 = vmul.f32 %v967, %v965
    %v970 = vmul.f32 %v955, %v767
    %v971 = vmul.f32 %v957, %v768
    %v972 = vadd.f32 %v968, %v970
    %v973 = vadd.f32 %v969, %v971
    %974 = vmatprep.subr.mxu0 %v688
    %975 = vmatpush1.msra.mxu0 %v687
    %976 = vmatprep.subr.mxu0 %v691
    %977 = vmatpush1.msra.mxu0 %v690
    %978 = vmatprep.subr.mxu0 %v694
    %979 = vmatpush1.msra.mxu0 %v693
    %980 = vmatprep.subr.mxu0 %v697
    %981 = vmatpush1.msra.mxu0 %v696
    %982 = vmatprep.subr.mxu0 %v700
    %983 = vmatpush1.msra.mxu0 %v699
    %984 = vmatprep.subr.mxu0 %v703
    %985 = vmatpush1.msra.mxu0 %v702
    %986 = vmatprep.subr.mxu0 %v706
    %987 = vmatpush1.msra.mxu0 %v705
    %988 = vmatprep.subr.mxu0 %v709
    %989 = vmatpush1.msra.mxu0 %v708
    %990 = vmatprep.subr.mxu0 %v712
    %991 = vmatpush1.msra.mxu0 %v711
    %992 = vmatprep.subr.mxu0 %v715
    %993 = vmatpush1.msra.mxu0 %v714
    %994 = vmatprep.subr.mxu0 %v718
    %995 = vmatpush1.msra.mxu0 %v717
    %996 = vmatprep.subr.mxu0 %v721
    %997 = vmatpush1.msra.mxu0 %v720
    %998 = vmatprep.subr.mxu0 %v724
    %999 = vmatpush1.msra.mxu0 %v723
    %1000 = vmatprep.subr.mxu0 %v727
    %1001 = vmatpush1.msra.mxu0 %v726
    %1002 = vmatprep.subr.mxu0 %v730
    %1003 = vmatpush1.msra.mxu0 %v729
    %1004 = vmatprep.subr.mxu0 %v733
    %1005 = vmatpush1.msra.mxu0 %v732
    %1006 = vmatprep.subr.mxu0 0.0
    %1007 = vmatpush1.msra.mxu0 0.0
    %1008 = vmatprep.subr.mxu0 0.0
    %1009 = vmatpush1.msra.mxu0 0.0
    %1010 = vmatprep.subr.mxu0 0.0
    %1011 = vmatpush1.msra.mxu0 0.0
    %1012 = vmatprep.subr.mxu0 0.0
    %1013 = vmatpush1.msra.mxu0 0.0
    %1014 = vmatprep.subr.mxu0 0.0
    %1015 = vmatpush1.msra.mxu0 0.0
    %1016 = vmatprep.subr.mxu0 0.0
    %1017 = vmatpush1.msra.mxu0 0.0
    %1018 = vmatprep.subr.mxu0 0.0
    %1019 = vmatpush1.msra.mxu0 0.0
    %1020 = vmatprep.subr.mxu0 0.0
    %1021 = vmatpush1.msra.mxu0 0.0
    %1022 = vmatprep.subr.mxu0 0.0
    %1023 = vmatpush1.msra.mxu0 0.0
    %1024 = vmatprep.subr.mxu0 0.0
    %1025 = vmatpush1.msra.mxu0 0.0
    %1026 = vmatprep.subr.mxu0 0.0
    %1027 = vmatpush1.msra.mxu0 0.0
    %1028 = vmatprep.subr.mxu0 0.0
    %1029 = vmatpush1.msra.mxu0 0.0
    %1030 = vmatprep.subr.mxu0 0.0
    %1031 = vmatpush1.msra.mxu0 0.0
    %1032 = vmatprep.subr.mxu0 0.0
    %1033 = vmatpush1.msra.mxu0 0.0
    %1034 = vmatprep.subr.mxu0 0.0
    %1035 = vmatpush1.msra.mxu0 0.0
    %1036 = vmatprep.subr.mxu0 0.0
    %1037 = vmatpush1.msra.mxu0 0.0
    %1038 = vmatprep.mubr.f32.mxu0 0.0
    %1039 = vmatmul.mubr.f32.gmra.mrb[0].mxu0 %v972
    %v1040 = vpop.f32.mrb[0].mxu0
    %v1041 = vadd.f32 %v740, %v1040
    %v1042 = vpop.f32.mrb[0].mxu0
    %v1043 = vadd.f32 %v744, %v1042
    %1044 = vmatprep.mubr.f32.mxu0 0.0
    %1045 = vmatmul.mubr.f32.gmra.mrb[0].mxu0 %v973
    %v1046 = vpop.f32.mrb[0].mxu0
    %v1047 = vadd.f32 %v740, %v1046
    %v1048 = vpop.f32.mrb[0].mxu0
    %v1049 = vadd.f32 %v744, %v1048
    %1050 = vdwg.mxu0
    %1051 = vmatprep.subr.mxu0 0.0
    %1052 = vmatpush1.msra.mxu0 %v689
    %1053 = vmatprep.subr.mxu0 0.0
    %1054 = vmatpush1.msra.mxu0 %v692
    %1055 = vmatprep.subr.mxu0 0.0
    %1056 = vmatpush1.msra.mxu0 %v695
    %1057 = vmatprep.subr.mxu0 0.0
    %1058 = vmatpush1.msra.mxu0 %v698
    %1059 = vmatprep.subr.mxu0 0.0
    %1060 = vmatpush1.msra.mxu0 %v701
    %1061 = vmatprep.subr.mxu0 0.0
    %1062 = vmatpush1.msra.mxu0 %v704
    %1063 = vmatprep.subr.mxu0 0.0
    %1064 = vmatpush1.msra.mxu0 %v707
    %1065 = vmatprep.subr.mxu0 0.0
    %1066 = vmatpush1.msra.mxu0 %v710
    %1067 = vmatprep.subr.mxu0 0.0
    %1068 = vmatpush1.msra.mxu0 %v713
    %1069 = vmatprep.subr.mxu0 0.0
    %1070 = vmatpush1.msra.mxu0 %v716
    %1071 = vmatprep.subr.mxu0 0.0
    %1072 = vmatpush1.msra.mxu0 %v719
    %1073 = vmatprep.subr.mxu0 0.0
    %1074 = vmatpush1.msra.mxu0 %v722
    %1075 = vmatprep.subr.mxu0 0.0
    %1076 = vmatpush1.msra.mxu0 %v725
    %1077 = vmatprep.subr.mxu0 0.0
    %1078 = vmatpush1.msra.mxu0 %v728
    %1079 = vmatprep.subr.mxu0 0.0
    %1080 = vmatpush1.msra.mxu0 %v731
    %1081 = vmatprep.subr.mxu0 0.0
    %1082 = vmatpush1.msra.mxu0 %v734
    %1083 = vmatprep.subr.mxu0 0.0
    %1084 = vmatpush1.msra.mxu0 0.0
    %1085 = vmatprep.subr.mxu0 0.0
    %1086 = vmatpush1.msra.mxu0 0.0
    %1087 = vmatprep.subr.mxu0 0.0
    %1088 = vmatpush1.msra.mxu0 0.0
    %1089 = vmatprep.subr.mxu0 0.0
    %1090 = vmatpush1.msra.mxu0 0.0
    %1091 = vmatprep.subr.mxu0 0.0
    %1092 = vmatpush1.msra.mxu0 0.0
    %1093 = vmatprep.subr.mxu0 0.0
    %1094 = vmatpush1.msra.mxu0 0.0
    %1095 = vmatprep.subr.mxu0 0.0
    %1096 = vmatpush1.msra.mxu0 0.0
    %1097 = vmatprep.subr.mxu0 0.0
    %1098 = vmatpush1.msra.mxu0 0.0
    %1099 = vmatprep.subr.mxu0 0.0
    %1100 = vmatpush1.msra.mxu0 0.0
    %1101 = vmatprep.subr.mxu0 0.0
    %1102 = vmatpush1.msra.mxu0 0.0
    %1103 = vmatprep.subr.mxu0 0.0
    %1104 = vmatpush1.msra.mxu0 0.0
    %1105 = vmatprep.subr.mxu0 0.0
    %1106 = vmatpush1.msra.mxu0 0.0
    %1107 = vmatprep.subr.mxu0 0.0
    %1108 = vmatpush1.msra.mxu0 0.0
    %1109 = vmatprep.subr.mxu0 0.0
    %1110 = vmatpush1.msra.mxu0 0.0
    %1111 = vmatprep.subr.mxu0 0.0
    %1112 = vmatpush1.msra.mxu0 0.0
    %1113 = vmatprep.subr.mxu0 0.0
    %1114 = vmatpush1.msra.mxu0 0.0
    %1115 = vmatprep.mubr.f32.mxu0 0.0
    %1116 = vmatmul.mubr.f32.gmra.mrb[0].mxu0 %v972
    %v1117 = vpop.f32.mrb[0].mxu0
    %v1118 = vadd.f32 %v748, %v1117
    %v1119 = vpop.f32.mrb[0].mxu0
    %1120 = vmatprep.mubr.f32.mxu0 0.0
    %1121 = vmatmul.mubr.f32.gmra.mrb[0].mxu0 %v973
    %v1122 = vpop.f32.mrb[0].mxu0
    %v1123 = vadd.f32 %v748, %v1122
    %v1124 = vpop.f32.mrb[0].mxu0
    %1125 = vdwg.mxu0
    %1126 = vmatprep.subr.mxu0 %v640
    %1127 = vmatpush1.msra.mxu0 %v639
    %1128 = vmatprep.subr.mxu0 %v643
    %1129 = vmatpush1.msra.mxu0 %v642
    %1130 = vmatprep.subr.mxu0 %v646
    %1131 = vmatpush1.msra.mxu0 %v645
    %1132 = vmatprep.subr.mxu0 %v649
    %1133 = vmatpush1.msra.mxu0 %v648
    %1134 = vmatprep.subr.mxu0 %v652
    %1135 = vmatpush1.msra.mxu0 %v651
    %1136 = vmatprep.subr.mxu0 %v655
    %1137 = vmatpush1.msra.mxu0 %v654
    %1138 = vmatprep.subr.mxu0 %v658
    %1139 = vmatpush1.msra.mxu0 %v657
    %1140 = vmatprep.subr.mxu0 %v661
    %1141 = vmatpush1.msra.mxu0 %v660
    %1142 = vmatprep.subr.mxu0 %v664
    %1143 = vmatpush1.msra.mxu0 %v663
    %1144 = vmatprep.subr.mxu0 %v667
    %1145 = vmatpush1.msra.mxu0 %v666
    %1146 = vmatprep.subr.mxu0 %v670
    %1147 = vmatpush1.msra.mxu0 %v669
    %1148 = vmatprep.subr.mxu0 %v673
    %1149 = vmatpush1.msra.mxu0 %v672
    %1150 = vmatprep.subr.mxu0 %v676
    %1151 = vmatpush1.msra.mxu0 %v675
    %1152 = vmatprep.subr.mxu0 %v679
    %1153 = vmatpush1.msra.mxu0 %v678
    %1154 = vmatprep.subr.mxu0 %v682
    %1155 = vmatpush1.msra.mxu0 %v681
    %1156 = vmatprep.subr.mxu0 %v685
    %1157 = vmatpush1.msra.mxu0 %v684
    %1158 = vmatprep.subr.mxu0 0.0
    %1159 = vmatpush1.msra.mxu0 0.0
    %1160 = vmatprep.subr.mxu0 0.0
    %1161 = vmatpush1.msra.mxu0 0.0
    %1162 = vmatprep.subr.mxu0 0.0
    %1163 = vmatpush1.msra.mxu0 0.0
    %1164 = vmatprep.subr.mxu0 0.0
    %1165 = vmatpush1.msra.mxu0 0.0
    %1166 = vmatprep.subr.mxu0 0.0
    %1167 = vmatpush1.msra.mxu0 0.0
    %1168 = vmatprep.subr.mxu0 0.0
    %1169 = vmatpush1.msra.mxu0 0.0
    %1170 = vmatprep.subr.mxu0 0.0
    %1171 = vmatpush1.msra.mxu0 0.0
    %1172 = vmatprep.subr.mxu0 0.0
    %1173 = vmatpush1.msra.mxu0 0.0
    %1174 = vmatprep.subr.mxu0 0.0
    %1175 = vmatpush1.msra.mxu0 0.0
    %1176 = vmatprep.subr.mxu0 0.0
    %1177 = vmatpush1.msra.mxu0 0.0
    %1178 = vmatprep.subr.mxu0 0.0
    %1179 = vmatpush1.msra.mxu0 0.0
    %1180 = vmatprep.subr.mxu0 0.0
    %1181 = vmatpush1.msra.mxu0 0.0
    %1182 = vmatprep.subr.mxu0 0.0
    %1183 = vmatpush1.msra.mxu0 0.0
    %1184 = vmatprep.subr.mxu0 0.0
    %1185 = vmatpush1.msra.mxu0 0.0
    %1186 = vmatprep.subr.mxu0 0.0
    %1187 = vmatpush1.msra.mxu0 0.0
    %1188 = vmatprep.subr.mxu0 0.0
    %1189 = vmatpush1.msra.mxu0 0.0
    %1190 = vmatprep.mubr.f32.mxu0 0.0
    %1191 = vmatmul.mubr.f32.gmra.mrb[0].mxu0 %v770
    %v1192 = vpop.f32.mrb[0].mxu0
    %v1193 = vadd.f32 0.0, %v1192
    %v1194 = vpop.f32.mrb[0].mxu0
    %v1195 = vadd.f32 0.0, %v1194
    %1196 = vmatprep.mubr.f32.mxu0 0.0
    %1197 = vmatmul.mubr.f32.gmra.mrb[0].mxu0 %v771
    %v1198 = vpop.f32.mrb[0].mxu0
    %v1199 = vadd.f32 0.0, %v1198
    %v1200 = vpop.f32.mrb[0].mxu0
    %v1201 = vadd.f32 0.0, %v1200
    %1202 = vdwg.mxu0
    %1203 = vmatprep.subr.mxu0 0.0
    %1204 = vmatpush1.msra.mxu0 %v641
    %1205 = vmatprep.subr.mxu0 0.0
    %1206 = vmatpush1.msra.mxu0 %v644
    %1207 = vmatprep.subr.mxu0 0.0
    %1208 = vmatpush1.msra.mxu0 %v647
    %1209 = vmatprep.subr.mxu0 0.0
    %1210 = vmatpush1.msra.mxu0 %v650
    %1211 = vmatprep.subr.mxu0 0.0
    %1212 = vmatpush1.msra.mxu0 %v653
    %1213 = vmatprep.subr.mxu0 0.0
    %1214 = vmatpush1.msra.mxu0 %v656
    %1215 = vmatprep.subr.mxu0 0.0
    %1216 = vmatpush1.msra.mxu0 %v659
    %1217 = vmatprep.subr.mxu0 0.0
    %1218 = vmatpush1.msra.mxu0 %v662
    %1219 = vmatprep.subr.mxu0 0.0
    %1220 = vmatpush1.msra.mxu0 %v665
    %1221 = vmatprep.subr.mxu0 0.0
    %1222 = vmatpush1.msra.mxu0 %v668
    %1223 = vmatprep.subr.mxu0 0.0
    %1224 = vmatpush1.msra.mxu0 %v671
    %1225 = vmatprep.subr.mxu0 0.0
    %1226 = vmatpush1.msra.mxu0 %v674
    %1227 = vmatprep.subr.mxu0 0.0
    %1228 = vmatpush1.msra.mxu0 %v677
    %1229 = vmatprep.subr.mxu0 0.0
    %1230 = vmatpush1.msra.mxu0 %v680
    %1231 = vmatprep.subr.mxu0 0.0
    %1232 = vmatpush1.msra.mxu0 %v683
    %1233 = vmatprep.subr.mxu0 0.0
    %1234 = vmatpush1.msra.mxu0 %v686
    %1235 = vmatprep.subr.mxu0 0.0
    %1236 = vmatpush1.msra.mxu0 0.0
    %1237 = vmatprep.subr.mxu0 0.0
    %1238 = vmatpush1.msra.mxu0 0.0
    %1239 = vmatprep.subr.mxu0 0.0
    %1240 = vmatpush1.msra.mxu0 0.0
    %1241 = vmatprep.subr.mxu0 0.0
    %1242 = vmatpush1.msra.mxu0 0.0
    %1243 = vmatprep.subr.mxu0 0.0
    %1244 = vmatpush1.msra.mxu0 0.0
    %1245 = vmatprep.subr.mxu0 0.0
    %1246 = vmatpush1.msra.mxu0 0.0
    %1247 = vmatprep.subr.mxu0 0.0
    %1248 = vmatpush1.msra.mxu0 0.0
    %1249 = vmatprep.subr.mxu0 0.0
    %1250 = vmatpush1.msra.mxu0 0.0
    %1251 = vmatprep.subr.mxu0 0.0
    %1252 = vmatpush1.msra.mxu0 0.0
    %1253 = vmatprep.subr.mxu0 0.0
    %1254 = vmatpush1.msra.mxu0 0.0
    %1255 = vmatprep.subr.mxu0 0.0
    %1256 = vmatpush1.msra.mxu0 0.0
    %1257 = vmatprep.subr.mxu0 0.0
    %1258 = vmatpush1.msra.mxu0 0.0
    %1259 = vmatprep.subr.mxu0 0.0
    %1260 = vmatpush1.msra.mxu0 0.0
    %1261 = vmatprep.subr.mxu0 0.0
    %1262 = vmatpush1.msra.mxu0 0.0
    %1263 = vmatprep.subr.mxu0 0.0
    %1264 = vmatpush1.msra.mxu0 0.0
    %1265 = vmatprep.subr.mxu0 0.0
    %1266 = vmatpush1.msra.mxu0 0.0
    %1267 = vmatprep.mubr.f32.mxu0 0.0
    %1268 = vmatmul.mubr.f32.gmra.mrb[0].mxu0 %v770
    %v1269 = vpop.f32.mrb[0].mxu0
    %v1270 = vadd.f32 0.0, %v1269
    %v1271 = vpop.f32.mrb[0].mxu0
    %1272 = vmatprep.mubr.f32.mxu0 0.0
    %1273 = vmatmul.mubr.f32.gmra.mrb[0].mxu0 %v771
    %v1274 = vpop.f32.mrb[0].mxu0
    %v1275 = vadd.f32 0.0, %v1274
    %v1276 = vpop.f32.mrb[0].mxu0
    %1277 = vdwg.mxu0
    %v1278 = vadd.f32 %v1041, %v1193
    %v1279 = vadd.f32 %v1047, %v1199
    %v1280 = vxor.u32 %v1278, 2147483648
    %v1281 = vxor.u32 %v1279, 2147483648
    %v1282 = vmul.f32 %v1280, 1.442695
    %v1283 = vpow.pop %v1282
    %v1284 = vmul.f32 %v1281, 1.442695
    %v1285 = vpow.pop %v1284
    %v1286 = vadd.f32 %v1283, 1.0
    %v1287 = vadd.f32 %v1285, 1.0
    %v1288 = vrcp.pop %v1286
    %v1289 = vmul.f32 1.0, %v1288
    %v1290 = vrcp.pop %v1287
    %v1291 = vmul.f32 1.0, %v1290
    %v1292 = vadd.f32 %v1043, %v1195
    %v1293 = vadd.f32 %v1049, %v1201
    %v1294 = vxor.u32 %v1292, 2147483648
    %v1295 = vxor.u32 %v1293, 2147483648
    %v1296 = vmul.f32 %v1294, 1.442695
    %v1297 = vpow.pop %v1296
    %v1298 = vmul.f32 %v1295, 1.442695
    %v1299 = vpow.pop %v1298
    %v1300 = vadd.f32 %v1297, 1.0
    %v1301 = vadd.f32 %v1299, 1.0
    %v1302 = vrcp.pop %v1300
    %v1303 = vmul.f32 1.0, %v1302
    %v1304 = vrcp.pop %v1301
    %v1305 = vmul.f32 1.0, %v1304
    %v1306 = vadd.f32 %v1270, %v765
    %v1307 = vadd.f32 %v1275, %v765
    %v1308 = vmul.f32 %v1289, %v1306
    %v1309 = vmul.f32 %v1291, %v1307
    %v1310 = vadd.f32 %v1118, %v1308
    %v1311 = vadd.f32 %v1123, %v1309
    %v1312 = vtanh.pop %v1310
    %v1313 = vtanh.pop %v1311
    %v1314 = vsub.f32 1.0, %v1303
    %v1315 = vsub.f32 1.0, %v1305
    %v1316 = vmul.f32 %v1314, %v1312
    %v1317 = vmul.f32 %v1315, %v1313
    %v1318 = vmul.f32 %v1303, %v770
    %v1319 = vmul.f32 %v1305, %v771
    %v1320 = vadd.f32 %v1316, %v1318
    %v1321 = vadd.f32 %v1317, %v1319
    %1322 = vst [vmem:[#allocation2] sm:$0xff] %v1320
    %1323 = vst [vmem:[#allocation2 + $0x8] sm:$0xff] %v1321
    %v1324 = vld [vmem:[#allocation3 + $0x30] sm:$0xff]
    %v1325 = vld [vmem:[#allocation3 + $0x38] sm:$0xff]
    %v1326 = vld [vmem:[#allocation3 + $0x40] sm:$0xff]
    %v1327 = vld [vmem:[#allocation3 + $0x48] sm:$0xff]
    %v1328 = vld [vmem:[#allocation3 + $0x50] sm:$0xff]
    %v1329 = vld [vmem:[#allocation3 + $0x58] sm:$0xff]
    %1330 = vmatprep.subr.mxu0 %v591
    %1331 = vmatpush1.msra.mxu0 %v590
    %1332 = vmatprep.subr.mxu0 %v594
    %1333 = vmatpush1.msra.mxu0 %v593
    %1334 = vmatprep.subr.mxu0 %v597
    %1335 = vmatpush1.msra.mxu0 %v596
    %1336 = vmatprep.subr.mxu0 %v600
    %1337 = vmatpush1.msra.mxu0 %v599
    %1338 = vmatprep.subr.mxu0 %v603
    %1339 = vmatpush1.msra.mxu0 %v602
    %1340 = vmatprep.subr.mxu0 %v606
    %1341 = vmatpush1.msra.mxu0 %v605
    %1342 = vmatprep.subr.mxu0 %v609
    %1343 = vmatpush1.msra.mxu0 %v608
    %1344 = vmatprep.subr.mxu0 %v612
    %1345 = vmatpush1.msra.mxu0 %v611
    %1346 = vmatprep.subr.mxu0 %v615
    %1347 = vmatpush1.msra.mxu0 %v614
    %1348 = vmatprep.subr.mxu0 %v618
    %1349 = vmatpush1.msra.mxu0 %v617
    %1350 = vmatprep.subr.mxu0 %v621
    %1351 = vmatpush1.msra.mxu0 %v620
    %1352 = vmatprep.subr.mxu0 %v624
    %1353 = vmatpush1.msra.mxu0 %v623
    %1354 = vmatprep.subr.mxu0 %v627
    %1355 = vmatpush1.msra.mxu0 %v626
    %1356 = vmatprep.subr.mxu0 %v630
    %1357 = vmatpush1.msra.mxu0 %v629
    %1358 = vmatprep.subr.mxu0 %v633
    %1359 = vmatpush1.msra.mxu0 %v632
    %1360 = vmatprep.subr.mxu0 %v636
    %1361 = vmatpush1.msra.mxu0 %v635
    %1362 = vmatprep.subr.mxu0 0.0
    %1363 = vmatpush1.msra.mxu0 0.0
    %1364 = vmatprep.subr.mxu0 0.0
    %1365 = vmatpush1.msra.mxu0 0.0
    %1366 = vmatprep.subr.mxu0 0.0
    %1367 = vmatpush1.msra.mxu0 0.0
    %1368 = vmatprep.subr.mxu0 0.0
    %1369 = vmatpush1.msra.mxu0 0.0
    %1370 = vmatprep.subr.mxu0 0.0
    %1371 = vmatpush1.msra.mxu0 0.0
    %1372 = vmatprep.subr.mxu0 0.0
    %1373 = vmatpush1.msra.mxu0 0.0
    %1374 = vmatprep.subr.mxu0 0.0
    %1375 = vmatpush1.msra.mxu0 0.0
    %1376 = vmatprep.subr.mxu0 0.0
    %1377 = vmatpush1.msra.mxu0 0.0
    %1378 = vmatprep.subr.mxu0 0.0
    %1379 = vmatpush1.msra.mxu0 0.0
    %1380 = vmatprep.subr.mxu0 0.0
    %1381 = vmatpush1.msra.mxu0 0.0
    %1382 = vmatprep.subr.mxu0 0.0
    %1383 = vmatpush1.msra.mxu0 0.0
    %1384 = vmatprep.subr.mxu0 0.0
    %1385 = vmatpush1.msra.mxu0 0.0
    %1386 = vmatprep.subr.mxu0 0.0
    %1387 = vmatpush1.msra.mxu0 0.0
    %1388 = vmatprep.subr.mxu0 0.0
    %1389 = vmatpush1.msra.mxu0 0.0
    %1390 = vmatprep.subr.mxu0 0.0
    %1391 = vmatpush1.msra.mxu0 0.0
    %1392 = vmatprep.subr.mxu0 0.0
    %1393 = vmatpush1.msra.mxu0 0.0
    %1394 = vmatprep.mubr.f32.mxu0 0.0
    %1395 = vmatmul.mubr.f32.gmra.mrb[0].mxu0 %v972
    %v1396 = vpop.f32.mrb[0].mxu0
    %v1397 = vadd.f32 0.0, %v1396
    %v1398 = vpop.f32.mrb[0].mxu0
    %v1399 = vadd.f32 0.0, %v1398
    %1400 = vmatprep.mubr.f32.mxu0 0.0
    %1401 = vmatmul.mubr.f32.gmra.mrb[0].mxu0 %v973
    %v1402 = vpop.f32.mrb[0].mxu0
    %v1403 = vadd.f32 0.0, %v1402
    %v1404 = vpop.f32.mrb[0].mxu0
    %v1405 = vadd.f32 0.0, %v1404
    %1406 = vdwg.mxu0
    %1407 = vmatprep.subr.mxu0 0.0
    %1408 = vmatpush1.msra.mxu0 %v592
    %1409 = vmatprep.subr.mxu0 0.0
    %1410 = vmatpush1.msra.mxu0 %v595
    %1411 = vmatprep.subr.mxu0 0.0
    %1412 = vmatpush1.msra.mxu0 %v598
    %1413 = vmatprep.subr.mxu0 0.0
    %1414 = vmatpush1.msra.mxu0 %v601
    %1415 = vmatprep.subr.mxu0 0.0
    %1416 = vmatpush1.msra.mxu0 %v604
    %1417 = vmatprep.subr.mxu0 0.0
    %1418 = vmatpush1.msra.mxu0 %v607
    %1419 = vmatprep.subr.mxu0 0.0
    %1420 = vmatpush1.msra.mxu0 %v610
    %1421 = vmatprep.subr.mxu0 0.0
    %1422 = vmatpush1.msra.mxu0 %v613
    %1423 = vmatprep.subr.mxu0 0.0
    %1424 = vmatpush1.msra.mxu0 %v616
    %1425 = vmatprep.subr.mxu0 0.0
    %1426 = vmatpush1.msra.mxu0 %v619
    %1427 = vmatprep.subr.mxu0 0.0
    %1428 = vmatpush1.msra.mxu0 %v622
    %1429 = vmatprep.subr.mxu0 0.0
    %1430 = vmatpush1.msra.mxu0 %v625
    %1431 = vmatprep.subr.mxu0 0.0
    %1432 = vmatpush1.msra.mxu0 %v628
    %1433 = vmatprep.subr.mxu0 0.0
    %1434 = vmatpush1.msra.mxu0 %v631
    %1435 = vmatprep.subr.mxu0 0.0
    %1436 = vmatpush1.msra.mxu0 %v634
    %1437 = vmatprep.subr.mxu0 0.0
    %1438 = vmatpush1.msra.mxu0 %v637
    %1439 = vmatprep.subr.mxu0 0.0
    %1440 = vmatpush1.msra.mxu0 0.0
    %1441 = vmatprep.subr.mxu0 0.0
    %1442 = vmatpush1.msra.mxu0 0.0
    %1443 = vmatprep.subr.mxu0 0.0
    %1444 = vmatpush1.msra.mxu0 0.0
    %1445 = vmatprep.subr.mxu0 0.0
    %1446 = vmatpush1.msra.mxu0 0.0
    %1447 = vmatprep.subr.mxu0 0.0
    %1448 = vmatpush1.msra.mxu0 0.0
    %1449 = vmatprep.subr.mxu0 0.0
    %1450 = vmatpush1.msra.mxu0 0.0
    %1451 = vmatprep.subr.mxu0 0.0
    %1452 = vmatpush1.msra.mxu0 0.0
    %1453 = vmatprep.subr.mxu0 0.0
    %1454 = vmatpush1.msra.mxu0 0.0
    %1455 = vmatprep.subr.mxu0 0.0
    %1456 = vmatpush1.msra.mxu0 0.0
    %1457 = vmatprep.subr.mxu0 0.0
    %1458 = vmatpush1.msra.mxu0 0.0
    %1459 = vmatprep.subr.mxu0 0.0
    %1460 = vmatpush1.msra.mxu0 0.0
    %1461 = vmatprep.subr.mxu0 0.0
    %1462 = vmatpush1.msra.mxu0 0.0
    %1463 = vmatprep.subr.mxu0 0.0
    %1464 = vmatpush1.msra.mxu0 0.0
    %1465 = vmatprep.subr.mxu0 0.0
    %1466 = vmatpush1.msra.mxu0 0.0
    %1467 = vmatprep.subr.mxu0 0.0
    %1468 = vmatpush1.msra.mxu0 0.0
    %1469 = vmatprep.subr.mxu0 0.0
    %1470 = vmatpush1.msra.mxu0 0.0
    %1471 = vmatprep.mubr.f32.mxu0 0.0
    %1472 = vmatmul.mubr.f32.gmra.mrb[0].mxu0 %v972
    %v1473 = vpop.f32.mrb[0].mxu0
    %v1474 = vadd.f32 0.0, %v1473
    %v1475 = vpop.f32.mrb[0].mxu0
    %1476 = vmatprep.mubr.f32.mxu0 0.0
    %1477 = vmatmul.mubr.f32.gmra.mrb[0].mxu0 %v973
    %v1478 = vpop.f32.mrb[0].mxu0
    %v1479 = vadd.f32 0.0, %v1478
    %v1480 = vpop.f32.mrb[0].mxu0
    %1481 = vdwg.mxu0
    %v1482 = vadd.f32 %v1324, %v1397
    %v1483 = vadd.f32 %v1327, %v1403
    %v1484 = vxor.u32 %v1482, 2147483648
    %v1485 = vxor.u32 %v1483, 2147483648
    %v1486 = vmul.f32 %v1484, 1.442695
    %v1487 = vpow.pop %v1486
    %v1488 = vmul.f32 %v1485, 1.442695
    %v1489 = vpow.pop %v1488
    %v1490 = vadd.f32 %v1487, 1.0
    %v1491 = vadd.f32 %v1489, 1.0
    %v1492 = vrcp.pop %v1490
    %v1493 = vmul.f32 1.0, %v1492
    %v1494 = vrcp.pop %v1491
    %v1495 = vmul.f32 1.0, %v1494
    %v1496 = vadd.f32 %v1325, %v1399
    %v1497 = vadd.f32 %v1328, %v1405
    %v1498 = vxor.u32 %v1496, 2147483648
    %v1499 = vxor.u32 %v1497, 2147483648
    %v1500 = vmul.f32 %v1498, 1.442695
    %v1501 = vpow.pop %v1500
    %v1502 = vmul.f32 %v1499, 1.442695
    %v1503 = vpow.pop %v1502
    %v1504 = vadd.f32 %v1501, 1.0
    %v1505 = vadd.f32 %v1503, 1.0
    %v1506 = vrcp.pop %v1504
    %v1507 = vmul.f32 1.0, %v1506
    %v1508 = vrcp.pop %v1505
    %v1509 = vmul.f32 1.0, %v1508
    %v1510 = vadd.f32 %v1474, %v757
    %v1511 = vadd.f32 %v1479, %v757
    %v1512 = vmul.f32 %v1493, %v1510
    %v1513 = vmul.f32 %v1495, %v1511
    %v1514 = vadd.f32 %v1326, %v1512
    %v1515 = vadd.f32 %v1329, %v1513
    %v1516 = vtanh.pop %v1514
    %v1517 = vtanh.pop %v1515
    %v1518 = vsub.f32 1.0, %v1507
    %v1519 = vsub.f32 1.0, %v1509
    %v1520 = vmul.f32 %v1518, %v1516
    %v1521 = vmul.f32 %v1519, %v1517
    %v1522 = vmul.f32 %v1507, %v972
    %v1523 = vmul.f32 %v1509, %v973
    %v1524 = vadd.f32 %v1520, %v1522
    %v1525 = vadd.f32 %v1521, %v1523
    %1526 = vmatprep.subr.mxu0 %v688
    %1527 = vmatpush1.msra.mxu0 %v687
    %1528 = vmatprep.subr.mxu0 %v691
    %1529 = vmatpush1.msra.mxu0 %v690
    %1530 = vmatprep.subr.mxu0 %v694
    %1531 = vmatpush1.msra.mxu0 %v693
    %1532 = vmatprep.subr.mxu0 %v697
    %1533 = vmatpush1.msra.mxu0 %v696
    %1534 = vmatprep.subr.mxu0 %v700
    %1535 = vmatpush1.msra.mxu0 %v699
    %1536 = vmatprep.subr.mxu0 %v703
    %1537 = vmatpush1.msra.mxu0 %v702
    %1538 = vmatprep.subr.mxu0 %v706
    %1539 = vmatpush1.msra.mxu0 %v705
    %1540 = vmatprep.subr.mxu0 %v709
    %1541 = vmatpush1.msra.mxu0 %v708
    %1542 = vmatprep.subr.mxu0 %v712
    %1543 = vmatpush1.msra.mxu0 %v711
    %1544 = vmatprep.subr.mxu0 %v715
    %1545 = vmatpush1.msra.mxu0 %v714
    %1546 = vmatprep.subr.mxu0 %v718
    %1547 = vmatpush1.msra.mxu0 %v717
    %1548 = vmatprep.subr.mxu0 %v721
    %1549 = vmatpush1.msra.mxu0 %v720
    %1550 = vmatprep.subr.mxu0 %v724
    %1551 = vmatpush1.msra.mxu0 %v723
    %1552 = vmatprep.subr.mxu0 %v727
    %1553 = vmatpush1.msra.mxu0 %v726
    %1554 = vmatprep.subr.mxu0 %v730
    %1555 = vmatpush1.msra.mxu0 %v729
    %1556 = vmatprep.subr.mxu0 %v733
    %1557 = vmatpush1.msra.mxu0 %v732
    %1558 = vmatprep.subr.mxu0 0.0
    %1559 = vmatpush1.msra.mxu0 0.0
    %1560 = vmatprep.subr.mxu0 0.0
    %1561 = vmatpush1.msra.mxu0 0.0
    %1562 = vmatprep.subr.mxu0 0.0
    %1563 = vmatpush1.msra.mxu0 0.0
    %1564 = vmatprep.subr.mxu0 0.0
    %1565 = vmatpush1.msra.mxu0 0.0
    %1566 = vmatprep.subr.mxu0 0.0
    %1567 = vmatpush1.msra.mxu0 0.0
    %1568 = vmatprep.subr.mxu0 0.0
    %1569 = vmatpush1.msra.mxu0 0.0
    %1570 = vmatprep.subr.mxu0 0.0
    %1571 = vmatpush1.msra.mxu0 0.0
    %1572 = vmatprep.subr.mxu0 0.0
    %1573 = vmatpush1.msra.mxu0 0.0
    %1574 = vmatprep.subr.mxu0 0.0
    %1575 = vmatpush1.msra.mxu0 0.0
    %1576 = vmatprep.subr.mxu0 0.0
    %1577 = vmatpush1.msra.mxu0 0.0
    %1578 = vmatprep.subr.mxu0 0.0
    %1579 = vmatpush1.msra.mxu0 0.0
    %1580 = vmatprep.subr.mxu0 0.0
    %1581 = vmatpush1.msra.mxu0 0.0
    %1582 = vmatprep.subr.mxu0 0.0
    %1583 = vmatpush1.msra.mxu0 0.0
    %1584 = vmatprep.subr.mxu0 0.0
    %1585 = vmatpush1.msra.mxu0 0.0
    %1586 = vmatprep.subr.mxu0 0.0
    %1587 = vmatpush1.msra.mxu0 0.0
    %1588 = vmatprep.subr.mxu0 0.0
    %1589 = vmatpush1.msra.mxu0 0.0
    %1590 = vmatprep.mubr.f32.mxu0 0.0
    %1591 = vmatmul.mubr.f32.gmra.mrb[0].mxu0 %v1524
    %v1592 = vpop.f32.mrb[0].mxu0
    %v1593 = vadd.f32 %v740, %v1592
    %v1594 = vpop.f32.mrb[0].mxu0
    %v1595 = vadd.f32 %v744, %v1594
    %1596 = vmatprep.mubr.f32.mxu0 0.0
    %1597 = vmatmul.mubr.f32.gmra.mrb[0].mxu0 %v1525
    %v1598 = vpop.f32.mrb[0].mxu0
    %v1599 = vadd.f32 %v740, %v1598
    %v1600 = vpop.f32.mrb[0].mxu0
    %v1601 = vadd.f32 %v744, %v1600
    %1602 = vdwg.mxu0
    %1603 = vmatprep.subr.mxu0 0.0
    %1604 = vmatpush1.msra.mxu0 %v689
    %1605 = vmatprep.subr.mxu0 0.0
    %1606 = vmatpush1.msra.mxu0 %v692
    %1607 = vmatprep.subr.mxu0 0.0
    %1608 = vmatpush1.msra.mxu0 %v695
    %1609 = vmatprep.subr.mxu0 0.0
    %1610 = vmatpush1.msra.mxu0 %v698
    %1611 = vmatprep.subr.mxu0 0.0
    %1612 = vmatpush1.msra.mxu0 %v701
    %1613 = vmatprep.subr.mxu0 0.0
    %1614 = vmatpush1.msra.mxu0 %v704
    %1615 = vmatprep.subr.mxu0 0.0
    %1616 = vmatpush1.msra.mxu0 %v707
    %1617 = vmatprep.subr.mxu0 0.0
    %1618 = vmatpush1.msra.mxu0 %v710
    %1619 = vmatprep.subr.mxu0 0.0
    %1620 = vmatpush1.msra.mxu0 %v713
    %1621 = vmatprep.subr.mxu0 0.0
    %1622 = vmatpush1.msra.mxu0 %v716
    %1623 = vmatprep.subr.mxu0 0.0
    %1624 = vmatpush1.msra.mxu0 %v719
    %1625 = vmatprep.subr.mxu0 0.0
    %1626 = vmatpush1.msra.mxu0 %v722
    %1627 = vmatprep.subr.mxu0 0.0
    %1628 = vmatpush1.msra.mxu0 %v725
    %1629 = vmatprep.subr.mxu0 0.0
    %1630 = vmatpush1.msra.mxu0 %v728
    %1631 = vmatprep.subr.mxu0 0.0
    %1632 = vmatpush1.msra.mxu0 %v731
    %1633 = vmatprep.subr.mxu0 0.0
    %1634 = vmatpush1.msra.mxu0 %v734
    %1635 = vmatprep.subr.mxu0 0.0
    %1636 = vmatpush1.msra.mxu0 0.0
    %1637 = vmatprep.subr.mxu0 0.0
    %1638 = vmatpush1.msra.mxu0 0.0
    %1639 = vmatprep.subr.mxu0 0.0
    %1640 = vmatpush1.msra.mxu0 0.0
    %1641 = vmatprep.subr.mxu0 0.0
    %1642 = vmatpush1.msra.mxu0 0.0
    %1643 = vmatprep.subr.mxu0 0.0
    %1644 = vmatpush1.msra.mxu0 0.0
    %1645 = vmatprep.subr.mxu0 0.0
    %1646 = vmatpush1.msra.mxu0 0.0
    %1647 = vmatprep.subr.mxu0 0.0
    %1648 = vmatpush1.msra.mxu0 0.0
    %1649 = vmatprep.subr.mxu0 0.0
    %1650 = vmatpush1.msra.mxu0 0.0
    %1651 = vmatprep.subr.mxu0 0.0
    %1652 = vmatpush1.msra.mxu0 0.0
    %1653 = vmatprep.subr.mxu0 0.0
    %1654 = vmatpush1.msra.mxu0 0.0
    %1655 = vmatprep.subr.mxu0 0.0
    %1656 = vmatpush1.msra.mxu0 0.0
    %1657 = vmatprep.subr.mxu0 0.0
    %1658 = vmatpush1.msra.mxu0 0.0
    %1659 = vmatprep.subr.mxu0 0.0
    %1660 = vmatpush1.msra.mxu0 0.0
    %1661 = vmatprep.subr.mxu0 0.0
    %1662 = vmatpush1.msra.mxu0 0.0
    %1663 = vmatprep.subr.mxu0 0.0
    %1664 = vmatpush1.msra.mxu0 0.0
    %1665 = vmatprep.subr.mxu0 0.0
    %1666 = vmatpush1.msra.mxu0 0.0
    %1667 = vmatprep.mubr.f32.mxu0 0.0
    %1668 = vmatmul.mubr.f32.gmra.mrb[0].mxu0 %v1524
    %v1669 = vpop.f32.mrb[0].mxu0
    %v1670 = vadd.f32 %v748, %v1669
    %v1671 = vpop.f32.mrb[0].mxu0
    %1672 = vmatprep.mubr.f32.mxu0 0.0
    %1673 = vmatmul.mubr.f32.gmra.mrb[0].mxu0 %v1525
    %v1674 = vpop.f32.mrb[0].mxu0
    %v1675 = vadd.f32 %v748, %v1674
    %v1676 = vpop.f32.mrb[0].mxu0
    %1677 = vdwg.mxu0
    %1678 = vmatprep.subr.mxu0 %v640
    %1679 = vmatpush1.msra.mxu0 %v639
    %1680 = vmatprep.subr.mxu0 %v643
    %1681 = vmatpush1.msra.mxu0 %v642
    %1682 = vmatprep.subr.mxu0 %v646
    %1683 = vmatpush1.msra.mxu0 %v645
    %1684 = vmatprep.subr.mxu0 %v649
    %1685 = vmatpush1.msra.mxu0 %v648
    %1686 = vmatprep.subr.mxu0 %v652
    %1687 = vmatpush1.msra.mxu0 %v651
    %1688 = vmatprep.subr.mxu0 %v655
    %1689 = vmatpush1.msra.mxu0 %v654
    %1690 = vmatprep.subr.mxu0 %v658
    %1691 = vmatpush1.msra.mxu0 %v657
    %1692 = vmatprep.subr.mxu0 %v661
    %1693 = vmatpush1.msra.mxu0 %v660
    %1694 = vmatprep.subr.mxu0 %v664
    %1695 = vmatpush1.msra.mxu0 %v663
    %1696 = vmatprep.subr.mxu0 %v667
    %1697 = vmatpush1.msra.mxu0 %v666
    %1698 = vmatprep.subr.mxu0 %v670
    %1699 = vmatpush1.msra.mxu0 %v669
    %1700 = vmatprep.subr.mxu0 %v673
    %1701 = vmatpush1.msra.mxu0 %v672
    %1702 = vmatprep.subr.mxu0 %v676
    %1703 = vmatpush1.msra.mxu0 %v675
    %1704 = vmatprep.subr.mxu0 %v679
    %1705 = vmatpush1.msra.mxu0 %v678
    %1706 = vmatprep.subr.mxu0 %v682
    %1707 = vmatpush1.msra.mxu0 %v681
    %1708 = vmatprep.subr.mxu0 %v685
    %1709 = vmatpush1.msra.mxu0 %v684
    %1710 = vmatprep.subr.mxu0 0.0
    %1711 = vmatpush1.msra.mxu0 0.0
    %1712 = vmatprep.subr.mxu0 0.0
    %1713 = vmatpush1.msra.mxu0 0.0
    %1714 = vmatprep.subr.mxu0 0.0
    %1715 = vmatpush1.msra.mxu0 0.0
    %1716 = vmatprep.subr.mxu0 0.0
    %1717 = vmatpush1.msra.mxu0 0.0
    %1718 = vmatprep.subr.mxu0 0.0
    %1719 = vmatpush1.msra.mxu0 0.0
    %1720 = vmatprep.subr.mxu0 0.0
    %1721 = vmatpush1.msra.mxu0 0.0
    %1722 = vmatprep.subr.mxu0 0.0
    %1723 = vmatpush1.msra.mxu0 0.0
    %1724 = vmatprep.subr.mxu0 0.0
    %1725 = vmatpush1.msra.mxu0 0.0
    %1726 = vmatprep.subr.mxu0 0.0
    %1727 = vmatpush1.msra.mxu0 0.0
    %1728 = vmatprep.subr.mxu0 0.0
    %1729 = vmatpush1.msra.mxu0 0.0
    %1730 = vmatprep.subr.mxu0 0.0
    %1731 = vmatpush1.msra.mxu0 0.0
    %1732 = vmatprep.subr.mxu0 0.0
    %1733 = vmatpush1.msra.mxu0 0.0
    %1734 = vmatprep.subr.mxu0 0.0
    %1735 = vmatpush1.msra.mxu0 0.0
    %1736 = vmatprep.subr.mxu0 0.0
    %1737 = vmatpush1.msra.mxu0 0.0
    %1738 = vmatprep.subr.mxu0 0.0
    %1739 = vmatpush1.msra.mxu0 0.0
    %1740 = vmatprep.subr.mxu0 0.0
    %1741 = vmatpush1.msra.mxu0 0.0
    %1742 = vmatprep.mubr.f32.mxu0 0.0
    %1743 = vmatmul.mubr.f32.gmra.mrb[0].mxu0 %v1320
    %v1744 = vpop.f32.mrb[0].mxu0
    %v1745 = vadd.f32 0.0, %v1744
    %v1746 = vpop.f32.mrb[0].mxu0
    %v1747 = vadd.f32 0.0, %v1746
    %1748 = vmatprep.mubr.f32.mxu0 0.0
    %1749 = vmatmul.mubr.f32.gmra.mrb[0].mxu0 %v1321
    %v1750 = vpop.f32.mrb[0].mxu0
    %v1751 = vadd.f32 0.0, %v1750
    %v1752 = vpop.f32.mrb[0].mxu0
    %v1753 = vadd.f32 0.0, %v1752
    %1754 = vdwg.mxu0
    %1755 = vmatprep.subr.mxu0 0.0
    %1756 = vmatpush1.msra.mxu0 %v641
    %1757 = vmatprep.subr.mxu0 0.0
    %1758 = vmatpush1.msra.mxu0 %v644
    %1759 = vmatprep.subr.mxu0 0.0
    %1760 = vmatpush1.msra.mxu0 %v647
    %1761 = vmatprep.subr.mxu0 0.0
    %1762 = vmatpush1.msra.mxu0 %v650
    %1763 = vmatprep.subr.mxu0 0.0
    %1764 = vmatpush1.msra.mxu0 %v653
    %1765 = vmatprep.subr.mxu0 0.0
    %1766 = vmatpush1.msra.mxu0 %v656
    %1767 = vmatprep.subr.mxu0 0.0
    %1768 = vmatpush1.msra.mxu0 %v659
    %1769 = vmatprep.subr.mxu0 0.0
    %1770 = vmatpush1.msra.mxu0 %v662
    %1771 = vmatprep.subr.mxu0 0.0
    %1772 = vmatpush1.msra.mxu0 %v665
    %1773 = vmatprep.subr.mxu0 0.0
    %1774 = vmatpush1.msra.mxu0 %v668
    %1775 = vmatprep.subr.mxu0 0.0
    %1776 = vmatpush1.msra.mxu0 %v671
    %1777 = vmatprep.subr.mxu0 0.0
    %1778 = vmatpush1.msra.mxu0 %v674
    %1779 = vmatprep.subr.mxu0 0.0
    %1780 = vmatpush1.msra.mxu0 %v677
    %1781 = vmatprep.subr.mxu0 0.0
    %1782 = vmatpush1.msra.mxu0 %v680
    %1783 = vmatprep.subr.mxu0 0.0
    %1784 = vmatpush1.msra.mxu0 %v683
    %1785 = vmatprep.subr.mxu0 0.0
    %1786 = vmatpush1.msra.mxu0 %v686
    %1787 = vmatprep.subr.mxu0 0.0
    %1788 = vmatpush1.msra.mxu0 0.0
    %1789 = vmatprep.subr.mxu0 0.0
    %1790 = vmatpush1.msra.mxu0 0.0
    %1791 = vmatprep.subr.mxu0 0.0
    %1792 = vmatpush1.msra.mxu0 0.0
    %1793 = vmatprep.subr.mxu0 0.0
    %1794 = vmatpush1.msra.mxu0 0.0
    %1795 = vmatprep.subr.mxu0 0.0
    %1796 = vmatpush1.msra.mxu0 0.0
    %1797 = vmatprep.subr.mxu0 0.0
    %1798 = vmatpush1.msra.mxu0 0.0
    %1799 = vmatprep.subr.mxu0 0.0
    %1800 = vmatpush1.msra.mxu0 0.0
    %1801 = vmatprep.subr.mxu0 0.0
    %1802 = vmatpush1.msra.mxu0 0.0
    %1803 = vmatprep.subr.mxu0 0.0
    %1804 = vmatpush1.msra.mxu0 0.0
    %1805 = vmatprep.subr.mxu0 0.0
    %1806 = vmatpush1.msra.mxu0 0.0
    %1807 = vmatprep.subr.mxu0 0.0
    %1808 = vmatpush1.msra.mxu0 0.0
    %1809 = vmatprep.subr.mxu0 0.0
    %1810 = vmatpush1.msra.mxu0 0.0
    %1811 = vmatprep.subr.mxu0 0.0
    %1812 = vmatpush1.msra.mxu0 0.0
    %1813 = vmatprep.subr.mxu0 0.0
    %1814 = vmatpush1.msra.mxu0 0.0
    %1815 = vmatprep.subr.mxu0 0.0
    %1816 = vmatpush1.msra.mxu0 0.0
    %1817 = vmatprep.subr.mxu0 0.0
    %1818 = vmatpush1.msra.mxu0 0.0
    %1819 = vmatprep.mubr.f32.mxu0 0.0
    %1820 = vmatmul.mubr.f32.gmra.mrb[0].mxu0 %v1320
    %v1821 = vpop.f32.mrb[0].mxu0
    %v1822 = vadd.f32 0.0, %v1821
    %v1823 = vpop.f32.mrb[0].mxu0
    %1824 = vmatprep.mubr.f32.mxu0 0.0
    %1825 = vmatmul.mubr.f32.gmra.mrb[0].mxu0 %v1321
    %v1826 = vpop.f32.mrb[0].mxu0
    %v1827 = vadd.f32 0.0, %v1826
    %v1828 = vpop.f32.mrb[0].mxu0
    %1829 = vdwg.mxu0
    %v1830 = vadd.f32 %v1593, %v1745
    %v1831 = vadd.f32 %v1599, %v1751
    %v1832 = vxor.u32 %v1830, 2147483648
    %v1833 = vxor.u32 %v1831, 2147483648
    %v1834 = vmul.f32 %v1832, 1.442695
    %v1835 = vpow.pop %v1834
    %v1836 = vmul.f32 %v1833, 1.442695
    %v1837 = vpow.pop %v1836
    %v1838 = vadd.f32 %v1835, 1.0
    %v1839 = vadd.f32 %v1837, 1.0
    %v1840 = vrcp.pop %v1838
    %v1841 = vmul.f32 1.0, %v1840
    %v1842 = vrcp.pop %v1839
    %v1843 = vmul.f32 1.0, %v1842
    %v1844 = vadd.f32 %v1595, %v1747
    %v1845 = vadd.f32 %v1601, %v1753
    %v1846 = vxor.u32 %v1844, 2147483648
    %v1847 = vxor.u32 %v1845, 2147483648
    %v1848 = vmul.f32 %v1846, 1.442695
    %v1849 = vpow.pop %v1848
    %v1850 = vmul.f32 %v1847, 1.442695
    %v1851 = vpow.pop %v1850
    %v1852 = vadd.f32 %v1849, 1.0
    %v1853 = vadd.f32 %v1851, 1.0
    %v1854 = vrcp.pop %v1852
    %v1855 = vmul.f32 1.0, %v1854
    %v1856 = vrcp.pop %v1853
    %v1857 = vmul.f32 1.0, %v1856
    %v1858 = vadd.f32 %v1822, %v765
    %v1859 = vadd.f32 %v1827, %v765
    %v1860 = vmul.f32 %v1841, %v1858
    %v1861 = vmul.f32 %v1843, %v1859
    %v1862 = vadd.f32 %v1670, %v1860
    %v1863 = vadd.f32 %v1675, %v1861
    %v1864 = vtanh.pop %v1862
    %v1865 = vtanh.pop %v1863
    %v1866 = vsub.f32 1.0, %v1855
    %v1867 = vsub.f32 1.0, %v1857
    %v1868 = vmul.f32 %v1866, %v1864
    %v1869 = vmul.f32 %v1867, %v1865
    %v1870 = vmul.f32 %v1855, %v1320
    %v1871 = vmul.f32 %v1857, %v1321
    %v1872 = vadd.f32 %v1868, %v1870
    %v1873 = vadd.f32 %v1869, %v1871
    %1874 = vst [vmem:[#allocation2 + $0x10] sm:$0xff] %v1872
    %1875 = vst [vmem:[#allocation2 + $0x18] sm:$0xff] %v1873
    %v1876 = vld [vmem:[#allocation3 + $0x60] sm:$0xff]
    %v1877 = vld [vmem:[#allocation3 + $0x68] sm:$0xff]
    %v1878 = vld [vmem:[#allocation3 + $0x70] sm:$0xff]
    %v1879 = vld [vmem:[#allocation3 + $0x78] sm:$0xff]
    %v1880 = vld [vmem:[#allocation3 + $0x80] sm:$0xff]
    %v1881 = vld [vmem:[#allocation3 + $0x88] sm:$0xff]
    %1882 = vmatprep.subr.mxu0 %v591
    %1883 = vmatpush1.msra.mxu0 %v590
    %1884 = vmatprep.subr.mxu0 %v594
    %1885 = vmatpush1.msra.mxu0 %v593
    %1886 = vmatprep.subr.mxu0 %v597
    %1887 = vmatpush1.msra.mxu0 %v596
    %1888 = vmatprep.subr.mxu0 %v600
    %1889 = vmatpush1.msra.mxu0 %v599
    %1890 = vmatprep.subr.mxu0 %v603
    %1891 = vmatpush1.msra.mxu0 %v602
    %1892 = vmatprep.subr.mxu0 %v606
    %1893 = vmatpush1.msra.mxu0 %v605
    %1894 = vmatprep.subr.mxu0 %v609
    %1895 = vmatpush1.msra.mxu0 %v608
    %1896 = vmatprep.subr.mxu0 %v612
    %1897 = vmatpush1.msra.mxu0 %v611
    %1898 = vmatprep.subr.mxu0 %v615
    %1899 = vmatpush1.msra.mxu0 %v614
    %1900 = vmatprep.subr.mxu0 %v618
    %1901 = vmatpush1.msra.mxu0 %v617
    %1902 = vmatprep.subr.mxu0 %v621
    %1903 = vmatpush1.msra.mxu0 %v620
    %1904 = vmatprep.subr.mxu0 %v624
    %1905 = vmatpush1.msra.mxu0 %v623
    %1906 = vmatprep.subr.mxu0 %v627
    %1907 = vmatpush1.msra.mxu0 %v626
    %1908 = vmatprep.subr.mxu0 %v630
    %1909 = vmatpush1.msra.mxu0 %v629
    %1910 = vmatprep.subr.mxu0 %v633
    %1911 = vmatpush1.msra.mxu0 %v632
    %1912 = vmatprep.subr.mxu0 %v636
    %1913 = vmatpush1.msra.mxu0 %v635
    %1914 = vmatprep.subr.mxu0 0.0
    %1915 = vmatpush1.msra.mxu0 0.0
    %1916 = vmatprep.subr.mxu0 0.0
    %1917 = vmatpush1.msra.mxu0 0.0
    %1918 = vmatprep.subr.mxu0 0.0
    %1919 = vmatpush1.msra.mxu0 0.0
    %1920 = vmatprep.subr.mxu0 0.0
    %1921 = vmatpush1.msra.mxu0 0.0
    %1922 = vmatprep.subr.mxu0 0.0
    %1923 = vmatpush1.msra.mxu0 0.0
    %1924 = vmatprep.subr.mxu0 0.0
    %1925 = vmatpush1.msra.mxu0 0.0
    %1926 = vmatprep.subr.mxu0 0.0
    %1927 = vmatpush1.msra.mxu0 0.0
    %1928 = vmatprep.subr.mxu0 0.0
    %1929 = vmatpush1.msra.mxu0 0.0
    %1930 = vmatprep.subr.mxu0 0.0
    %1931 = vmatpush1.msra.mxu0 0.0
    %1932 = vmatprep.subr.mxu0 0.0
    %1933 = vmatpush1.msra.mxu0 0.0
    %1934 = vmatprep.subr.mxu0 0.0
    %1935 = vmatpush1.msra.mxu0 0.0
    %1936 = vmatprep.subr.mxu0 0.0
    %1937 = vmatpush1.msra.mxu0 0.0
    %1938 = vmatprep.subr.mxu0 0.0
    %1939 = vmatpush1.msra.mxu0 0.0
    %1940 = vmatprep.subr.mxu0 0.0
    %1941 = vmatpush1.msra.mxu0 0.0
    %1942 = vmatprep.subr.mxu0 0.0
    %1943 = vmatpush1.msra.mxu0 0.0
    %1944 = vmatprep.subr.mxu0 0.0
    %1945 = vmatpush1.msra.mxu0 0.0
    %1946 = vmatprep.mubr.f32.mxu0 0.0
    %1947 = vmatmul.mubr.f32.gmra.mrb[0].mxu0 %v1524
    %v1948 = vpop.f32.mrb[0].mxu0
    %v1949 = vadd.f32 0.0, %v1948
    %v1950 = vpop.f32.mrb[0].mxu0
    %v1951 = vadd.f32 0.0, %v1950
    %1952 = vmatprep.mubr.f32.mxu0 0.0
    %1953 = vmatmul.mubr.f32.gmra.mrb[0].mxu0 %v1525
    %v1954 = vpop.f32.mrb[0].mxu0
    %v1955 = vadd.f32 0.0, %v1954
    %v1956 = vpop.f32.mrb[0].mxu0
    %v1957 = vadd.f32 0.0, %v1956
    %1958 = vdwg.mxu0
    %1959 = vmatprep.subr.mxu0 0.0
    %1960 = vmatpush1.msra.mxu0 %v592
    %1961 = vmatprep.subr.mxu0 0.0
    %1962 = vmatpush1.msra.mxu0 %v595
    %1963 = vmatprep.subr.mxu0 0.0
    %1964 = vmatpush1.msra.mxu0 %v598
    %1965 = vmatprep.subr.mxu0 0.0
    %1966 = vmatpush1.msra.mxu0 %v601
    %1967 = vmatprep.subr.mxu0 0.0
    %1968 = vmatpush1.msra.mxu0 %v604
    %1969 = vmatprep.subr.mxu0 0.0
    %1970 = vmatpush1.msra.mxu0 %v607
    %1971 = vmatprep.subr.mxu0 0.0
    %1972 = vmatpush1.msra.mxu0 %v610
    %1973 = vmatprep.subr.mxu0 0.0
    %1974 = vmatpush1.msra.mxu0 %v613
    %1975 = vmatprep.subr.mxu0 0.0
    %1976 = vmatpush1.msra.mxu0 %v616
    %1977 = vmatprep.subr.mxu0 0.0
    %1978 = vmatpush1.msra.mxu0 %v619
    %1979 = vmatprep.subr.mxu0 0.0
    %1980 = vmatpush1.msra.mxu0 %v622
    %1981 = vmatprep.subr.mxu0 0.0
    %1982 = vmatpush1.msra.mxu0 %v625
    %1983 = vmatprep.subr.mxu0 0.0
    %1984 = vmatpush1.msra.mxu0 %v628
    %1985 = vmatprep.subr.mxu0 0.0
    %1986 = vmatpush1.msra.mxu0 %v631
    %1987 = vmatprep.subr.mxu0 0.0
    %1988 = vmatpush1.msra.mxu0 %v634
    %1989 = vmatprep.subr.mxu0 0.0
    %1990 = vmatpush1.msra.mxu0 %v637
    %1991 = vmatprep.subr.mxu0 0.0
    %1992 = vmatpush1.msra.mxu0 0.0
    %1993 = vmatprep.subr.mxu0 0.0
    %1994 = vmatpush1.msra.mxu0 0.0
    %1995 = vmatprep.subr.mxu0 0.0
    %1996 = vmatpush1.msra.mxu0 0.0
    %1997 = vmatprep.subr.mxu0 0.0
    %1998 = vmatpush1.msra.mxu0 0.0
    %1999 = vmatprep.subr.mxu0 0.0
    %2000 = vmatpush1.msra.mxu0 0.0
    %2001 = vmatprep.subr.mxu0 0.0
    %2002 = vmatpush1.msra.mxu0 0.0
    %2003 = vmatprep.subr.mxu0 0.0
    %2004 = vmatpush1.msra.mxu0 0.0
    %2005 = vmatprep.subr.mxu0 0.0
    %2006 = vmatpush1.msra.mxu0 0.0
    %2007 = vmatprep.subr.mxu0 0.0
    %2008 = vmatpush1.msra.mxu0 0.0
    %2009 = vmatprep.subr.mxu0 0.0
    %2010 = vmatpush1.msra.mxu0 0.0
    %2011 = vmatprep.subr.mxu0 0.0
    %2012 = vmatpush1.msra.mxu0 0.0
    %2013 = vmatprep.subr.mxu0 0.0
    %2014 = vmatpush1.msra.mxu0 0.0
    %2015 = vmatprep.subr.mxu0 0.0
    %2016 = vmatpush1.msra.mxu0 0.0
    %2017 = vmatprep.subr.mxu0 0.0
    %2018 = vmatpush1.msra.mxu0 0.0
    %2019 = vmatprep.subr.mxu0 0.0
    %2020 = vmatpush1.msra.mxu0 0.0
    %2021 = vmatprep.subr.mxu0 0.0
    %2022 = vmatpush1.msra.mxu0 0.0
    %2023 = vmatprep.mubr.f32.mxu0 0.0
    %2024 = vmatmul.mubr.f32.gmra.mrb[0].mxu0 %v1524
    %v2025 = vpop.f32.mrb[0].mxu0
    %v2026 = vadd.f32 0.0, %v2025
    %v2027 = vpop.f32.mrb[0].mxu0
    %2028 = vmatprep.mubr.f32.mxu0 0.0
    %2029 = vmatmul.mubr.f32.gmra.mrb[0].mxu0 %v1525
    %v2030 = vpop.f32.mrb[0].mxu0
    %v2031 = vadd.f32 0.0, %v2030
    %v2032 = vpop.f32.mrb[0].mxu0
    %2033 = vdwg.mxu0
    %v2034 = vadd.f32 %v1876, %v1949
    %v2035 = vadd.f32 %v1879, %v1955
    %v2036 = vxor.u32 %v2034, 2147483648
    %v2037 = vxor.u32 %v2035, 2147483648
    %v2038 = vmul.f32 %v2036, 1.442695
    %v2039 = vpow.pop %v2038
    %v2040 = vmul.f32 %v2037, 1.442695
    %v2041 = vpow.pop %v2040
    %v2042 = vadd.f32 %v2039, 1.0
    %v2043 = vadd.f32 %v2041, 1.0
    %v2044 = vrcp.pop %v2042
    %v2045 = vmul.f32 1.0, %v2044
    %v2046 = vrcp.pop %v2043
    %v2047 = vmul.f32 1.0, %v2046
    %v2048 = vadd.f32 %v1877, %v1951
    %v2049 = vadd.f32 %v1880, %v1957
    %v2050 = vxor.u32 %v2048, 2147483648
    %v2051 = vxor.u32 %v2049, 2147483648
    %v2052 = vmul.f32 %v2050, 1.442695
    %v2053 = vpow.pop %v2052
    %v2054 = vmul.f32 %v2051, 1.442695
    %v2055 = vpow.pop %v2054
    %v2056 = vadd.f32 %v2053, 1.0
    %v2057 = vadd.f32 %v2055, 1.0
    %v2058 = vrcp.pop %v2056
    %v2059 = vmul.f32 1.0, %v2058
    %v2060 = vrcp.pop %v2057
    %v2061 = vmul.f32 1.0, %v2060
    %v2062 = vadd.f32 %v2026, %v757
    %v2063 = vadd.f32 %v2031, %v757
    %v2064 = vmul.f32 %v2045, %v2062
    %v2065 = vmul.f32 %v2047, %v2063
    %v2066 = vadd.f32 %v1878, %v2064
    %v2067 = vadd.f32 %v1881, %v2065
    %v2068 = vtanh.pop %v2066
    %v2069 = vtanh.pop %v2067
    %v2070 = vsub.f32 1.0, %v2059
    %v2071 = vsub.f32 1.0, %v2061
    %v2072 = vmul.f32 %v2070, %v2068
    %v2073 = vmul.f32 %v2071, %v2069
    %v2074 = vmul.f32 %v2059, %v1524
    %v2075 = vmul.f32 %v2061, %v1525
    %v2076 = vadd.f32 %v2072, %v2074
    %v2077 = vadd.f32 %v2073, %v2075
    %2078 = vmatprep.subr.mxu0 %v688
    %2079 = vmatpush1.msra.mxu0 %v687
    %2080 = vmatprep.subr.mxu0 %v691
    %2081 = vmatpush1.msra.mxu0 %v690
    %2082 = vmatprep.subr.mxu0 %v694
    %2083 = vmatpush1.msra.mxu0 %v693
    %2084 = vmatprep.subr.mxu0 %v697
    %2085 = vmatpush1.msra.mxu0 %v696
    %2086 = vmatprep.subr.mxu0 %v700
    %2087 = vmatpush1.msra.mxu0 %v699
    %2088 = vmatprep.subr.mxu0 %v703
    %2089 = vmatpush1.msra.mxu0 %v702
    %2090 = vmatprep.subr.mxu0 %v706
    %2091 = vmatpush1.msra.mxu0 %v705
    %2092 = vmatprep.subr.mxu0 %v709
    %2093 = vmatpush1.msra.mxu0 %v708
    %2094 = vmatprep.subr.mxu0 %v712
    %2095 = vmatpush1.msra.mxu0 %v711
    %2096 = vmatprep.subr.mxu0 %v715
    %2097 = vmatpush1.msra.mxu0 %v714
    %2098 = vmatprep.subr.mxu0 %v718
    %2099 = vmatpush1.msra.mxu0 %v717
    %2100 = vmatprep.subr.mxu0 %v721
    %2101 = vmatpush1.msra.mxu0 %v720
    %2102 = vmatprep.subr.mxu0 %v724
    %2103 = vmatpush1.msra.mxu0 %v723
    %2104 = vmatprep.subr.mxu0 %v727
    %2105 = vmatpush1.msra.mxu0 %v726
    %2106 = vmatprep.subr.mxu0 %v730
    %2107 = vmatpush1.msra.mxu0 %v729
    %2108 = vmatprep.subr.mxu0 %v733
    %2109 = vmatpush1.msra.mxu0 %v732
    %2110 = vmatprep.subr.mxu0 0.0
    %2111 = vmatpush1.msra.mxu0 0.0
    %2112 = vmatprep.subr.mxu0 0.0
    %2113 = vmatpush1.msra.mxu0 0.0
    %2114 = vmatprep.subr.mxu0 0.0
    %2115 = vmatpush1.msra.mxu0 0.0
    %2116 = vmatprep.subr.mxu0 0.0
    %2117 = vmatpush1.msra.mxu0 0.0
    %2118 = vmatprep.subr.mxu0 0.0
    %2119 = vmatpush1.msra.mxu0 0.0
    %2120 = vmatprep.subr.mxu0 0.0
    %2121 = vmatpush1.msra.mxu0 0.0
    %2122 = vmatprep.subr.mxu0 0.0
    %2123 = vmatpush1.msra.mxu0 0.0
    %2124 = vmatprep.subr.mxu0 0.0
    %2125 = vmatpush1.msra.mxu0 0.0
    %2126 = vmatprep.subr.mxu0 0.0
    %2127 = vmatpush1.msra.mxu0 0.0
    %2128 = vmatprep.subr.mxu0 0.0
    %2129 = vmatpush1.msra.mxu0 0.0
    %2130 = vmatprep.subr.mxu0 0.0
    %2131 = vmatpush1.msra.mxu0 0.0
    %2132 = vmatprep.subr.mxu0 0.0
    %2133 = vmatpush1.msra.mxu0 0.0
    %2134 = vmatprep.subr.mxu0 0.0
    %2135 = vmatpush1.msra.mxu0 0.0
    %2136 = vmatprep.subr.mxu0 0.0
    %2137 = vmatpush1.msra.mxu0 0.0
    %2138 = vmatprep.subr.mxu0 0.0
    %2139 = vmatpush1.msra.mxu0 0.0
    %2140 = vmatprep.subr.mxu0 0.0
    %2141 = vmatpush1.msra.mxu0 0.0
    %2142 = vmatprep.mubr.f32.mxu0 0.0
    %2143 = vmatmul.mubr.f32.gmra.mrb[0].mxu0 %v2076
    %v2144 = vpop.f32.mrb[0].mxu0
    %v2145 = vadd.f32 %v740, %v2144
    %v2146 = vpop.f32.mrb[0].mxu0
    %v2147 = vadd.f32 %v744, %v2146
    %2148 = vmatprep.mubr.f32.mxu0 0.0
    %2149 = vmatmul.mubr.f32.gmra.mrb[0].mxu0 %v2077
    %v2150 = vpop.f32.mrb[0].mxu0
    %v2151 = vadd.f32 %v740, %v2150
    %v2152 = vpop.f32.mrb[0].mxu0
    %v2153 = vadd.f32 %v744, %v2152
    %2154 = vdwg.mxu0
    %2155 = vmatprep.subr.mxu0 0.0
    %2156 = vmatpush1.msra.mxu0 %v689
    %2157 = vmatprep.subr.mxu0 0.0
    %2158 = vmatpush1.msra.mxu0 %v692
    %2159 = vmatprep.subr.mxu0 0.0
    %2160 = vmatpush1.msra.mxu0 %v695
    %2161 = vmatprep.subr.mxu0 0.0
    %2162 = vmatpush1.msra.mxu0 %v698
    %2163 = vmatprep.subr.mxu0 0.0
    %2164 = vmatpush1.msra.mxu0 %v701
    %2165 = vmatprep.subr.mxu0 0.0
    %2166 = vmatpush1.msra.mxu0 %v704
    %2167 = vmatprep.subr.mxu0 0.0
    %2168 = vmatpush1.msra.mxu0 %v707
    %2169 = vmatprep.subr.mxu0 0.0
    %2170 = vmatpush1.msra.mxu0 %v710
    %2171 = vmatprep.subr.mxu0 0.0
    %2172 = vmatpush1.msra.mxu0 %v713
    %2173 = vmatprep.subr.mxu0 0.0
    %2174 = vmatpush1.msra.mxu0 %v716
    %2175 = vmatprep.subr.mxu0 0.0
    %2176 = vmatpush1.msra.mxu0 %v719
    %2177 = vmatprep.subr.mxu0 0.0
    %2178 = vmatpush1.msra.mxu0 %v722
    %2179 = vmatprep.subr.mxu0 0.0
    %2180 = vmatpush1.msra.mxu0 %v725
    %2181 = vmatprep.subr.mxu0 0.0
    %2182 = vmatpush1.msra.mxu0 %v728
    %2183 = vmatprep.subr.mxu0 0.0
    %2184 = vmatpush1.msra.mxu0 %v731
    %2185 = vmatprep.subr.mxu0 0.0
    %2186 = vmatpush1.msra.mxu0 %v734
    %2187 = vmatprep.subr.mxu0 0.0
    %2188 = vmatpush1.msra.mxu0 0.0
    %2189 = vmatprep.subr.mxu0 0.0
    %2190 = vmatpush1.msra.mxu0 0.0
    %2191 = vmatprep.subr.mxu0 0.0
    %2192 = vmatpush1.msra.mxu0 0.0
    %2193 = vmatprep.subr.mxu0 0.0
    %2194 = vmatpush1.msra.mxu0 0.0
    %2195 = vmatprep.subr.mxu0 0.0
    %2196 = vmatpush1.msra.mxu0 0.0
    %2197 = vmatprep.subr.mxu0 0.0
    %2198 = vmatpush1.msra.mxu0 0.0
    %2199 = vmatprep.subr.mxu0 0.0
    %2200 = vmatpush1.msra.mxu0 0.0
    %2201 = vmatprep.subr.mxu0 0.0
    %2202 = vmatpush1.msra.mxu0 0.0
    %2203 = vmatprep.subr.mxu0 0.0
    %2204 = vmatpush1.msra.mxu0 0.0
    %2205 = vmatprep.subr.mxu0 0.0
    %2206 = vmatpush1.msra.mxu0 0.0
    %2207 = vmatprep.subr.mxu0 0.0
    %2208 = vmatpush1.msra.mxu0 0.0
    %2209 = vmatprep.subr.mxu0 0.0
    %2210 = vmatpush1.msra.mxu0 0.0
    %2211 = vmatprep.subr.mxu0 0.0
    %2212 = vmatpush1.msra.mxu0 0.0
    %2213 = vmatprep.subr.mxu0 0.0
    %2214 = vmatpush1.msra.mxu0 0.0
    %2215 = vmatprep.subr.mxu0 0.0
    %2216 = vmatpush1.msra.mxu0 0.0
    %2217 = vmatprep.subr.mxu0 0.0
    %2218 = vmatpush1.msra.mxu0 0.0
    %2219 = vmatprep.mubr.f32.mxu0 0.0
    %2220 = vmatmul.mubr.f32.gmra.mrb[0].mxu0 %v2076
    %v2221 = vpop.f32.mrb[0].mxu0
    %v2222 = vadd.f32 %v748, %v2221
    %v2223 = vpop.f32.mrb[0].mxu0
    %2224 = vmatprep.mubr.f32.mxu0 0.0
    %2225 = vmatmul.mubr.f32.gmra.mrb[0].mxu0 %v2077
    %v2226 = vpop.f32.mrb[0].mxu0
    %v2227 = vadd.f32 %v748, %v2226
    %v2228 = vpop.f32.mrb[0].mxu0
    %2229 = vdwg.mxu0
    %2230 = vmatprep.subr.mxu0 %v640
    %2231 = vmatpush1.msra.mxu0 %v639
    %2232 = vmatprep.subr.mxu0 %v643
    %2233 = vmatpush1.msra.mxu0 %v642
    %2234 = vmatprep.subr.mxu0 %v646
    %2235 = vmatpush1.msra.mxu0 %v645
    %2236 = vmatprep.subr.mxu0 %v649
    %2237 = vmatpush1.msra.mxu0 %v648
    %2238 = vmatprep.subr.mxu0 %v652
    %2239 = vmatpush1.msra.mxu0 %v651
    %2240 = vmatprep.subr.mxu0 %v655
    %2241 = vmatpush1.msra.mxu0 %v654
    %2242 = vmatprep.subr.mxu0 %v658
    %2243 = vmatpush1.msra.mxu0 %v657
    %2244 = vmatprep.subr.mxu0 %v661
    %2245 = vmatpush1.msra.mxu0 %v660
    %2246 = vmatprep.subr.mxu0 %v664
    %2247 = vmatpush1.msra.mxu0 %v663
    %2248 = vmatprep.subr.mxu0 %v667
    %2249 = vmatpush1.msra.mxu0 %v666
    %2250 = vmatprep.subr.mxu0 %v670
    %2251 = vmatpush1.msra.mxu0 %v669
    %2252 = vmatprep.subr.mxu0 %v673
    %2253 = vmatpush1.msra.mxu0 %v672
    %2254 = vmatprep.subr.mxu0 %v676
    %2255 = vmatpush1.msra.mxu0 %v675
    %2256 = vmatprep.subr.mxu0 %v679
    %2257 = vmatpush1.msra.mxu0 %v678
    %2258 = vmatprep.subr.mxu0 %v682
    %2259 = vmatpush1.msra.mxu0 %v681
    %2260 = vmatprep.subr.mxu0 %v685
    %2261 = vmatpush1.msra.mxu0 %v684
    %2262 = vmatprep.subr.mxu0 0.0
    %2263 = vmatpush1.msra.mxu0 0.0
    %2264 = vmatprep.subr.mxu0 0.0
    %2265 = vmatpush1.msra.mxu0 0.0
    %2266 = vmatprep.subr.mxu0 0.0
    %2267 = vmatpush1.msra.mxu0 0.0
    %2268 = vmatprep.subr.mxu0 0.0
    %2269 = vmatpush1.msra.mxu0 0.0
    %2270 = vmatprep.subr.mxu0 0.0
    %2271 = vmatpush1.msra.mxu0 0.0
    %2272 = vmatprep.subr.mxu0 0.0
    %2273 = vmatpush1.msra.mxu0 0.0
    %2274 = vmatprep.subr.mxu0 0.0
    %2275 = vmatpush1.msra.mxu0 0.0
    %2276 = vmatprep.subr.mxu0 0.0
    %2277 = vmatpush1.msra.mxu0 0.0
    %2278 = vmatprep.subr.mxu0 0.0
    %2279 = vmatpush1.msra.mxu0 0.0
    %2280 = vmatprep.subr.mxu0 0.0
    %2281 = vmatpush1.msra.mxu0 0.0
    %2282 = vmatprep.subr.mxu0 0.0
    %2283 = vmatpush1.msra.mxu0 0.0
    %2284 = vmatprep.subr.mxu0 0.0
    %2285 = vmatpush1.msra.mxu0 0.0
    %2286 = vmatprep.subr.mxu0 0.0
    %2287 = vmatpush1.msra.mxu0 0.0
    %2288 = vmatprep.subr.mxu0 0.0
    %2289 = vmatpush1.msra.mxu0 0.0
    %2290 = vmatprep.subr.mxu0 0.0
    %2291 = vmatpush1.msra.mxu0 0.0
    %2292 = vmatprep.subr.mxu0 0.0
    %2293 = vmatpush1.msra.mxu0 0.0
    %2294 = vmatprep.mubr.f32.mxu0 0.0
    %2295 = vmatmul.mubr.f32.gmra.mrb[0].mxu0 %v1872
    %v2296 = vpop.f32.mrb[0].mxu0
    %v2297 = vadd.f32 0.0, %v2296
    %v2298 = vpop.f32.mrb[0].mxu0
    %v2299 = vadd.f32 0.0, %v2298
    %2300 = vmatprep.mubr.f32.mxu0 0.0
    %2301 = vmatmul.mubr.f32.gmra.mrb[0].mxu0 %v1873
    %v2302 = vpop.f32.mrb[0].mxu0
    %v2303 = vadd.f32 0.0, %v2302
    %v2304 = vpop.f32.mrb[0].mxu0
    %v2305 = vadd.f32 0.0, %v2304
    %2306 = vdwg.mxu0
    %2307 = vmatprep.subr.mxu0 0.0
    %2308 = vmatpush1.msra.mxu0 %v641
    %2309 = vmatprep.subr.mxu0 0.0
    %2310 = vmatpush1.msra.mxu0 %v644
    %2311 = vmatprep.subr.mxu0 0.0
    %2312 = vmatpush1.msra.mxu0 %v647
    %2313 = vmatprep.subr.mxu0 0.0
    %2314 = vmatpush1.msra.mxu0 %v650
    %2315 = vmatprep.subr.mxu0 0.0
    %2316 = vmatpush1.msra.mxu0 %v653
    %2317 = vmatprep.subr.mxu0 0.0
    %2318 = vmatpush1.msra.mxu0 %v656
    %2319 = vmatprep.subr.mxu0 0.0
    %2320 = vmatpush1.msra.mxu0 %v659
    %2321 = vmatprep.subr.mxu0 0.0
    %2322 = vmatpush1.msra.mxu0 %v662
    %2323 = vmatprep.subr.mxu0 0.0
    %2324 = vmatpush1.msra.mxu0 %v665
    %2325 = vmatprep.subr.mxu0 0.0
    %2326 = vmatpush1.msra.mxu0 %v668
    %2327 = vmatprep.subr.mxu0 0.0
    %2328 = vmatpush1.msra.mxu0 %v671
    %2329 = vmatprep.subr.mxu0 0.0
    %2330 = vmatpush1.msra.mxu0 %v674
    %2331 = vmatprep.subr.mxu0 0.0
    %2332 = vmatpush1.msra.mxu0 %v677
    %2333 = vmatprep.subr.mxu0 0.0
    %2334 = vmatpush1.msra.mxu0 %v680
    %2335 = vmatprep.subr.mxu0 0.0
    %2336 = vmatpush1.msra.mxu0 %v683
    %2337 = vmatprep.subr.mxu0 0.0
    %2338 = vmatpush1.msra.mxu0 %v686
    %2339 = vmatprep.subr.mxu0 0.0
    %2340 = vmatpush1.msra.mxu0 0.0
    %2341 = vmatprep.subr.mxu0 0.0
    %2342 = vmatpush1.msra.mxu0 0.0
    %2343 = vmatprep.subr.mxu0 0.0
    %2344 = vmatpush1.msra.mxu0 0.0
    %2345 = vmatprep.subr.mxu0 0.0
    %2346 = vmatpush1.msra.mxu0 0.0
    %2347 = vmatprep.subr.mxu0 0.0
    %2348 = vmatpush1.msra.mxu0 0.0
    %2349 = vmatprep.subr.mxu0 0.0
    %2350 = vmatpush1.msra.mxu0 0.0
    %2351 = vmatprep.subr.mxu0 0.0
    %2352 = vmatpush1.msra.mxu0 0.0
    %2353 = vmatprep.subr.mxu0 0.0
    %2354 = vmatpush1.msra.mxu0 0.0
    %2355 = vmatprep.subr.mxu0 0.0
    %2356 = vmatpush1.msra.mxu0 0.0
    %2357 = vmatprep.subr.mxu0 0.0
    %2358 = vmatpush1.msra.mxu0 0.0
    %2359 = vmatprep.subr.mxu0 0.0
    %2360 = vmatpush1.msra.mxu0 0.0
    %2361 = vmatprep.subr.mxu0 0.0
    %2362 = vmatpush1.msra.mxu0 0.0
    %2363 = vmatprep.subr.mxu0 0.0
    %2364 = vmatpush1.msra.mxu0 0.0
    %2365 = vmatprep.subr.mxu0 0.0
    %2366 = vmatpush1.msra.mxu0 0.0
    %2367 = vmatprep.subr.mxu0 0.0
    %2368 = vmatpush1.msra.mxu0 0.0
    %2369 = vmatprep.subr.mxu0 0.0
    %2370 = vmatpush1.msra.mxu0 0.0
    %2371 = vmatprep.mubr.f32.mxu0 0.0
    %2372 = vmatmul.mubr.f32.gmra.mrb[0].mxu0 %v1872
    %v2373 = vpop.f32.mrb[0].mxu0
    %v2374 = vadd.f32 0.0, %v2373
    %v2375 = vpop.f32.mrb[0].mxu0
    %2376 = vmatprep.mubr.f32.mxu0 0.0
    %2377 = vmatmul.mubr.f32.gmra.mrb[0].mxu0 %v1873
    %v2378 = vpop.f32.mrb[0].mxu0
    %v2379 = vadd.f32 0.0, %v2378
    %v2380 = vpop.f32.mrb[0].mxu0
    %2381 = vdwg.mxu0
    %v2382 = vadd.f32 %v2145, %v2297
    %v2383 = vadd.f32 %v2151, %v2303
    %v2384 = vxor.u32 %v2382, 2147483648
    %v2385 = vxor.u32 %v2383, 2147483648
    %v2386 = vmul.f32 %v2384, 1.442695
    %v2387 = vpow.pop %v2386
    %v2388 = vmul.f32 %v2385, 1.442695
    %v2389 = vpow.pop %v2388
    %v2390 = vadd.f32 %v2387, 1.0
    %v2391 = vadd.f32 %v2389, 1.0
    %v2392 = vrcp.pop %v2390
    %v2393 = vmul.f32 1.0, %v2392
    %v2394 = vrcp.pop %v2391
    %v2395 = vmul.f32 1.0, %v2394
    %v2396 = vadd.f32 %v2147, %v2299
    %v2397 = vadd.f32 %v2153, %v2305
    %v2398 = vxor.u32 %v2396, 2147483648
    %v2399 = vxor.u32 %v2397, 2147483648
    %v2400 = vmul.f32 %v2398, 1.442695
    %v2401 = vpow.pop %v2400
    %v2402 = vmul.f32 %v2399, 1.442695
    %v2403 = vpow.pop %v2402
    %v2404 = vadd.f32 %v2401, 1.0
    %v2405 = vadd.f32 %v2403, 1.0
    %v2406 = vrcp.pop %v2404
    %v2407 = vmul.f32 1.0, %v2406
    %v2408 = vrcp.pop %v2405
    %v2409 = vmul.f32 1.0, %v2408
    %v2410 = vadd.f32 %v2374, %v765
    %v2411 = vadd.f32 %v2379, %v765
    %v2412 = vmul.f32 %v2393, %v2410
    %v2413 = vmul.f32 %v2395, %v2411
    %v2414 = vadd.f32 %v2222, %v2412
    %v2415 = vadd.f32 %v2227, %v2413
    %v2416 = vtanh.pop %v2414
    %v2417 = vtanh.pop %v2415
    %v2418 = vsub.f32 1.0, %v2407
    %v2419 = vsub.f32 1.0, %v2409
    %v2420 = vmul.f32 %v2418, %v2416
    %v2421 = vmul.f32 %v2419, %v2417
    %v2422 = vmul.f32 %v2407, %v1872
    %v2423 = vmul.f32 %v2409, %v1873
    %v2424 = vadd.f32 %v2420, %v2422
    %v2425 = vadd.f32 %v2421, %v2423
    %2426 = vst [vmem:[#allocation2 + $0x20] sm:$0xff] %v2424
    %2427 = vst [vmem:[#allocation2 + $0x28] sm:$0xff] %v2425
    %v2428 = vld [vmem:[#allocation3 + $0x90] sm:$0xff]
    %v2429 = vld [vmem:[#allocation3 + $0x98] sm:$0xff]
    %v2430 = vld [vmem:[#allocation3 + $0xa0] sm:$0xff]
    %v2431 = vld [vmem:[#allocation3 + $0xa8] sm:$0xff]
    %v2432 = vld [vmem:[#allocation3 + $0xb0] sm:$0xff]
    %v2433 = vld [vmem:[#allocation3 + $0xb8] sm:$0xff]
    %2434 = vmatprep.subr.mxu0 %v591
    %2435 = vmatpush1.msra.mxu0 %v590
    %2436 = vmatprep.subr.mxu0 %v594
    %2437 = vmatpush1.msra.mxu0 %v593
    %2438 = vmatprep.subr.mxu0 %v597
    %2439 = vmatpush1.msra.mxu0 %v596
    %2440 = vmatprep.subr.mxu0 %v600
    %2441 = vmatpush1.msra.mxu0 %v599
    %2442 = vmatprep.subr.mxu0 %v603
    %2443 = vmatpush1.msra.mxu0 %v602
    %2444 = vmatprep.subr.mxu0 %v606
    %2445 = vmatpush1.msra.mxu0 %v605
    %2446 = vmatprep.subr.mxu0 %v609
    %2447 = vmatpush1.msra.mxu0 %v608
    %2448 = vmatprep.subr.mxu0 %v612
    %2449 = vmatpush1.msra.mxu0 %v611
    %2450 = vmatprep.subr.mxu0 %v615
    %2451 = vmatpush1.msra.mxu0 %v614
    %2452 = vmatprep.subr.mxu0 %v618
    %2453 = vmatpush1.msra.mxu0 %v617
    %2454 = vmatprep.subr.mxu0 %v621
    %2455 = vmatpush1.msra.mxu0 %v620
    %2456 = vmatprep.subr.mxu0 %v624
    %2457 = vmatpush1.msra.mxu0 %v623
    %2458 = vmatprep.subr.mxu0 %v627
    %2459 = vmatpush1.msra.mxu0 %v626
    %2460 = vmatprep.subr.mxu0 %v630
    %2461 = vmatpush1.msra.mxu0 %v629
    %2462 = vmatprep.subr.mxu0 %v633
    %2463 = vmatpush1.msra.mxu0 %v632
    %2464 = vmatprep.subr.mxu0 %v636
    %2465 = vmatpush1.msra.mxu0 %v635
    %2466 = vmatprep.subr.mxu0 0.0
    %2467 = vmatpush1.msra.mxu0 0.0
    %2468 = vmatprep.subr.mxu0 0.0
    %2469 = vmatpush1.msra.mxu0 0.0
    %2470 = vmatprep.subr.mxu0 0.0
    %2471 = vmatpush1.msra.mxu0 0.0
    %2472 = vmatprep.subr.mxu0 0.0
    %2473 = vmatpush1.msra.mxu0 0.0
    %2474 = vmatprep.subr.mxu0 0.0
    %2475 = vmatpush1.msra.mxu0 0.0
    %2476 = vmatprep.subr.mxu0 0.0
    %2477 = vmatpush1.msra.mxu0 0.0
    %2478 = vmatprep.subr.mxu0 0.0
    %2479 = vmatpush1.msra.mxu0 0.0
    %2480 = vmatprep.subr.mxu0 0.0
    %2481 = vmatpush1.msra.mxu0 0.0
    %2482 = vmatprep.subr.mxu0 0.0
    %2483 = vmatpush1.msra.mxu0 0.0
    %2484 = vmatprep.subr.mxu0 0.0
    %2485 = vmatpush1.msra.mxu0 0.0
    %2486 = vmatprep.subr.mxu0 0.0
    %2487 = vmatpush1.msra.mxu0 0.0
    %2488 = vmatprep.subr.mxu0 0.0
    %2489 = vmatpush1.msra.mxu0 0.0
    %2490 = vmatprep.subr.mxu0 0.0
    %2491 = vmatpush1.msra.mxu0 0.0
    %2492 = vmatprep.subr.mxu0 0.0
    %2493 = vmatpush1.msra.mxu0 0.0
    %2494 = vmatprep.subr.mxu0 0.0
    %2495 = vmatpush1.msra.mxu0 0.0
    %2496 = vmatprep.subr.mxu0 0.0
    %2497 = vmatpush1.msra.mxu0 0.0
    %2498 = vmatprep.mubr.f32.mxu0 0.0
    %2499 = vmatmul.mubr.f32.gmra.mrb[0].mxu0 %v2076
    %v2500 = vpop.f32.mrb[0].mxu0
    %v2501 = vadd.f32 0.0, %v2500
    %v2502 = vpop.f32.mrb[0].mxu0
    %v2503 = vadd.f32 0.0, %v2502
    %2504 = vmatprep.mubr.f32.mxu0 0.0
    %2505 = vmatmul.mubr.f32.gmra.mrb[0].mxu0 %v2077
    %v2506 = vpop.f32.mrb[0].mxu0
    %v2507 = vadd.f32 0.0, %v2506
    %v2508 = vpop.f32.mrb[0].mxu0
    %v2509 = vadd.f32 0.0, %v2508
    %2510 = vdwg.mxu0
    %2511 = vmatprep.subr.mxu0 0.0
    %2512 = vmatpush1.msra.mxu0 %v592
    %2513 = vmatprep.subr.mxu0 0.0
    %2514 = vmatpush1.msra.mxu0 %v595
    %2515 = vmatprep.subr.mxu0 0.0
    %2516 = vmatpush1.msra.mxu0 %v598
    %2517 = vmatprep.subr.mxu0 0.0
    %2518 = vmatpush1.msra.mxu0 %v601
    %2519 = vmatprep.subr.mxu0 0.0
    %2520 = vmatpush1.msra.mxu0 %v604
    %2521 = vmatprep.subr.mxu0 0.0
    %2522 = vmatpush1.msra.mxu0 %v607
    %2523 = vmatprep.subr.mxu0 0.0
    %2524 = vmatpush1.msra.mxu0 %v610
    %2525 = vmatprep.subr.mxu0 0.0
    %2526 = vmatpush1.msra.mxu0 %v613
    %2527 = vmatprep.subr.mxu0 0.0
    %2528 = vmatpush1.msra.mxu0 %v616
    %2529 = vmatprep.subr.mxu0 0.0
    %2530 = vmatpush1.msra.mxu0 %v619
    %2531 = vmatprep.subr.mxu0 0.0
    %2532 = vmatpush1.msra.mxu0 %v622
    %2533 = vmatprep.subr.mxu0 0.0
    %2534 = vmatpush1.msra.mxu0 %v625
    %2535 = vmatprep.subr.mxu0 0.0
    %2536 = vmatpush1.msra.mxu0 %v628
    %2537 = vmatprep.subr.mxu0 0.0
    %2538 = vmatpush1.msra.mxu0 %v631
    %2539 = vmatprep.subr.mxu0 0.0
    %2540 = vmatpush1.msra.mxu0 %v634
    %2541 = vmatprep.subr.mxu0 0.0
    %2542 = vmatpush1.msra.mxu0 %v637
    %2543 = vmatprep.subr.mxu0 0.0
    %2544 = vmatpush1.msra.mxu0 0.0
    %2545 = vmatprep.subr.mxu0 0.0
    %2546 = vmatpush1.msra.mxu0 0.0
    %2547 = vmatprep.subr.mxu0 0.0
    %2548 = vmatpush1.msra.mxu0 0.0
    %2549 = vmatprep.subr.mxu0 0.0
    %2550 = vmatpush1.msra.mxu0 0.0
    %2551 = vmatprep.subr.mxu0 0.0
    %2552 = vmatpush1.msra.mxu0 0.0
    %2553 = vmatprep.subr.mxu0 0.0
    %2554 = vmatpush1.msra.mxu0 0.0
    %2555 = vmatprep.subr.mxu0 0.0
    %2556 = vmatpush1.msra.mxu0 0.0
    %2557 = vmatprep.subr.mxu0 0.0
    %2558 = vmatpush1.msra.mxu0 0.0
    %2559 = vmatprep.subr.mxu0 0.0
    %2560 = vmatpush1.msra.mxu0 0.0
    %2561 = vmatprep.subr.mxu0 0.0
    %2562 = vmatpush1.msra.mxu0 0.0
    %2563 = vmatprep.subr.mxu0 0.0
    %2564 = vmatpush1.msra.mxu0 0.0
    %2565 = vmatprep.subr.mxu0 0.0
    %2566 = vmatpush1.msra.mxu0 0.0
    %2567 = vmatprep.subr.mxu0 0.0
    %2568 = vmatpush1.msra.mxu0 0.0
    %2569 = vmatprep.subr.mxu0 0.0
    %2570 = vmatpush1.msra.mxu0 0.0
    %2571 = vmatprep.subr.mxu0 0.0
    %2572 = vmatpush1.msra.mxu0 0.0
    %2573 = vmatprep.subr.mxu0 0.0
    %2574 = vmatpush1.msra.mxu0 0.0
    %2575 = vmatprep.mubr.f32.mxu0 0.0
    %2576 = vmatmul.mubr.f32.gmra.mrb[0].mxu0 %v2076
    %v2577 = vpop.f32.mrb[0].mxu0
    %v2578 = vadd.f32 0.0, %v2577
    %v2579 = vpop.f32.mrb[0].mxu0
    %2580 = vmatprep.mubr.f32.mxu0 0.0
    %2581 = vmatmul.mubr.f32.gmra.mrb[0].mxu0 %v2077
    %v2582 = vpop.f32.mrb[0].mxu0
    %v2583 = vadd.f32 0.0, %v2582
    %v2584 = vpop.f32.mrb[0].mxu0
    %2585 = vdwg.mxu0
    %v2586 = vadd.f32 %v2428, %v2501
    %v2587 = vadd.f32 %v2431, %v2507
    %v2588 = vxor.u32 %v2586, 2147483648
    %v2589 = vxor.u32 %v2587, 2147483648
    %v2590 = vmul.f32 %v2588, 1.442695
    %v2591 = vpow.pop %v2590
    %v2592 = vmul.f32 %v2589, 1.442695
    %v2593 = vpow.pop %v2592
    %v2594 = vadd.f32 %v2591, 1.0
    %v2595 = vadd.f32 %v2593, 1.0
    %v2596 = vrcp.pop %v2594
    %v2597 = vmul.f32 1.0, %v2596
    %v2598 = vrcp.pop %v2595
    %v2599 = vmul.f32 1.0, %v2598
    %v2600 = vadd.f32 %v2429, %v2503
    %v2601 = vadd.f32 %v2432, %v2509
    %v2602 = vxor.u32 %v2600, 2147483648
    %v2603 = vxor.u32 %v2601, 2147483648
    %v2604 = vmul.f32 %v2602, 1.442695
    %v2605 = vpow.pop %v2604
    %v2606 = vmul.f32 %v2603, 1.442695
    %v2607 = vpow.pop %v2606
    %v2608 = vadd.f32 %v2605, 1.0
    %v2609 = vadd.f32 %v2607, 1.0
    %v2610 = vrcp.pop %v2608
    %v2611 = vmul.f32 1.0, %v2610
    %v2612 = vrcp.pop %v2609
    %v2613 = vmul.f32 1.0, %v2612
    %v2614 = vadd.f32 %v2578, %v757
    %v2615 = vadd.f32 %v2583, %v757
    %v2616 = vmul.f32 %v2597, %v2614
    %v2617 = vmul.f32 %v2599, %v2615
    %v2618 = vadd.f32 %v2430, %v2616
    %v2619 = vadd.f32 %v2433, %v2617
    %v2620 = vtanh.pop %v2618
    %v2621 = vtanh.pop %v2619
    %v2622 = vsub.f32 1.0, %v2611
    %v2623 = vsub.f32 1.0, %v2613
    %v2624 = vmul.f32 %v2622, %v2620
    %v2625 = vmul.f32 %v2623, %v2621
    %v2626 = vmul.f32 %v2611, %v2076
    %v2627 = vmul.f32 %v2613, %v2077
    %v2628 = vadd.f32 %v2624, %v2626
    %v2629 = vadd.f32 %v2625, %v2627
    %2630 = vmatprep.subr.mxu0 %v688
    %2631 = vmatpush1.msra.mxu0 %v687
    %2632 = vmatprep.subr.mxu0 %v691
    %2633 = vmatpush1.msra.mxu0 %v690
    %2634 = vmatprep.subr.mxu0 %v694
    %2635 = vmatpush1.msra.mxu0 %v693
    %2636 = vmatprep.subr.mxu0 %v697
    %2637 = vmatpush1.msra.mxu0 %v696
    %2638 = vmatprep.subr.mxu0 %v700
    %2639 = vmatpush1.msra.mxu0 %v699
    %2640 = vmatprep.subr.mxu0 %v703
    %2641 = vmatpush1.msra.mxu0 %v702
    %2642 = vmatprep.subr.mxu0 %v706
    %2643 = vmatpush1.msra.mxu0 %v705
    %2644 = vmatprep.subr.mxu0 %v709
    %2645 = vmatpush1.msra.mxu0 %v708
    %2646 = vmatprep.subr.mxu0 %v712
    %2647 = vmatpush1.msra.mxu0 %v711
    %2648 = vmatprep.subr.mxu0 %v715
    %2649 = vmatpush1.msra.mxu0 %v714
    %2650 = vmatprep.subr.mxu0 %v718
    %2651 = vmatpush1.msra.mxu0 %v717
    %2652 = vmatprep.subr.mxu0 %v721
    %2653 = vmatpush1.msra.mxu0 %v720
    %2654 = vmatprep.subr.mxu0 %v724
    %2655 = vmatpush1.msra.mxu0 %v723
    %2656 = vmatprep.subr.mxu0 %v727
    %2657 = vmatpush1.msra.mxu0 %v726
    %2658 = vmatprep.subr.mxu0 %v730
    %2659 = vmatpush1.msra.mxu0 %v729
    %2660 = vmatprep.subr.mxu0 %v733
    %2661 = vmatpush1.msra.mxu0 %v732
    %2662 = vmatprep.subr.mxu0 0.0
    %2663 = vmatpush1.msra.mxu0 0.0
    %2664 = vmatprep.subr.mxu0 0.0
    %2665 = vmatpush1.msra.mxu0 0.0
    %2666 = vmatprep.subr.mxu0 0.0
    %2667 = vmatpush1.msra.mxu0 0.0
    %2668 = vmatprep.subr.mxu0 0.0
    %2669 = vmatpush1.msra.mxu0 0.0
    %2670 = vmatprep.subr.mxu0 0.0
    %2671 = vmatpush1.msra.mxu0 0.0
    %2672 = vmatprep.subr.mxu0 0.0
    %2673 = vmatpush1.msra.mxu0 0.0
    %2674 = vmatprep.subr.mxu0 0.0
    %2675 = vmatpush1.msra.mxu0 0.0
    %2676 = vmatprep.subr.mxu0 0.0
    %2677 = vmatpush1.msra.mxu0 0.0
    %2678 = vmatprep.subr.mxu0 0.0
    %2679 = vmatpush1.msra.mxu0 0.0
    %2680 = vmatprep.subr.mxu0 0.0
    %2681 = vmatpush1.msra.mxu0 0.0
    %2682 = vmatprep.subr.mxu0 0.0
    %2683 = vmatpush1.msra.mxu0 0.0
    %2684 = vmatprep.subr.mxu0 0.0
    %2685 = vmatpush1.msra.mxu0 0.0
    %2686 = vmatprep.subr.mxu0 0.0
    %2687 = vmatpush1.msra.mxu0 0.0
    %2688 = vmatprep.subr.mxu0 0.0
    %2689 = vmatpush1.msra.mxu0 0.0
    %2690 = vmatprep.subr.mxu0 0.0
    %2691 = vmatpush1.msra.mxu0 0.0
    %2692 = vmatprep.subr.mxu0 0.0
    %2693 = vmatpush1.msra.mxu0 0.0
    %2694 = vmatprep.mubr.f32.mxu0 0.0
    %2695 = vmatmul.mubr.f32.gmra.mrb[0].mxu0 %v2628
    %v2696 = vpop.f32.mrb[0].mxu0
    %v2697 = vadd.f32 %v740, %v2696
    %v2698 = vpop.f32.mrb[0].mxu0
    %v2699 = vadd.f32 %v744, %v2698
    %2700 = vmatprep.mubr.f32.mxu0 0.0
    %2701 = vmatmul.mubr.f32.gmra.mrb[0].mxu0 %v2629
    %v2702 = vpop.f32.mrb[0].mxu0
    %v2703 = vadd.f32 %v740, %v2702
    %v2704 = vpop.f32.mrb[0].mxu0
    %v2705 = vadd.f32 %v744, %v2704
    %2706 = vdwg.mxu0
    %2707 = vmatprep.subr.mxu0 0.0
    %2708 = vmatpush1.msra.mxu0 %v689
    %2709 = vmatprep.subr.mxu0 0.0
    %2710 = vmatpush1.msra.mxu0 %v692
    %2711 = vmatprep.subr.mxu0 0.0
    %2712 = vmatpush1.msra.mxu0 %v695
    %2713 = vmatprep.subr.mxu0 0.0
    %2714 = vmatpush1.msra.mxu0 %v698
    %2715 = vmatprep.subr.mxu0 0.0
    %2716 = vmatpush1.msra.mxu0 %v701
    %2717 = vmatprep.subr.mxu0 0.0
    %2718 = vmatpush1.msra.mxu0 %v704
    %2719 = vmatprep.subr.mxu0 0.0
    %2720 = vmatpush1.msra.mxu0 %v707
    %2721 = vmatprep.subr.mxu0 0.0
    %2722 = vmatpush1.msra.mxu0 %v710
    %2723 = vmatprep.subr.mxu0 0.0
    %2724 = vmatpush1.msra.mxu0 %v713
    %2725 = vmatprep.subr.mxu0 0.0
    %2726 = vmatpush1.msra.mxu0 %v716
    %2727 = vmatprep.subr.mxu0 0.0
    %2728 = vmatpush1.msra.mxu0 %v719
    %2729 = vmatprep.subr.mxu0 0.0
    %2730 = vmatpush1.msra.mxu0 %v722
    %2731 = vmatprep.subr.mxu0 0.0
    %2732 = vmatpush1.msra.mxu0 %v725
    %2733 = vmatprep.subr.mxu0 0.0
    %2734 = vmatpush1.msra.mxu0 %v728
    %2735 = vmatprep.subr.mxu0 0.0
    %2736 = vmatpush1.msra.mxu0 %v731
    %2737 = vmatprep.subr.mxu0 0.0
    %2738 = vmatpush1.msra.mxu0 %v734
    %2739 = vmatprep.subr.mxu0 0.0
    %2740 = vmatpush1.msra.mxu0 0.0
    %2741 = vmatprep.subr.mxu0 0.0
    %2742 = vmatpush1.msra.mxu0 0.0
    %2743 = vmatprep.subr.mxu0 0.0
    %2744 = vmatpush1.msra.mxu0 0.0
    %2745 = vmatprep.subr.mxu0 0.0
    %2746 = vmatpush1.msra.mxu0 0.0
    %2747 = vmatprep.subr.mxu0 0.0
    %2748 = vmatpush1.msra.mxu0 0.0
    %2749 = vmatprep.subr.mxu0 0.0
    %2750 = vmatpush1.msra.mxu0 0.0
    %2751 = vmatprep.subr.mxu0 0.0
    %2752 = vmatpush1.msra.mxu0 0.0
    %2753 = vmatprep.subr.mxu0 0.0
    %2754 = vmatpush1.msra.mxu0 0.0
    %2755 = vmatprep.subr.mxu0 0.0
    %2756 = vmatpush1.msra.mxu0 0.0
    %2757 = vmatprep.subr.mxu0 0.0
    %2758 = vmatpush1.msra.mxu0 0.0
    %2759 = vmatprep.subr.mxu0 0.0
    %2760 = vmatpush1.msra.mxu0 0.0
    %2761 = vmatprep.subr.mxu0 0.0
    %2762 = vmatpush1.msra.mxu0 0.0
    %2763 = vmatprep.subr.mxu0 0.0
    %2764 = vmatpush1.msra.mxu0 0.0
    %2765 = vmatprep.subr.mxu0 0.0
    %2766 = vmatpush1.msra.mxu0 0.0
    %2767 = vmatprep.subr.mxu0 0.0
    %2768 = vmatpush1.msra.mxu0 0.0
    %2769 = vmatprep.subr.mxu0 0.0
    %2770 = vmatpush1.msra.mxu0 0.0
    %2771 = vmatprep.mubr.f32.mxu0 0.0
    %2772 = vmatmul.mubr.f32.gmra.mrb[0].mxu0 %v2628
    %v2773 = vpop.f32.mrb[0].mxu0
    %v2774 = vadd.f32 %v748, %v2773
    %v2775 = vpop.f32.mrb[0].mxu0
    %2776 = vmatprep.mubr.f32.mxu0 0.0
    %2777 = vmatmul.mubr.f32.gmra.mrb[0].mxu0 %v2629
    %v2778 = vpop.f32.mrb[0].mxu0
    %v2779 = vadd.f32 %v748, %v2778
    %v2780 = vpop.f32.mrb[0].mxu0
    %2781 = vdwg.mxu0
    %2782 = vmatprep.subr.mxu0 %v640
    %2783 = vmatpush1.msra.mxu0 %v639
    %2784 = vmatprep.subr.mxu0 %v643
    %2785 = vmatpush1.msra.mxu0 %v642
    %2786 = vmatprep.subr.mxu0 %v646
    %2787 = vmatpush1.msra.mxu0 %v645
    %2788 = vmatprep.subr.mxu0 %v649
    %2789 = vmatpush1.msra.mxu0 %v648
    %2790 = vmatprep.subr.mxu0 %v652
    %2791 = vmatpush1.msra.mxu0 %v651
    %2792 = vmatprep.subr.mxu0 %v655
    %2793 = vmatpush1.msra.mxu0 %v654
    %2794 = vmatprep.subr.mxu0 %v658
    %2795 = vmatpush1.msra.mxu0 %v657
    %2796 = vmatprep.subr.mxu0 %v661
    %2797 = vmatpush1.msra.mxu0 %v660
    %2798 = vmatprep.subr.mxu0 %v664
    %2799 = vmatpush1.msra.mxu0 %v663
    %2800 = vmatprep.subr.mxu0 %v667
    %2801 = vmatpush1.msra.mxu0 %v666
    %2802 = vmatprep.subr.mxu0 %v670
    %2803 = vmatpush1.msra.mxu0 %v669
    %2804 = vmatprep.subr.mxu0 %v673
    %2805 = vmatpush1.msra.mxu0 %v672
    %2806 = vmatprep.subr.mxu0 %v676
    %2807 = vmatpush1.msra.mxu0 %v675
    %2808 = vmatprep.subr.mxu0 %v679
    %2809 = vmatpush1.msra.mxu0 %v678
    %2810 = vmatprep.subr.mxu0 %v682
    %2811 = vmatpush1.msra.mxu0 %v681
    %2812 = vmatprep.subr.mxu0 %v685
    %2813 = vmatpush1.msra.mxu0 %v684
    %2814 = vmatprep.subr.mxu0 0.0
    %2815 = vmatpush1.msra.mxu0 0.0
    %2816 = vmatprep.subr.mxu0 0.0
    %2817 = vmatpush1.msra.mxu0 0.0
    %2818 = vmatprep.subr.mxu0 0.0
    %2819 = vmatpush1.msra.mxu0 0.0
    %2820 = vmatprep.subr.mxu0 0.0
    %2821 = vmatpush1.msra.mxu0 0.0
    %2822 = vmatprep.subr.mxu0 0.0
    %2823 = vmatpush1.msra.mxu0 0.0
    %2824 = vmatprep.subr.mxu0 0.0
    %2825 = vmatpush1.msra.mxu0 0.0
    %2826 = vmatprep.subr.mxu0 0.0
    %2827 = vmatpush1.msra.mxu0 0.0
    %2828 = vmatprep.subr.mxu0 0.0
    %2829 = vmatpush1.msra.mxu0 0.0
    %2830 = vmatprep.subr.mxu0 0.0
    %2831 = vmatpush1.msra.mxu0 0.0
    %2832 = vmatprep.subr.mxu0 0.0
    %2833 = vmatpush1.msra.mxu0 0.0
    %2834 = vmatprep.subr.mxu0 0.0
    %2835 = vmatpush1.msra.mxu0 0.0
    %2836 = vmatprep.subr.mxu0 0.0
    %2837 = vmatpush1.msra.mxu0 0.0
    %2838 = vmatprep.subr.mxu0 0.0
    %2839 = vmatpush1.msra.mxu0 0.0
    %2840 = vmatprep.subr.mxu0 0.0
    %2841 = vmatpush1.msra.mxu0 0.0
    %2842 = vmatprep.subr.mxu0 0.0
    %2843 = vmatpush1.msra.mxu0 0.0
    %2844 = vmatprep.subr.mxu0 0.0
    %2845 = vmatpush1.msra.mxu0 0.0
    %2846 = vmatprep.mubr.f32.mxu0 0.0
    %2847 = vmatmul.mubr.f32.gmra.mrb[0].mxu0 %v2424
    %v2848 = vpop.f32.mrb[0].mxu0
    %v2849 = vadd.f32 0.0, %v2848
    %v2850 = vpop.f32.mrb[0].mxu0
    %v2851 = vadd.f32 0.0, %v2850
    %2852 = vmatprep.mubr.f32.mxu0 0.0
    %2853 = vmatmul.mubr.f32.gmra.mrb[0].mxu0 %v2425
    %v2854 = vpop.f32.mrb[0].mxu0
    %v2855 = vadd.f32 0.0, %v2854
    %v2856 = vpop.f32.mrb[0].mxu0
    %v2857 = vadd.f32 0.0, %v2856
    %2858 = vdwg.mxu0
    %2859 = vmatprep.subr.mxu0 0.0
    %2860 = vmatpush1.msra.mxu0 %v641
    %2861 = vmatprep.subr.mxu0 0.0
    %2862 = vmatpush1.msra.mxu0 %v644
    %2863 = vmatprep.subr.mxu0 0.0
    %2864 = vmatpush1.msra.mxu0 %v647
    %2865 = vmatprep.subr.mxu0 0.0
    %2866 = vmatpush1.msra.mxu0 %v650
    %2867 = vmatprep.subr.mxu0 0.0
    %2868 = vmatpush1.msra.mxu0 %v653
    %2869 = vmatprep.subr.mxu0 0.0
    %2870 = vmatpush1.msra.mxu0 %v656
    %2871 = vmatprep.subr.mxu0 0.0
    %2872 = vmatpush1.msra.mxu0 %v659
    %2873 = vmatprep.subr.mxu0 0.0
    %2874 = vmatpush1.msra.mxu0 %v662
    %2875 = vmatprep.subr.mxu0 0.0
    %2876 = vmatpush1.msra.mxu0 %v665
    %2877 = vmatprep.subr.mxu0 0.0
    %2878 = vmatpush1.msra.mxu0 %v668
    %2879 = vmatprep.subr.mxu0 0.0
    %2880 = vmatpush1.msra.mxu0 %v671
    %2881 = vmatprep.subr.mxu0 0.0
    %2882 = vmatpush1.msra.mxu0 %v674
    %2883 = vmatprep.subr.mxu0 0.0
    %2884 = vmatpush1.msra.mxu0 %v677
    %2885 = vmatprep.subr.mxu0 0.0
    %2886 = vmatpush1.msra.mxu0 %v680
    %2887 = vmatprep.subr.mxu0 0.0
    %2888 = vmatpush1.msra.mxu0 %v683
    %2889 = vmatprep.subr.mxu0 0.0
    %2890 = vmatpush1.msra.mxu0 %v686
    %2891 = vmatprep.subr.mxu0 0.0
    %2892 = vmatpush1.msra.mxu0 0.0
    %2893 = vmatprep.subr.mxu0 0.0
    %2894 = vmatpush1.msra.mxu0 0.0
    %2895 = vmatprep.subr.mxu0 0.0
    %2896 = vmatpush1.msra.mxu0 0.0
    %2897 = vmatprep.subr.mxu0 0.0
    %2898 = vmatpush1.msra.mxu0 0.0
    %2899 = vmatprep.subr.mxu0 0.0
    %2900 = vmatpush1.msra.mxu0 0.0
    %2901 = vmatprep.subr.mxu0 0.0
    %2902 = vmatpush1.msra.mxu0 0.0
    %2903 = vmatprep.subr.mxu0 0.0
    %2904 = vmatpush1.msra.mxu0 0.0
    %2905 = vmatprep.subr.mxu0 0.0
    %2906 = vmatpush1.msra.mxu0 0.0
    %2907 = vmatprep.subr.mxu0 0.0
    %2908 = vmatpush1.msra.mxu0 0.0
    %2909 = vmatprep.subr.mxu0 0.0
    %2910 = vmatpush1.msra.mxu0 0.0
    %2911 = vmatprep.subr.mxu0 0.0
    %2912 = vmatpush1.msra.mxu0 0.0
    %2913 = vmatprep.subr.mxu0 0.0
    %2914 = vmatpush1.msra.mxu0 0.0
    %2915 = vmatprep.subr.mxu0 0.0
    %2916 = vmatpush1.msra.mxu0 0.0
    %2917 = vmatprep.subr.mxu0 0.0
    %2918 = vmatpush1.msra.mxu0 0.0
    %2919 = vmatprep.subr.mxu0 0.0
    %2920 = vmatpush1.msra.mxu0 0.0
    %2921 = vmatprep.subr.mxu0 0.0
    %2922 = vmatpush1.msra.mxu0 0.0
    %2923 = vmatprep.mubr.f32.mxu0 0.0
    %2924 = vmatmul.mubr.f32.gmra.mrb[0].mxu0 %v2424
    %v2925 = vpop.f32.mrb[0].mxu0
    %v2926 = vadd.f32 0.0, %v2925
    %v2927 = vpop.f32.mrb[0].mxu0
    %2928 = vmatprep.mubr.f32.mxu0 0.0
    %2929 = vmatmul.mubr.f32.gmra.mrb[0].mxu0 %v2425
    %v2930 = vpop.f32.mrb[0].mxu0
    %v2931 = vadd.f32 0.0, %v2930
    %v2932 = vpop.f32.mrb[0].mxu0
    %2933 = vdwg.mxu0
    %v2934 = vadd.f32 %v2697, %v2849
    %v2935 = vadd.f32 %v2703, %v2855
    %v2936 = vxor.u32 %v2934, 2147483648
    %v2937 = vxor.u32 %v2935, 2147483648
    %v2938 = vmul.f32 %v2936, 1.442695
    %v2939 = vpow.pop %v2938
    %v2940 = vmul.f32 %v2937, 1.442695
    %v2941 = vpow.pop %v2940
    %v2942 = vadd.f32 %v2939, 1.0
    %v2943 = vadd.f32 %v2941, 1.0
    %v2944 = vrcp.pop %v2942
    %v2945 = vmul.f32 1.0, %v2944
    %v2946 = vrcp.pop %v2943
    %v2947 = vmul.f32 1.0, %v2946
    %v2948 = vadd.f32 %v2699, %v2851
    %v2949 = vadd.f32 %v2705, %v2857
    %v2950 = vxor.u32 %v2948, 2147483648
    %v2951 = vxor.u32 %v2949, 2147483648
    %v2952 = vmul.f32 %v2950, 1.442695
    %v2953 = vpow.pop %v2952
    %v2954 = vmul.f32 %v2951, 1.442695
    %v2955 = vpow.pop %v2954
    %v2956 = vadd.f32 %v2953, 1.0
    %v2957 = vadd.f32 %v2955, 1.0
    %v2958 = vrcp.pop %v2956
    %v2959 = vmul.f32 1.0, %v2958
    %v2960 = vrcp.pop %v2957
    %v2961 = vmul.f32 1.0, %v2960
    %v2962 = vadd.f32 %v2926, %v765
    %v2963 = vadd.f32 %v2931, %v765
    %v2964 = vmul.f32 %v2945, %v2962
    %v2965 = vmul.f32 %v2947, %v2963
    %v2966 = vadd.f32 %v2774, %v2964
    %v2967 = vadd.f32 %v2779, %v2965
    %v2968 = vtanh.pop %v2966
    %v2969 = vtanh.pop %v2967
    %v2970 = vsub.f32 1.0, %v2959
    %v2971 = vsub.f32 1.0, %v2961
    %v2972 = vmul.f32 %v2970, %v2968
    %v2973 = vmul.f32 %v2971, %v2969
    %v2974 = vmul.f32 %v2959, %v2424
    %v2975 = vmul.f32 %v2961, %v2425
    %v2976 = vadd.f32 %v2972, %v2974
    %v2977 = vadd.f32 %v2973, %v2975
    %2978 = vst [vmem:[#allocation2 + $0x30] sm:$0xff] %v2976
    %2979 = vst [vmem:[#allocation2 + $0x38] sm:$0xff] %v2977
    %v2980 = vld [vmem:[#allocation3 + $0xc0] sm:$0xff]
    %v2981 = vld [vmem:[#allocation3 + $0xc8] sm:$0xff]
    %v2982 = vld [vmem:[#allocation3 + $0xd0] sm:$0xff]
    %v2983 = vld [vmem:[#allocation3 + $0xd8] sm:$0xff]
    %v2984 = vld [vmem:[#allocation3 + $0xe0] sm:$0xff]
    %v2985 = vld [vmem:[#allocation3 + $0xe8] sm:$0xff]
    %2986 = vmatprep.subr.mxu0 %v591
    %2987 = vmatpush1.msra.mxu0 %v590
    %2988 = vmatprep.subr.mxu0 %v594
    %2989 = vmatpush1.msra.mxu0 %v593
    %2990 = vmatprep.subr.mxu0 %v597
    %2991 = vmatpush1.msra.mxu0 %v596
    %2992 = vmatprep.subr.mxu0 %v600
    %2993 = vmatpush1.msra.mxu0 %v599
    %2994 = vmatprep.subr.mxu0 %v603
    %2995 = vmatpush1.msra.mxu0 %v602
    %2996 = vmatprep.subr.mxu0 %v606
    %2997 = vmatpush1.msra.mxu0 %v605
    %2998 = vmatprep.subr.mxu0 %v609
    %2999 = vmatpush1.msra.mxu0 %v608
    %3000 = vmatprep.subr.mxu0 %v612
    %3001 = vmatpush1.msra.mxu0 %v611
    %3002 = vmatprep.subr.mxu0 %v615
    %3003 = vmatpush1.msra.mxu0 %v614
    %3004 = vmatprep.subr.mxu0 %v618
    %3005 = vmatpush1.msra.mxu0 %v617
    %3006 = vmatprep.subr.mxu0 %v621
    %3007 = vmatpush1.msra.mxu0 %v620
    %3008 = vmatprep.subr.mxu0 %v624
    %3009 = vmatpush1.msra.mxu0 %v623
    %3010 = vmatprep.subr.mxu0 %v627
    %3011 = vmatpush1.msra.mxu0 %v626
    %3012 = vmatprep.subr.mxu0 %v630
    %3013 = vmatpush1.msra.mxu0 %v629
    %3014 = vmatprep.subr.mxu0 %v633
    %3015 = vmatpush1.msra.mxu0 %v632
    %3016 = vmatprep.subr.mxu0 %v636
    %3017 = vmatpush1.msra.mxu0 %v635
    %3018 = vmatprep.subr.mxu0 0.0
    %3019 = vmatpush1.msra.mxu0 0.0
    %3020 = vmatprep.subr.mxu0 0.0
    %3021 = vmatpush1.msra.mxu0 0.0
    %3022 = vmatprep.subr.mxu0 0.0
    %3023 = vmatpush1.msra.mxu0 0.0
    %3024 = vmatprep.subr.mxu0 0.0
    %3025 = vmatpush1.msra.mxu0 0.0
    %3026 = vmatprep.subr.mxu0 0.0
    %3027 = vmatpush1.msra.mxu0 0.0
    %3028 = vmatprep.subr.mxu0 0.0
    %3029 = vmatpush1.msra.mxu0 0.0
    %3030 = vmatprep.subr.mxu0 0.0
    %3031 = vmatpush1.msra.mxu0 0.0
    %3032 = vmatprep.subr.mxu0 0.0
    %3033 = vmatpush1.msra.mxu0 0.0
    %3034 = vmatprep.subr.mxu0 0.0
    %3035 = vmatpush1.msra.mxu0 0.0
    %3036 = vmatprep.subr.mxu0 0.0
    %3037 = vmatpush1.msra.mxu0 0.0
    %3038 = vmatprep.subr.mxu0 0.0
    %3039 = vmatpush1.msra.mxu0 0.0
    %3040 = vmatprep.subr.mxu0 0.0
    %3041 = vmatpush1.msra.mxu0 0.0
    %3042 = vmatprep.subr.mxu0 0.0
    %3043 = vmatpush1.msra.mxu0 0.0
    %3044 = vmatprep.subr.mxu0 0.0
    %3045 = vmatpush1.msra.mxu0 0.0
    %3046 = vmatprep.subr.mxu0 0.0
    %3047 = vmatpush1.msra.mxu0 0.0
    %3048 = vmatprep.subr.mxu0 0.0
    %3049 = vmatpush1.msra.mxu0 0.0
    %3050 = vmatprep.mubr.f32.mxu0 0.0
    %3051 = vmatmul.mubr.f32.gmra.mrb[0].mxu0 %v2628
    %v3052 = vpop.f32.mrb[0].mxu0
    %v3053 = vadd.f32 0.0, %v3052
    %v3054 = vpop.f32.mrb[0].mxu0
    %v3055 = vadd.f32 0.0, %v3054
    %3056 = vmatprep.mubr.f32.mxu0 0.0
    %3057 = vmatmul.mubr.f32.gmra.mrb[0].mxu0 %v2629
    %v3058 = vpop.f32.mrb[0].mxu0
    %v3059 = vadd.f32 0.0, %v3058
    %v3060 = vpop.f32.mrb[0].mxu0
    %v3061 = vadd.f32 0.0, %v3060
    %3062 = vdwg.mxu0
    %3063 = vmatprep.subr.mxu0 0.0
    %3064 = vmatpush1.msra.mxu0 %v592
    %3065 = vmatprep.subr.mxu0 0.0
    %3066 = vmatpush1.msra.mxu0 %v595
    %3067 = vmatprep.subr.mxu0 0.0
    %3068 = vmatpush1.msra.mxu0 %v598
    %3069 = vmatprep.subr.mxu0 0.0
    %3070 = vmatpush1.msra.mxu0 %v601
    %3071 = vmatprep.subr.mxu0 0.0
    %3072 = vmatpush1.msra.mxu0 %v604
    %3073 = vmatprep.subr.mxu0 0.0
    %3074 = vmatpush1.msra.mxu0 %v607
    %3075 = vmatprep.subr.mxu0 0.0
    %3076 = vmatpush1.msra.mxu0 %v610
    %3077 = vmatprep.subr.mxu0 0.0
    %3078 = vmatpush1.msra.mxu0 %v613
    %3079 = vmatprep.subr.mxu0 0.0
    %3080 = vmatpush1.msra.mxu0 %v616
    %3081 = vmatprep.subr.mxu0 0.0
    %3082 = vmatpush1.msra.mxu0 %v619
    %3083 = vmatprep.subr.mxu0 0.0
    %3084 = vmatpush1.msra.mxu0 %v622
    %3085 = vmatprep.subr.mxu0 0.0
    %3086 = vmatpush1.msra.mxu0 %v625
    %3087 = vmatprep.subr.mxu0 0.0
    %3088 = vmatpush1.msra.mxu0 %v628
    %3089 = vmatprep.subr.mxu0 0.0
    %3090 = vmatpush1.msra.mxu0 %v631
    %3091 = vmatprep.subr.mxu0 0.0
    %3092 = vmatpush1.msra.mxu0 %v634
    %3093 = vmatprep.subr.mxu0 0.0
    %3094 = vmatpush1.msra.mxu0 %v637
    %3095 = vmatprep.subr.mxu0 0.0
    %3096 = vmatpush1.msra.mxu0 0.0
    %3097 = vmatprep.subr.mxu0 0.0
    %3098 = vmatpush1.msra.mxu0 0.0
    %3099 = vmatprep.subr.mxu0 0.0
    %3100 = vmatpush1.msra.mxu0 0.0
    %3101 = vmatprep.subr.mxu0 0.0
    %3102 = vmatpush1.msra.mxu0 0.0
    %3103 = vmatprep.subr.mxu0 0.0
    %3104 = vmatpush1.msra.mxu0 0.0
    %3105 = vmatprep.subr.mxu0 0.0
    %3106 = vmatpush1.msra.mxu0 0.0
    %3107 = vmatprep.subr.mxu0 0.0
    %3108 = vmatpush1.msra.mxu0 0.0
    %3109 = vmatprep.subr.mxu0 0.0
    %3110 = vmatpush1.msra.mxu0 0.0
    %3111 = vmatprep.subr.mxu0 0.0
    %3112 = vmatpush1.msra.mxu0 0.0
    %3113 = vmatprep.subr.mxu0 0.0
    %3114 = vmatpush1.msra.mxu0 0.0
    %3115 = vmatprep.subr.mxu0 0.0
    %3116 = vmatpush1.msra.mxu0 0.0
    %3117 = vmatprep.subr.mxu0 0.0
    %3118 = vmatpush1.msra.mxu0 0.0
    %3119 = vmatprep.subr.mxu0 0.0
    %3120 = vmatpush1.msra.mxu0 0.0
    %3121 = vmatprep.subr.mxu0 0.0
    %3122 = vmatpush1.msra.mxu0 0.0
    %3123 = vmatprep.subr.mxu0 0.0
    %3124 = vmatpush1.msra.mxu0 0.0
    %3125 = vmatprep.subr.mxu0 0.0
    %3126 = vmatpush1.msra.mxu0 0.0
    %3127 = vmatprep.mubr.f32.mxu0 0.0
    %3128 = vmatmul.mubr.f32.gmra.mrb[0].mxu0 %v2628
    %v3129 = vpop.f32.mrb[0].mxu0
    %v3130 = vadd.f32 0.0, %v3129
    %v3131 = vpop.f32.mrb[0].mxu0
    %3132 = vmatprep.mubr.f32.mxu0 0.0
    %3133 = vmatmul.mubr.f32.gmra.mrb[0].mxu0 %v2629
    %v3134 = vpop.f32.mrb[0].mxu0
    %v3135 = vadd.f32 0.0, %v3134
    %v3136 = vpop.f32.mrb[0].mxu0
    %3137 = vdwg.mxu0
    %v3138 = vadd.f32 %v2980, %v3053
    %v3139 = vadd.f32 %v2983, %v3059
    %v3140 = vxor.u32 %v3138, 2147483648
    %v3141 = vxor.u32 %v3139, 2147483648
    %v3142 = vmul.f32 %v3140, 1.442695
    %v3143 = vpow.pop %v3142
    %v3144 = vmul.f32 %v3141, 1.442695
    %v3145 = vpow.pop %v3144
    %v3146 = vadd.f32 %v3143, 1.0
    %v3147 = vadd.f32 %v3145, 1.0
    %v3148 = vrcp.pop %v3146
    %v3149 = vmul.f32 1.0, %v3148
    %v3150 = vrcp.pop %v3147
    %v3151 = vmul.f32 1.0, %v3150
    %v3152 = vadd.f32 %v2981, %v3055
    %v3153 = vadd.f32 %v2984, %v3061
    %v3154 = vxor.u32 %v3152, 2147483648
    %v3155 = vxor.u32 %v3153, 2147483648
    %v3156 = vmul.f32 %v3154, 1.442695
    %v3157 = vpow.pop %v3156
    %v3158 = vmul.f32 %v3155, 1.442695
    %v3159 = vpow.pop %v3158
    %v3160 = vadd.f32 %v3157, 1.0
    %v3161 = vadd.f32 %v3159, 1.0
    %v3162 = vrcp.pop %v3160
    %v3163 = vmul.f32 1.0, %v3162
    %v3164 = vrcp.pop %v3161
    %v3165 = vmul.f32 1.0, %v3164
    %v3166 = vadd.f32 %v3130, %v757
    %v3167 = vadd.f32 %v3135, %v757
    %v3168 = vmul.f32 %v3149, %v3166
    %v3169 = vmul.f32 %v3151, %v3167
    %v3170 = vadd.f32 %v2982, %v3168
    %v3171 = vadd.f32 %v2985, %v3169
    %v3172 = vtanh.pop %v3170
    %v3173 = vtanh.pop %v3171
    %v3174 = vsub.f32 1.0, %v3163
    %v3175 = vsub.f32 1.0, %v3165
    %v3176 = vmul.f32 %v3174, %v3172
    %v3177 = vmul.f32 %v3175, %v3173
    %v3178 = vmul.f32 %v3163, %v2628
    %v3179 = vmul.f32 %v3165, %v2629
    %v3180 = vadd.f32 %v3176, %v3178
    %v3181 = vadd.f32 %v3177, %v3179
    %3182 = vmatprep.subr.mxu0 %v688
    %3183 = vmatpush1.msra.mxu0 %v687
    %3184 = vmatprep.subr.mxu0 %v691
    %3185 = vmatpush1.msra.mxu0 %v690
    %3186 = vmatprep.subr.mxu0 %v694
    %3187 = vmatpush1.msra.mxu0 %v693
    %3188 = vmatprep.subr.mxu0 %v697
    %3189 = vmatpush1.msra.mxu0 %v696
    %3190 = vmatprep.subr.mxu0 %v700
    %3191 = vmatpush1.msra.mxu0 %v699
    %3192 = vmatprep.subr.mxu0 %v703
    %3193 = vmatpush1.msra.mxu0 %v702
    %3194 = vmatprep.subr.mxu0 %v706
    %3195 = vmatpush1.msra.mxu0 %v705
    %3196 = vmatprep.subr.mxu0 %v709
    %3197 = vmatpush1.msra.mxu0 %v708
    %3198 = vmatprep.subr.mxu0 %v712
    %3199 = vmatpush1.msra.mxu0 %v711
    %3200 = vmatprep.subr.mxu0 %v715
    %3201 = vmatpush1.msra.mxu0 %v714
    %3202 = vmatprep.subr.mxu0 %v718
    %3203 = vmatpush1.msra.mxu0 %v717
    %3204 = vmatprep.subr.mxu0 %v721
    %3205 = vmatpush1.msra.mxu0 %v720
    %3206 = vmatprep.subr.mxu0 %v724
    %3207 = vmatpush1.msra.mxu0 %v723
    %3208 = vmatprep.subr.mxu0 %v727
    %3209 = vmatpush1.msra.mxu0 %v726
    %3210 = vmatprep.subr.mxu0 %v730
    %3211 = vmatpush1.msra.mxu0 %v729
    %3212 = vmatprep.subr.mxu0 %v733
    %3213 = vmatpush1.msra.mxu0 %v732
    %3214 = vmatprep.subr.mxu0 0.0
    %3215 = vmatpush1.msra.mxu0 0.0
    %3216 = vmatprep.subr.mxu0 0.0
    %3217 = vmatpush1.msra.mxu0 0.0
    %3218 = vmatprep.subr.mxu0 0.0
    %3219 = vmatpush1.msra.mxu0 0.0
    %3220 = vmatprep.subr.mxu0 0.0
    %3221 = vmatpush1.msra.mxu0 0.0
    %3222 = vmatprep.subr.mxu0 0.0
    %3223 = vmatpush1.msra.mxu0 0.0
    %3224 = vmatprep.subr.mxu0 0.0
    %3225 = vmatpush1.msra.mxu0 0.0
    %3226 = vmatprep.subr.mxu0 0.0
    %3227 = vmatpush1.msra.mxu0 0.0
    %3228 = vmatprep.subr.mxu0 0.0
    %3229 = vmatpush1.msra.mxu0 0.0
    %3230 = vmatprep.subr.mxu0 0.0
    %3231 = vmatpush1.msra.mxu0 0.0
    %3232 = vmatprep.subr.mxu0 0.0
    %3233 = vmatpush1.msra.mxu0 0.0
    %3234 = vmatprep.subr.mxu0 0.0
    %3235 = vmatpush1.msra.mxu0 0.0
    %3236 = vmatprep.subr.mxu0 0.0
    %3237 = vmatpush1.msra.mxu0 0.0
    %3238 = vmatprep.subr.mxu0 0.0
    %3239 = vmatpush1.msra.mxu0 0.0
    %3240 = vmatprep.subr.mxu0 0.0
    %3241 = vmatpush1.msra.mxu0 0.0
    %3242 = vmatprep.subr.mxu0 0.0
    %3243 = vmatpush1.msra.mxu0 0.0
    %3244 = vmatprep.subr.mxu0 0.0
    %3245 = vmatpush1.msra.mxu0 0.0
    %3246 = vmatprep.mubr.f32.mxu0 0.0
    %3247 = vmatmul.mubr.f32.gmra.mrb[0].mxu0 %v3180
    %v3248 = vpop.f32.mrb[0].mxu0
    %v3249 = vadd.f32 %v740, %v3248
    %v3250 = vpop.f32.mrb[0].mxu0
    %v3251 = vadd.f32 %v744, %v3250
    %3252 = vmatprep.mubr.f32.mxu0 0.0
    %3253 = vmatmul.mubr.f32.gmra.mrb[0].mxu0 %v3181
    %v3254 = vpop.f32.mrb[0].mxu0
    %v3255 = vadd.f32 %v740, %v3254
    %v3256 = vpop.f32.mrb[0].mxu0
    %v3257 = vadd.f32 %v744, %v3256
    %3258 = vdwg.mxu0
    %3259 = vmatprep.subr.mxu0 0.0
    %3260 = vmatpush1.msra.mxu0 %v689
    %3261 = vmatprep.subr.mxu0 0.0
    %3262 = vmatpush1.msra.mxu0 %v692
    %3263 = vmatprep.subr.mxu0 0.0
    %3264 = vmatpush1.msra.mxu0 %v695
    %3265 = vmatprep.subr.mxu0 0.0
    %3266 = vmatpush1.msra.mxu0 %v698
    %3267 = vmatprep.subr.mxu0 0.0
    %3268 = vmatpush1.msra.mxu0 %v701
    %3269 = vmatprep.subr.mxu0 0.0
    %3270 = vmatpush1.msra.mxu0 %v704
    %3271 = vmatprep.subr.mxu0 0.0
    %3272 = vmatpush1.msra.mxu0 %v707
    %3273 = vmatprep.subr.mxu0 0.0
    %3274 = vmatpush1.msra.mxu0 %v710
    %3275 = vmatprep.subr.mxu0 0.0
    %3276 = vmatpush1.msra.mxu0 %v713
    %3277 = vmatprep.subr.mxu0 0.0
    %3278 = vmatpush1.msra.mxu0 %v716
    %3279 = vmatprep.subr.mxu0 0.0
    %3280 = vmatpush1.msra.mxu0 %v719
    %3281 = vmatprep.subr.mxu0 0.0
    %3282 = vmatpush1.msra.mxu0 %v722
    %3283 = vmatprep.subr.mxu0 0.0
    %3284 = vmatpush1.msra.mxu0 %v725
    %3285 = vmatprep.subr.mxu0 0.0
    %3286 = vmatpush1.msra.mxu0 %v728
    %3287 = vmatprep.subr.mxu0 0.0
    %3288 = vmatpush1.msra.mxu0 %v731
    %3289 = vmatprep.subr.mxu0 0.0
    %3290 = vmatpush1.msra.mxu0 %v734
    %3291 = vmatprep.subr.mxu0 0.0
    %3292 = vmatpush1.msra.mxu0 0.0
    %3293 = vmatprep.subr.mxu0 0.0
    %3294 = vmatpush1.msra.mxu0 0.0
    %3295 = vmatprep.subr.mxu0 0.0
    %3296 = vmatpush1.msra.mxu0 0.0
    %3297 = vmatprep.subr.mxu0 0.0
    %3298 = vmatpush1.msra.mxu0 0.0
    %3299 = vmatprep.subr.mxu0 0.0
    %3300 = vmatpush1.msra.mxu0 0.0
    %3301 = vmatprep.subr.mxu0 0.0
    %3302 = vmatpush1.msra.mxu0 0.0
    %3303 = vmatprep.subr.mxu0 0.0
    %3304 = vmatpush1.msra.mxu0 0.0
    %3305 = vmatprep.subr.mxu0 0.0
    %3306 = vmatpush1.msra.mxu0 0.0
    %3307 = vmatprep.subr.mxu0 0.0
    %3308 = vmatpush1.msra.mxu0 0.0
    %3309 = vmatprep.subr.mxu0 0.0
    %3310 = vmatpush1.msra.mxu0 0.0
    %3311 = vmatprep.subr.mxu0 0.0
    %3312 = vmatpush1.msra.mxu0 0.0
    %3313 = vmatprep.subr.mxu0 0.0
    %3314 = vmatpush1.msra.mxu0 0.0
    %3315 = vmatprep.subr.mxu0 0.0
    %3316 = vmatpush1.msra.mxu0 0.0
    %3317 = vmatprep.subr.mxu0 0.0
    %3318 = vmatpush1.msra.mxu0 0.0
    %3319 = vmatprep.subr.mxu0 0.0
    %3320 = vmatpush1.msra.mxu0 0.0
    %3321 = vmatprep.subr.mxu0 0.0
    %3322 = vmatpush1.msra.mxu0 0.0
    %3323 = vmatprep.mubr.f32.mxu0 0.0
    %3324 = vmatmul.mubr.f32.gmra.mrb[0].mxu0 %v3180
    %v3325 = vpop.f32.mrb[0].mxu0
    %v3326 = vadd.f32 %v748, %v3325
    %v3327 = vpop.f32.mrb[0].mxu0
    %3328 = vmatprep.mubr.f32.mxu0 0.0
    %3329 = vmatmul.mubr.f32.gmra.mrb[0].mxu0 %v3181
    %v3330 = vpop.f32.mrb[0].mxu0
    %v3331 = vadd.f32 %v748, %v3330
    %v3332 = vpop.f32.mrb[0].mxu0
    %3333 = vdwg.mxu0
    %3334 = vmatprep.subr.mxu0 %v640
    %3335 = vmatpush1.msra.mxu0 %v639
    %3336 = vmatprep.subr.mxu0 %v643
    %3337 = vmatpush1.msra.mxu0 %v642
    %3338 = vmatprep.subr.mxu0 %v646
    %3339 = vmatpush1.msra.mxu0 %v645
    %3340 = vmatprep.subr.mxu0 %v649
    %3341 = vmatpush1.msra.mxu0 %v648
    %3342 = vmatprep.subr.mxu0 %v652
    %3343 = vmatpush1.msra.mxu0 %v651
    %3344 = vmatprep.subr.mxu0 %v655
    %3345 = vmatpush1.msra.mxu0 %v654
    %3346 = vmatprep.subr.mxu0 %v658
    %3347 = vmatpush1.msra.mxu0 %v657
    %3348 = vmatprep.subr.mxu0 %v661
    %3349 = vmatpush1.msra.mxu0 %v660
    %3350 = vmatprep.subr.mxu0 %v664
    %3351 = vmatpush1.msra.mxu0 %v663
    %3352 = vmatprep.subr.mxu0 %v667
    %3353 = vmatpush1.msra.mxu0 %v666
    %3354 = vmatprep.subr.mxu0 %v670
    %3355 = vmatpush1.msra.mxu0 %v669
    %3356 = vmatprep.subr.mxu0 %v673
    %3357 = vmatpush1.msra.mxu0 %v672
    %3358 = vmatprep.subr.mxu0 %v676
    %3359 = vmatpush1.msra.mxu0 %v675
    %3360 = vmatprep.subr.mxu0 %v679
    %3361 = vmatpush1.msra.mxu0 %v678
    %3362 = vmatprep.subr.mxu0 %v682
    %3363 = vmatpush1.msra.mxu0 %v681
    %3364 = vmatprep.subr.mxu0 %v685
    %3365 = vmatpush1.msra.mxu0 %v684
    %3366 = vmatprep.subr.mxu0 0.0
    %3367 = vmatpush1.msra.mxu0 0.0
    %3368 = vmatprep.subr.mxu0 0.0
    %3369 = vmatpush1.msra.mxu0 0.0
    %3370 = vmatprep.subr.mxu0 0.0
    %3371 = vmatpush1.msra.mxu0 0.0
    %3372 = vmatprep.subr.mxu0 0.0
    %3373 = vmatpush1.msra.mxu0 0.0
    %3374 = vmatprep.subr.mxu0 0.0
    %3375 = vmatpush1.msra.mxu0 0.0
    %3376 = vmatprep.subr.mxu0 0.0
    %3377 = vmatpush1.msra.mxu0 0.0
    %3378 = vmatprep.subr.mxu0 0.0
    %3379 = vmatpush1.msra.mxu0 0.0
    %3380 = vmatprep.subr.mxu0 0.0
    %3381 = vmatpush1.msra.mxu0 0.0
    %3382 = vmatprep.subr.mxu0 0.0
    %3383 = vmatpush1.msra.mxu0 0.0
    %3384 = vmatprep.subr.mxu0 0.0
    %3385 = vmatpush1.msra.mxu0 0.0
    %3386 = vmatprep.subr.mxu0 0.0
    %3387 = vmatpush1.msra.mxu0 0.0
    %3388 = vmatprep.subr.mxu0 0.0
    %3389 = vmatpush1.msra.mxu0 0.0
    %3390 = vmatprep.subr.mxu0 0.0
    %3391 = vmatpush1.msra.mxu0 0.0
    %3392 = vmatprep.subr.mxu0 0.0
    %3393 = vmatpush1.msra.mxu0 0.0
    %3394 = vmatprep.subr.mxu0 0.0
    %3395 = vmatpush1.msra.mxu0 0.0
    %3396 = vmatprep.subr.mxu0 0.0
    %3397 = vmatpush1.msra.mxu0 0.0
    %3398 = vmatprep.mubr.f32.mxu0 0.0
    %3399 = vmatmul.mubr.f32.gmra.mrb[0].mxu0 %v2976
    %v3400 = vpop.f32.mrb[0].mxu0
    %v3401 = vadd.f32 0.0, %v3400
    %v3402 = vpop.f32.mrb[0].mxu0
    %v3403 = vadd.f32 0.0, %v3402
    %3404 = vmatprep.mubr.f32.mxu0 0.0
    %3405 = vmatmul.mubr.f32.gmra.mrb[0].mxu0 %v2977
    %v3406 = vpop.f32.mrb[0].mxu0
    %v3407 = vadd.f32 0.0, %v3406
    %v3408 = vpop.f32.mrb[0].mxu0
    %v3409 = vadd.f32 0.0, %v3408
    %3410 = vdwg.mxu0
    %3411 = vmatprep.subr.mxu0 0.0
    %3412 = vmatpush1.msra.mxu0 %v641
    %3413 = vmatprep.subr.mxu0 0.0
    %3414 = vmatpush1.msra.mxu0 %v644
    %3415 = vmatprep.subr.mxu0 0.0
    %3416 = vmatpush1.msra.mxu0 %v647
    %3417 = vmatprep.subr.mxu0 0.0
    %3418 = vmatpush1.msra.mxu0 %v650
    %3419 = vmatprep.subr.mxu0 0.0
    %3420 = vmatpush1.msra.mxu0 %v653
    %3421 = vmatprep.subr.mxu0 0.0
    %3422 = vmatpush1.msra.mxu0 %v656
    %3423 = vmatprep.subr.mxu0 0.0
    %3424 = vmatpush1.msra.mxu0 %v659
    %3425 = vmatprep.subr.mxu0 0.0
    %3426 = vmatpush1.msra.mxu0 %v662
    %3427 = vmatprep.subr.mxu0 0.0
    %3428 = vmatpush1.msra.mxu0 %v665
    %3429 = vmatprep.subr.mxu0 0.0
    %3430 = vmatpush1.msra.mxu0 %v668
    %3431 = vmatprep.subr.mxu0 0.0
    %3432 = vmatpush1.msra.mxu0 %v671
    %3433 = vmatprep.subr.mxu0 0.0
    %3434 = vmatpush1.msra.mxu0 %v674
    %3435 = vmatprep.subr.mxu0 0.0
    %3436 = vmatpush1.msra.mxu0 %v677
    %3437 = vmatprep.subr.mxu0 0.0
    %3438 = vmatpush1.msra.mxu0 %v680
    %3439 = vmatprep.subr.mxu0 0.0
    %3440 = vmatpush1.msra.mxu0 %v683
    %3441 = vmatprep.subr.mxu0 0.0
    %3442 = vmatpush1.msra.mxu0 %v686
    %3443 = vmatprep.subr.mxu0 0.0
    %3444 = vmatpush1.msra.mxu0 0.0
    %3445 = vmatprep.subr.mxu0 0.0
    %3446 = vmatpush1.msra.mxu0 0.0
    %3447 = vmatprep.subr.mxu0 0.0
    %3448 = vmatpush1.msra.mxu0 0.0
    %3449 = vmatprep.subr.mxu0 0.0
    %3450 = vmatpush1.msra.mxu0 0.0
    %3451 = vmatprep.subr.mxu0 0.0
    %3452 = vmatpush1.msra.mxu0 0.0
    %3453 = vmatprep.subr.mxu0 0.0
    %3454 = vmatpush1.msra.mxu0 0.0
    %3455 = vmatprep.subr.mxu0 0.0
    %3456 = vmatpush1.msra.mxu0 0.0
    %3457 = vmatprep.subr.mxu0 0.0
    %3458 = vmatpush1.msra.mxu0 0.0
    %3459 = vmatprep.subr.mxu0 0.0
    %3460 = vmatpush1.msra.mxu0 0.0
    %3461 = vmatprep.subr.mxu0 0.0
    %3462 = vmatpush1.msra.mxu0 0.0
    %3463 = vmatprep.subr.mxu0 0.0
    %3464 = vmatpush1.msra.mxu0 0.0
    %3465 = vmatprep.subr.mxu0 0.0
    %3466 = vmatpush1.msra.mxu0 0.0
    %3467 = vmatprep.subr.mxu0 0.0
    %3468 = vmatpush1.msra.mxu0 0.0
    %3469 = vmatprep.subr.mxu0 0.0
    %3470 = vmatpush1.msra.mxu0 0.0
    %3471 = vmatprep.subr.mxu0 0.0
    %3472 = vmatpush1.msra.mxu0 0.0
    %3473 = vmatprep.subr.mxu0 0.0
    %3474 = vmatpush1.msra.mxu0 0.0
    %3475 = vmatprep.mubr.f32.mxu0 0.0
    %3476 = vmatmul.mubr.f32.gmra.mrb[0].mxu0 %v2976
    %v3477 = vpop.f32.mrb[0].mxu0
    %v3478 = vadd.f32 0.0, %v3477
    %v3479 = vpop.f32.mrb[0].mxu0
    %3480 = vmatprep.mubr.f32.mxu0 0.0
    %3481 = vmatmul.mubr.f32.gmra.mrb[0].mxu0 %v2977
    %v3482 = vpop.f32.mrb[0].mxu0
    %v3483 = vadd.f32 0.0, %v3482
    %v3484 = vpop.f32.mrb[0].mxu0
    %3485 = vdwg.mxu0
    %v3486 = vadd.f32 %v3249, %v3401
    %v3487 = vadd.f32 %v3255, %v3407
    %v3488 = vxor.u32 %v3486, 2147483648
    %v3489 = vxor.u32 %v3487, 2147483648
    %v3490 = vmul.f32 %v3488, 1.442695
    %v3491 = vpow.pop %v3490
    %v3492 = vmul.f32 %v3489, 1.442695
    %v3493 = vpow.pop %v3492
    %v3494 = vadd.f32 %v3491, 1.0
    %v3495 = vadd.f32 %v3493, 1.0
    %v3496 = vrcp.pop %v3494
    %v3497 = vmul.f32 1.0, %v3496
    %v3498 = vrcp.pop %v3495
    %v3499 = vmul.f32 1.0, %v3498
    %v3500 = vadd.f32 %v3251, %v3403
    %v3501 = vadd.f32 %v3257, %v3409
    %v3502 = vxor.u32 %v3500, 2147483648
    %v3503 = vxor.u32 %v3501, 2147483648
    %v3504 = vmul.f32 %v3502, 1.442695
    %v3505 = vpow.pop %v3504
    %v3506 = vmul.f32 %v3503, 1.442695
    %v3507 = vpow.pop %v3506
    %v3508 = vadd.f32 %v3505, 1.0
    %v3509 = vadd.f32 %v3507, 1.0
    %v3510 = vrcp.pop %v3508
    %v3511 = vmul.f32 1.0, %v3510
    %v3512 = vrcp.pop %v3509
    %v3513 = vmul.f32 1.0, %v3512
    %v3514 = vadd.f32 %v3478, %v765
    %v3515 = vadd.f32 %v3483, %v765
    %v3516 = vmul.f32 %v3497, %v3514
    %v3517 = vmul.f32 %v3499, %v3515
    %v3518 = vadd.f32 %v3326, %v3516
    %v3519 = vadd.f32 %v3331, %v3517
    %v3520 = vtanh.pop %v3518
    %v3521 = vtanh.pop %v3519
    %v3522 = vsub.f32 1.0, %v3511
    %v3523 = vsub.f32 1.0, %v3513
    %v3524 = vmul.f32 %v3522, %v3520
    %v3525 = vmul.f32 %v3523, %v3521
    %v3526 = vmul.f32 %v3511, %v2976
    %v3527 = vmul.f32 %v3513, %v2977
    %v3528 = vadd.f32 %v3524, %v3526
    %v3529 = vadd.f32 %v3525, %v3527
    %3530 = vst [vmem:[#allocation2 + $0x40] sm:$0xff] %v3528
    %3531 = vst [vmem:[#allocation2 + $0x48] sm:$0xff] %v3529
    %v3532 = vld [vmem:[#allocation3 + $0xf0] sm:$0xff]
    %v3533 = vld [vmem:[#allocation3 + $0xf8] sm:$0xff]
    %v3534 = vld [vmem:[#allocation3 + $0x100] sm:$0xff]
    %v3535 = vld [vmem:[#allocation3 + $0x108] sm:$0xff]
    %v3536 = vld [vmem:[#allocation3 + $0x110] sm:$0xff]
    %v3537 = vld [vmem:[#allocation3 + $0x118] sm:$0xff]
    %3538 = vmatprep.subr.mxu0 %v591
    %3539 = vmatpush1.msra.mxu0 %v590
    %3540 = vmatprep.subr.mxu0 %v594
    %3541 = vmatpush1.msra.mxu0 %v593
    %3542 = vmatprep.subr.mxu0 %v597
    %3543 = vmatpush1.msra.mxu0 %v596
    %3544 = vmatprep.subr.mxu0 %v600
    %3545 = vmatpush1.msra.mxu0 %v599
    %3546 = vmatprep.subr.mxu0 %v603
    %3547 = vmatpush1.msra.mxu0 %v602
    %3548 = vmatprep.subr.mxu0 %v606
    %3549 = vmatpush1.msra.mxu0 %v605
    %3550 = vmatprep.subr.mxu0 %v609
    %3551 = vmatpush1.msra.mxu0 %v608
    %3552 = vmatprep.subr.mxu0 %v612
    %3553 = vmatpush1.msra.mxu0 %v611
    %3554 = vmatprep.subr.mxu0 %v615
    %3555 = vmatpush1.msra.mxu0 %v614
    %3556 = vmatprep.subr.mxu0 %v618
    %3557 = vmatpush1.msra.mxu0 %v617
    %3558 = vmatprep.subr.mxu0 %v621
    %3559 = vmatpush1.msra.mxu0 %v620
    %3560 = vmatprep.subr.mxu0 %v624
    %3561 = vmatpush1.msra.mxu0 %v623
    %3562 = vmatprep.subr.mxu0 %v627
    %3563 = vmatpush1.msra.mxu0 %v626
    %3564 = vmatprep.subr.mxu0 %v630
    %3565 = vmatpush1.msra.mxu0 %v629
    %3566 = vmatprep.subr.mxu0 %v633
    %3567 = vmatpush1.msra.mxu0 %v632
    %3568 = vmatprep.subr.mxu0 %v636
    %3569 = vmatpush1.msra.mxu0 %v635
    %3570 = vmatprep.subr.mxu0 0.0
    %3571 = vmatpush1.msra.mxu0 0.0
    %3572 = vmatprep.subr.mxu0 0.0
    %3573 = vmatpush1.msra.mxu0 0.0
    %3574 = vmatprep.subr.mxu0 0.0
    %3575 = vmatpush1.msra.mxu0 0.0
    %3576 = vmatprep.subr.mxu0 0.0
    %3577 = vmatpush1.msra.mxu0 0.0
    %3578 = vmatprep.subr.mxu0 0.0
    %3579 = vmatpush1.msra.mxu0 0.0
    %3580 = vmatprep.subr.mxu0 0.0
    %3581 = vmatpush1.msra.mxu0 0.0
    %3582 = vmatprep.subr.mxu0 0.0
    %3583 = vmatpush1.msra.mxu0 0.0
    %3584 = vmatprep.subr.mxu0 0.0
    %3585 = vmatpush1.msra.mxu0 0.0
    %3586 = vmatprep.subr.mxu0 0.0
    %3587 = vmatpush1.msra.mxu0 0.0
    %3588 = vmatprep.subr.mxu0 0.0
    %3589 = vmatpush1.msra.mxu0 0.0
    %3590 = vmatprep.subr.mxu0 0.0
    %3591 = vmatpush1.msra.mxu0 0.0
    %3592 = vmatprep.subr.mxu0 0.0
    %3593 = vmatpush1.msra.mxu0 0.0
    %3594 = vmatprep.subr.mxu0 0.0
    %3595 = vmatpush1.msra.mxu0 0.0
    %3596 = vmatprep.subr.mxu0 0.0
    %3597 = vmatpush1.msra.mxu0 0.0
    %3598 = vmatprep.subr.mxu0 0.0
    %3599 = vmatpush1.msra.mxu0 0.0
    %3600 = vmatprep.subr.mxu0 0.0
    %3601 = vmatpush1.msra.mxu0 0.0
    %3602 = vmatprep.mubr.f32.mxu0 0.0
    %3603 = vmatmul.mubr.f32.gmra.mrb[0].mxu0 %v3180
    %v3604 = vpop.f32.mrb[0].mxu0
    %v3605 = vadd.f32 0.0, %v3604
    %v3606 = vpop.f32.mrb[0].mxu0
    %v3607 = vadd.f32 0.0, %v3606
    %3608 = vmatprep.mubr.f32.mxu0 0.0
    %3609 = vmatmul.mubr.f32.gmra.mrb[0].mxu0 %v3181
    %v3610 = vpop.f32.mrb[0].mxu0
    %v3611 = vadd.f32 0.0, %v3610
    %v3612 = vpop.f32.mrb[0].mxu0
    %v3613 = vadd.f32 0.0, %v3612
    %3614 = vdwg.mxu0
    %3615 = vmatprep.subr.mxu0 0.0
    %3616 = vmatpush1.msra.mxu0 %v592
    %3617 = vmatprep.subr.mxu0 0.0
    %3618 = vmatpush1.msra.mxu0 %v595
    %3619 = vmatprep.subr.mxu0 0.0
    %3620 = vmatpush1.msra.mxu0 %v598
    %3621 = vmatprep.subr.mxu0 0.0
    %3622 = vmatpush1.msra.mxu0 %v601
    %3623 = vmatprep.subr.mxu0 0.0
    %3624 = vmatpush1.msra.mxu0 %v604
    %3625 = vmatprep.subr.mxu0 0.0
    %3626 = vmatpush1.msra.mxu0 %v607
    %3627 = vmatprep.subr.mxu0 0.0
    %3628 = vmatpush1.msra.mxu0 %v610
    %3629 = vmatprep.subr.mxu0 0.0
    %3630 = vmatpush1.msra.mxu0 %v613
    %3631 = vmatprep.subr.mxu0 0.0
    %3632 = vmatpush1.msra.mxu0 %v616
    %3633 = vmatprep.subr.mxu0 0.0
    %3634 = vmatpush1.msra.mxu0 %v619
    %3635 = vmatprep.subr.mxu0 0.0
    %3636 = vmatpush1.msra.mxu0 %v622
    %3637 = vmatprep.subr.mxu0 0.0
    %3638 = vmatpush1.msra.mxu0 %v625
    %3639 = vmatprep.subr.mxu0 0.0
    %3640 = vmatpush1.msra.mxu0 %v628
    %3641 = vmatprep.subr.mxu0 0.0
    %3642 = vmatpush1.msra.mxu0 %v631
    %3643 = vmatprep.subr.mxu0 0.0
    %3644 = vmatpush1.msra.mxu0 %v634
    %3645 = vmatprep.subr.mxu0 0.0
    %3646 = vmatpush1.msra.mxu0 %v637
    %3647 = vmatprep.subr.mxu0 0.0
    %3648 = vmatpush1.msra.mxu0 0.0
    %3649 = vmatprep.subr.mxu0 0.0
    %3650 = vmatpush1.msra.mxu0 0.0
    %3651 = vmatprep.subr.mxu0 0.0
    %3652 = vmatpush1.msra.mxu0 0.0
    %3653 = vmatprep.subr.mxu0 0.0
    %3654 = vmatpush1.msra.mxu0 0.0
    %3655 = vmatprep.subr.mxu0 0.0
    %3656 = vmatpush1.msra.mxu0 0.0
    %3657 = vmatprep.subr.mxu0 0.0
    %3658 = vmatpush1.msra.mxu0 0.0
    %3659 = vmatprep.subr.mxu0 0.0
    %3660 = vmatpush1.msra.mxu0 0.0
    %3661 = vmatprep.subr.mxu0 0.0
    %3662 = vmatpush1.msra.mxu0 0.0
    %3663 = vmatprep.subr.mxu0 0.0
    %3664 = vmatpush1.msra.mxu0 0.0
    %3665 = vmatprep.subr.mxu0 0.0
    %3666 = vmatpush1.msra.mxu0 0.0
    %3667 = vmatprep.subr.mxu0 0.0
    %3668 = vmatpush1.msra.mxu0 0.0
    %3669 = vmatprep.subr.mxu0 0.0
    %3670 = vmatpush1.msra.mxu0 0.0
    %3671 = vmatprep.subr.mxu0 0.0
    %3672 = vmatpush1.msra.mxu0 0.0
    %3673 = vmatprep.subr.mxu0 0.0
    %3674 = vmatpush1.msra.mxu0 0.0
    %3675 = vmatprep.subr.mxu0 0.0
    %3676 = vmatpush1.msra.mxu0 0.0
    %3677 = vmatprep.subr.mxu0 0.0
    %3678 = vmatpush1.msra.mxu0 0.0
    %3679 = vmatprep.mubr.f32.mxu0 0.0
    %3680 = vmatmul.mubr.f32.gmra.mrb[0].mxu0 %v3180
    %v3681 = vpop.f32.mrb[0].mxu0
    %v3682 = vadd.f32 0.0, %v3681
    %v3683 = vpop.f32.mrb[0].mxu0
    %3684 = vmatprep.mubr.f32.mxu0 0.0
    %3685 = vmatmul.mubr.f32.gmra.mrb[0].mxu0 %v3181
    %v3686 = vpop.f32.mrb[0].mxu0
    %v3687 = vadd.f32 0.0, %v3686
    %v3688 = vpop.f32.mrb[0].mxu0
    %3689 = vdwg.mxu0
    %v3690 = vadd.f32 %v3532, %v3605
    %v3691 = vadd.f32 %v3535, %v3611
    %v3692 = vxor.u32 %v3690, 2147483648
    %v3693 = vxor.u32 %v3691, 2147483648
    %v3694 = vmul.f32 %v3692, 1.442695
    %v3695 = vpow.pop %v3694
    %v3696 = vmul.f32 %v3693, 1.442695
    %v3697 = vpow.pop %v3696
    %v3698 = vadd.f32 %v3695, 1.0
    %v3699 = vadd.f32 %v3697, 1.0
    %v3700 = vrcp.pop %v3698
    %v3701 = vmul.f32 1.0, %v3700
    %v3702 = vrcp.pop %v3699
    %v3703 = vmul.f32 1.0, %v3702
    %v3704 = vadd.f32 %v3533, %v3607
    %v3705 = vadd.f32 %v3536, %v3613
    %v3706 = vxor.u32 %v3704, 2147483648
    %v3707 = vxor.u32 %v3705, 2147483648
    %v3708 = vmul.f32 %v3706, 1.442695
    %v3709 = vpow.pop %v3708
    %v3710 = vmul.f32 %v3707, 1.442695
    %v3711 = vpow.pop %v3710
    %v3712 = vadd.f32 %v3709, 1.0
    %v3713 = vadd.f32 %v3711, 1.0
    %v3714 = vrcp.pop %v3712
    %v3715 = vmul.f32 1.0, %v3714
    %v3716 = vrcp.pop %v3713
    %v3717 = vmul.f32 1.0, %v3716
    %v3718 = vadd.f32 %v3682, %v757
    %v3719 = vadd.f32 %v3687, %v757
    %v3720 = vmul.f32 %v3701, %v3718
    %v3721 = vmul.f32 %v3703, %v3719
    %v3722 = vadd.f32 %v3534, %v3720
    %v3723 = vadd.f32 %v3537, %v3721
    %v3724 = vtanh.pop %v3722
    %v3725 = vtanh.pop %v3723
    %v3726 = vsub.f32 1.0, %v3715
    %v3727 = vsub.f32 1.0, %v3717
    %v3728 = vmul.f32 %v3726, %v3724
    %v3729 = vmul.f32 %v3727, %v3725
    %v3730 = vmul.f32 %v3715, %v3180
    %v3731 = vmul.f32 %v3717, %v3181
    %v3732 = vadd.f32 %v3728, %v3730
    %v3733 = vadd.f32 %v3729, %v3731
    %3734 = vmatprep.subr.mxu0 %v688
    %3735 = vmatpush1.msra.mxu0 %v687
    %3736 = vmatprep.subr.mxu0 %v691
    %3737 = vmatpush1.msra.mxu0 %v690
    %3738 = vmatprep.subr.mxu0 %v694
    %3739 = vmatpush1.msra.mxu0 %v693
    %3740 = vmatprep.subr.mxu0 %v697
    %3741 = vmatpush1.msra.mxu0 %v696
    %3742 = vmatprep.subr.mxu0 %v700
    %3743 = vmatpush1.msra.mxu0 %v699
    %3744 = vmatprep.subr.mxu0 %v703
    %3745 = vmatpush1.msra.mxu0 %v702
    %3746 = vmatprep.subr.mxu0 %v706
    %3747 = vmatpush1.msra.mxu0 %v705
    %3748 = vmatprep.subr.mxu0 %v709
    %3749 = vmatpush1.msra.mxu0 %v708
    %3750 = vmatprep.subr.mxu0 %v712
    %3751 = vmatpush1.msra.mxu0 %v711
    %3752 = vmatprep.subr.mxu0 %v715
    %3753 = vmatpush1.msra.mxu0 %v714
    %3754 = vmatprep.subr.mxu0 %v718
    %3755 = vmatpush1.msra.mxu0 %v717
    %3756 = vmatprep.subr.mxu0 %v721
    %3757 = vmatpush1.msra.mxu0 %v720
    %3758 = vmatprep.subr.mxu0 %v724
    %3759 = vmatpush1.msra.mxu0 %v723
    %3760 = vmatprep.subr.mxu0 %v727
    %3761 = vmatpush1.msra.mxu0 %v726
    %3762 = vmatprep.subr.mxu0 %v730
    %3763 = vmatpush1.msra.mxu0 %v729
    %3764 = vmatprep.subr.mxu0 %v733
    %3765 = vmatpush1.msra.mxu0 %v732
    %3766 = vmatprep.subr.mxu0 0.0
    %3767 = vmatpush1.msra.mxu0 0.0
    %3768 = vmatprep.subr.mxu0 0.0
    %3769 = vmatpush1.msra.mxu0 0.0
    %3770 = vmatprep.subr.mxu0 0.0
    %3771 = vmatpush1.msra.mxu0 0.0
    %3772 = vmatprep.subr.mxu0 0.0
    %3773 = vmatpush1.msra.mxu0 0.0
    %3774 = vmatprep.subr.mxu0 0.0
    %3775 = vmatpush1.msra.mxu0 0.0
    %3776 = vmatprep.subr.mxu0 0.0
    %3777 = vmatpush1.msra.mxu0 0.0
    %3778 = vmatprep.subr.mxu0 0.0
    %3779 = vmatpush1.msra.mxu0 0.0
    %3780 = vmatprep.subr.mxu0 0.0
    %3781 = vmatpush1.msra.mxu0 0.0
    %3782 = vmatprep.subr.mxu0 0.0
    %3783 = vmatpush1.msra.mxu0 0.0
    %3784 = vmatprep.subr.mxu0 0.0
    %3785 = vmatpush1.msra.mxu0 0.0
    %3786 = vmatprep.subr.mxu0 0.0
    %3787 = vmatpush1.msra.mxu0 0.0
    %3788 = vmatprep.subr.mxu0 0.0
    %3789 = vmatpush1.msra.mxu0 0.0
    %3790 = vmatprep.subr.mxu0 0.0
    %3791 = vmatpush1.msra.mxu0 0.0
    %3792 = vmatprep.subr.mxu0 0.0
    %3793 = vmatpush1.msra.mxu0 0.0
    %3794 = vmatprep.subr.mxu0 0.0
    %3795 = vmatpush1.msra.mxu0 0.0
    %3796 = vmatprep.subr.mxu0 0.0
    %3797 = vmatpush1.msra.mxu0 0.0
    %3798 = vmatprep.mubr.f32.mxu0 0.0
    %3799 = vmatmul.mubr.f32.gmra.mrb[0].mxu0 %v3732
    %v3800 = vpop.f32.mrb[0].mxu0
    %v3801 = vadd.f32 %v740, %v3800
    %v3802 = vpop.f32.mrb[0].mxu0
    %v3803 = vadd.f32 %v744, %v3802
    %3804 = vmatprep.mubr.f32.mxu0 0.0
    %3805 = vmatmul.mubr.f32.gmra.mrb[0].mxu0 %v3733
    %v3806 = vpop.f32.mrb[0].mxu0
    %v3807 = vadd.f32 %v740, %v3806
    %v3808 = vpop.f32.mrb[0].mxu0
    %v3809 = vadd.f32 %v744, %v3808
    %3810 = vdwg.mxu0
    %3811 = vmatprep.subr.mxu0 0.0
    %3812 = vmatpush1.msra.mxu0 %v689
    %3813 = vmatprep.subr.mxu0 0.0
    %3814 = vmatpush1.msra.mxu0 %v692
    %3815 = vmatprep.subr.mxu0 0.0
    %3816 = vmatpush1.msra.mxu0 %v695
    %3817 = vmatprep.subr.mxu0 0.0
    %3818 = vmatpush1.msra.mxu0 %v698
    %3819 = vmatprep.subr.mxu0 0.0
    %3820 = vmatpush1.msra.mxu0 %v701
    %3821 = vmatprep.subr.mxu0 0.0
    %3822 = vmatpush1.msra.mxu0 %v704
    %3823 = vmatprep.subr.mxu0 0.0
    %3824 = vmatpush1.msra.mxu0 %v707
    %3825 = vmatprep.subr.mxu0 0.0
    %3826 = vmatpush1.msra.mxu0 %v710
    %3827 = vmatprep.subr.mxu0 0.0
    %3828 = vmatpush1.msra.mxu0 %v713
    %3829 = vmatprep.subr.mxu0 0.0
    %3830 = vmatpush1.msra.mxu0 %v716
    %3831 = vmatprep.subr.mxu0 0.0
    %3832 = vmatpush1.msra.mxu0 %v719
    %3833 = vmatprep.subr.mxu0 0.0
    %3834 = vmatpush1.msra.mxu0 %v722
    %3835 = vmatprep.subr.mxu0 0.0
    %3836 = vmatpush1.msra.mxu0 %v725
    %3837 = vmatprep.subr.mxu0 0.0
    %3838 = vmatpush1.msra.mxu0 %v728
    %3839 = vmatprep.subr.mxu0 0.0
    %3840 = vmatpush1.msra.mxu0 %v731
    %3841 = vmatprep.subr.mxu0 0.0
    %3842 = vmatpush1.msra.mxu0 %v734
    %3843 = vmatprep.subr.mxu0 0.0
    %3844 = vmatpush1.msra.mxu0 0.0
    %3845 = vmatprep.subr.mxu0 0.0
    %3846 = vmatpush1.msra.mxu0 0.0
    %3847 = vmatprep.subr.mxu0 0.0
    %3848 = vmatpush1.msra.mxu0 0.0
    %3849 = vmatprep.subr.mxu0 0.0
    %3850 = vmatpush1.msra.mxu0 0.0
    %3851 = vmatprep.subr.mxu0 0.0
    %3852 = vmatpush1.msra.mxu0 0.0
    %3853 = vmatprep.subr.mxu0 0.0
    %3854 = vmatpush1.msra.mxu0 0.0
    %3855 = vmatprep.subr.mxu0 0.0
    %3856 = vmatpush1.msra.mxu0 0.0
    %3857 = vmatprep.subr.mxu0 0.0
    %3858 = vmatpush1.msra.mxu0 0.0
    %3859 = vmatprep.subr.mxu0 0.0
    %3860 = vmatpush1.msra.mxu0 0.0
    %3861 = vmatprep.subr.mxu0 0.0
    %3862 = vmatpush1.msra.mxu0 0.0
    %3863 = vmatprep.subr.mxu0 0.0
    %3864 = vmatpush1.msra.mxu0 0.0
    %3865 = vmatprep.subr.mxu0 0.0
    %3866 = vmatpush1.msra.mxu0 0.0
    %3867 = vmatprep.subr.mxu0 0.0
    %3868 = vmatpush1.msra.mxu0 0.0
    %3869 = vmatprep.subr.mxu0 0.0
    %3870 = vmatpush1.msra.mxu0 0.0
    %3871 = vmatprep.subr.mxu0 0.0
    %3872 = vmatpush1.msra.mxu0 0.0
    %3873 = vmatprep.subr.mxu0 0.0
    %3874 = vmatpush1.msra.mxu0 0.0
    %3875 = vmatprep.mubr.f32.mxu0 0.0
    %3876 = vmatmul.mubr.f32.gmra.mrb[0].mxu0 %v3732
    %v3877 = vpop.f32.mrb[0].mxu0
    %v3878 = vadd.f32 %v748, %v3877
    %v3879 = vpop.f32.mrb[0].mxu0
    %3880 = vmatprep.mubr.f32.mxu0 0.0
    %3881 = vmatmul.mubr.f32.gmra.mrb[0].mxu0 %v3733
    %v3882 = vpop.f32.mrb[0].mxu0
    %v3883 = vadd.f32 %v748, %v3882
    %v3884 = vpop.f32.mrb[0].mxu0
    %3885 = vdwg.mxu0
    %3886 = vmatprep.subr.mxu0 %v640
    %3887 = vmatpush1.msra.mxu0 %v639
    %3888 = vmatprep.subr.mxu0 %v643
    %3889 = vmatpush1.msra.mxu0 %v642
    %3890 = vmatprep.subr.mxu0 %v646
    %3891 = vmatpush1.msra.mxu0 %v645
    %3892 = vmatprep.subr.mxu0 %v649
    %3893 = vmatpush1.msra.mxu0 %v648
    %3894 = vmatprep.subr.mxu0 %v652
    %3895 = vmatpush1.msra.mxu0 %v651
    %3896 = vmatprep.subr.mxu0 %v655
    %3897 = vmatpush1.msra.mxu0 %v654
    %3898 = vmatprep.subr.mxu0 %v658
    %3899 = vmatpush1.msra.mxu0 %v657
    %3900 = vmatprep.subr.mxu0 %v661
    %3901 = vmatpush1.msra.mxu0 %v660
    %3902 = vmatprep.subr.mxu0 %v664
    %3903 = vmatpush1.msra.mxu0 %v663
    %3904 = vmatprep.subr.mxu0 %v667
    %3905 = vmatpush1.msra.mxu0 %v666
    %3906 = vmatprep.subr.mxu0 %v670
    %3907 = vmatpush1.msra.mxu0 %v669
    %3908 = vmatprep.subr.mxu0 %v673
    %3909 = vmatpush1.msra.mxu0 %v672
    %3910 = vmatprep.subr.mxu0 %v676
    %3911 = vmatpush1.msra.mxu0 %v675
    %3912 = vmatprep.subr.mxu0 %v679
    %3913 = vmatpush1.msra.mxu0 %v678
    %3914 = vmatprep.subr.mxu0 %v682
    %3915 = vmatpush1.msra.mxu0 %v681
    %3916 = vmatprep.subr.mxu0 %v685
    %3917 = vmatpush1.msra.mxu0 %v684
    %3918 = vmatprep.subr.mxu0 0.0
    %3919 = vmatpush1.msra.mxu0 0.0
    %3920 = vmatprep.subr.mxu0 0.0
    %3921 = vmatpush1.msra.mxu0 0.0
    %3922 = vmatprep.subr.mxu0 0.0
    %3923 = vmatpush1.msra.mxu0 0.0
    %3924 = vmatprep.subr.mxu0 0.0
    %3925 = vmatpush1.msra.mxu0 0.0
    %3926 = vmatprep.subr.mxu0 0.0
    %3927 = vmatpush1.msra.mxu0 0.0
    %3928 = vmatprep.subr.mxu0 0.0
    %3929 = vmatpush1.msra.mxu0 0.0
    %3930 = vmatprep.subr.mxu0 0.0
    %3931 = vmatpush1.msra.mxu0 0.0
    %3932 = vmatprep.subr.mxu0 0.0
    %3933 = vmatpush1.msra.mxu0 0.0
    %3934 = vmatprep.subr.mxu0 0.0
    %3935 = vmatpush1.msra.mxu0 0.0
    %3936 = vmatprep.subr.mxu0 0.0
    %3937 = vmatpush1.msra.mxu0 0.0
    %3938 = vmatprep.subr.mxu0 0.0
    %3939 = vmatpush1.msra.mxu0 0.0
    %3940 = vmatprep.subr.mxu0 0.0
    %3941 = vmatpush1.msra.mxu0 0.0
    %3942 = vmatprep.subr.mxu0 0.0
    %3943 = vmatpush1.msra.mxu0 0.0
    %3944 = vmatprep.subr.mxu0 0.0
    %3945 = vmatpush1.msra.mxu0 0.0
    %3946 = vmatprep.subr.mxu0 0.0
    %3947 = vmatpush1.msra.mxu0 0.0
    %3948 = vmatprep.subr.mxu0 0.0
    %3949 = vmatpush1.msra.mxu0 0.0
    %3950 = vmatprep.mubr.f32.mxu0 0.0
    %3951 = vmatmul.mubr.f32.gmra.mrb[0].mxu0 %v3528
    %v3952 = vpop.f32.mrb[0].mxu0
    %v3953 = vadd.f32 0.0, %v3952
    %v3954 = vpop.f32.mrb[0].mxu0
    %v3955 = vadd.f32 0.0, %v3954
    %3956 = vmatprep.mubr.f32.mxu0 0.0
    %3957 = vmatmul.mubr.f32.gmra.mrb[0].mxu0 %v3529
    %v3958 = vpop.f32.mrb[0].mxu0
    %v3959 = vadd.f32 0.0, %v3958
    %v3960 = vpop.f32.mrb[0].mxu0
    %v3961 = vadd.f32 0.0, %v3960
    %3962 = vdwg.mxu0
    %3963 = vmatprep.subr.mxu0 0.0
    %3964 = vmatpush1.msra.mxu0 %v641
    %3965 = vmatprep.subr.mxu0 0.0
    %3966 = vmatpush1.msra.mxu0 %v644
    %3967 = vmatprep.subr.mxu0 0.0
    %3968 = vmatpush1.msra.mxu0 %v647
    %3969 = vmatprep.subr.mxu0 0.0
    %3970 = vmatpush1.msra.mxu0 %v650
    %3971 = vmatprep.subr.mxu0 0.0
    %3972 = vmatpush1.msra.mxu0 %v653
    %3973 = vmatprep.subr.mxu0 0.0
    %3974 = vmatpush1.msra.mxu0 %v656
    %3975 = vmatprep.subr.mxu0 0.0
    %3976 = vmatpush1.msra.mxu0 %v659
    %3977 = vmatprep.subr.mxu0 0.0
    %3978 = vmatpush1.msra.mxu0 %v662
    %3979 = vmatprep.subr.mxu0 0.0
    %3980 = vmatpush1.msra.mxu0 %v665
    %3981 = vmatprep.subr.mxu0 0.0
    %3982 = vmatpush1.msra.mxu0 %v668
    %3983 = vmatprep.subr.mxu0 0.0
    %3984 = vmatpush1.msra.mxu0 %v671
    %3985 = vmatprep.subr.mxu0 0.0
    %3986 = vmatpush1.msra.mxu0 %v674
    %3987 = vmatprep.subr.mxu0 0.0
    %3988 = vmatpush1.msra.mxu0 %v677
    %3989 = vmatprep.subr.mxu0 0.0
    %3990 = vmatpush1.msra.mxu0 %v680
    %3991 = vmatprep.subr.mxu0 0.0
    %3992 = vmatpush1.msra.mxu0 %v683
    %3993 = vmatprep.subr.mxu0 0.0
    %3994 = vmatpush1.msra.mxu0 %v686
    %3995 = vmatprep.subr.mxu0 0.0
    %3996 = vmatpush1.msra.mxu0 0.0
    %3997 = vmatprep.subr.mxu0 0.0
    %3998 = vmatpush1.msra.mxu0 0.0
    %3999 = vmatprep.subr.mxu0 0.0
    %4000 = vmatpush1.msra.mxu0 0.0
    %4001 = vmatprep.subr.mxu0 0.0
    %4002 = vmatpush1.msra.mxu0 0.0
    %4003 = vmatprep.subr.mxu0 0.0
    %4004 = vmatpush1.msra.mxu0 0.0
    %4005 = vmatprep.subr.mxu0 0.0
    %4006 = vmatpush1.msra.mxu0 0.0
    %4007 = vmatprep.subr.mxu0 0.0
    %4008 = vmatpush1.msra.mxu0 0.0
    %4009 = vmatprep.subr.mxu0 0.0
    %4010 = vmatpush1.msra.mxu0 0.0
    %4011 = vmatprep.subr.mxu0 0.0
    %4012 = vmatpush1.msra.mxu0 0.0
    %4013 = vmatprep.subr.mxu0 0.0
    %4014 = vmatpush1.msra.mxu0 0.0
    %4015 = vmatprep.subr.mxu0 0.0
    %4016 = vmatpush1.msra.mxu0 0.0
    %4017 = vmatprep.subr.mxu0 0.0
    %4018 = vmatpush1.msra.mxu0 0.0
    %4019 = vmatprep.subr.mxu0 0.0
    %4020 = vmatpush1.msra.mxu0 0.0
    %4021 = vmatprep.subr.mxu0 0.0
    %4022 = vmatpush1.msra.mxu0 0.0
    %4023 = vmatprep.subr.mxu0 0.0
    %4024 = vmatpush1.msra.mxu0 0.0
    %4025 = vmatprep.subr.mxu0 0.0
    %4026 = vmatpush1.msra.mxu0 0.0
    %4027 = vmatprep.mubr.f32.mxu0 0.0
    %4028 = vmatmul.mubr.f32.gmra.mrb[0].mxu0 %v3528
    %v4029 = vpop.f32.mrb[0].mxu0
    %v4030 = vadd.f32 0.0, %v4029
    %v4031 = vpop.f32.mrb[0].mxu0
    %4032 = vmatprep.mubr.f32.mxu0 0.0
    %4033 = vmatmul.mubr.f32.gmra.mrb[0].mxu0 %v3529
    %v4034 = vpop.f32.mrb[0].mxu0
    %v4035 = vadd.f32 0.0, %v4034
    %v4036 = vpop.f32.mrb[0].mxu0
    %4037 = vdwg.mxu0
    %v4038 = vadd.f32 %v3801, %v3953
    %v4039 = vadd.f32 %v3807, %v3959
    %v4040 = vxor.u32 %v4038, 2147483648
    %v4041 = vxor.u32 %v4039, 2147483648
    %v4042 = vmul.f32 %v4040, 1.442695
    %v4043 = vpow.pop %v4042
    %v4044 = vmul.f32 %v4041, 1.442695
    %v4045 = vpow.pop %v4044
    %v4046 = vadd.f32 %v4043, 1.0
    %v4047 = vadd.f32 %v4045, 1.0
    %v4048 = vrcp.pop %v4046
    %v4049 = vmul.f32 1.0, %v4048
    %v4050 = vrcp.pop %v4047
    %v4051 = vmul.f32 1.0, %v4050
    %v4052 = vadd.f32 %v3803, %v3955
    %v4053 = vadd.f32 %v3809, %v3961
    %v4054 = vxor.u32 %v4052, 2147483648
    %v4055 = vxor.u32 %v4053, 2147483648
    %v4056 = vmul.f32 %v4054, 1.442695
    %v4057 = vpow.pop %v4056
    %v4058 = vmul.f32 %v4055, 1.442695
    %v4059 = vpow.pop %v4058
    %v4060 = vadd.f32 %v4057, 1.0
    %v4061 = vadd.f32 %v4059, 1.0
    %v4062 = vrcp.pop %v4060
    %v4063 = vmul.f32 1.0, %v4062
    %v4064 = vrcp.pop %v4061
    %v4065 = vmul.f32 1.0, %v4064
    %v4066 = vadd.f32 %v4030, %v765
    %v4067 = vadd.f32 %v4035, %v765
    %v4068 = vmul.f32 %v4049, %v4066
    %v4069 = vmul.f32 %v4051, %v4067
    %v4070 = vadd.f32 %v3878, %v4068
    %v4071 = vadd.f32 %v3883, %v4069
    %v4072 = vtanh.pop %v4070
    %v4073 = vtanh.pop %v4071
    %v4074 = vsub.f32 1.0, %v4063
    %v4075 = vsub.f32 1.0, %v4065
    %v4076 = vmul.f32 %v4074, %v4072
    %v4077 = vmul.f32 %v4075, %v4073
    %v4078 = vmul.f32 %v4063, %v3528
    %v4079 = vmul.f32 %v4065, %v3529
    %v4080 = vadd.f32 %v4076, %v4078
    %v4081 = vadd.f32 %v4077, %v4079
    %4082 = vst [vmem:[#allocation2 + $0x50] sm:$0xff] %v4080
    %4083 = vst [vmem:[#allocation2 + $0x58] sm:$0xff] %v4081
    %v4084 = vld [vmem:[#allocation3 + $0x120] sm:$0xff]
    %v4085 = vld [vmem:[#allocation3 + $0x128] sm:$0xff]
    %v4086 = vld [vmem:[#allocation3 + $0x130] sm:$0xff]
    %v4087 = vld [vmem:[#allocation3 + $0x138] sm:$0xff]
    %v4088 = vld [vmem:[#allocation3 + $0x140] sm:$0xff]
    %v4089 = vld [vmem:[#allocation3 + $0x148] sm:$0xff]
    %4090 = vmatprep.subr.mxu0 %v591
    %4091 = vmatpush1.msra.mxu0 %v590
    %4092 = vmatprep.subr.mxu0 %v594
    %4093 = vmatpush1.msra.mxu0 %v593
    %4094 = vmatprep.subr.mxu0 %v597
    %4095 = vmatpush1.msra.mxu0 %v596
    %4096 = vmatprep.subr.mxu0 %v600
    %4097 = vmatpush1.msra.mxu0 %v599
    %4098 = vmatprep.subr.mxu0 %v603
    %4099 = vmatpush1.msra.mxu0 %v602
    %4100 = vmatprep.subr.mxu0 %v606
    %4101 = vmatpush1.msra.mxu0 %v605
    %4102 = vmatprep.subr.mxu0 %v609
    %4103 = vmatpush1.msra.mxu0 %v608
    %4104 = vmatprep.subr.mxu0 %v612
    %4105 = vmatpush1.msra.mxu0 %v611
    %4106 = vmatprep.subr.mxu0 %v615
    %4107 = vmatpush1.msra.mxu0 %v614
    %4108 = vmatprep.subr.mxu0 %v618
    %4109 = vmatpush1.msra.mxu0 %v617
    %4110 = vmatprep.subr.mxu0 %v621
    %4111 = vmatpush1.msra.mxu0 %v620
    %4112 = vmatprep.subr.mxu0 %v624
    %4113 = vmatpush1.msra.mxu0 %v623
    %4114 = vmatprep.subr.mxu0 %v627
    %4115 = vmatpush1.msra.mxu0 %v626
    %4116 = vmatprep.subr.mxu0 %v630
    %4117 = vmatpush1.msra.mxu0 %v629
    %4118 = vmatprep.subr.mxu0 %v633
    %4119 = vmatpush1.msra.mxu0 %v632
    %4120 = vmatprep.subr.mxu0 %v636
    %4121 = vmatpush1.msra.mxu0 %v635
    %4122 = vmatprep.subr.mxu0 0.0
    %4123 = vmatpush1.msra.mxu0 0.0
    %4124 = vmatprep.subr.mxu0 0.0
    %4125 = vmatpush1.msra.mxu0 0.0
    %4126 = vmatprep.subr.mxu0 0.0
    %4127 = vmatpush1.msra.mxu0 0.0
    %4128 = vmatprep.subr.mxu0 0.0
    %4129 = vmatpush1.msra.mxu0 0.0
    %4130 = vmatprep.subr.mxu0 0.0
    %4131 = vmatpush1.msra.mxu0 0.0
    %4132 = vmatprep.subr.mxu0 0.0
    %4133 = vmatpush1.msra.mxu0 0.0
    %4134 = vmatprep.subr.mxu0 0.0
    %4135 = vmatpush1.msra.mxu0 0.0
    %4136 = vmatprep.subr.mxu0 0.0
    %4137 = vmatpush1.msra.mxu0 0.0
    %4138 = vmatprep.subr.mxu0 0.0
    %4139 = vmatpush1.msra.mxu0 0.0
    %4140 = vmatprep.subr.mxu0 0.0
    %4141 = vmatpush1.msra.mxu0 0.0
    %4142 = vmatprep.subr.mxu0 0.0
    %4143 = vmatpush1.msra.mxu0 0.0
    %4144 = vmatprep.subr.mxu0 0.0
    %4145 = vmatpush1.msra.mxu0 0.0
    %4146 = vmatprep.subr.mxu0 0.0
    %4147 = vmatpush1.msra.mxu0 0.0
    %4148 = vmatprep.subr.mxu0 0.0
    %4149 = vmatpush1.msra.mxu0 0.0
    %4150 = vmatprep.subr.mxu0 0.0
    %4151 = vmatpush1.msra.mxu0 0.0
    %4152 = vmatprep.subr.mxu0 0.0
    %4153 = vmatpush1.msra.mxu0 0.0
    %4154 = vmatprep.mubr.f32.mxu0 0.0
    %4155 = vmatmul.mubr.f32.gmra.mrb[0].mxu0 %v3732
    %v4156 = vpop.f32.mrb[0].mxu0
    %v4157 = vadd.f32 0.0, %v4156
    %v4158 = vpop.f32.mrb[0].mxu0
    %v4159 = vadd.f32 0.0, %v4158
    %4160 = vmatprep.mubr.f32.mxu0 0.0
    %4161 = vmatmul.mubr.f32.gmra.mrb[0].mxu0 %v3733
    %v4162 = vpop.f32.mrb[0].mxu0
    %v4163 = vadd.f32 0.0, %v4162
    %v4164 = vpop.f32.mrb[0].mxu0
    %v4165 = vadd.f32 0.0, %v4164
    %4166 = vdwg.mxu0
    %4167 = vmatprep.subr.mxu0 0.0
    %4168 = vmatpush1.msra.mxu0 %v592
    %4169 = vmatprep.subr.mxu0 0.0
    %4170 = vmatpush1.msra.mxu0 %v595
    %4171 = vmatprep.subr.mxu0 0.0
    %4172 = vmatpush1.msra.mxu0 %v598
    %4173 = vmatprep.subr.mxu0 0.0
    %4174 = vmatpush1.msra.mxu0 %v601
    %4175 = vmatprep.subr.mxu0 0.0
    %4176 = vmatpush1.msra.mxu0 %v604
    %4177 = vmatprep.subr.mxu0 0.0
    %4178 = vmatpush1.msra.mxu0 %v607
    %4179 = vmatprep.subr.mxu0 0.0
    %4180 = vmatpush1.msra.mxu0 %v610
    %4181 = vmatprep.subr.mxu0 0.0
    %4182 = vmatpush1.msra.mxu0 %v613
    %4183 = vmatprep.subr.mxu0 0.0
    %4184 = vmatpush1.msra.mxu0 %v616
    %4185 = vmatprep.subr.mxu0 0.0
    %4186 = vmatpush1.msra.mxu0 %v619
    %4187 = vmatprep.subr.mxu0 0.0
    %4188 = vmatpush1.msra.mxu0 %v622
    %4189 = vmatprep.subr.mxu0 0.0
    %4190 = vmatpush1.msra.mxu0 %v625
    %4191 = vmatprep.subr.mxu0 0.0
    %4192 = vmatpush1.msra.mxu0 %v628
    %4193 = vmatprep.subr.mxu0 0.0
    %4194 = vmatpush1.msra.mxu0 %v631
    %4195 = vmatprep.subr.mxu0 0.0
    %4196 = vmatpush1.msra.mxu0 %v634
    %4197 = vmatprep.subr.mxu0 0.0
    %4198 = vmatpush1.msra.mxu0 %v637
    %4199 = vmatprep.subr.mxu0 0.0
    %4200 = vmatpush1.msra.mxu0 0.0
    %4201 = vmatprep.subr.mxu0 0.0
    %4202 = vmatpush1.msra.mxu0 0.0
    %4203 = vmatprep.subr.mxu0 0.0
    %4204 = vmatpush1.msra.mxu0 0.0
    %4205 = vmatprep.subr.mxu0 0.0
    %4206 = vmatpush1.msra.mxu0 0.0
    %4207 = vmatprep.subr.mxu0 0.0
    %4208 = vmatpush1.msra.mxu0 0.0
    %4209 = vmatprep.subr.mxu0 0.0
    %4210 = vmatpush1.msra.mxu0 0.0
    %4211 = vmatprep.subr.mxu0 0.0
    %4212 = vmatpush1.msra.mxu0 0.0
    %4213 = vmatprep.subr.mxu0 0.0
    %4214 = vmatpush1.msra.mxu0 0.0
    %4215 = vmatprep.subr.mxu0 0.0
    %4216 = vmatpush1.msra.mxu0 0.0
    %4217 = vmatprep.subr.mxu0 0.0
    %4218 = vmatpush1.msra.mxu0 0.0
    %4219 = vmatprep.subr.mxu0 0.0
    %4220 = vmatpush1.msra.mxu0 0.0
    %4221 = vmatprep.subr.mxu0 0.0
    %4222 = vmatpush1.msra.mxu0 0.0
    %4223 = vmatprep.subr.mxu0 0.0
    %4224 = vmatpush1.msra.mxu0 0.0
    %4225 = vmatprep.subr.mxu0 0.0
    %4226 = vmatpush1.msra.mxu0 0.0
    %4227 = vmatprep.subr.mxu0 0.0
    %4228 = vmatpush1.msra.mxu0 0.0
    %4229 = vmatprep.subr.mxu0 0.0
    %4230 = vmatpush1.msra.mxu0 0.0
    %4231 = vmatprep.mubr.f32.mxu0 0.0
    %4232 = vmatmul.mubr.f32.gmra.mrb[0].mxu0 %v3732
    %v4233 = vpop.f32.mrb[0].mxu0
    %v4234 = vadd.f32 0.0, %v4233
    %v4235 = vpop.f32.mrb[0].mxu0
    %4236 = vmatprep.mubr.f32.mxu0 0.0
    %4237 = vmatmul.mubr.f32.gmra.mrb[0].mxu0 %v3733
    %v4238 = vpop.f32.mrb[0].mxu0
    %v4239 = vadd.f32 0.0, %v4238
    %v4240 = vpop.f32.mrb[0].mxu0
    %4241 = vdwg.mxu0
    %v4242 = vadd.f32 %v4084, %v4157
    %v4243 = vadd.f32 %v4087, %v4163
    %v4244 = vxor.u32 %v4242, 2147483648
    %v4245 = vxor.u32 %v4243, 2147483648
    %v4246 = vmul.f32 %v4244, 1.442695
    %v4247 = vpow.pop %v4246
    %v4248 = vmul.f32 %v4245, 1.442695
    %v4249 = vpow.pop %v4248
    %v4250 = vadd.f32 %v4247, 1.0
    %v4251 = vadd.f32 %v4249, 1.0
    %v4252 = vrcp.pop %v4250
    %v4253 = vmul.f32 1.0, %v4252
    %v4254 = vrcp.pop %v4251
    %v4255 = vmul.f32 1.0, %v4254
    %v4256 = vadd.f32 %v4085, %v4159
    %v4257 = vadd.f32 %v4088, %v4165
    %v4258 = vxor.u32 %v4256, 2147483648
    %v4259 = vxor.u32 %v4257, 2147483648
    %v4260 = vmul.f32 %v4258, 1.442695
    %v4261 = vpow.pop %v4260
    %v4262 = vmul.f32 %v4259, 1.442695
    %v4263 = vpow.pop %v4262
    %v4264 = vadd.f32 %v4261, 1.0
    %v4265 = vadd.f32 %v4263, 1.0
    %v4266 = vrcp.pop %v4264
    %v4267 = vmul.f32 1.0, %v4266
    %v4268 = vrcp.pop %v4265
    %v4269 = vmul.f32 1.0, %v4268
    %v4270 = vadd.f32 %v4234, %v757
    %v4271 = vadd.f32 %v4239, %v757
    %v4272 = vmul.f32 %v4253, %v4270
    %v4273 = vmul.f32 %v4255, %v4271
    %v4274 = vadd.f32 %v4086, %v4272
    %v4275 = vadd.f32 %v4089, %v4273
    %v4276 = vtanh.pop %v4274
    %v4277 = vtanh.pop %v4275
    %v4278 = vsub.f32 1.0, %v4267
    %v4279 = vsub.f32 1.0, %v4269
    %v4280 = vmul.f32 %v4278, %v4276
    %v4281 = vmul.f32 %v4279, %v4277
    %v4282 = vmul.f32 %v4267, %v3732
    %v4283 = vmul.f32 %v4269, %v3733
    %v4284 = vadd.f32 %v4280, %v4282
    %v4285 = vadd.f32 %v4281, %v4283
    %4286 = vmatprep.subr.mxu0 %v688
    %4287 = vmatpush1.msra.mxu0 %v687
    %4288 = vmatprep.subr.mxu0 %v691
    %4289 = vmatpush1.msra.mxu0 %v690
    %4290 = vmatprep.subr.mxu0 %v694
    %4291 = vmatpush1.msra.mxu0 %v693
    %4292 = vmatprep.subr.mxu0 %v697
    %4293 = vmatpush1.msra.mxu0 %v696
    %4294 = vmatprep.subr.mxu0 %v700
    %4295 = vmatpush1.msra.mxu0 %v699
    %4296 = vmatprep.subr.mxu0 %v703
    %4297 = vmatpush1.msra.mxu0 %v702
    %4298 = vmatprep.subr.mxu0 %v706
    %4299 = vmatpush1.msra.mxu0 %v705
    %4300 = vmatprep.subr.mxu0 %v709
    %4301 = vmatpush1.msra.mxu0 %v708
    %4302 = vmatprep.subr.mxu0 %v712
    %4303 = vmatpush1.msra.mxu0 %v711
    %4304 = vmatprep.subr.mxu0 %v715
    %4305 = vmatpush1.msra.mxu0 %v714
    %4306 = vmatprep.subr.mxu0 %v718
    %4307 = vmatpush1.msra.mxu0 %v717
    %4308 = vmatprep.subr.mxu0 %v721
    %4309 = vmatpush1.msra.mxu0 %v720
    %4310 = vmatprep.subr.mxu0 %v724
    %4311 = vmatpush1.msra.mxu0 %v723
    %4312 = vmatprep.subr.mxu0 %v727
    %4313 = vmatpush1.msra.mxu0 %v726
    %4314 = vmatprep.subr.mxu0 %v730
    %4315 = vmatpush1.msra.mxu0 %v729
    %4316 = vmatprep.subr.mxu0 %v733
    %4317 = vmatpush1.msra.mxu0 %v732
    %4318 = vmatprep.subr.mxu0 0.0
    %4319 = vmatpush1.msra.mxu0 0.0
    %4320 = vmatprep.subr.mxu0 0.0
    %4321 = vmatpush1.msra.mxu0 0.0
    %4322 = vmatprep.subr.mxu0 0.0
    %4323 = vmatpush1.msra.mxu0 0.0
    %4324 = vmatprep.subr.mxu0 0.0
    %4325 = vmatpush1.msra.mxu0 0.0
    %4326 = vmatprep.subr.mxu0 0.0
    %4327 = vmatpush1.msra.mxu0 0.0
    %4328 = vmatprep.subr.mxu0 0.0
    %4329 = vmatpush1.msra.mxu0 0.0
    %4330 = vmatprep.subr.mxu0 0.0
    %4331 = vmatpush1.msra.mxu0 0.0
    %4332 = vmatprep.subr.mxu0 0.0
    %4333 = vmatpush1.msra.mxu0 0.0
    %4334 = vmatprep.subr.mxu0 0.0
    %4335 = vmatpush1.msra.mxu0 0.0
    %4336 = vmatprep.subr.mxu0 0.0
    %4337 = vmatpush1.msra.mxu0 0.0
    %4338 = vmatprep.subr.mxu0 0.0
    %4339 = vmatpush1.msra.mxu0 0.0
    %4340 = vmatprep.subr.mxu0 0.0
    %4341 = vmatpush1.msra.mxu0 0.0
    %4342 = vmatprep.subr.mxu0 0.0
    %4343 = vmatpush1.msra.mxu0 0.0
    %4344 = vmatprep.subr.mxu0 0.0
    %4345 = vmatpush1.msra.mxu0 0.0
    %4346 = vmatprep.subr.mxu0 0.0
    %4347 = vmatpush1.msra.mxu0 0.0
    %4348 = vmatprep.subr.mxu0 0.0
    %4349 = vmatpush1.msra.mxu0 0.0
    %4350 = vmatprep.mubr.f32.mxu0 0.0
    %4351 = vmatmul.mubr.f32.gmra.mrb[0].mxu0 %v4284
    %v4352 = vpop.f32.mrb[0].mxu0
    %v4353 = vadd.f32 %v740, %v4352
    %v4354 = vpop.f32.mrb[0].mxu0
    %v4355 = vadd.f32 %v744, %v4354
    %4356 = vmatprep.mubr.f32.mxu0 0.0
    %4357 = vmatmul.mubr.f32.gmra.mrb[0].mxu0 %v4285
    %v4358 = vpop.f32.mrb[0].mxu0
    %v4359 = vadd.f32 %v740, %v4358
    %v4360 = vpop.f32.mrb[0].mxu0
    %v4361 = vadd.f32 %v744, %v4360
    %4362 = vdwg.mxu0
    %4363 = vmatprep.subr.mxu0 0.0
    %4364 = vmatpush1.msra.mxu0 %v689
    %4365 = vmatprep.subr.mxu0 0.0
    %4366 = vmatpush1.msra.mxu0 %v692
    %4367 = vmatprep.subr.mxu0 0.0
    %4368 = vmatpush1.msra.mxu0 %v695
    %4369 = vmatprep.subr.mxu0 0.0
    %4370 = vmatpush1.msra.mxu0 %v698
    %4371 = vmatprep.subr.mxu0 0.0
    %4372 = vmatpush1.msra.mxu0 %v701
    %4373 = vmatprep.subr.mxu0 0.0
    %4374 = vmatpush1.msra.mxu0 %v704
    %4375 = vmatprep.subr.mxu0 0.0
    %4376 = vmatpush1.msra.mxu0 %v707
    %4377 = vmatprep.subr.mxu0 0.0
    %4378 = vmatpush1.msra.mxu0 %v710
    %4379 = vmatprep.subr.mxu0 0.0
    %4380 = vmatpush1.msra.mxu0 %v713
    %4381 = vmatprep.subr.mxu0 0.0
    %4382 = vmatpush1.msra.mxu0 %v716
    %4383 = vmatprep.subr.mxu0 0.0
    %4384 = vmatpush1.msra.mxu0 %v719
    %4385 = vmatprep.subr.mxu0 0.0
    %4386 = vmatpush1.msra.mxu0 %v722
    %4387 = vmatprep.subr.mxu0 0.0
    %4388 = vmatpush1.msra.mxu0 %v725
    %4389 = vmatprep.subr.mxu0 0.0
    %4390 = vmatpush1.msra.mxu0 %v728
    %4391 = vmatprep.subr.mxu0 0.0
    %4392 = vmatpush1.msra.mxu0 %v731
    %4393 = vmatprep.subr.mxu0 0.0
    %4394 = vmatpush1.msra.mxu0 %v734
    %4395 = vmatprep.subr.mxu0 0.0
    %4396 = vmatpush1.msra.mxu0 0.0
    %4397 = vmatprep.subr.mxu0 0.0
    %4398 = vmatpush1.msra.mxu0 0.0
    %4399 = vmatprep.subr.mxu0 0.0
    %4400 = vmatpush1.msra.mxu0 0.0
    %4401 = vmatprep.subr.mxu0 0.0
    %4402 = vmatpush1.msra.mxu0 0.0
    %4403 = vmatprep.subr.mxu0 0.0
    %4404 = vmatpush1.msra.mxu0 0.0
    %4405 = vmatprep.subr.mxu0 0.0
    %4406 = vmatpush1.msra.mxu0 0.0
    %4407 = vmatprep.subr.mxu0 0.0
    %4408 = vmatpush1.msra.mxu0 0.0
    %4409 = vmatprep.subr.mxu0 0.0
    %4410 = vmatpush1.msra.mxu0 0.0
    %4411 = vmatprep.subr.mxu0 0.0
    %4412 = vmatpush1.msra.mxu0 0.0
    %4413 = vmatprep.subr.mxu0 0.0
    %4414 = vmatpush1.msra.mxu0 0.0
    %4415 = vmatprep.subr.mxu0 0.0
    %4416 = vmatpush1.msra.mxu0 0.0
    %4417 = vmatprep.subr.mxu0 0.0
    %4418 = vmatpush1.msra.mxu0 0.0
    %4419 = vmatprep.subr.mxu0 0.0
    %4420 = vmatpush1.msra.mxu0 0.0
    %4421 = vmatprep.subr.mxu0 0.0
    %4422 = vmatpush1.msra.mxu0 0.0
    %4423 = vmatprep.subr.mxu0 0.0
    %4424 = vmatpush1.msra.mxu0 0.0
    %4425 = vmatprep.subr.mxu0 0.0
    %4426 = vmatpush1.msra.mxu0 0.0
    %4427 = vmatprep.mubr.f32.mxu0 0.0
    %4428 = vmatmul.mubr.f32.gmra.mrb[0].mxu0 %v4284
    %v4429 = vpop.f32.mrb[0].mxu0
    %v4430 = vadd.f32 %v748, %v4429
    %v4431 = vpop.f32.mrb[0].mxu0
    %4432 = vmatprep.mubr.f32.mxu0 0.0
    %4433 = vmatmul.mubr.f32.gmra.mrb[0].mxu0 %v4285
    %v4434 = vpop.f32.mrb[0].mxu0
    %v4435 = vadd.f32 %v748, %v4434
    %v4436 = vpop.f32.mrb[0].mxu0
    %4437 = vdwg.mxu0
    %4438 = vmatprep.subr.mxu0 %v640
    %4439 = vmatpush1.msra.mxu0 %v639
    %4440 = vmatprep.subr.mxu0 %v643
    %4441 = vmatpush1.msra.mxu0 %v642
    %4442 = vmatprep.subr.mxu0 %v646
    %4443 = vmatpush1.msra.mxu0 %v645
    %4444 = vmatprep.subr.mxu0 %v649
    %4445 = vmatpush1.msra.mxu0 %v648
    %4446 = vmatprep.subr.mxu0 %v652
    %4447 = vmatpush1.msra.mxu0 %v651
    %4448 = vmatprep.subr.mxu0 %v655
    %4449 = vmatpush1.msra.mxu0 %v654
    %4450 = vmatprep.subr.mxu0 %v658
    %4451 = vmatpush1.msra.mxu0 %v657
    %4452 = vmatprep.subr.mxu0 %v661
    %4453 = vmatpush1.msra.mxu0 %v660
    %4454 = vmatprep.subr.mxu0 %v664
    %4455 = vmatpush1.msra.mxu0 %v663
    %4456 = vmatprep.subr.mxu0 %v667
    %4457 = vmatpush1.msra.mxu0 %v666
    %4458 = vmatprep.subr.mxu0 %v670
    %4459 = vmatpush1.msra.mxu0 %v669
    %4460 = vmatprep.subr.mxu0 %v673
    %4461 = vmatpush1.msra.mxu0 %v672
    %4462 = vmatprep.subr.mxu0 %v676
    %4463 = vmatpush1.msra.mxu0 %v675
    %4464 = vmatprep.subr.mxu0 %v679
    %4465 = vmatpush1.msra.mxu0 %v678
    %4466 = vmatprep.subr.mxu0 %v682
    %4467 = vmatpush1.msra.mxu0 %v681
    %4468 = vmatprep.subr.mxu0 %v685
    %4469 = vmatpush1.msra.mxu0 %v684
    %4470 = vmatprep.subr.mxu0 0.0
    %4471 = vmatpush1.msra.mxu0 0.0
    %4472 = vmatprep.subr.mxu0 0.0
    %4473 = vmatpush1.msra.mxu0 0.0
    %4474 = vmatprep.subr.mxu0 0.0
    %4475 = vmatpush1.msra.mxu0 0.0
    %4476 = vmatprep.subr.mxu0 0.0
    %4477 = vmatpush1.msra.mxu0 0.0
    %4478 = vmatprep.subr.mxu0 0.0
    %4479 = vmatpush1.msra.mxu0 0.0
    %4480 = vmatprep.subr.mxu0 0.0
    %4481 = vmatpush1.msra.mxu0 0.0
    %4482 = vmatprep.subr.mxu0 0.0
    %4483 = vmatpush1.msra.mxu0 0.0
    %4484 = vmatprep.subr.mxu0 0.0
    %4485 = vmatpush1.msra.mxu0 0.0
    %4486 = vmatprep.subr.mxu0 0.0
    %4487 = vmatpush1.msra.mxu0 0.0
    %4488 = vmatprep.subr.mxu0 0.0
    %4489 = vmatpush1.msra.mxu0 0.0
    %4490 = vmatprep.subr.mxu0 0.0
    %4491 = vmatpush1.msra.mxu0 0.0
    %4492 = vmatprep.subr.mxu0 0.0
    %4493 = vmatpush1.msra.mxu0 0.0
    %4494 = vmatprep.subr.mxu0 0.0
    %4495 = vmatpush1.msra.mxu0 0.0
    %4496 = vmatprep.subr.mxu0 0.0
    %4497 = vmatpush1.msra.mxu0 0.0
    %4498 = vmatprep.subr.mxu0 0.0
    %4499 = vmatpush1.msra.mxu0 0.0
    %4500 = vmatprep.subr.mxu0 0.0
    %4501 = vmatpush1.msra.mxu0 0.0
    %4502 = vmatprep.mubr.f32.mxu0 0.0
    %4503 = vmatmul.mubr.f32.gmra.mrb[0].mxu0 %v4080
    %v4504 = vpop.f32.mrb[0].mxu0
    %v4505 = vadd.f32 0.0, %v4504
    %v4506 = vpop.f32.mrb[0].mxu0
    %v4507 = vadd.f32 0.0, %v4506
    %4508 = vmatprep.mubr.f32.mxu0 0.0
    %4509 = vmatmul.mubr.f32.gmra.mrb[0].mxu0 %v4081
    %v4510 = vpop.f32.mrb[0].mxu0
    %v4511 = vadd.f32 0.0, %v4510
    %v4512 = vpop.f32.mrb[0].mxu0
    %v4513 = vadd.f32 0.0, %v4512
    %4514 = vdwg.mxu0
    %4515 = vmatprep.subr.mxu0 0.0
    %4516 = vmatpush1.msra.mxu0 %v641
    %4517 = vmatprep.subr.mxu0 0.0
    %4518 = vmatpush1.msra.mxu0 %v644
    %4519 = vmatprep.subr.mxu0 0.0
    %4520 = vmatpush1.msra.mxu0 %v647
    %4521 = vmatprep.subr.mxu0 0.0
    %4522 = vmatpush1.msra.mxu0 %v650
    %4523 = vmatprep.subr.mxu0 0.0
    %4524 = vmatpush1.msra.mxu0 %v653
    %4525 = vmatprep.subr.mxu0 0.0
    %4526 = vmatpush1.msra.mxu0 %v656
    %4527 = vmatprep.subr.mxu0 0.0
    %4528 = vmatpush1.msra.mxu0 %v659
    %4529 = vmatprep.subr.mxu0 0.0
    %4530 = vmatpush1.msra.mxu0 %v662
    %4531 = vmatprep.subr.mxu0 0.0
    %4532 = vmatpush1.msra.mxu0 %v665
    %4533 = vmatprep.subr.mxu0 0.0
    %4534 = vmatpush1.msra.mxu0 %v668
    %4535 = vmatprep.subr.mxu0 0.0
    %4536 = vmatpush1.msra.mxu0 %v671
    %4537 = vmatprep.subr.mxu0 0.0
    %4538 = vmatpush1.msra.mxu0 %v674
    %4539 = vmatprep.subr.mxu0 0.0
    %4540 = vmatpush1.msra.mxu0 %v677
    %4541 = vmatprep.subr.mxu0 0.0
    %4542 = vmatpush1.msra.mxu0 %v680
    %4543 = vmatprep.subr.mxu0 0.0
    %4544 = vmatpush1.msra.mxu0 %v683
    %4545 = vmatprep.subr.mxu0 0.0
    %4546 = vmatpush1.msra.mxu0 %v686
    %4547 = vmatprep.subr.mxu0 0.0
    %4548 = vmatpush1.msra.mxu0 0.0
    %4549 = vmatprep.subr.mxu0 0.0
    %4550 = vmatpush1.msra.mxu0 0.0
    %4551 = vmatprep.subr.mxu0 0.0
    %4552 = vmatpush1.msra.mxu0 0.0
    %4553 = vmatprep.subr.mxu0 0.0
    %4554 = vmatpush1.msra.mxu0 0.0
    %4555 = vmatprep.subr.mxu0 0.0
    %4556 = vmatpush1.msra.mxu0 0.0
    %4557 = vmatprep.subr.mxu0 0.0
    %4558 = vmatpush1.msra.mxu0 0.0
    %4559 = vmatprep.subr.mxu0 0.0
    %4560 = vmatpush1.msra.mxu0 0.0
    %4561 = vmatprep.subr.mxu0 0.0
    %4562 = vmatpush1.msra.mxu0 0.0
    %4563 = vmatprep.subr.mxu0 0.0
    %4564 = vmatpush1.msra.mxu0 0.0
    %4565 = vmatprep.subr.mxu0 0.0
    %4566 = vmatpush1.msra.mxu0 0.0
    %4567 = vmatprep.subr.mxu0 0.0
    %4568 = vmatpush1.msra.mxu0 0.0
    %4569 = vmatprep.subr.mxu0 0.0
    %4570 = vmatpush1.msra.mxu0 0.0
    %4571 = vmatprep.subr.mxu0 0.0
    %4572 = vmatpush1.msra.mxu0 0.0
    %4573 = vmatprep.subr.mxu0 0.0
    %4574 = vmatpush1.msra.mxu0 0.0
    %4575 = vmatprep.subr.mxu0 0.0
    %4576 = vmatpush1.msra.mxu0 0.0
    %4577 = vmatprep.subr.mxu0 0.0
    %4578 = vmatpush1.msra.mxu0 0.0
    %4579 = vmatprep.mubr.f32.mxu0 0.0
    %4580 = vmatmul.mubr.f32.gmra.mrb[0].mxu0 %v4080
    %v4581 = vpop.f32.mrb[0].mxu0
    %v4582 = vadd.f32 0.0, %v4581
    %v4583 = vpop.f32.mrb[0].mxu0
    %4584 = vmatprep.mubr.f32.mxu0 0.0
    %4585 = vmatmul.mubr.f32.gmra.mrb[0].mxu0 %v4081
    %v4586 = vpop.f32.mrb[0].mxu0
    %v4587 = vadd.f32 0.0, %v4586
    %v4588 = vpop.f32.mrb[0].mxu0
    %4589 = vdwg.mxu0
    %v4590 = vadd.f32 %v4353, %v4505
    %v4591 = vadd.f32 %v4359, %v4511
    %v4592 = vxor.u32 %v4590, 2147483648
    %v4593 = vxor.u32 %v4591, 2147483648
    %v4594 = vmul.f32 %v4592, 1.442695
    %v4595 = vpow.pop %v4594
    %v4596 = vmul.f32 %v4593, 1.442695
    %v4597 = vpow.pop %v4596
    %v4598 = vadd.f32 %v4595, 1.0
    %v4599 = vadd.f32 %v4597, 1.0
    %v4600 = vrcp.pop %v4598
    %v4601 = vmul.f32 1.0, %v4600
    %v4602 = vrcp.pop %v4599
    %v4603 = vmul.f32 1.0, %v4602
    %v4604 = vadd.f32 %v4355, %v4507
    %v4605 = vadd.f32 %v4361, %v4513
    %v4606 = vxor.u32 %v4604, 2147483648
    %v4607 = vxor.u32 %v4605, 2147483648
    %v4608 = vmul.f32 %v4606, 1.442695
    %v4609 = vpow.pop %v4608
    %v4610 = vmul.f32 %v4607, 1.442695
    %v4611 = vpow.pop %v4610
    %v4612 = vadd.f32 %v4609, 1.0
    %v4613 = vadd.f32 %v4611, 1.0
    %v4614 = vrcp.pop %v4612
    %v4615 = vmul.f32 1.0, %v4614
    %v4616 = vrcp.pop %v4613
    %v4617 = vmul.f32 1.0, %v4616
    %v4618 = vadd.f32 %v4582, %v765
    %v4619 = vadd.f32 %v4587, %v765
    %v4620 = vmul.f32 %v4601, %v4618
    %v4621 = vmul.f32 %v4603, %v4619
    %v4622 = vadd.f32 %v4430, %v4620
    %v4623 = vadd.f32 %v4435, %v4621
    %v4624 = vtanh.pop %v4622
    %v4625 = vtanh.pop %v4623
    %v4626 = vsub.f32 1.0, %v4615
    %v4627 = vsub.f32 1.0, %v4617
    %v4628 = vmul.f32 %v4626, %v4624
    %v4629 = vmul.f32 %v4627, %v4625
    %v4630 = vmul.f32 %v4615, %v4080
    %v4631 = vmul.f32 %v4617, %v4081
    %v4632 = vadd.f32 %v4628, %v4630
    %v4633 = vadd.f32 %v4629, %v4631
    %4634 = vst [vmem:[#allocation2 + $0x60] sm:$0xff] %v4632
    %4635 = vst [vmem:[#allocation2 + $0x68] sm:$0xff] %v4633
    %v4636 = vld [vmem:[#allocation3 + $0x150] sm:$0xff]
    %v4637 = vld [vmem:[#allocation3 + $0x158] sm:$0xff]
    %v4638 = vld [vmem:[#allocation3 + $0x160] sm:$0xff]
    %v4639 = vld [vmem:[#allocation3 + $0x168] sm:$0xff]
    %v4640 = vld [vmem:[#allocation3 + $0x170] sm:$0xff]
    %v4641 = vld [vmem:[#allocation3 + $0x178] sm:$0xff]
    %4642 = vmatprep.subr.mxu0 %v591
    %4643 = vmatpush1.msra.mxu0 %v590
    %4644 = vmatprep.subr.mxu0 %v594
    %4645 = vmatpush1.msra.mxu0 %v593
    %4646 = vmatprep.subr.mxu0 %v597
    %4647 = vmatpush1.msra.mxu0 %v596
    %4648 = vmatprep.subr.mxu0 %v600
    %4649 = vmatpush1.msra.mxu0 %v599
    %4650 = vmatprep.subr.mxu0 %v603
    %4651 = vmatpush1.msra.mxu0 %v602
    %4652 = vmatprep.subr.mxu0 %v606
    %4653 = vmatpush1.msra.mxu0 %v605
    %4654 = vmatprep.subr.mxu0 %v609
    %4655 = vmatpush1.msra.mxu0 %v608
    %4656 = vmatprep.subr.mxu0 %v612
    %4657 = vmatpush1.msra.mxu0 %v611
    %4658 = vmatprep.subr.mxu0 %v615
    %4659 = vmatpush1.msra.mxu0 %v614
    %4660 = vmatprep.subr.mxu0 %v618
    %4661 = vmatpush1.msra.mxu0 %v617
    %4662 = vmatprep.subr.mxu0 %v621
    %4663 = vmatpush1.msra.mxu0 %v620
    %4664 = vmatprep.subr.mxu0 %v624
    %4665 = vmatpush1.msra.mxu0 %v623
    %4666 = vmatprep.subr.mxu0 %v627
    %4667 = vmatpush1.msra.mxu0 %v626
    %4668 = vmatprep.subr.mxu0 %v630
    %4669 = vmatpush1.msra.mxu0 %v629
    %4670 = vmatprep.subr.mxu0 %v633
    %4671 = vmatpush1.msra.mxu0 %v632
    %4672 = vmatprep.subr.mxu0 %v636
    %4673 = vmatpush1.msra.mxu0 %v635
    %4674 = vmatprep.subr.mxu0 0.0
    %4675 = vmatpush1.msra.mxu0 0.0
    %4676 = vmatprep.subr.mxu0 0.0
    %4677 = vmatpush1.msra.mxu0 0.0
    %4678 = vmatprep.subr.mxu0 0.0
    %4679 = vmatpush1.msra.mxu0 0.0
    %4680 = vmatprep.subr.mxu0 0.0
    %4681 = vmatpush1.msra.mxu0 0.0
    %4682 = vmatprep.subr.mxu0 0.0
    %4683 = vmatpush1.msra.mxu0 0.0
    %4684 = vmatprep.subr.mxu0 0.0
    %4685 = vmatpush1.msra.mxu0 0.0
    %4686 = vmatprep.subr.mxu0 0.0
    %4687 = vmatpush1.msra.mxu0 0.0
    %4688 = vmatprep.subr.mxu0 0.0
    %4689 = vmatpush1.msra.mxu0 0.0
    %4690 = vmatprep.subr.mxu0 0.0
    %4691 = vmatpush1.msra.mxu0 0.0
    %4692 = vmatprep.subr.mxu0 0.0
    %4693 = vmatpush1.msra.mxu0 0.0
    %4694 = vmatprep.subr.mxu0 0.0
    %4695 = vmatpush1.msra.mxu0 0.0
    %4696 = vmatprep.subr.mxu0 0.0
    %4697 = vmatpush1.msra.mxu0 0.0
    %4698 = vmatprep.subr.mxu0 0.0
    %4699 = vmatpush1.msra.mxu0 0.0
    %4700 = vmatprep.subr.mxu0 0.0
    %4701 = vmatpush1.msra.mxu0 0.0
    %4702 = vmatprep.subr.mxu0 0.0
    %4703 = vmatpush1.msra.mxu0 0.0
    %4704 = vmatprep.subr.mxu0 0.0
    %4705 = vmatpush1.msra.mxu0 0.0
    %4706 = vmatprep.mubr.f32.mxu0 0.0
    %4707 = vmatmul.mubr.f32.gmra.mrb[0].mxu0 %v4284
    %v4708 = vpop.f32.mrb[0].mxu0
    %v4709 = vadd.f32 0.0, %v4708
    %v4710 = vpop.f32.mrb[0].mxu0
    %v4711 = vadd.f32 0.0, %v4710
    %4712 = vmatprep.mubr.f32.mxu0 0.0
    %4713 = vmatmul.mubr.f32.gmra.mrb[0].mxu0 %v4285
    %v4714 = vpop.f32.mrb[0].mxu0
    %v4715 = vadd.f32 0.0, %v4714
    %v4716 = vpop.f32.mrb[0].mxu0
    %v4717 = vadd.f32 0.0, %v4716
    %4718 = vdwg.mxu0
    %4719 = vmatprep.subr.mxu0 0.0
    %4720 = vmatpush1.msra.mxu0 %v592
    %4721 = vmatprep.subr.mxu0 0.0
    %4722 = vmatpush1.msra.mxu0 %v595
    %4723 = vmatprep.subr.mxu0 0.0
    %4724 = vmatpush1.msra.mxu0 %v598
    %4725 = vmatprep.subr.mxu0 0.0
    %4726 = vmatpush1.msra.mxu0 %v601
    %4727 = vmatprep.subr.mxu0 0.0
    %4728 = vmatpush1.msra.mxu0 %v604
    %4729 = vmatprep.subr.mxu0 0.0
    %4730 = vmatpush1.msra.mxu0 %v607
    %4731 = vmatprep.subr.mxu0 0.0
    %4732 = vmatpush1.msra.mxu0 %v610
    %4733 = vmatprep.subr.mxu0 0.0
    %4734 = vmatpush1.msra.mxu0 %v613
    %4735 = vmatprep.subr.mxu0 0.0
    %4736 = vmatpush1.msra.mxu0 %v616
    %4737 = vmatprep.subr.mxu0 0.0
    %4738 = vmatpush1.msra.mxu0 %v619
    %4739 = vmatprep.subr.mxu0 0.0
    %4740 = vmatpush1.msra.mxu0 %v622
    %4741 = vmatprep.subr.mxu0 0.0
    %4742 = vmatpush1.msra.mxu0 %v625
    %4743 = vmatprep.subr.mxu0 0.0
    %4744 = vmatpush1.msra.mxu0 %v628
    %4745 = vmatprep.subr.mxu0 0.0
    %4746 = vmatpush1.msra.mxu0 %v631
    %4747 = vmatprep.subr.mxu0 0.0
    %4748 = vmatpush1.msra.mxu0 %v634
    %4749 = vmatprep.subr.mxu0 0.0
    %4750 = vmatpush1.msra.mxu0 %v637
    %4751 = vmatprep.subr.mxu0 0.0
    %4752 = vmatpush1.msra.mxu0 0.0
    %4753 = vmatprep.subr.mxu0 0.0
    %4754 = vmatpush1.msra.mxu0 0.0
    %4755 = vmatprep.subr.mxu0 0.0
    %4756 = vmatpush1.msra.mxu0 0.0
    %4757 = vmatprep.subr.mxu0 0.0
    %4758 = vmatpush1.msra.mxu0 0.0
    %4759 = vmatprep.subr.mxu0 0.0
    %4760 = vmatpush1.msra.mxu0 0.0
    %4761 = vmatprep.subr.mxu0 0.0
    %4762 = vmatpush1.msra.mxu0 0.0
    %4763 = vmatprep.subr.mxu0 0.0
    %4764 = vmatpush1.msra.mxu0 0.0
    %4765 = vmatprep.subr.mxu0 0.0
    %4766 = vmatpush1.msra.mxu0 0.0
    %4767 = vmatprep.subr.mxu0 0.0
    %4768 = vmatpush1.msra.mxu0 0.0
    %4769 = vmatprep.subr.mxu0 0.0
    %4770 = vmatpush1.msra.mxu0 0.0
    %4771 = vmatprep.subr.mxu0 0.0
    %4772 = vmatpush1.msra.mxu0 0.0
    %4773 = vmatprep.subr.mxu0 0.0
    %4774 = vmatpush1.msra.mxu0 0.0
    %4775 = vmatprep.subr.mxu0 0.0
    %4776 = vmatpush1.msra.mxu0 0.0
    %4777 = vmatprep.subr.mxu0 0.0
    %4778 = vmatpush1.msra.mxu0 0.0
    %4779 = vmatprep.subr.mxu0 0.0
    %4780 = vmatpush1.msra.mxu0 0.0
    %4781 = vmatprep.subr.mxu0 0.0
    %4782 = vmatpush1.msra.mxu0 0.0
    %4783 = vmatprep.mubr.f32.mxu0 0.0
    %4784 = vmatmul.mubr.f32.gmra.mrb[0].mxu0 %v4284
    %v4785 = vpop.f32.mrb[0].mxu0
    %v4786 = vadd.f32 0.0, %v4785
    %v4787 = vpop.f32.mrb[0].mxu0
    %4788 = vmatprep.mubr.f32.mxu0 0.0
    %4789 = vmatmul.mubr.f32.gmra.mrb[0].mxu0 %v4285
    %v4790 = vpop.f32.mrb[0].mxu0
    %v4791 = vadd.f32 0.0, %v4790
    %v4792 = vpop.f32.mrb[0].mxu0
    %4793 = vdwg.mxu0
    %v4794 = vadd.f32 %v4636, %v4709
    %v4795 = vadd.f32 %v4639, %v4715
    %v4796 = vxor.u32 %v4794, 2147483648
    %v4797 = vxor.u32 %v4795, 2147483648
    %v4798 = vmul.f32 %v4796, 1.442695
    %v4799 = vpow.pop %v4798
    %v4800 = vmul.f32 %v4797, 1.442695
    %v4801 = vpow.pop %v4800
    %v4802 = vadd.f32 %v4799, 1.0
    %v4803 = vadd.f32 %v4801, 1.0
    %v4804 = vrcp.pop %v4802
    %v4805 = vmul.f32 1.0, %v4804
    %v4806 = vrcp.pop %v4803
    %v4807 = vmul.f32 1.0, %v4806
    %v4808 = vadd.f32 %v4637, %v4711
    %v4809 = vadd.f32 %v4640, %v4717
    %v4810 = vxor.u32 %v4808, 2147483648
    %v4811 = vxor.u32 %v4809, 2147483648
    %v4812 = vmul.f32 %v4810, 1.442695
    %v4813 = vpow.pop %v4812
    %v4814 = vmul.f32 %v4811, 1.442695
    %v4815 = vpow.pop %v4814
    %v4816 = vadd.f32 %v4813, 1.0
    %v4817 = vadd.f32 %v4815, 1.0
    %v4818 = vrcp.pop %v4816
    %v4819 = vmul.f32 1.0, %v4818
    %v4820 = vrcp.pop %v4817
    %v4821 = vmul.f32 1.0, %v4820
    %v4822 = vadd.f32 %v4786, %v757
    %v4823 = vadd.f32 %v4791, %v757
    %v4824 = vmul.f32 %v4805, %v4822
    %v4825 = vmul.f32 %v4807, %v4823
    %v4826 = vadd.f32 %v4638, %v4824
    %v4827 = vadd.f32 %v4641, %v4825
    %v4828 = vtanh.pop %v4826
    %v4829 = vtanh.pop %v4827
    %v4830 = vsub.f32 1.0, %v4819
    %v4831 = vsub.f32 1.0, %v4821
    %v4832 = vmul.f32 %v4830, %v4828
    %v4833 = vmul.f32 %v4831, %v4829
    %v4834 = vmul.f32 %v4819, %v4284
    %v4835 = vmul.f32 %v4821, %v4285
    %v4836 = vadd.f32 %v4832, %v4834
    %v4837 = vadd.f32 %v4833, %v4835
    %4838 = vmatprep.subr.mxu0 %v688
    %4839 = vmatpush1.msra.mxu0 %v687
    %4840 = vmatprep.subr.mxu0 %v691
    %4841 = vmatpush1.msra.mxu0 %v690
    %4842 = vmatprep.subr.mxu0 %v694
    %4843 = vmatpush1.msra.mxu0 %v693
    %4844 = vmatprep.subr.mxu0 %v697
    %4845 = vmatpush1.msra.mxu0 %v696
    %4846 = vmatprep.subr.mxu0 %v700
    %4847 = vmatpush1.msra.mxu0 %v699
    %4848 = vmatprep.subr.mxu0 %v703
    %4849 = vmatpush1.msra.mxu0 %v702
    %4850 = vmatprep.subr.mxu0 %v706
    %4851 = vmatpush1.msra.mxu0 %v705
    %4852 = vmatprep.subr.mxu0 %v709
    %4853 = vmatpush1.msra.mxu0 %v708
    %4854 = vmatprep.subr.mxu0 %v712
    %4855 = vmatpush1.msra.mxu0 %v711
    %4856 = vmatprep.subr.mxu0 %v715
    %4857 = vmatpush1.msra.mxu0 %v714
    %4858 = vmatprep.subr.mxu0 %v718
    %4859 = vmatpush1.msra.mxu0 %v717
    %4860 = vmatprep.subr.mxu0 %v721
    %4861 = vmatpush1.msra.mxu0 %v720
    %4862 = vmatprep.subr.mxu0 %v724
    %4863 = vmatpush1.msra.mxu0 %v723
    %4864 = vmatprep.subr.mxu0 %v727
    %4865 = vmatpush1.msra.mxu0 %v726
    %4866 = vmatprep.subr.mxu0 %v730
    %4867 = vmatpush1.msra.mxu0 %v729
    %4868 = vmatprep.subr.mxu0 %v733
    %4869 = vmatpush1.msra.mxu0 %v732
    %4870 = vmatprep.subr.mxu0 0.0
    %4871 = vmatpush1.msra.mxu0 0.0
    %4872 = vmatprep.subr.mxu0 0.0
    %4873 = vmatpush1.msra.mxu0 0.0
    %4874 = vmatprep.subr.mxu0 0.0
    %4875 = vmatpush1.msra.mxu0 0.0
    %4876 = vmatprep.subr.mxu0 0.0
    %4877 = vmatpush1.msra.mxu0 0.0
    %4878 = vmatprep.subr.mxu0 0.0
    %4879 = vmatpush1.msra.mxu0 0.0
    %4880 = vmatprep.subr.mxu0 0.0
    %4881 = vmatpush1.msra.mxu0 0.0
    %4882 = vmatprep.subr.mxu0 0.0
    %4883 = vmatpush1.msra.mxu0 0.0
    %4884 = vmatprep.subr.mxu0 0.0
    %4885 = vmatpush1.msra.mxu0 0.0
    %4886 = vmatprep.subr.mxu0 0.0
    %4887 = vmatpush1.msra.mxu0 0.0
    %4888 = vmatprep.subr.mxu0 0.0
    %4889 = vmatpush1.msra.mxu0 0.0
    %4890 = vmatprep.subr.mxu0 0.0
    %4891 = vmatpush1.msra.mxu0 0.0
    %4892 = vmatprep.subr.mxu0 0.0
    %4893 = vmatpush1.msra.mxu0 0.0
    %4894 = vmatprep.subr.mxu0 0.0
    %4895 = vmatpush1.msra.mxu0 0.0
    %4896 = vmatprep.subr.mxu0 0.0
    %4897 = vmatpush1.msra.mxu0 0.0
    %4898 = vmatprep.subr.mxu0 0.0
    %4899 = vmatpush1.msra.mxu0 0.0
    %4900 = vmatprep.subr.mxu0 0.0
    %4901 = vmatpush1.msra.mxu0 0.0
    %4902 = vmatprep.mubr.f32.mxu0 0.0
    %4903 = vmatmul.mubr.f32.gmra.mrb[0].mxu0 %v4836
    %v4904 = vpop.f32.mrb[0].mxu0
    %v4905 = vadd.f32 %v740, %v4904
    %v4906 = vpop.f32.mrb[0].mxu0
    %v4907 = vadd.f32 %v744, %v4906
    %4908 = vmatprep.mubr.f32.mxu0 0.0
    %4909 = vmatmul.mubr.f32.gmra.mrb[0].mxu0 %v4837
    %v4910 = vpop.f32.mrb[0].mxu0
    %v4911 = vadd.f32 %v740, %v4910
    %v4912 = vpop.f32.mrb[0].mxu0
    %v4913 = vadd.f32 %v744, %v4912
    %4914 = vdwg.mxu0
    %4915 = vmatprep.subr.mxu0 0.0
    %4916 = vmatpush1.msra.mxu0 %v689
    %4917 = vmatprep.subr.mxu0 0.0
    %4918 = vmatpush1.msra.mxu0 %v692
    %4919 = vmatprep.subr.mxu0 0.0
    %4920 = vmatpush1.msra.mxu0 %v695
    %4921 = vmatprep.subr.mxu0 0.0
    %4922 = vmatpush1.msra.mxu0 %v698
    %4923 = vmatprep.subr.mxu0 0.0
    %4924 = vmatpush1.msra.mxu0 %v701
    %4925 = vmatprep.subr.mxu0 0.0
    %4926 = vmatpush1.msra.mxu0 %v704
    %4927 = vmatprep.subr.mxu0 0.0
    %4928 = vmatpush1.msra.mxu0 %v707
    %4929 = vmatprep.subr.mxu0 0.0
    %4930 = vmatpush1.msra.mxu0 %v710
    %4931 = vmatprep.subr.mxu0 0.0
    %4932 = vmatpush1.msra.mxu0 %v713
    %4933 = vmatprep.subr.mxu0 0.0
    %4934 = vmatpush1.msra.mxu0 %v716
    %4935 = vmatprep.subr.mxu0 0.0
    %4936 = vmatpush1.msra.mxu0 %v719
    %4937 = vmatprep.subr.mxu0 0.0
    %4938 = vmatpush1.msra.mxu0 %v722
    %4939 = vmatprep.subr.mxu0 0.0
    %4940 = vmatpush1.msra.mxu0 %v725
    %4941 = vmatprep.subr.mxu0 0.0
    %4942 = vmatpush1.msra.mxu0 %v728
    %4943 = vmatprep.subr.mxu0 0.0
    %4944 = vmatpush1.msra.mxu0 %v731
    %4945 = vmatprep.subr.mxu0 0.0
    %4946 = vmatpush1.msra.mxu0 %v734
    %4947 = vmatprep.subr.mxu0 0.0
    %4948 = vmatpush1.msra.mxu0 0.0
    %4949 = vmatprep.subr.mxu0 0.0
    %4950 = vmatpush1.msra.mxu0 0.0
    %4951 = vmatprep.subr.mxu0 0.0
    %4952 = vmatpush1.msra.mxu0 0.0
    %4953 = vmatprep.subr.mxu0 0.0
    %4954 = vmatpush1.msra.mxu0 0.0
    %4955 = vmatprep.subr.mxu0 0.0
    %4956 = vmatpush1.msra.mxu0 0.0
    %4957 = vmatprep.subr.mxu0 0.0
    %4958 = vmatpush1.msra.mxu0 0.0
    %4959 = vmatprep.subr.mxu0 0.0
    %4960 = vmatpush1.msra.mxu0 0.0
    %4961 = vmatprep.subr.mxu0 0.0
    %4962 = vmatpush1.msra.mxu0 0.0
    %4963 = vmatprep.subr.mxu0 0.0
    %4964 = vmatpush1.msra.mxu0 0.0
    %4965 = vmatprep.subr.mxu0 0.0
    %4966 = vmatpush1.msra.mxu0 0.0
    %4967 = vmatprep.subr.mxu0 0.0
    %4968 = vmatpush1.msra.mxu0 0.0
    %4969 = vmatprep.subr.mxu0 0.0
    %4970 = vmatpush1.msra.mxu0 0.0
    %4971 = vmatprep.subr.mxu0 0.0
    %4972 = vmatpush1.msra.mxu0 0.0
    %4973 = vmatprep.subr.mxu0 0.0
    %4974 = vmatpush1.msra.mxu0 0.0
    %4975 = vmatprep.subr.mxu0 0.0
    %4976 = vmatpush1.msra.mxu0 0.0
    %4977 = vmatprep.subr.mxu0 0.0
    %4978 = vmatpush1.msra.mxu0 0.0
    %4979 = vmatprep.mubr.f32.mxu0 0.0
    %4980 = vmatmul.mubr.f32.gmra.mrb[0].mxu0 %v4836
    %v4981 = vpop.f32.mrb[0].mxu0
    %v4982 = vadd.f32 %v748, %v4981
    %v4983 = vpop.f32.mrb[0].mxu0
    %4984 = vmatprep.mubr.f32.mxu0 0.0
    %4985 = vmatmul.mubr.f32.gmra.mrb[0].mxu0 %v4837
    %v4986 = vpop.f32.mrb[0].mxu0
    %v4987 = vadd.f32 %v748, %v4986
    %v4988 = vpop.f32.mrb[0].mxu0
    %4989 = vdwg.mxu0
    %4990 = vmatprep.subr.mxu0 %v640
    %4991 = vmatpush1.msra.mxu0 %v639
    %4992 = vmatprep.subr.mxu0 %v643
    %4993 = vmatpush1.msra.mxu0 %v642
    %4994 = vmatprep.subr.mxu0 %v646
    %4995 = vmatpush1.msra.mxu0 %v645
    %4996 = vmatprep.subr.mxu0 %v649
    %4997 = vmatpush1.msra.mxu0 %v648
    %4998 = vmatprep.subr.mxu0 %v652
    %4999 = vmatpush1.msra.mxu0 %v651
    %5000 = vmatprep.subr.mxu0 %v655
    %5001 = vmatpush1.msra.mxu0 %v654
    %5002 = vmatprep.subr.mxu0 %v658
    %5003 = vmatpush1.msra.mxu0 %v657
    %5004 = vmatprep.subr.mxu0 %v661
    %5005 = vmatpush1.msra.mxu0 %v660
    %5006 = vmatprep.subr.mxu0 %v664
    %5007 = vmatpush1.msra.mxu0 %v663
    %5008 = vmatprep.subr.mxu0 %v667
    %5009 = vmatpush1.msra.mxu0 %v666
    %5010 = vmatprep.subr.mxu0 %v670
    %5011 = vmatpush1.msra.mxu0 %v669
    %5012 = vmatprep.subr.mxu0 %v673
    %5013 = vmatpush1.msra.mxu0 %v672
    %5014 = vmatprep.subr.mxu0 %v676
    %5015 = vmatpush1.msra.mxu0 %v675
    %5016 = vmatprep.subr.mxu0 %v679
    %5017 = vmatpush1.msra.mxu0 %v678
    %5018 = vmatprep.subr.mxu0 %v682
    %5019 = vmatpush1.msra.mxu0 %v681
    %5020 = vmatprep.subr.mxu0 %v685
    %5021 = vmatpush1.msra.mxu0 %v684
    %5022 = vmatprep.subr.mxu0 0.0
    %5023 = vmatpush1.msra.mxu0 0.0
    %5024 = vmatprep.subr.mxu0 0.0
    %5025 = vmatpush1.msra.mxu0 0.0
    %5026 = vmatprep.subr.mxu0 0.0
    %5027 = vmatpush1.msra.mxu0 0.0
    %5028 = vmatprep.subr.mxu0 0.0
    %5029 = vmatpush1.msra.mxu0 0.0
    %5030 = vmatprep.subr.mxu0 0.0
    %5031 = vmatpush1.msra.mxu0 0.0
    %5032 = vmatprep.subr.mxu0 0.0
    %5033 = vmatpush1.msra.mxu0 0.0
    %5034 = vmatprep.subr.mxu0 0.0
    %5035 = vmatpush1.msra.mxu0 0.0
    %5036 = vmatprep.subr.mxu0 0.0
    %5037 = vmatpush1.msra.mxu0 0.0
    %5038 = vmatprep.subr.mxu0 0.0
    %5039 = vmatpush1.msra.mxu0 0.0
    %5040 = vmatprep.subr.mxu0 0.0
    %5041 = vmatpush1.msra.mxu0 0.0
    %5042 = vmatprep.subr.mxu0 0.0
    %5043 = vmatpush1.msra.mxu0 0.0
    %5044 = vmatprep.subr.mxu0 0.0
    %5045 = vmatpush1.msra.mxu0 0.0
    %5046 = vmatprep.subr.mxu0 0.0
    %5047 = vmatpush1.msra.mxu0 0.0
    %5048 = vmatprep.subr.mxu0 0.0
    %5049 = vmatpush1.msra.mxu0 0.0
    %5050 = vmatprep.subr.mxu0 0.0
    %5051 = vmatpush1.msra.mxu0 0.0
    %5052 = vmatprep.subr.mxu0 0.0
    %5053 = vmatpush1.msra.mxu0 0.0
    %5054 = vmatprep.mubr.f32.mxu0 0.0
    %5055 = vmatmul.mubr.f32.gmra.mrb[0].mxu0 %v4632
    %v5056 = vpop.f32.mrb[0].mxu0
    %v5057 = vadd.f32 0.0, %v5056
    %v5058 = vpop.f32.mrb[0].mxu0
    %v5059 = vadd.f32 0.0, %v5058
    %5060 = vmatprep.mubr.f32.mxu0 0.0
    %5061 = vmatmul.mubr.f32.gmra.mrb[0].mxu0 %v4633
    %v5062 = vpop.f32.mrb[0].mxu0
    %v5063 = vadd.f32 0.0, %v5062
    %v5064 = vpop.f32.mrb[0].mxu0
    %v5065 = vadd.f32 0.0, %v5064
    %5066 = vdwg.mxu0
    %5067 = vmatprep.subr.mxu0 0.0
    %5068 = vmatpush1.msra.mxu0 %v641
    %5069 = vmatprep.subr.mxu0 0.0
    %5070 = vmatpush1.msra.mxu0 %v644
    %5071 = vmatprep.subr.mxu0 0.0
    %5072 = vmatpush1.msra.mxu0 %v647
    %5073 = vmatprep.subr.mxu0 0.0
    %5074 = vmatpush1.msra.mxu0 %v650
    %5075 = vmatprep.subr.mxu0 0.0
    %5076 = vmatpush1.msra.mxu0 %v653
    %5077 = vmatprep.subr.mxu0 0.0
    %5078 = vmatpush1.msra.mxu0 %v656
    %5079 = vmatprep.subr.mxu0 0.0
    %5080 = vmatpush1.msra.mxu0 %v659
    %5081 = vmatprep.subr.mxu0 0.0
    %5082 = vmatpush1.msra.mxu0 %v662
    %5083 = vmatprep.subr.mxu0 0.0
    %5084 = vmatpush1.msra.mxu0 %v665
    %5085 = vmatprep.subr.mxu0 0.0
    %5086 = vmatpush1.msra.mxu0 %v668
    %5087 = vmatprep.subr.mxu0 0.0
    %5088 = vmatpush1.msra.mxu0 %v671
    %5089 = vmatprep.subr.mxu0 0.0
    %5090 = vmatpush1.msra.mxu0 %v674
    %5091 = vmatprep.subr.mxu0 0.0
    %5092 = vmatpush1.msra.mxu0 %v677
    %5093 = vmatprep.subr.mxu0 0.0
    %5094 = vmatpush1.msra.mxu0 %v680
    %5095 = vmatprep.subr.mxu0 0.0
    %5096 = vmatpush1.msra.mxu0 %v683
    %5097 = vmatprep.subr.mxu0 0.0
    %5098 = vmatpush1.msra.mxu0 %v686
    %5099 = vmatprep.subr.mxu0 0.0
    %5100 = vmatpush1.msra.mxu0 0.0
    %5101 = vmatprep.subr.mxu0 0.0
    %5102 = vmatpush1.msra.mxu0 0.0
    %5103 = vmatprep.subr.mxu0 0.0
    %5104 = vmatpush1.msra.mxu0 0.0
    %5105 = vmatprep.subr.mxu0 0.0
    %5106 = vmatpush1.msra.mxu0 0.0
    %5107 = vmatprep.subr.mxu0 0.0
    %5108 = vmatpush1.msra.mxu0 0.0
    %5109 = vmatprep.subr.mxu0 0.0
    %5110 = vmatpush1.msra.mxu0 0.0
    %5111 = vmatprep.subr.mxu0 0.0
    %5112 = vmatpush1.msra.mxu0 0.0
    %5113 = vmatprep.subr.mxu0 0.0
    %5114 = vmatpush1.msra.mxu0 0.0
    %5115 = vmatprep.subr.mxu0 0.0
    %5116 = vmatpush1.msra.mxu0 0.0
    %5117 = vmatprep.subr.mxu0 0.0
    %5118 = vmatpush1.msra.mxu0 0.0
    %5119 = vmatprep.subr.mxu0 0.0
    %5120 = vmatpush1.msra.mxu0 0.0
    %5121 = vmatprep.subr.mxu0 0.0
    %5122 = vmatpush1.msra.mxu0 0.0
    %5123 = vmatprep.subr.mxu0 0.0
    %5124 = vmatpush1.msra.mxu0 0.0
    %5125 = vmatprep.subr.mxu0 0.0
    %5126 = vmatpush1.msra.mxu0 0.0
    %5127 = vmatprep.subr.mxu0 0.0
    %5128 = vmatpush1.msra.mxu0 0.0
    %5129 = vmatprep.subr.mxu0 0.0
    %5130 = vmatpush1.msra.mxu0 0.0
    %5131 = vmatprep.mubr.f32.mxu0 0.0
    %5132 = vmatmul.mubr.f32.gmra.mrb[0].mxu0 %v4632
    %v5133 = vpop.f32.mrb[0].mxu0
    %v5134 = vadd.f32 0.0, %v5133
    %v5135 = vpop.f32.mrb[0].mxu0
    %5136 = vmatprep.mubr.f32.mxu0 0.0
    %5137 = vmatmul.mubr.f32.gmra.mrb[0].mxu0 %v4633
    %v5138 = vpop.f32.mrb[0].mxu0
    %v5139 = vadd.f32 0.0, %v5138
    %v5140 = vpop.f32.mrb[0].mxu0
    %5141 = vdwg.mxu0
    %v5142 = vadd.f32 %v4905, %v5057
    %v5143 = vadd.f32 %v4911, %v5063
    %v5144 = vxor.u32 %v5142, 2147483648
    %v5145 = vxor.u32 %v5143, 2147483648
    %v5146 = vmul.f32 %v5144, 1.442695
    %v5147 = vpow.pop %v5146
    %v5148 = vmul.f32 %v5145, 1.442695
    %v5149 = vpow.pop %v5148
    %v5150 = vadd.f32 %v5147, 1.0
    %v5151 = vadd.f32 %v5149, 1.0
    %v5152 = vrcp.pop %v5150
    %v5153 = vmul.f32 1.0, %v5152
    %v5154 = vrcp.pop %v5151
    %v5155 = vmul.f32 1.0, %v5154
    %v5156 = vadd.f32 %v4907, %v5059
    %v5157 = vadd.f32 %v4913, %v5065
    %v5158 = vxor.u32 %v5156, 2147483648
    %v5159 = vxor.u32 %v5157, 2147483648
    %v5160 = vmul.f32 %v5158, 1.442695
    %v5161 = vpow.pop %v5160
    %v5162 = vmul.f32 %v5159, 1.442695
    %v5163 = vpow.pop %v5162
    %v5164 = vadd.f32 %v5161, 1.0
    %v5165 = vadd.f32 %v5163, 1.0
    %v5166 = vrcp.pop %v5164
    %v5167 = vmul.f32 1.0, %v5166
    %v5168 = vrcp.pop %v5165
    %v5169 = vmul.f32 1.0, %v5168
    %v5170 = vadd.f32 %v5134, %v765
    %v5171 = vadd.f32 %v5139, %v765
    %v5172 = vmul.f32 %v5153, %v5170
    %v5173 = vmul.f32 %v5155, %v5171
    %v5174 = vadd.f32 %v4982, %v5172
    %v5175 = vadd.f32 %v4987, %v5173
    %v5176 = vtanh.pop %v5174
    %v5177 = vtanh.pop %v5175
    %v5178 = vsub.f32 1.0, %v5167
    %v5179 = vsub.f32 1.0, %v5169
    %v5180 = vmul.f32 %v5178, %v5176
    %v5181 = vmul.f32 %v5179, %v5177
    %v5182 = vmul.f32 %v5167, %v4632
    %v5183 = vmul.f32 %v5169, %v4633
    %v5184 = vadd.f32 %v5180, %v5182
    %v5185 = vadd.f32 %v5181, %v5183
    %5186 = vst [vmem:[#allocation2 + $0x70] sm:$0xff] %v5184
    %5187 = vst [vmem:[#allocation2 + $0x78] sm:$0xff] %v5185
    %5188 = vst [vmem:[#allocation12] sm:$0xff] %v4836
    %5189 = vst [vmem:[#allocation12 + $0x8] sm:$0xff] %v4837
    %s5190 = scalar_lea.vmem [#allocation12], 16
    %5191 = vst [vmem:[%s5190] sm:$0xff] %v5184
    %5192 = vst [vmem:[%s5190 + $0x8] sm:$0xff] %v5185
    %v5193 = vld [vmem:[#allocation2] sm:$0xff]
    %v5194 = vld [vmem:[#allocation2 + $0x8] sm:$0xff]
    %v5195 = vld [vmem:[#allocation2 + $0x10] sm:$0xff]
    %v5196 = vld [vmem:[#allocation2 + $0x18] sm:$0xff]
    %v5197 = vld [vmem:[#allocation2 + $0x20] sm:$0xff]
    %v5198 = vld [vmem:[#allocation2 + $0x28] sm:$0xff]
    %v5199 = vld [vmem:[#allocation2 + $0x30] sm:$0xff]
    %v5200 = vld [vmem:[#allocation2 + $0x38] sm:$0xff]
    %v5201 = vld [vmem:[#allocation2 + $0x40] sm:$0xff]
    %v5202 = vld [vmem:[#allocation2 + $0x48] sm:$0xff]
    %v5203 = vld [vmem:[#allocation2 + $0x50] sm:$0xff]
    %v5204 = vld [vmem:[#allocation2 + $0x58] sm:$0xff]
    %v5205 = vld [vmem:[#allocation2 + $0x60] sm:$0xff]
    %v5206 = vld [vmem:[#allocation2 + $0x68] sm:$0xff]
    %v5207 = vld [vmem:[#allocation2 + $0x70] sm:$0xff]
    %v5208 = vld [vmem:[#allocation2 + $0x78] sm:$0xff]
    %v5209 = vld [vmem:[%s7] sm:$0xff]
    %v5210 = vld [vmem:[%s7 + $0x8] sm:$0xff]
    %v5211 = vld [vmem:[%s7 + $0x10] sm:$0xff]
    %v5212 = vld [vmem:[%s7 + $0x18] sm:$0xff]
    %v5213 = vld [vmem:[%s7 + $0x20] sm:$0xff]
    %v5214 = vld [vmem:[%s7 + $0x28] sm:$0xff]
    %v5215 = vld [vmem:[%s7 + $0x30] sm:$0xff]
    %v5216 = vld [vmem:[%s7 + $0x38] sm:$0xff]
    %v5217 = vld [vmem:[%s7 + $0x40] sm:$0xff]
    %v5218 = vld [vmem:[%s7 + $0x48] sm:$0xff]
    %v5219 = vld [vmem:[%s7 + $0x50] sm:$0xff]
    %v5220 = vld [vmem:[%s7 + $0x58] sm:$0xff]
    %v5221 = vld [vmem:[%s7 + $0x60] sm:$0xff]
    %v5222 = vld [vmem:[%s7 + $0x68] sm:$0xff]
    %v5223 = vld [vmem:[%s7 + $0x70] sm:$0xff]
    %v5224 = vld [vmem:[%s7 + $0x78] sm:$0xff]
    %v5225 = vld [vmem:[%s8] sm:$0x1]
    %v5227 = vlaneseq
    %v5228 = vshrl.u32 %v5227, 7
    %v5229 = vsub.s32 0, %v5228
    %v5230 = vrot.slane %v5225, %v5229
    %5232 = vmatprep.subr.mxu0 0.0
    %5233 = vmatpush1.msra.mxu0 %v5209
    %5234 = vmatprep.subr.mxu0 0.0
    %5235 = vmatpush1.msra.mxu0 %v5210
    %5236 = vmatprep.subr.mxu0 0.0
    %5237 = vmatpush1.msra.mxu0 %v5211
    %5238 = vmatprep.subr.mxu0 0.0
    %5239 = vmatpush1.msra.mxu0 %v5212
    %5240 = vmatprep.subr.mxu0 0.0
    %5241 = vmatpush1.msra.mxu0 %v5213
    %5242 = vmatprep.subr.mxu0 0.0
    %5243 = vmatpush1.msra.mxu0 %v5214
    %5244 = vmatprep.subr.mxu0 0.0
    %5245 = vmatpush1.msra.mxu0 %v5215
    %5246 = vmatprep.subr.mxu0 0.0
    %5247 = vmatpush1.msra.mxu0 %v5216
    %5248 = vmatprep.subr.mxu0 0.0
    %5249 = vmatpush1.msra.mxu0 %v5217
    %5250 = vmatprep.subr.mxu0 0.0
    %5251 = vmatpush1.msra.mxu0 %v5218
    %5252 = vmatprep.subr.mxu0 0.0
    %5253 = vmatpush1.msra.mxu0 %v5219
    %5254 = vmatprep.subr.mxu0 0.0
    %5255 = vmatpush1.msra.mxu0 %v5220
    %5256 = vmatprep.subr.mxu0 0.0
    %5257 = vmatpush1.msra.mxu0 %v5221
    %5258 = vmatprep.subr.mxu0 0.0
    %5259 = vmatpush1.msra.mxu0 %v5222
    %5260 = vmatprep.subr.mxu0 0.0
    %5261 = vmatpush1.msra.mxu0 %v5223
    %5262 = vmatprep.subr.mxu0 0.0
    %5263 = vmatpush1.msra.mxu0 %v5224
    %5264 = vmatprep.subr.mxu0 0.0
    %5265 = vmatpush1.msra.mxu0 0.0
    %5266 = vmatprep.subr.mxu0 0.0
    %5267 = vmatpush1.msra.mxu0 0.0
    %5268 = vmatprep.subr.mxu0 0.0
    %5269 = vmatpush1.msra.mxu0 0.0
    %5270 = vmatprep.subr.mxu0 0.0
    %5271 = vmatpush1.msra.mxu0 0.0
    %5272 = vmatprep.subr.mxu0 0.0
    %5273 = vmatpush1.msra.mxu0 0.0
    %5274 = vmatprep.subr.mxu0 0.0
    %5275 = vmatpush1.msra.mxu0 0.0
    %5276 = vmatprep.subr.mxu0 0.0
    %5277 = vmatpush1.msra.mxu0 0.0
    %5278 = vmatprep.subr.mxu0 0.0
    %5279 = vmatpush1.msra.mxu0 0.0
    %5280 = vmatprep.subr.mxu0 0.0
    %5281 = vmatpush1.msra.mxu0 0.0
    %5282 = vmatprep.subr.mxu0 0.0
    %5283 = vmatpush1.msra.mxu0 0.0
    %5284 = vmatprep.subr.mxu0 0.0
    %5285 = vmatpush1.msra.mxu0 0.0
    %5286 = vmatprep.subr.mxu0 0.0
    %5287 = vmatpush1.msra.mxu0 0.0
    %5288 = vmatprep.subr.mxu0 0.0
    %5289 = vmatpush1.msra.mxu0 0.0
    %5290 = vmatprep.subr.mxu0 0.0
    %5291 = vmatpush1.msra.mxu0 0.0
    %5292 = vmatprep.subr.mxu0 0.0
    %5293 = vmatpush1.msra.mxu0 0.0
    %5294 = vmatprep.subr.mxu0 0.0
    %5295 = vmatpush1.msra.mxu0 0.0
    %5296 = vmatprep.mubr.f32.mxu0 0.0
    %5297 = vmatmul.mubr.f32.gmra.mrb[0].mxu0 %v5193
    %v5298 = vpop.f32.mrb[0].mxu0
    %v5299 = vadd.f32 %v5230, %v5298
    %v5300 = vpop.f32.mrb[0].mxu0
    %5301 = vmatprep.mubr.f32.mxu0 0.0
    %5302 = vmatmul.mubr.f32.gmra.mrb[0].mxu0 %v5194
    %v5303 = vpop.f32.mrb[0].mxu0
    %v5304 = vadd.f32 %v5230, %v5303
    %v5305 = vpop.f32.mrb[0].mxu0
    %5306 = vmatprep.mubr.f32.mxu0 0.0
    %5307 = vmatmul.mubr.f32.gmra.mrb[0].mxu0 %v5195
    %v5308 = vpop.f32.mrb[0].mxu0
    %v5309 = vadd.f32 %v5230, %v5308
    %v5310 = vpop.f32.mrb[0].mxu0
    %5311 = vmatprep.mubr.f32.mxu0 0.0
    %5312 = vmatmul.mubr.f32.gmra.mrb[0].mxu0 %v5196
    %v5313 = vpop.f32.mrb[0].mxu0
    %v5314 = vadd.f32 %v5230, %v5313
    %v5315 = vpop.f32.mrb[0].mxu0
    %5316 = vmatprep.mubr.f32.mxu0 0.0
    %5317 = vmatmul.mubr.f32.gmra.mrb[0].mxu0 %v5197
    %v5318 = vpop.f32.mrb[0].mxu0
    %v5319 = vadd.f32 %v5230, %v5318
    %v5320 = vpop.f32.mrb[0].mxu0
    %5321 = vmatprep.mubr.f32.mxu0 0.0
    %5322 = vmatmul.mubr.f32.gmra.mrb[0].mxu0 %v5198
    %v5323 = vpop.f32.mrb[0].mxu0
    %v5324 = vadd.f32 %v5230, %v5323
    %v5325 = vpop.f32.mrb[0].mxu0
    %5326 = vmatprep.mubr.f32.mxu0 0.0
    %5327 = vmatmul.mubr.f32.gmra.mrb[0].mxu0 %v5199
    %v5328 = vpop.f32.mrb[0].mxu0
    %v5329 = vadd.f32 %v5230, %v5328
    %v5330 = vpop.f32.mrb[0].mxu0
    %5331 = vmatprep.mubr.f32.mxu0 0.0
    %5332 = vmatmul.mubr.f32.gmra.mrb[0].mxu0 %v5200
    %v5333 = vpop.f32.mrb[0].mxu0
    %v5334 = vadd.f32 %v5230, %v5333
    %v5335 = vpop.f32.mrb[0].mxu0
    %5336 = vmatprep.mubr.f32.mxu0 0.0
    %5337 = vmatmul.mubr.f32.gmra.mrb[0].mxu0 %v5201
    %v5338 = vpop.f32.mrb[0].mxu0
    %v5339 = vadd.f32 %v5230, %v5338
    %v5340 = vpop.f32.mrb[0].mxu0
    %5341 = vmatprep.mubr.f32.mxu0 0.0
    %5342 = vmatmul.mubr.f32.gmra.mrb[0].mxu0 %v5202
    %v5343 = vpop.f32.mrb[0].mxu0
    %v5344 = vadd.f32 %v5230, %v5343
    %v5345 = vpop.f32.mrb[0].mxu0
    %5346 = vmatprep.mubr.f32.mxu0 0.0
    %5347 = vmatmul.mubr.f32.gmra.mrb[0].mxu0 %v5203
    %v5348 = vpop.f32.mrb[0].mxu0
    %v5349 = vadd.f32 %v5230, %v5348
    %v5350 = vpop.f32.mrb[0].mxu0
    %5351 = vmatprep.mubr.f32.mxu0 0.0
    %5352 = vmatmul.mubr.f32.gmra.mrb[0].mxu0 %v5204
    %v5353 = vpop.f32.mrb[0].mxu0
    %v5354 = vadd.f32 %v5230, %v5353
    %v5355 = vpop.f32.mrb[0].mxu0
    %5356 = vmatprep.mubr.f32.mxu0 0.0
    %5357 = vmatmul.mubr.f32.gmra.mrb[0].mxu0 %v5205
    %v5358 = vpop.f32.mrb[0].mxu0
    %v5359 = vadd.f32 %v5230, %v5358
    %v5360 = vpop.f32.mrb[0].mxu0
    %5361 = vmatprep.mubr.f32.mxu0 0.0
    %5362 = vmatmul.mubr.f32.gmra.mrb[0].mxu0 %v5206
    %v5363 = vpop.f32.mrb[0].mxu0
    %v5364 = vadd.f32 %v5230, %v5363
    %v5365 = vpop.f32.mrb[0].mxu0
    %5366 = vmatprep.mubr.f32.mxu0 0.0
    %5367 = vmatmul.mubr.f32.gmra.mrb[0].mxu0 %v5207
    %v5368 = vpop.f32.mrb[0].mxu0
    %v5369 = vadd.f32 %v5230, %v5368
    %v5370 = vpop.f32.mrb[0].mxu0
    %5371 = vmatprep.mubr.f32.mxu0 0.0
    %5372 = vmatmul.mubr.f32.gmra.mrb[0].mxu0 %v5208
    %v5373 = vpop.f32.mrb[0].mxu0
    %v5374 = vadd.f32 %v5230, %v5373
    %v5375 = vpop.f32.mrb[0].mxu0
    %5376 = vdwg.mxu0
    %5377 = vst [vmem:[%s9] sm:$0xff] %v5299
    %5378 = vst [vmem:[%s9 + $0x8] sm:$0xff] %v5304
    %5379 = vst [vmem:[%s9 + $0x10] sm:$0xff] %v5309
    %5380 = vst [vmem:[%s9 + $0x18] sm:$0xff] %v5314
    %5381 = vst [vmem:[%s9 + $0x20] sm:$0xff] %v5319
    %5382 = vst [vmem:[%s9 + $0x28] sm:$0xff] %v5324
    %5383 = vst [vmem:[%s9 + $0x30] sm:$0xff] %v5329
    %5384 = vst [vmem:[%s9 + $0x38] sm:$0xff] %v5334
    %5385 = vst [vmem:[%s9 + $0x40] sm:$0xff] %v5339
    %5386 = vst [vmem:[%s9 + $0x48] sm:$0xff] %v5344
    %5387 = vst [vmem:[%s9 + $0x50] sm:$0xff] %v5349
    %5388 = vst [vmem:[%s9 + $0x58] sm:$0xff] %v5354
    %5389 = vst [vmem:[%s9 + $0x60] sm:$0xff] %v5359
    %5390 = vst [vmem:[%s9 + $0x68] sm:$0xff] %v5364
    %5391 = vst [vmem:[%s9 + $0x70] sm:$0xff] %v5369
    %5392 = vst [vmem:[%s9 + $0x78] sm:$0xff] %v5374
    // Predicated region
    $region54: #{rnn_forward.1} parent=1 // pred_check
      _
    $region55: #{rnn_forward.1} parent=1 // pred_check_branch
      %5394 = sbr.rel (0) target = $region57
    $region56: #{rnn_forward.1} parent=1 // pred_region
      _
    $region57: #{rnn_forward.1} parent=1 // pred_fallthru
      _
    // Predicated region
    $region58: #{rnn_forward.1} parent=1 // pred_check
      _
    $region59: #{rnn_forward.1} parent=1 // pred_check_branch
      %5396 = sbr.rel (0) target = $region61
    $region60: #{rnn_forward.1} parent=1 // pred_region
      %s5398 = ssub.s32 512, 512
      %5399 = vsyncadd [#allocation6], %s5398
      %s5400 = sshll.u32 [#allocation12], 4
      %s5401 = int_to_ptr.vmem [resolvable:$true] %s5400
      %5406 = dma.vmem_to_hbm [thread:$0]  %s5401, 512, %s10, [#allocation6], 128, 128, 8
    $region61: #{rnn_forward.1} parent=1 // pred_fallthru
      _
    // Predicated region
    $region62: #{rnn_forward.1} parent=1 // pred_check
      _
    $region63: #{rnn_forward.1} parent=1 // pred_check_branch
      %5408 = sbr.rel (0) target = $region65
    $region64: #{rnn_forward.1} parent=1 // pred_region
      _
    $region65: #{rnn_forward.1} parent=1 // pred_fallthru
      _
    // Predicated region
    $region66: #{rnn_forward.1} parent=1 // pred_check
      _
    $region67: #{rnn_forward.1} parent=1 // pred_check_branch
      %5410 = sbr.rel (0) target = $region69
    $region68: #{rnn_forward.1} parent=1 // pred_region
      %5411 = dma.done [#allocation6], 512
    $region69: #{rnn_forward.1} parent=1 // pred_fallthru
      _
    %5412 = vsyncpa [#allocation5], 1
    %5413 = vsyncpa [#allocation8], 1
    %5414 = vsyncpa [#allocation11], 1
    %5415 = vsyncpa [#allocation6], 1

</llo_original>
